<compile_context>
chip_gen: v6e
topology: v6e:2x2x1
jax: 0.10.0
libtpu: 0.0.40
codegen_flags: <defaults>
</compile_context>

<pallas_src>
import functools

import jax
import jax.numpy as jnp
from jax.experimental import pallas as pl
from jax.experimental.pallas import tpu as pltpu

MID = 64    # hidden channel count fixed by the module
LPAD = 8    # sublane-aligned left halo inside the padded activation scratches


def unet_kernel(xcols_ref, w1_ref, b1_ref, w2_ref, b2_ref, w3_ref, b3_ref,
                out_ref, h1pad, h2pad, *, H, W, Wp):
    base = LPAD - 1                       # column where the kx == 0 window starts
    rpad = Wp - LPAD - W

    # --- per-step border zeroing (cheap) -------------------------------------
    # The interior is fully rewritten every step, so only the halo rows/columns
    # touched by the 3x3 windows need to be zero.  Re-zeroing per step (instead
    # of a one-time program_id==0 init) keeps each grid iteration independent,
    # which makes the "parallel" batch axis safe on v7x's two TensorCores.
    zrow = jnp.zeros((Wp, MID), h1pad.dtype)
    zleft = jnp.zeros((H, LPAD, MID), h1pad.dtype)
    zright = jnp.zeros((H, rpad, MID), h1pad.dtype)
    for pad in (h1pad, h2pad):
        pad[0] = zrow                                        # top halo row
        pad[H + 1] = zrow                                    # bottom halo row
        pad[1:H + 1, :LPAD, :] = zleft                       # left halo cols
        pad[1:H + 1, LPAD + W:, :] = zright                  # right halo cols

    # --- conv1: 3 -> 64 as a single K=27 bf16 im2col matmul, ReLU ------------
    a1 = jnp.dot(xcols_ref[0], w1_ref[...], preferred_element_type=jnp.float32)
    a1 = jnp.maximum(a1 + b1_ref[...], 0.0)                  # (H*W, 64) f32
    h1pad[1:H + 1, LPAD:LPAD + W, :] = a1.reshape(H, W, MID)  # aligned store

    # --- conv2: 64 -> 64, kx taps folded per ky into K=256 bf16 matmuls ------
    zchunk = jnp.zeros((H, W, MID), jnp.bfloat16)            # K pad 192 -> 256
    acc2 = jnp.zeros((H * W, MID), jnp.float32)
    for ky in range(3):
        wins = [h1pad[ky:ky + H, base + kx:base + kx + W, :].astype(jnp.bfloat16)
                for kx in range(3)]
        slab = jnp.concatenate(wins + [zchunk], axis=-1)     # (H, W, 256) bf16
        acc2 = acc2 + jnp.dot(slab.reshape(H * W, 4 * MID), w2_ref[ky],
                              preferred_element_type=jnp.float32)
    a2 = jnp.maximum(acc2 + b2_ref[...], 0.0)                # (H*W, 64) f32
    h2pad[1:H + 1, LPAD:LPAD + W, :] = a2.reshape(H, W, MID)

    # --- conv3: 64 -> 1 on the VPU, per-tap channel reduction, Sigmoid -------
    acc3 = jnp.zeros((1, H * W), jnp.float32)
    for ky in range(3):
        for kx in range(3):
            win = h2pad[ky:ky + H, base + kx:base + kx + W, :]   # (H, W, 64) f32
            prod = win.reshape(1, H * W, MID) * w3_ref[ky, kx]   # (1, H*W, 64)
            acc3 = acc3 + jnp.sum(prod, axis=-1)                 # XLU lane reduce
    logit = acc3 + b3_ref[...]                                   # (1, H*W)
    out_ref[0] = (1.0 / (1.0 + jnp.exp(-logit))).astype(out_ref.dtype)


def _vmem_limit_bytes(default=32 * 1024 * 1024):
    # ~3/4 of physical VMEM per generation (v5e/v6e 128 MiB -> 96 MiB,
    # v7x 64 MiB -> 48 MiB); conservative fallback if the query is unavailable.
    try:
        cap = getattr(pltpu.get_tpu_info(), "vmem_capacity_bytes", None)
        if cap:
            return int(cap) * 3 // 4
    except Exception:
        pass
    return default


def unet_forward(x_nchw, params):
    """x_nchw: (N, 3, H, W) float32. Returns (N, 1, H, W) float32."""
    w1r, b1, w2r, b2, w3r, b3 = params
    N, C, H, W = x_nchw.shape
    Wp = LPAD + ((W + 1 + 7) // 8) * 8    # >=1 right halo col, 8-aligned width

    x_nhwc = jnp.transpose(x_nchw, (0, 2, 3, 1)).astype(jnp.float32)
    xpad = jnp.pad(x_nhwc, ((0, 0), (1, 1), (1, 1), (0, 0)))
    # im2col for conv1: (N, H*W, 9*C); tap order (ky, kx) with channel inner,
    # matching w1r = HWIO(3,3,C,64).reshape(9*C, 64).  Emitted in bf16 to halve
    # the im2col HBM traffic (the MXU is bf16-native anyway).
    x_cols = jnp.concatenate(
        [xpad[:, ky:ky + H, kx:kx + W, :]
         for ky in range(3) for kx in range(3)],
        axis=-1).reshape(N, H * W, 9 * C).astype(jnp.bfloat16)

    # TODO(synk): for large H,W add an H-row grid axis with halo recompute (and
    # bf16 scratches) so the two (H+2, Wp, 64) scratches fit v7x's 64 MiB VMEM;
    # the row axis then also becomes a second "parallel" axis.
    # TODO(synk): for tiny H*W, pack several images per grid step to amortize
    # the ~0.35us per-step overhead and deepen the matmul M dimension.
    kernel = functools.partial(unet_kernel, H=H, W=W, Wp=Wp)
    out = pl.pallas_call(
        kernel,
        out_shape=jax.ShapeDtypeStruct((N, 1, H * W), jnp.float32),
        grid_spec=pltpu.PrefetchScalarGridSpec(
            num_scalar_prefetch=0,
            grid=(N,),
            in_specs=[
                pl.BlockSpec((1, H * W, 9 * C), lambda n: (n, 0, 0)),
                pl.BlockSpec((9 * C, MID), lambda n: (0, 0)),
                pl.BlockSpec((1, MID), lambda n: (0, 0)),
                pl.BlockSpec((3, 4 * MID, MID), lambda n: (0, 0, 0)),
                pl.BlockSpec((1, MID), lambda n: (0, 0)),
                pl.BlockSpec((3, 3, 1, MID), lambda n: (0, 0, 0, 0)),
                pl.BlockSpec((1, 1), lambda n: (0, 0)),
            ],
            out_specs=pl.BlockSpec((1, 1, H * W), lambda n: (n, 0, 0)),
            scratch_shapes=[
                pltpu.VMEM((H + 2, Wp, MID), jnp.float32),   # padded h1
                pltpu.VMEM((H + 2, Wp, MID), jnp.float32),   # padded h2
            ],
        ),
        compiler_params=pltpu.CompilerParams(
            dimension_semantics=("parallel",),
            vmem_limit_bytes=_vmem_limit_bytes()),
    )(x_cols, w1r, b1, w2r, b2, w3r, b3)

    return out.reshape(N, 1, H, W)


def prepare_params(w1_oihw, b1, w2_oihw, b2, w3_oihw, b3):
    """Convert PyTorch-layout (OIHW) weights / biases to the kernel layouts."""
    w1_hwio = jnp.transpose(w1_oihw, (2, 3, 1, 0))           # (3, 3, 3, 64)
    w2_hwio = jnp.transpose(w2_oihw, (2, 3, 1, 0))           # (3, 3, 64, 64)
    w3_hwio = jnp.transpose(w3_oihw, (2, 3, 1, 0))           # (3, 3, 64, 1)
    w2r = w2_hwio.reshape(3, 3 * MID, MID)                   # (3, 192, 64)
    w2r = jnp.pad(w2r, ((0, 0), (0, MID), (0, 0)))           # K pad -> (3, 256, 64)
    return (
        w1_hwio.reshape(9 * w1_hwio.shape[2], MID).astype(jnp.bfloat16),  # (27, 64)
        b1[None, :].astype(jnp.float32),                     # (1, 64)
        w2r.astype(jnp.bfloat16),                            # (3, 256, 64)
        b2[None, :].astype(jnp.float32),                     # (1, 64)
        jnp.transpose(w3_hwio, (0, 1, 3, 2)).astype(jnp.float32),  # (3, 3, 1, 64)
        b3[None, :].astype(jnp.float32),                     # (1, 1)
    )


def ref_forward(x, w1_t, b1, w2_t, b2, w3_t, b3):
    """Pure-JAX reference matching PyTorch semantics (NCHW / OIHW)."""
    def conv(h, w, b):
        y = jax.lax.conv_general_dilated(
            h, w, window_strides=(1, 1), padding="SAME",
            dimension_numbers=("NCHW", "OIHW", "NCHW"))
        return y + b[None, :, None, None]
    h = jax.nn.relu(conv(x, w1_t, b1))
    h = jax.nn.relu(conv(h, w2_t, b2))
    return jax.nn.sigmoid(conv(h, w3_t, b3))


if __name__ == "__main__":
    key = jax.random.PRNGKey(0)
    kx_, k1, k2, k3, k4, k5, k6 = jax.random.split(key, 7)

    # small but shape-consistent input: batch=2, C_in=3 (module requires 3)
    x = jax.random.normal(kx_, (2, 3, 16, 16), jnp.float32)

    # deterministic synthetic parameters, PyTorch OIHW layout
    w1_t = jax.random.normal(k1, (64, 3, 3, 3), jnp.float32) * 0.10
    b1 = jax.random.normal(k2, (64,), jnp.float32) * 0.10
    w2_t = jax.random.normal(k3, (64, 64, 3, 3), jnp.float32) * 0.05
    b2 = jax.random.normal(k4, (64,), jnp.float32) * 0.10
    w3_t = jax.random.normal(k5, (1, 64, 3, 3), jnp.float32) * 0.05
    b3 = jax.random.normal(k6, (1,), jnp.float32) * 0.10

    params = prepare_params(w1_t, b1, w2_t, b2, w3_t, b3)

    out = jax.block_until_ready(unet_forward(x, params))
    assert out.shape == (2, 1, 16, 16), out.shape

    ref = jax.block_until_ready(ref_forward(x, w1_t, b1, w2_t, b2, w3_t, b3))
    max_err = float(jnp.max(jnp.abs(out - ref)))
    # bf16 matmul operands (x_cols, w1, w2, conv2 slab) bound the abs error of
    # the post-sigmoid output vs. the f32 reference; keep a generous margin.
    assert max_err < 1e-2, f"max abs err {max_err}"

    print("KERNEL_OK")
</pallas_src>

<mosaic_0001>
module attributes {stable_mosaic.version = 11 : i64} {
  func.func @unet_kernel(%arg0: i32, %arg1: memref<1x256x27xbf16, #tpu.memory_space<vmem>>, %arg2: memref<27x64xbf16, #tpu.memory_space<vmem>>, %arg3: memref<1x64xf32, #tpu.memory_space<vmem>>, %arg4: memref<3x256x64xbf16, #tpu.memory_space<vmem>>, %arg5: memref<1x64xf32, #tpu.memory_space<vmem>>, %arg6: memref<3x3x1x64xf32, #tpu.memory_space<vmem>>, %arg7: memref<1x1xf32, #tpu.memory_space<vmem>>, %arg8: memref<1x1x256xf32, #tpu.memory_space<vmem>>, %arg9: memref<18x32x64xf32, #tpu.memory_space<vmem>>, %arg10: memref<18x32x64xf32, #tpu.memory_space<vmem>>) attributes {dimension_semantics = [#tpu.dimension_semantics<parallel>], iteration_bounds = array<i64: 2>, scalar_prefetch = 0 : i64, scratch_operands = 2 : i64, tpu.core_type = #tpu.core_type<tc>, window_params = [{transform_indices = @transform_0, window_bounds = array<i64: 1, 256, 27>}, {pipeline_mode = #tpu.pipeline_mode<synchronous>, transform_indices = @transform_1, window_bounds = array<i64: 27, 64>}, {pipeline_mode = #tpu.pipeline_mode<synchronous>, transform_indices = @transform_2, window_bounds = array<i64: 1, 64>}, {pipeline_mode = #tpu.pipeline_mode<synchronous>, transform_indices = @transform_3, window_bounds = array<i64: 3, 256, 64>}, {pipeline_mode = #tpu.pipeline_mode<synchronous>, transform_indices = @transform_4, window_bounds = array<i64: 1, 64>}, {pipeline_mode = #tpu.pipeline_mode<synchronous>, transform_indices = @transform_5, window_bounds = array<i64: 3, 3, 1, 64>}, {pipeline_mode = #tpu.pipeline_mode<synchronous>, transform_indices = @transform_6, window_bounds = array<i64: 1, 1>}, {transform_indices = @transform_7, window_bounds = array<i64: 1, 1, 256>}]} {
    %cst = arith.constant 0.000000e+00 : f32
    %0 = vector.broadcast %cst : f32 to vector<32x64xf32>
    %cst_0 = arith.constant 0.000000e+00 : f32
    %1 = vector.broadcast %cst_0 : f32 to vector<16x8x64xf32>
    %cst_1 = arith.constant 0.000000e+00 : f32
    %2 = vector.broadcast %cst_1 : f32 to vector<16x8x64xf32>
    %c0 = arith.constant 0 : index
    %c0_2 = arith.constant 0 : index
    %c0_3 = arith.constant 0 : index
    %3 = vector.load %arg9[%c0, %c0_2, %c0_3] : memref<18x32x64xf32, #tpu.memory_space<vmem>>, vector<1x32x64xf32>
    %4 = vector.shape_cast %3 : vector<1x32x64xf32> to vector<32x64xf32>
    %5 = vector.shape_cast %0 : vector<32x64xf32> to vector<1x32x64xf32>
    tpu.vector_store %arg9[%c0, %c0_2, %c0_3], %5 {strides = array<i32>} : memref<18x32x64xf32, #tpu.memory_space<vmem>>, vector<1x32x64xf32>,
    %c17 = arith.constant 17 : index
    %c0_4 = arith.constant 0 : index
    %c0_5 = arith.constant 0 : index
    %6 = vector.load %arg9[%c17, %c0_4, %c0_5] : memref<18x32x64xf32, #tpu.memory_space<vmem>>, vector<1x32x64xf32>
    %7 = vector.shape_cast %6 : vector<1x32x64xf32> to vector<32x64xf32>
    %8 = vector.shape_cast %0 : vector<32x64xf32> to vector<1x32x64xf32>
    tpu.vector_store %arg9[%c17, %c0_4, %c0_5], %8 {strides = array<i32>} : memref<18x32x64xf32, #tpu.memory_space<vmem>>, vector<1x32x64xf32>,
    %c1 = arith.constant 1 : index
    %c0_6 = arith.constant 0 : index
    %c0_7 = arith.constant 0 : index
    %9 = vector.load %arg9[%c1, %c0_6, %c0_7] : memref<18x32x64xf32, #tpu.memory_space<vmem>>, vector<16x8x64xf32>
    tpu.vector_store %arg9[%c1, %c0_6, %c0_7], %1 {strides = array<i32>} : memref<18x32x64xf32, #tpu.memory_space<vmem>>, vector<16x8x64xf32>,
    %c1_8 = arith.constant 1 : index
    %c24 = arith.constant 24 : index
    %c0_9 = arith.constant 0 : index
    %10 = vector.load %arg9[%c1_8, %c24, %c0_9] : memref<18x32x64xf32, #tpu.memory_space<vmem>>, vector<16x8x64xf32>
    tpu.vector_store %arg9[%c1_8, %c24, %c0_9], %2 {strides = array<i32>} : memref<18x32x64xf32, #tpu.memory_space<vmem>>, vector<16x8x64xf32>,
    %c0_10 = arith.constant 0 : index
    %c0_11 = arith.constant 0 : index
    %c0_12 = arith.constant 0 : index
    %11 = vector.load %arg10[%c0_10, %c0_11, %c0_12] : memref<18x32x64xf32, #tpu.memory_space<vmem>>, vector<1x32x64xf32>
    %12 = vector.shape_cast %11 : vector<1x32x64xf32> to vector<32x64xf32>
    %13 = vector.shape_cast %0 : vector<32x64xf32> to vector<1x32x64xf32>
    tpu.vector_store %arg10[%c0_10, %c0_11, %c0_12], %13 {strides = array<i32>} : memref<18x32x64xf32, #tpu.memory_space<vmem>>, vector<1x32x64xf32>,
    %c17_13 = arith.constant 17 : index
    %c0_14 = arith.constant 0 : index
    %c0_15 = arith.constant 0 : index
    %14 = vector.load %arg10[%c17_13, %c0_14, %c0_15] : memref<18x32x64xf32, #tpu.memory_space<vmem>>, vector<1x32x64xf32>
    %15 = vector.shape_cast %14 : vector<1x32x64xf32> to vector<32x64xf32>
    %16 = vector.shape_cast %0 : vector<32x64xf32> to vector<1x32x64xf32>
    tpu.vector_store %arg10[%c17_13, %c0_14, %c0_15], %16 {strides = array<i32>} : memref<18x32x64xf32, #tpu.memory_space<vmem>>, vector<1x32x64xf32>,
    %c1_16 = arith.constant 1 : index
    %c0_17 = arith.constant 0 : index
    %c0_18 = arith.constant 0 : index
    %17 = vector.load %arg10[%c1_16, %c0_17, %c0_18] : memref<18x32x64xf32, #tpu.memory_space<vmem>>, vector<16x8x64xf32>
    tpu.vector_store %arg10[%c1_16, %c0_17, %c0_18], %1 {strides = array<i32>} : memref<18x32x64xf32, #tpu.memory_space<vmem>>, vector<16x8x64xf32>,
    %c1_19 = arith.constant 1 : index
    %c24_20 = arith.constant 24 : index
    %c0_21 = arith.constant 0 : index
    %18 = vector.load %arg10[%c1_19, %c24_20, %c0_21] : memref<18x32x64xf32, #tpu.memory_space<vmem>>, vector<16x8x64xf32>
    tpu.vector_store %arg10[%c1_19, %c24_20, %c0_21], %2 {strides = array<i32>} : memref<18x32x64xf32, #tpu.memory_space<vmem>>, vector<16x8x64xf32>,
    %c0_22 = arith.constant 0 : index
    %c0_23 = arith.constant 0 : index
    %c0_24 = arith.constant 0 : index
    %19 = vector.load %arg1[%c0_22, %c0_23, %c0_24] : memref<1x256x27xbf16, #tpu.memory_space<vmem>>, vector<1x256x27xbf16>
    %20 = vector.shape_cast %19 : vector<1x256x27xbf16> to vector<256x27xbf16>
    %c0_25 = arith.constant 0 : index
    %c0_26 = arith.constant 0 : index
    %21 = vector.load %arg2[%c0_25, %c0_26] : memref<27x64xbf16, #tpu.memory_space<vmem>>, vector<27x64xbf16>
    %cst_27 = arith.constant dense<0.000000e+00> : vector<256x64xf32>
    %22 = tpu.matmul %20, %21, %cst_27 {dimension_numbers = #tpu.dot_dimension_numbers<[1], [0], [0], [1], [0, 0, 1, 1], [], []>} : vector<256x27xbf16>, vector<27x64xbf16>, vector<256x64xf32> -> vector<256x64xf32>
    %c0_28 = arith.constant 0 : index
    %c0_29 = arith.constant 0 : index
    %23 = vector.load %arg3[%c0_28, %c0_29] : memref<1x64xf32, #tpu.memory_space<vmem>>, vector<1x64xf32>
    %24 = vector.broadcast %23 : vector<1x64xf32> to vector<256x64xf32>
    %25 = arith.addf %22, %24 : vector<256x64xf32>
    %cst_30 = arith.constant 0.000000e+00 : f32
    %26 = vector.broadcast %cst_30 : f32 to vector<256x64xf32>
    %27 = arith.maximumf %25, %26 : vector<256x64xf32>
    %28 = vector.shape_cast %27 : vector<256x64xf32> to vector<16x16x64xf32>
    %c1_31 = arith.constant 1 : index
    %c8 = arith.constant 8 : index
    %c0_32 = arith.constant 0 : index
    %29 = vector.load %arg9[%c1_31, %c8, %c0_32] : memref<18x32x64xf32, #tpu.memory_space<vmem>>, vector<16x16x64xf32>
    tpu.vector_store %arg9[%c1_31, %c8, %c0_32], %28 {strides = array<i32>} : memref<18x32x64xf32, #tpu.memory_space<vmem>>, vector<16x16x64xf32>,
    %cst_33 = arith.constant 0.000000e+00 : bf16
    %30 = vector.broadcast %cst_33 : bf16 to vector<16x16x64xbf16>
    %cst_34 = arith.constant 0.000000e+00 : f32
    %31 = vector.broadcast %cst_34 : f32 to vector<256x64xf32>
    %c0_35 = arith.constant 0 : index
    %c7 = arith.constant 7 : index
    %c0_36 = arith.constant 0 : index
    %32 = vector.load %arg9[%c0_35, %c7, %c0_36] : memref<18x32x64xf32, #tpu.memory_space<vmem>>, vector<16x16x64xf32>
    %33 = arith.truncf %32 : vector<16x16x64xf32> to vector<16x16x64xbf16>
    %c0_37 = arith.constant 0 : index
    %c8_38 = arith.constant 8 : index
    %c0_39 = arith.constant 0 : index
    %34 = vector.load %arg9[%c0_37, %c8_38, %c0_39] : memref<18x32x64xf32, #tpu.memory_space<vmem>>, vector<16x16x64xf32>
    %35 = arith.truncf %34 : vector<16x16x64xf32> to vector<16x16x64xbf16>
    %c0_40 = arith.constant 0 : index
    %c9 = arith.constant 9 : index
    %c0_41 = arith.constant 0 : index
    %36 = vector.load %arg9[%c0_40, %c9, %c0_41] : memref<18x32x64xf32, #tpu.memory_space<vmem>>, vector<16x16x64xf32>
    %37 = arith.truncf %36 : vector<16x16x64xf32> to vector<16x16x64xbf16>
    %38 = tpu.concatenate %33, %35, %37, %30 in 2 : vector<16x16x64xbf16>, vector<16x16x64xbf16>, vector<16x16x64xbf16>, vector<16x16x64xbf16> -> vector<16x16x256xbf16>
    %39 = vector.shape_cast %38 : vector<16x16x256xbf16> to vector<256x256xbf16>
    %c0_42 = arith.constant 0 : index
    %c0_43 = arith.constant 0 : index
    %c0_44 = arith.constant 0 : index
    %40 = vector.load %arg4[%c0_42, %c0_43, %c0_44] : memref<3x256x64xbf16, #tpu.memory_space<vmem>>, vector<1x256x64xbf16>
    %41 = vector.shape_cast %40 : vector<1x256x64xbf16> to vector<256x64xbf16>
    %cst_45 = arith.constant dense<0.000000e+00> : vector<256x64xf32>
    %42 = tpu.matmul %39, %41, %cst_45 {dimension_numbers = #tpu.dot_dimension_numbers<[1], [0], [0], [1], [0, 0, 1, 1], [], []>} : vector<256x256xbf16>, vector<256x64xbf16>, vector<256x64xf32> -> vector<256x64xf32>
    %43 = arith.addf %31, %42 : vector<256x64xf32>
    %c1_46 = arith.constant 1 : index
    %c7_47 = arith.constant 7 : index
    %c0_48 = arith.constant 0 : index
    %44 = vector.load %arg9[%c1_46, %c7_47, %c0_48] : memref<18x32x64xf32, #tpu.memory_space<vmem>>, vector<16x16x64xf32>
    %45 = arith.truncf %44 : vector<16x16x64xf32> to vector<16x16x64xbf16>
    %c1_49 = arith.constant 1 : index
    %c8_50 = arith.constant 8 : index
    %c0_51 = arith.constant 0 : index
    %46 = vector.load %arg9[%c1_49, %c8_50, %c0_51] : memref<18x32x64xf32, #tpu.memory_space<vmem>>, vector<16x16x64xf32>
    %47 = arith.truncf %46 : vector<16x16x64xf32> to vector<16x16x64xbf16>
    %c1_52 = arith.constant 1 : index
    %c9_53 = arith.constant 9 : index
    %c0_54 = arith.constant 0 : index
    %48 = vector.load %arg9[%c1_52, %c9_53, %c0_54] : memref<18x32x64xf32, #tpu.memory_space<vmem>>, vector<16x16x64xf32>
    %49 = arith.truncf %48 : vector<16x16x64xf32> to vector<16x16x64xbf16>
    %50 = tpu.concatenate %45, %47, %49, %30 in 2 : vector<16x16x64xbf16>, vector<16x16x64xbf16>, vector<16x16x64xbf16>, vector<16x16x64xbf16> -> vector<16x16x256xbf16>
    %51 = vector.shape_cast %50 : vector<16x16x256xbf16> to vector<256x256xbf16>
    %c1_55 = arith.constant 1 : index
    %c0_56 = arith.constant 0 : index
    %c0_57 = arith.constant 0 : index
    %52 = vector.load %arg4[%c1_55, %c0_56, %c0_57] : memref<3x256x64xbf16, #tpu.memory_space<vmem>>, vector<1x256x64xbf16>
    %53 = vector.shape_cast %52 : vector<1x256x64xbf16> to vector<256x64xbf16>
    %cst_58 = arith.constant dense<0.000000e+00> : vector<256x64xf32>
    %54 = tpu.matmul %51, %53, %cst_58 {dimension_numbers = #tpu.dot_dimension_numbers<[1], [0], [0], [1], [0, 0, 1, 1], [], []>} : vector<256x256xbf16>, vector<256x64xbf16>, vector<256x64xf32> -> vector<256x64xf32>
    %55 = arith.addf %43, %54 : vector<256x64xf32>
    %c2 = arith.constant 2 : index
    %c7_59 = arith.constant 7 : index
    %c0_60 = arith.constant 0 : index
    %56 = vector.load %arg9[%c2, %c7_59, %c0_60] : memref<18x32x64xf32, #tpu.memory_space<vmem>>, vector<16x16x64xf32>
    %57 = arith.truncf %56 : vector<16x16x64xf32> to vector<16x16x64xbf16>
    %c2_61 = arith.constant 2 : index
    %c8_62 = arith.constant 8 : index
    %c0_63 = arith.constant 0 : index
    %58 = vector.load %arg9[%c2_61, %c8_62, %c0_63] : memref<18x32x64xf32, #tpu.memory_space<vmem>>, vector<16x16x64xf32>
    %59 = arith.truncf %58 : vector<16x16x64xf32> to vector<16x16x64xbf16>
    %c2_64 = arith.constant 2 : index
    %c9_65 = arith.constant 9 : index
    %c0_66 = arith.constant 0 : index
    %60 = vector.load %arg9[%c2_64, %c9_65, %c0_66] : memref<18x32x64xf32, #tpu.memory_space<vmem>>, vector<16x16x64xf32>
    %61 = arith.truncf %60 : vector<16x16x64xf32> to vector<16x16x64xbf16>
    %62 = tpu.concatenate %57, %59, %61, %30 in 2 : vector<16x16x64xbf16>, vector<16x16x64xbf16>, vector<16x16x64xbf16>, vector<16x16x64xbf16> -> vector<16x16x256xbf16>
    %63 = vector.shape_cast %62 : vector<16x16x256xbf16> to vector<256x256xbf16>
    %c2_67 = arith.constant 2 : index
    %c0_68 = arith.constant 0 : index
    %c0_69 = arith.constant 0 : index
    %64 = vector.load %arg4[%c2_67, %c0_68, %c0_69] : memref<3x256x64xbf16, #tpu.memory_space<vmem>>, vector<1x256x64xbf16>
    %65 = vector.shape_cast %64 : vector<1x256x64xbf16> to vector<256x64xbf16>
    %cst_70 = arith.constant dense<0.000000e+00> : vector<256x64xf32>
    %66 = tpu.matmul %63, %65, %cst_70 {dimension_numbers = #tpu.dot_dimension_numbers<[1], [0], [0], [1], [0, 0, 1, 1], [], []>} : vector<256x256xbf16>, vector<256x64xbf16>, vector<256x64xf32> -> vector<256x64xf32>
    %67 = arith.addf %55, %66 : vector<256x64xf32>
    %c0_71 = arith.constant 0 : index
    %c0_72 = arith.constant 0 : index
    %68 = vector.load %arg5[%c0_71, %c0_72] : memref<1x64xf32, #tpu.memory_space<vmem>>, vector<1x64xf32>
    %69 = vector.broadcast %68 : vector<1x64xf32> to vector<256x64xf32>
    %70 = arith.addf %67, %69 : vector<256x64xf32>
    %cst_73 = arith.constant 0.000000e+00 : f32
    %71 = vector.broadcast %cst_73 : f32 to vector<256x64xf32>
    %72 = arith.maximumf %70, %71 : vector<256x64xf32>
    %73 = vector.shape_cast %72 : vector<256x64xf32> to vector<16x16x64xf32>
    %c1_74 = arith.constant 1 : index
    %c8_75 = arith.constant 8 : index
    %c0_76 = arith.constant 0 : index
    %74 = vector.load %arg10[%c1_74, %c8_75, %c0_76] : memref<18x32x64xf32, #tpu.memory_space<vmem>>, vector<16x16x64xf32>
    tpu.vector_store %arg10[%c1_74, %c8_75, %c0_76], %73 {strides = array<i32>} : memref<18x32x64xf32, #tpu.memory_space<vmem>>, vector<16x16x64xf32>,
    %cst_77 = arith.constant 0.000000e+00 : f32
    %75 = vector.broadcast %cst_77 : f32 to vector<1x256xf32>
    %c0_78 = arith.constant 0 : index
    %c7_79 = arith.constant 7 : index
    %c0_80 = arith.constant 0 : index
    %76 = vector.load %arg10[%c0_78, %c7_79, %c0_80] : memref<18x32x64xf32, #tpu.memory_space<vmem>>, vector<16x16x64xf32>
    %77 = vector.shape_cast %76 : vector<16x16x64xf32> to vector<1x256x64xf32>
    %c0_81 = arith.constant 0 : index
    %c0_82 = arith.constant 0 : index
    %c0_83 = arith.constant 0 : index
    %c0_84 = arith.constant 0 : index
    %78 = vector.load %arg6[%c0_81, %c0_82, %c0_83, %c0_84] : memref<3x3x1x64xf32, #tpu.memory_space<vmem>>, vector<1x1x1x64xf32>
    %79 = vector.shape_cast %78 : vector<1x1x1x64xf32> to vector<1x64xf32>
    %80 = vector.shape_cast %79 : vector<1x64xf32> to vector<1x1x64xf32>
    %81 = vector.broadcast %80 : vector<1x1x64xf32> to vector<1x256x64xf32>
    %82 = arith.mulf %77, %81 : vector<1x256x64xf32>
    %cst_85 = arith.constant dense<0.000000e+00> : vector<1x256xf32>
    %83 = vector.multi_reduction <add>, %82, %cst_85 [2] : vector<1x256x64xf32> to vector<1x256xf32>
    %84 = arith.addf %75, %83 : vector<1x256xf32>
    %c0_86 = arith.constant 0 : index
    %c8_87 = arith.constant 8 : index
    %c0_88 = arith.constant 0 : index
    %85 = vector.load %arg10[%c0_86, %c8_87, %c0_88] : memref<18x32x64xf32, #tpu.memory_space<vmem>>, vector<16x16x64xf32>
    %86 = vector.shape_cast %85 : vector<16x16x64xf32> to vector<1x256x64xf32>
    %c0_89 = arith.constant 0 : index
    %c1_90 = arith.constant 1 : index
    %c0_91 = arith.constant 0 : index
    %c0_92 = arith.constant 0 : index
    %87 = vector.load %arg6[%c0_89, %c1_90, %c0_91, %c0_92] : memref<3x3x1x64xf32, #tpu.memory_space<vmem>>, vector<1x1x1x64xf32>
    %88 = vector.shape_cast %87 : vector<1x1x1x64xf32> to vector<1x64xf32>
    %89 = vector.shape_cast %88 : vector<1x64xf32> to vector<1x1x64xf32>
    %90 = vector.broadcast %89 : vector<1x1x64xf32> to vector<1x256x64xf32>
    %91 = arith.mulf %86, %90 : vector<1x256x64xf32>
    %cst_93 = arith.constant dense<0.000000e+00> : vector<1x256xf32>
    %92 = vector.multi_reduction <add>, %91, %cst_93 [2] : vector<1x256x64xf32> to vector<1x256xf32>
    %93 = arith.addf %84, %92 : vector<1x256xf32>
    %c0_94 = arith.constant 0 : index
    %c9_95 = arith.constant 9 : index
    %c0_96 = arith.constant 0 : index
    %94 = vector.load %arg10[%c0_94, %c9_95, %c0_96] : memref<18x32x64xf32, #tpu.memory_space<vmem>>, vector<16x16x64xf32>
    %95 = vector.shape_cast %94 : vector<16x16x64xf32> to vector<1x256x64xf32>
    %c0_97 = arith.constant 0 : index
    %c2_98 = arith.constant 2 : index
    %c0_99 = arith.constant 0 : index
    %c0_100 = arith.constant 0 : index
    %96 = vector.load %arg6[%c0_97, %c2_98, %c0_99, %c0_100] : memref<3x3x1x64xf32, #tpu.memory_space<vmem>>, vector<1x1x1x64xf32>
    %97 = vector.shape_cast %96 : vector<1x1x1x64xf32> to vector<1x64xf32>
    %98 = vector.shape_cast %97 : vector<1x64xf32> to vector<1x1x64xf32>
    %99 = vector.broadcast %98 : vector<1x1x64xf32> to vector<1x256x64xf32>
    %100 = arith.mulf %95, %99 : vector<1x256x64xf32>
    %cst_101 = arith.constant dense<0.000000e+00> : vector<1x256xf32>
    %101 = vector.multi_reduction <add>, %100, %cst_101 [2] : vector<1x256x64xf32> to vector<1x256xf32>
    %102 = arith.addf %93, %101 : vector<1x256xf32>
    %c1_102 = arith.constant 1 : index
    %c7_103 = arith.constant 7 : index
    %c0_104 = arith.constant 0 : index
    %103 = vector.load %arg10[%c1_102, %c7_103, %c0_104] : memref<18x32x64xf32, #tpu.memory_space<vmem>>, vector<16x16x64xf32>
    %104 = vector.shape_cast %103 : vector<16x16x64xf32> to vector<1x256x64xf32>
    %c1_105 = arith.constant 1 : index
    %c0_106 = arith.constant 0 : index
    %c0_107 = arith.constant 0 : index
    %c0_108 = arith.constant 0 : index
    %105 = vector.load %arg6[%c1_105, %c0_106, %c0_107, %c0_108] : memref<3x3x1x64xf32, #tpu.memory_space<vmem>>, vector<1x1x1x64xf32>
    %106 = vector.shape_cast %105 : vector<1x1x1x64xf32> to vector<1x64xf32>
    %107 = vector.shape_cast %106 : vector<1x64xf32> to vector<1x1x64xf32>
    %108 = vector.broadcast %107 : vector<1x1x64xf32> to vector<1x256x64xf32>
    %109 = arith.mulf %104, %108 : vector<1x256x64xf32>
    %cst_109 = arith.constant dense<0.000000e+00> : vector<1x256xf32>
    %110 = vector.multi_reduction <add>, %109, %cst_109 [2] : vector<1x256x64xf32> to vector<1x256xf32>
    %111 = arith.addf %102, %110 : vector<1x256xf32>
    %c1_110 = arith.constant 1 : index
    %c8_111 = arith.constant 8 : index
    %c0_112 = arith.constant 0 : index
    %112 = vector.load %arg10[%c1_110, %c8_111, %c0_112] : memref<18x32x64xf32, #tpu.memory_space<vmem>>, vector<16x16x64xf32>
    %113 = vector.shape_cast %112 : vector<16x16x64xf32> to vector<1x256x64xf32>
    %c1_113 = arith.constant 1 : index
    %c1_114 = arith.constant 1 : index
    %c0_115 = arith.constant 0 : index
    %c0_116 = arith.constant 0 : index
    %114 = vector.load %arg6[%c1_113, %c1_114, %c0_115, %c0_116] : memref<3x3x1x64xf32, #tpu.memory_space<vmem>>, vector<1x1x1x64xf32>
    %115 = vector.shape_cast %114 : vector<1x1x1x64xf32> to vector<1x64xf32>
    %116 = vector.shape_cast %115 : vector<1x64xf32> to vector<1x1x64xf32>
    %117 = vector.broadcast %116 : vector<1x1x64xf32> to vector<1x256x64xf32>
    %118 = arith.mulf %113, %117 : vector<1x256x64xf32>
    %cst_117 = arith.constant dense<0.000000e+00> : vector<1x256xf32>
    %119 = vector.multi_reduction <add>, %118, %cst_117 [2] : vector<1x256x64xf32> to vector<1x256xf32>
    %120 = arith.addf %111, %119 : vector<1x256xf32>
    %c1_118 = arith.constant 1 : index
    %c9_119 = arith.constant 9 : index
    %c0_120 = arith.constant 0 : index
    %121 = vector.load %arg10[%c1_118, %c9_119, %c0_120] : memref<18x32x64xf32, #tpu.memory_space<vmem>>, vector<16x16x64xf32>
    %122 = vector.shape_cast %121 : vector<16x16x64xf32> to vector<1x256x64xf32>
    %c1_121 = arith.constant 1 : index
    %c2_122 = arith.constant 2 : index
    %c0_123 = arith.constant 0 : index
    %c0_124 = arith.constant 0 : index
    %123 = vector.load %arg6[%c1_121, %c2_122, %c0_123, %c0_124] : memref<3x3x1x64xf32, #tpu.memory_space<vmem>>, vector<1x1x1x64xf32>
    %124 = vector.shape_cast %123 : vector<1x1x1x64xf32> to vector<1x64xf32>
    %125 = vector.shape_cast %124 : vector<1x64xf32> to vector<1x1x64xf32>
    %126 = vector.broadcast %125 : vector<1x1x64xf32> to vector<1x256x64xf32>
    %127 = arith.mulf %122, %126 : vector<1x256x64xf32>
    %cst_125 = arith.constant dense<0.000000e+00> : vector<1x256xf32>
    %128 = vector.multi_reduction <add>, %127, %cst_125 [2] : vector<1x256x64xf32> to vector<1x256xf32>
    %129 = arith.addf %120, %128 : vector<1x256xf32>
    %c2_126 = arith.constant 2 : index
    %c7_127 = arith.constant 7 : index
    %c0_128 = arith.constant 0 : index
    %130 = vector.load %arg10[%c2_126, %c7_127, %c0_128] : memref<18x32x64xf32, #tpu.memory_space<vmem>>, vector<16x16x64xf32>
    %131 = vector.shape_cast %130 : vector<16x16x64xf32> to vector<1x256x64xf32>
    %c2_129 = arith.constant 2 : index
    %c0_130 = arith.constant 0 : index
    %c0_131 = arith.constant 0 : index
    %c0_132 = arith.constant 0 : index
    %132 = vector.load %arg6[%c2_129, %c0_130, %c0_131, %c0_132] : memref<3x3x1x64xf32, #tpu.memory_space<vmem>>, vector<1x1x1x64xf32>
    %133 = vector.shape_cast %132 : vector<1x1x1x64xf32> to vector<1x64xf32>
    %134 = vector.shape_cast %133 : vector<1x64xf32> to vector<1x1x64xf32>
    %135 = vector.broadcast %134 : vector<1x1x64xf32> to vector<1x256x64xf32>
    %136 = arith.mulf %131, %135 : vector<1x256x64xf32>
    %cst_133 = arith.constant dense<0.000000e+00> : vector<1x256xf32>
    %137 = vector.multi_reduction <add>, %136, %cst_133 [2] : vector<1x256x64xf32> to vector<1x256xf32>
    %138 = arith.addf %129, %137 : vector<1x256xf32>
    %c2_134 = arith.constant 2 : index
    %c8_135 = arith.constant 8 : index
    %c0_136 = arith.constant 0 : index
    %139 = vector.load %arg10[%c2_134, %c8_135, %c0_136] : memref<18x32x64xf32, #tpu.memory_space<vmem>>, vector<16x16x64xf32>
    %140 = vector.shape_cast %139 : vector<16x16x64xf32> to vector<1x256x64xf32>
    %c2_137 = arith.constant 2 : index
    %c1_138 = arith.constant 1 : index
    %c0_139 = arith.constant 0 : index
    %c0_140 = arith.constant 0 : index
    %141 = vector.load %arg6[%c2_137, %c1_138, %c0_139, %c0_140] : memref<3x3x1x64xf32, #tpu.memory_space<vmem>>, vector<1x1x1x64xf32>
    %142 = vector.shape_cast %141 : vector<1x1x1x64xf32> to vector<1x64xf32>
    %143 = vector.shape_cast %142 : vector<1x64xf32> to vector<1x1x64xf32>
    %144 = vector.broadcast %143 : vector<1x1x64xf32> to vector<1x256x64xf32>
    %145 = arith.mulf %140, %144 : vector<1x256x64xf32>
    %cst_141 = arith.constant dense<0.000000e+00> : vector<1x256xf32>
    %146 = vector.multi_reduction <add>, %145, %cst_141 [2] : vector<1x256x64xf32> to vector<1x256xf32>
    %147 = arith.addf %138, %146 : vector<1x256xf32>
    %c2_142 = arith.constant 2 : index
    %c9_143 = arith.constant 9 : index
    %c0_144 = arith.constant 0 : index
    %148 = vector.load %arg10[%c2_142, %c9_143, %c0_144] : memref<18x32x64xf32, #tpu.memory_space<vmem>>, vector<16x16x64xf32>
    %149 = vector.shape_cast %148 : vector<16x16x64xf32> to vector<1x256x64xf32>
    %c2_145 = arith.constant 2 : index
    %c2_146 = arith.constant 2 : index
    %c0_147 = arith.constant 0 : index
    %c0_148 = arith.constant 0 : index
    %150 = vector.load %arg6[%c2_145, %c2_146, %c0_147, %c0_148] : memref<3x3x1x64xf32, #tpu.memory_space<vmem>>, vector<1x1x1x64xf32>
    %151 = vector.shape_cast %150 : vector<1x1x1x64xf32> to vector<1x64xf32>
    %152 = vector.shape_cast %151 : vector<1x64xf32> to vector<1x1x64xf32>
    %153 = vector.broadcast %152 : vector<1x1x64xf32> to vector<1x256x64xf32>
    %154 = arith.mulf %149, %153 : vector<1x256x64xf32>
    %cst_149 = arith.constant dense<0.000000e+00> : vector<1x256xf32>
    %155 = vector.multi_reduction <add>, %154, %cst_149 [2] : vector<1x256x64xf32> to vector<1x256xf32>
    %156 = arith.addf %147, %155 : vector<1x256xf32>
    %c0_150 = arith.constant 0 : index
    %c0_151 = arith.constant 0 : index
    %157 = vector.load %arg7[%c0_150, %c0_151] : memref<1x1xf32, #tpu.memory_space<vmem>>, vector<1x1xf32>
    %158 = vector.broadcast %157 : vector<1x1xf32> to vector<1x256xf32>
    %159 = arith.addf %156, %158 : vector<1x256xf32>
    %cst_152 = arith.constant 0.000000e+00 : f32
    %160 = vector.broadcast %cst_152 : f32 to vector<1x256xf32>
    %161 = arith.subf %160, %159 : vector<1x256xf32>
    %162 = math.exp %161 : vector<1x256xf32>
    %cst_153 = arith.constant 1.000000e+00 : f32
    %163 = vector.broadcast %cst_153 : f32 to vector<1x256xf32>
    %164 = arith.addf %163, %162 : vector<1x256xf32>
    %cst_154 = arith.constant 1.000000e+00 : f32
    %165 = vector.broadcast %cst_154 : f32 to vector<1x256xf32>
    %166 = arith.divf %165, %164 : vector<1x256xf32>
    %c0_155 = arith.constant 0 : index
    %c0_156 = arith.constant 0 : index
    %c0_157 = arith.constant 0 : index
    %167 = vector.load %arg8[%c0_155, %c0_156, %c0_157] : memref<1x1x256xf32, #tpu.memory_space<vmem>>, vector<1x1x256xf32>
    %168 = vector.shape_cast %167 : vector<1x1x256xf32> to vector<1x256xf32>
    %169 = vector.shape_cast %166 : vector<1x256xf32> to vector<1x1x256xf32>
    tpu.vector_store %arg8[%c0_155, %c0_156, %c0_157], %169 {strides = array<i32>} : memref<1x1x256xf32, #tpu.memory_space<vmem>>, vector<1x1x256xf32>,
    return
  }
  func.func @transform_0(%arg0: i32) -> (i32, i32, i32) {
    %c0_i32 = arith.constant 0 : i32
    %c0_i32_0 = arith.constant 0 : i32
    %c0_i32_1 = arith.constant 0 : i32
    return %arg0, %c0_i32, %c0_i32_0 : i32, i32, i32
  }
  func.func @transform_1(%arg0: i32) -> (i32, i32) {
    %c0_i32 = arith.constant 0 : i32
    %c0_i32_0 = arith.constant 0 : i32
    %c0_i32_1 = arith.constant 0 : i32
    return %c0_i32, %c0_i32_0 : i32, i32
  }
  func.func @transform_2(%arg0: i32) -> (i32, i32) {
    %c0_i32 = arith.constant 0 : i32
    %c0_i32_0 = arith.constant 0 : i32
    %c0_i32_1 = arith.constant 0 : i32
    return %c0_i32, %c0_i32_0 : i32, i32
  }
  func.func @transform_3(%arg0: i32) -> (i32, i32, i32) {
    %c0_i32 = arith.constant 0 : i32
    %c0_i32_0 = arith.constant 0 : i32
    %c0_i32_1 = arith.constant 0 : i32
    %c0_i32_2 = arith.constant 0 : i32
    return %c0_i32, %c0_i32_0, %c0_i32_1 : i32, i32, i32
  }
  func.func @transform_4(%arg0: i32) -> (i32, i32) {
    %c0_i32 = arith.constant 0 : i32
    %c0_i32_0 = arith.constant 0 : i32
    %c0_i32_1 = arith.constant 0 : i32
    return %c0_i32, %c0_i32_0 : i32, i32
  }
  func.func @transform_5(%arg0: i32) -> (i32, i32, i32, i32) {
    %c0_i32 = arith.constant 0 : i32
    %c0_i32_0 = arith.constant 0 : i32
    %c0_i32_1 = arith.constant 0 : i32
    %c0_i32_2 = arith.constant 0 : i32
    %c0_i32_3 = arith.constant 0 : i32
    return %c0_i32, %c0_i32_0, %c0_i32_1, %c0_i32_2 : i32, i32, i32, i32
  }
  func.func @transform_6(%arg0: i32) -> (i32, i32) {
    %c0_i32 = arith.constant 0 : i32
    %c0_i32_0 = arith.constant 0 : i32
    %c0_i32_1 = arith.constant 0 : i32
    return %c0_i32, %c0_i32_0 : i32, i32
  }
  func.func @transform_7(%arg0: i32) -> (i32, i32, i32) {
    %c0_i32 = arith.constant 0 : i32
    %c0_i32_0 = arith.constant 0 : i32
    %c0_i32_1 = arith.constant 0 : i32
    return %arg0, %c0_i32, %c0_i32_0 : i32, i32, i32
  }
}

</mosaic_0001>

<llo_original>
// kernel: tpu_custom_call.1
$region0: #{tpu_custom_call.1}
  #allocation0 [shape = 'u32[]', space=smem, size = 0x4, offset = 0x4, fixed_abs, tag = 'smem constant byte address 0x4 - core index']
  #allocation1 [shape = 'u32[144,128]{1,0:T(1,128)}', space=vmem, size = 0x12000, scoped, tag = 'internal scratch']
  #allocation2 [shape = 'f32[18,32,64]{2,1,0:T(8,128)}', space=vmem, size = 0x48000, scoped, tag = 'scratch operand']
  #allocation3 [shape = 'f32[18,32,64]{2,1,0:T(8,128)}', space=vmem, size = 0x48000, scoped, tag = 'scratch operand']
  #allocation4 [shape = 'f32[1,1]{1,0:T(1,128)S(1)}', space=vmem, size = 0x200, scoped, tag = 'scoped memory for tpu_custom_call.1']
  %s0 = inlined_call_operand.vmem [shape: bf16[2,256,27], index: 0, kind: input, shape index: {}]
  %s1 = inlined_call_operand.vmem [shape: bf16[27,64], index: 1, kind: input, shape index: {}]
  %s2 = inlined_call_operand.vmem [shape: f32[1,64], index: 2, kind: input, shape index: {}]
  %s3 = inlined_call_operand.vmem [shape: bf16[3,256,64], index: 3, kind: input, shape index: {}]
  %s4 = inlined_call_operand.vmem [shape: f32[1,64], index: 4, kind: input, shape index: {}]
  %s5 = inlined_call_operand.vmem [shape: f32[3,3,1,64], index: 5, kind: input, shape index: {}]
  %s6 = inlined_call_operand.<no memory space> [shape: f32[1,1], index: 6, kind: input, shape index: {}]
  %s7 = inlined_call_operand.hbm [shape: f32[2,1,256], index: 7, kind: output, shape index: {}]
  %s8 = sld [smem:[#allocation0]]
  $region61: #{tpu_custom_call.1} parent=0
    _
  %s10 = ssub.s32 1, %s8
  %s11 = scalar_select 0, %s10, %s8
  %v12 = vstv %s6
  %13 = vst [vmem:[#allocation4] sm:$0x1] %v12
  $region1: #{tpu_custom_call.1} parent=0
    #allocation5 [shape = 'u8[2048]{0}', space=vmem, size = 0x800, scoped, tag = 'output window, operand 0']
    #allocation6 [shape = 's32[2]{0}', space=sflag, size = 0x8, scoped, tag = 'scoped memory for tpu_custom_call.1']
    %14 = vsyncpa [#allocation6], 0
    %s15 = scalar_lea.sflag [#allocation6], 1
    %16 = vsyncpa %s15, 0
    loop: start=0, step=1, limit=4
    $region2: #{tpu_custom_call.1} parent=1 // loop_pre_header
      _
    $region3: #{tpu_custom_call.1} parent=1 // loop_header
      %s18 = sphi 0, %s22
      %p19 = scmp.ge.s32.totalorder %s18, 4
      %s28 = sphi 0, %s30
      %s31 = sphi 0, %s28
      %s32 = sphi 0, %s31
      %s48 = sphi 0, %s32
      %s52 = sphi 0, %s52
      %s54 = sphi 0, %s52
      %s55 = sphi 0, %s54
      %s69 = sphi 0, %s55
      %s73 = sphi 0, %s73
      %s75 = sphi 0, %s73
      %s76 = sphi 0, %s75
      %s90 = sphi 0, %s76
      %s94 = sphi 0, %s94
      %s96 = sphi 0, %s94
      %s97 = sphi 0, %s96
      %s111 = sphi 0, %s97
      %s115 = sphi 0, %s115
      %s117 = sphi 0, %s115
      %s118 = sphi 0, %s117
      %s132 = sphi 0, %s118
      %s136 = sphi 0, %s136
      %s138 = sphi 0, %s136
      %s139 = sphi 0, %s138
      %s153 = sphi 0, %s139
      %s157 = sphi 0, %s157
      %s159 = sphi 0, %s157
      %s160 = sphi 0, %s159
      %s174 = sphi 0, %s160
      %s180 = sphi 0, %s182
      %s183 = sphi 0, %s180
      %s184 = sphi 0, %s183
      %s200 = sphi 0, %s184
    $region4: #{tpu_custom_call.1} parent=1 // loop_header_branch
      %21 = sbr.rel (%p19) target = $region8
    $region5: #{tpu_custom_call.1} parent=1 // loop_body
      %s23 = ssub.s32 %s18, 1
      %s24 = ssub.s32 %s18, 2
      %s25 = sadd.s32 %s18, 1
      %s26 = ssub.s32 %s18, %s25
      %p27 = scmp.eq.s32.totalorder %s26, 0
      %s29 = sadd.s32 %s28, 1
      %s30 = scalar_select %p27, %s28, %s29
      %p33 = pneg %p27
      %p34 = scmp.eq.s32.totalorder %s18, 1
      %p35 = por %p33, %p34
      %p36 = scmp.ne.s32.totalorder %s28, %s31
      %p37 = scmp.eq.s32.totalorder %s18, 0
      %p38 = por %p36, %p37
      %p39 = scmp.ne.s32.totalorder %s28, %s31
      %p40 = scmp.eq.s32.totalorder %s23, 1
      %p41 = por %p39, %p40
      %p42 = scmp.ne.s32.totalorder %s31, %s32
      %p43 = scmp.eq.s32.totalorder %s23, 0
      %p44 = por %p42, %p43
      %p45 = scmp.ne.s32.totalorder %s31, %s32
      %p46 = scmp.eq.s32.totalorder %s24, 1
      %p47 = por %p45, %p46
      %p49 = scmp.ne.s32.totalorder %s32, %s48
      %p50 = scmp.eq.s32.totalorder %s24, 0
      %p51 = por %p49, %p50
      %s53 = sadd.s32 %s52, 1
      %p56 = scmp.eq.s32.totalorder %s18, 1
      %p57 = scmp.ne.s32.totalorder %s52, %s54
      %p58 = scmp.eq.s32.totalorder %s18, 0
      %p59 = por %p57, %p58
      %p60 = scmp.ne.s32.totalorder %s52, %s54
      %p61 = scmp.eq.s32.totalorder %s23, 1
      %p62 = por %p60, %p61
      %p63 = scmp.ne.s32.totalorder %s54, %s55
      %p64 = scmp.eq.s32.totalorder %s23, 0
      %p65 = por %p63, %p64
      %p66 = scmp.ne.s32.totalorder %s54, %s55
      %p67 = scmp.eq.s32.totalorder %s24, 1
      %p68 = por %p66, %p67
      %p70 = scmp.ne.s32.totalorder %s55, %s69
      %p71 = scmp.eq.s32.totalorder %s24, 0
      %p72 = por %p70, %p71
      %s74 = sadd.s32 %s73, 1
      %p77 = scmp.eq.s32.totalorder %s18, 1
      %p78 = scmp.ne.s32.totalorder %s73, %s75
      %p79 = scmp.eq.s32.totalorder %s18, 0
      %p80 = por %p78, %p79
      %p81 = scmp.ne.s32.totalorder %s73, %s75
      %p82 = scmp.eq.s32.totalorder %s23, 1
      %p83 = por %p81, %p82
      %p84 = scmp.ne.s32.totalorder %s75, %s76
      %p85 = scmp.eq.s32.totalorder %s23, 0
      %p86 = por %p84, %p85
      %p87 = scmp.ne.s32.totalorder %s75, %s76
      %p88 = scmp.eq.s32.totalorder %s24, 1
      %p89 = por %p87, %p88
      %p91 = scmp.ne.s32.totalorder %s76, %s90
      %p92 = scmp.eq.s32.totalorder %s24, 0
      %p93 = por %p91, %p92
      %s95 = sadd.s32 %s94, 1
      %p98 = scmp.eq.s32.totalorder %s18, 1
      %p99 = scmp.ne.s32.totalorder %s94, %s96
      %p100 = scmp.eq.s32.totalorder %s18, 0
      %p101 = por %p99, %p100
      %p102 = scmp.ne.s32.totalorder %s94, %s96
      %p103 = scmp.eq.s32.totalorder %s23, 1
      %p104 = por %p102, %p103
      %p105 = scmp.ne.s32.totalorder %s96, %s97
      %p106 = scmp.eq.s32.totalorder %s23, 0
      %p107 = por %p105, %p106
      %p108 = scmp.ne.s32.totalorder %s96, %s97
      %p109 = scmp.eq.s32.totalorder %s24, 1
      %p110 = por %p108, %p109
      %p112 = scmp.ne.s32.totalorder %s97, %s111
      %p113 = scmp.eq.s32.totalorder %s24, 0
      %p114 = por %p112, %p113
      %s116 = sadd.s32 %s115, 1
      %p119 = scmp.eq.s32.totalorder %s18, 1
      %p120 = scmp.ne.s32.totalorder %s115, %s117
      %p121 = scmp.eq.s32.totalorder %s18, 0
      %p122 = por %p120, %p121
      %p123 = scmp.ne.s32.totalorder %s115, %s117
      %p124 = scmp.eq.s32.totalorder %s23, 1
      %p125 = por %p123, %p124
      %p126 = scmp.ne.s32.totalorder %s117, %s118
      %p127 = scmp.eq.s32.totalorder %s23, 0
      %p128 = por %p126, %p127
      %p129 = scmp.ne.s32.totalorder %s117, %s118
      %p130 = scmp.eq.s32.totalorder %s24, 1
      %p131 = por %p129, %p130
      %p133 = scmp.ne.s32.totalorder %s118, %s132
      %p134 = scmp.eq.s32.totalorder %s24, 0
      %p135 = por %p133, %p134
      %s137 = sadd.s32 %s136, 1
      %p140 = scmp.eq.s32.totalorder %s18, 1
      %p141 = scmp.ne.s32.totalorder %s136, %s138
      %p142 = scmp.eq.s32.totalorder %s18, 0
      %p143 = por %p141, %p142
      %p144 = scmp.ne.s32.totalorder %s136, %s138
      %p145 = scmp.eq.s32.totalorder %s23, 1
      %p146 = por %p144, %p145
      %p147 = scmp.ne.s32.totalorder %s138, %s139
      %p148 = scmp.eq.s32.totalorder %s23, 0
      %p149 = por %p147, %p148
      %p150 = scmp.ne.s32.totalorder %s138, %s139
      %p151 = scmp.eq.s32.totalorder %s24, 1
      %p152 = por %p150, %p151
      %p154 = scmp.ne.s32.totalorder %s139, %s153
      %p155 = scmp.eq.s32.totalorder %s24, 0
      %p156 = por %p154, %p155
      %s158 = sadd.s32 %s157, 1
      %p161 = scmp.eq.s32.totalorder %s18, 1
      %p162 = scmp.ne.s32.totalorder %s157, %s159
      %p163 = scmp.eq.s32.totalorder %s18, 0
      %p164 = por %p162, %p163
      %p165 = scmp.ne.s32.totalorder %s157, %s159
      %p166 = scmp.eq.s32.totalorder %s23, 1
      %p167 = por %p165, %p166
      %p168 = scmp.ne.s32.totalorder %s159, %s160
      %p169 = scmp.eq.s32.totalorder %s23, 0
      %p170 = por %p168, %p169
      %p171 = scmp.ne.s32.totalorder %s159, %s160
      %p172 = scmp.eq.s32.totalorder %s24, 1
      %p173 = por %p171, %p172
      %p175 = scmp.ne.s32.totalorder %s160, %s174
      %p176 = scmp.eq.s32.totalorder %s24, 0
      %p177 = por %p175, %p176
      %s178 = ssub.s32 %s18, %s25
      %p179 = scmp.eq.s32.totalorder %s178, 0
      %s181 = sadd.s32 %s180, 1
      %s182 = scalar_select %p179, %s180, %s181
      %p185 = pneg %p179
      %p186 = scmp.eq.s32.totalorder %s18, 1
      %p187 = por %p185, %p186
      %p188 = scmp.ne.s32.totalorder %s180, %s183
      %p189 = scmp.eq.s32.totalorder %s18, 0
      %p190 = por %p188, %p189
      %p191 = scmp.ne.s32.totalorder %s180, %s183
      %p192 = scmp.eq.s32.totalorder %s23, 1
      %p193 = por %p191, %p192
      %p194 = scmp.ne.s32.totalorder %s183, %s184
      %p195 = scmp.eq.s32.totalorder %s23, 0
      %p196 = por %p194, %p195
      %p197 = scmp.ne.s32.totalorder %s183, %s184
      %p198 = scmp.eq.s32.totalorder %s24, 1
      %p199 = por %p197, %p198
      %p201 = scmp.ne.s32.totalorder %s184, %s200
      %p202 = scmp.eq.s32.totalorder %s24, 0
      %p203 = por %p201, %p202
      %p204 = scmp.le.s32.totalorder 1, %s18
      %p205 = scmp.lt.s32.totalorder %s18, 3
      %p206 = pnand %p204, %p205
      %p207 = pneg %p206
      // Predicated region
      $region9: #{tpu_custom_call.1} parent=5 // pred_check
        _
      $region10: #{tpu_custom_call.1} parent=5 // pred_check_branch
        %209 = sbr.rel (%p206) target = $region12
      $region11: #{tpu_custom_call.1} parent=5 // pred_region
        %s210 = ssub.s32 %s18, 1
        // Predicated region
        $region13: #{tpu_custom_call.1} parent=11 // pred_check
          %p211 = pneg %p65
        $region14: #{tpu_custom_call.1} parent=11 // pred_check_branch
          %213 = sbr.rel (%p211) target = $region16
        $region15: #{tpu_custom_call.1} parent=11 // pred_region
          _
        $region16: #{tpu_custom_call.1} parent=11 // pred_fallthru
          _
        // Predicated region
        $region17: #{tpu_custom_call.1} parent=11 // pred_check
          %p214 = pneg %p86
        $region18: #{tpu_custom_call.1} parent=11 // pred_check_branch
          %216 = sbr.rel (%p214) target = $region20
        $region19: #{tpu_custom_call.1} parent=11 // pred_region
          _
        $region20: #{tpu_custom_call.1} parent=11 // pred_fallthru
          _
        // Predicated region
        $region21: #{tpu_custom_call.1} parent=11 // pred_check
          %p217 = pneg %p107
        $region22: #{tpu_custom_call.1} parent=11 // pred_check_branch
          %219 = sbr.rel (%p217) target = $region24
        $region23: #{tpu_custom_call.1} parent=11 // pred_region
          _
        $region24: #{tpu_custom_call.1} parent=11 // pred_fallthru
          _
        // Predicated region
        $region25: #{tpu_custom_call.1} parent=11 // pred_check
          %p220 = pneg %p128
        $region26: #{tpu_custom_call.1} parent=11 // pred_check_branch
          %222 = sbr.rel (%p220) target = $region28
        $region27: #{tpu_custom_call.1} parent=11 // pred_region
          _
        $region28: #{tpu_custom_call.1} parent=11 // pred_fallthru
          _
        // Predicated region
        $region29: #{tpu_custom_call.1} parent=11 // pred_check
          %p223 = pneg %p149
        $region30: #{tpu_custom_call.1} parent=11 // pred_check_branch
          %225 = sbr.rel (%p223) target = $region32
        $region31: #{tpu_custom_call.1} parent=11 // pred_region
          _
        $region32: #{tpu_custom_call.1} parent=11 // pred_fallthru
          _
        // Predicated region
        $region33: #{tpu_custom_call.1} parent=11 // pred_check
          %p226 = pneg %p170
        $region34: #{tpu_custom_call.1} parent=11 // pred_check_branch
          %228 = sbr.rel (%p226) target = $region36
        $region35: #{tpu_custom_call.1} parent=11 // pred_region
          _
        $region36: #{tpu_custom_call.1} parent=11 // pred_fallthru
          _
      $region12: #{tpu_custom_call.1} parent=5 // pred_fallthru
        _
      %p229 = scmp.lt.s32.totalorder %s18, 2
      // Predicated region
      $region37: #{tpu_custom_call.1} parent=5 // pred_check
        %p230 = pneg %p229
      $region38: #{tpu_custom_call.1} parent=5 // pred_check_branch
        %232 = sbr.rel (%p230) target = $region40
      $region39: #{tpu_custom_call.1} parent=5 // pred_region
        // Predicated region
        $region41: #{tpu_custom_call.1} parent=39 // pred_check
          %p233 = pneg %p38
        $region42: #{tpu_custom_call.1} parent=39 // pred_check_branch
          %235 = sbr.rel (%p233) target = $region44
        $region43: #{tpu_custom_call.1} parent=39 // pred_region
          %p236 = scmp.lt.s32.totalorder %s18, 1
          %s237 = scalar_select %p236, %s18, 1
          %s238 = smul.addr %s237, 32
          %s239 = smul.addr %s238, 4
          %s240 = scalar_lea.vmem %s0, %s239
        $region44: #{tpu_custom_call.1} parent=39 // pred_fallthru
          _
      $region40: #{tpu_custom_call.1} parent=5 // pred_fallthru
        _
      %p241 = scmp.le.s32.totalorder 1, %s18
      %p242 = scmp.lt.s32.totalorder %s18, 3
      %p243 = pnand %p241, %p242
      %p244 = pneg %p243
      // Predicated region
      $region45: #{tpu_custom_call.1} parent=5 // pred_check
        _
      $region46: #{tpu_custom_call.1} parent=5 // pred_check_branch
        %246 = sbr.rel (%p243) target = $region48
      $region47: #{tpu_custom_call.1} parent=5 // pred_region
        %s247 = ssub.s32 %s18, 1
        %p248 = scmp.lt.s32.totalorder %s23, 1
        %s249 = scalar_select %p248, %s23, 1
        %s250 = smul.addr %s249, 32
        %s251 = smul.addr %s250, 4
        %s252 = scalar_lea.vmem %s0, %s251
        %p253 = pneg %p44
        %p254 = pneg %p41
        %p255 = pneg %p65
        %p256 = pneg %p62
        %p257 = pneg %p86
        %p258 = pneg %p83
        %p259 = pneg %p107
        %p260 = pneg %p104
        %p261 = pneg %p128
        %p262 = pneg %p125
        %p263 = pneg %p149
        %p264 = pneg %p146
        %p265 = pneg %p170
        %p266 = pneg %p167
        %p267 = pneg %p196
        %p268 = pneg %p193
        %s269 = sand.u32 %s183, 1
        %s270 = scalar_lea.sflag [#allocation6], %s269
        %s271 = sand.u32 %s183, 1
        %s272 = smul.addr %s271, 2
        %s273 = scalar_lea.vmem [#allocation5], %s272
        %p274 = scmp.lt.s32.totalorder %s23, 1
        %s275 = scalar_select %p274, %s23, 1
        %s276 = smul.addr %s275, 32
        %s277 = smul.addr %s276, 4
        %s278 = scalar_lea.vmem %s0, %s277
        %vm280 = vcmask 523264
        %281 = vst.msk [vmem:[#allocation2] sm:$0xff] %vm280, 0.0
        %282 = vst.msk [vmem:[#allocation2 + $0x8] sm:$0xff] %vm280, 0.0
        %283 = vst.msk [vmem:[#allocation2 + $0x10] sm:$0xff] %vm280, 0.0
        %284 = vst.msk [vmem:[#allocation2 + $0x18] sm:$0xff] %vm280, 0.0
        %s285 = scalar_lea.vmem [#allocation2], 544
        %286 = vst.msk [vmem:[%s285] sm:$0xff] %vm280, 0.0
        %287 = vst.msk [vmem:[%s285 + $0x8] sm:$0xff] %vm280, 0.0
        %288 = vst.msk [vmem:[%s285 + $0x10] sm:$0xff] %vm280, 0.0
        %289 = vst.msk [vmem:[%s285 + $0x18] sm:$0xff] %vm280, 0.0
        %s290 = scalar_lea.vmem [#allocation2], 32
        %291 = vst.msk [vmem:[%s290] sm:$0xff] %vm280, 0.0
        %292 = vst.msk [vmem:[%s290 + $0x20] sm:$0xff] %vm280, 0.0
        %293 = vst.msk [vmem:[%s290 + $0x40] sm:$0xff] %vm280, 0.0
        %294 = vst.msk [vmem:[%s290 + $0x60] sm:$0xff] %vm280, 0.0
        %295 = vst.msk [vmem:[%s290 + $0x80] sm:$0xff] %vm280, 0.0
        %296 = vst.msk [vmem:[%s290 + $0xa0] sm:$0xff] %vm280, 0.0
        %297 = vst.msk [vmem:[%s290 + $0xc0] sm:$0xff] %vm280, 0.0
        %298 = vst.msk [vmem:[%s290 + $0xe0] sm:$0xff] %vm280, 0.0
        %299 = vst.msk [vmem:[%s290 + $0x100] sm:$0xff] %vm280, 0.0
        %300 = vst.msk [vmem:[%s290 + $0x120] sm:$0xff] %vm280, 0.0
        %301 = vst.msk [vmem:[%s290 + $0x140] sm:$0xff] %vm280, 0.0
        %302 = vst.msk [vmem:[%s290 + $0x160] sm:$0xff] %vm280, 0.0
        %303 = vst.msk [vmem:[%s290 + $0x180] sm:$0xff] %vm280, 0.0
        %304 = vst.msk [vmem:[%s290 + $0x1a0] sm:$0xff] %vm280, 0.0
        %305 = vst.msk [vmem:[%s290 + $0x1c0] sm:$0xff] %vm280, 0.0
        %306 = vst.msk [vmem:[%s290 + $0x1e0] sm:$0xff] %vm280, 0.0
        %307 = vst.msk [vmem:[%s290 + $0x18] sm:$0xff] %vm280, 0.0
        %308 = vst.msk [vmem:[%s290 + $0x38] sm:$0xff] %vm280, 0.0
        %309 = vst.msk [vmem:[%s290 + $0x58] sm:$0xff] %vm280, 0.0
        %310 = vst.msk [vmem:[%s290 + $0x78] sm:$0xff] %vm280, 0.0
        %311 = vst.msk [vmem:[%s290 + $0x98] sm:$0xff] %vm280, 0.0
        %312 = vst.msk [vmem:[%s290 + $0xb8] sm:$0xff] %vm280, 0.0
        %313 = vst.msk [vmem:[%s290 + $0xd8] sm:$0xff] %vm280, 0.0
        %314 = vst.msk [vmem:[%s290 + $0xf8] sm:$0xff] %vm280, 0.0
        %315 = vst.msk [vmem:[%s290 + $0x118] sm:$0xff] %vm280, 0.0
        %316 = vst.msk [vmem:[%s290 + $0x138] sm:$0xff] %vm280, 0.0
        %317 = vst.msk [vmem:[%s290 + $0x158] sm:$0xff] %vm280, 0.0
        %318 = vst.msk [vmem:[%s290 + $0x178] sm:$0xff] %vm280, 0.0
        %319 = vst.msk [vmem:[%s290 + $0x198] sm:$0xff] %vm280, 0.0
        %320 = vst.msk [vmem:[%s290 + $0x1b8] sm:$0xff] %vm280, 0.0
        %321 = vst.msk [vmem:[%s290 + $0x1d8] sm:$0xff] %vm280, 0.0
        %322 = vst.msk [vmem:[%s290 + $0x1f8] sm:$0xff] %vm280, 0.0
        %323 = vst.msk [vmem:[#allocation3] sm:$0xff] %vm280, 0.0
        %324 = vst.msk [vmem:[#allocation3 + $0x8] sm:$0xff] %vm280, 0.0
        %325 = vst.msk [vmem:[#allocation3 + $0x10] sm:$0xff] %vm280, 0.0
        %326 = vst.msk [vmem:[#allocation3 + $0x18] sm:$0xff] %vm280, 0.0
        %s327 = scalar_lea.vmem [#allocation3], 544
        %328 = vst.msk [vmem:[%s327] sm:$0xff] %vm280, 0.0
        %329 = vst.msk [vmem:[%s327 + $0x8] sm:$0xff] %vm280, 0.0
        %330 = vst.msk [vmem:[%s327 + $0x10] sm:$0xff] %vm280, 0.0
        %331 = vst.msk [vmem:[%s327 + $0x18] sm:$0xff] %vm280, 0.0
        %s332 = scalar_lea.vmem [#allocation3], 32
        %333 = vst.msk [vmem:[%s332] sm:$0xff] %vm280, 0.0
        %334 = vst.msk [vmem:[%s332 + $0x20] sm:$0xff] %vm280, 0.0
        %335 = vst.msk [vmem:[%s332 + $0x40] sm:$0xff] %vm280, 0.0
        %336 = vst.msk [vmem:[%s332 + $0x60] sm:$0xff] %vm280, 0.0
        %337 = vst.msk [vmem:[%s332 + $0x80] sm:$0xff] %vm280, 0.0
        %338 = vst.msk [vmem:[%s332 + $0xa0] sm:$0xff] %vm280, 0.0
        %339 = vst.msk [vmem:[%s332 + $0xc0] sm:$0xff] %vm280, 0.0
        %340 = vst.msk [vmem:[%s332 + $0xe0] sm:$0xff] %vm280, 0.0
        %341 = vst.msk [vmem:[%s332 + $0x100] sm:$0xff] %vm280, 0.0
        %342 = vst.msk [vmem:[%s332 + $0x120] sm:$0xff] %vm280, 0.0
        %343 = vst.msk [vmem:[%s332 + $0x140] sm:$0xff] %vm280, 0.0
        %344 = vst.msk [vmem:[%s332 + $0x160] sm:$0xff] %vm280, 0.0
        %345 = vst.msk [vmem:[%s332 + $0x180] sm:$0xff] %vm280, 0.0
        %346 = vst.msk [vmem:[%s332 + $0x1a0] sm:$0xff] %vm280, 0.0
        %347 = vst.msk [vmem:[%s332 + $0x1c0] sm:$0xff] %vm280, 0.0
        %348 = vst.msk [vmem:[%s332 + $0x1e0] sm:$0xff] %vm280, 0.0
        %349 = vst.msk [vmem:[%s332 + $0x18] sm:$0xff] %vm280, 0.0
        %350 = vst.msk [vmem:[%s332 + $0x38] sm:$0xff] %vm280, 0.0
        %351 = vst.msk [vmem:[%s332 + $0x58] sm:$0xff] %vm280, 0.0
        %352 = vst.msk [vmem:[%s332 + $0x78] sm:$0xff] %vm280, 0.0
        %353 = vst.msk [vmem:[%s332 + $0x98] sm:$0xff] %vm280, 0.0
        %354 = vst.msk [vmem:[%s332 + $0xb8] sm:$0xff] %vm280, 0.0
        %355 = vst.msk [vmem:[%s332 + $0xd8] sm:$0xff] %vm280, 0.0
        %356 = vst.msk [vmem:[%s332 + $0xf8] sm:$0xff] %vm280, 0.0
        %357 = vst.msk [vmem:[%s332 + $0x118] sm:$0xff] %vm280, 0.0
        %358 = vst.msk [vmem:[%s332 + $0x138] sm:$0xff] %vm280, 0.0
        %359 = vst.msk [vmem:[%s332 + $0x158] sm:$0xff] %vm280, 0.0
        %360 = vst.msk [vmem:[%s332 + $0x178] sm:$0xff] %vm280, 0.0
        %361 = vst.msk [vmem:[%s332 + $0x198] sm:$0xff] %vm280, 0.0
        %362 = vst.msk [vmem:[%s332 + $0x1b8] sm:$0xff] %vm280, 0.0
        %363 = vst.msk [vmem:[%s332 + $0x1d8] sm:$0xff] %vm280, 0.0
        %364 = vst.msk [vmem:[%s332 + $0x1f8] sm:$0xff] %vm280, 0.0
        %v365 = vld [vmem:[%s278] sm:$0xf]
        %v366 = vld [vmem:[%s278 + $0x4] sm:$0xf]
        %v367 = vld [vmem:[%s278 + $0x8] sm:$0xf]
        %v368 = vld [vmem:[%s278 + $0xc] sm:$0xf]
        %v369 = vld [vmem:[%s278 + $0x10] sm:$0xf]
        %v370 = vld [vmem:[%s278 + $0x14] sm:$0xf]
        %v371 = vld [vmem:[%s278 + $0x18] sm:$0xf]
        %v372 = vld [vmem:[%s278 + $0x1c] sm:$0xf]
        %v373 = vld [vmem:[%s278 + $0x20] sm:$0xf]
        %v374 = vld [vmem:[%s278 + $0x24] sm:$0xf]
        %v375 = vld [vmem:[%s278 + $0x28] sm:$0xf]
        %v376 = vld [vmem:[%s278 + $0x2c] sm:$0xf]
        %v377 = vld [vmem:[%s278 + $0x30] sm:$0xf]
        %v378 = vld [vmem:[%s278 + $0x34] sm:$0xf]
        %v379 = vld [vmem:[%s278 + $0x38] sm:$0xf]
        %v380 = vld [vmem:[%s278 + $0x3c] sm:$0xf]
        %v381 = vld [vmem:[%s278 + $0x40] sm:$0xf]
        %v382 = vld [vmem:[%s278 + $0x44] sm:$0xf]
        %v383 = vld [vmem:[%s278 + $0x48] sm:$0xf]
        %v384 = vld [vmem:[%s278 + $0x4c] sm:$0xf]
        %v385 = vld [vmem:[%s278 + $0x50] sm:$0xf]
        %v386 = vld [vmem:[%s278 + $0x54] sm:$0xf]
        %v387 = vld [vmem:[%s278 + $0x58] sm:$0xf]
        %v388 = vld [vmem:[%s278 + $0x5c] sm:$0xf]
        %v389 = vld [vmem:[%s278 + $0x60] sm:$0xf]
        %v390 = vld [vmem:[%s278 + $0x64] sm:$0xf]
        %v391 = vld [vmem:[%s278 + $0x68] sm:$0xf]
        %v392 = vld [vmem:[%s278 + $0x6c] sm:$0xf]
        %v393 = vld [vmem:[%s278 + $0x70] sm:$0xf]
        %v394 = vld [vmem:[%s278 + $0x74] sm:$0xf]
        %v395 = vld [vmem:[%s278 + $0x78] sm:$0xf]
        %v396 = vld [vmem:[%s278 + $0x7c] sm:$0xf]
        %v397 = vld [vmem:[%s1] sm:$0xf]
        %v398 = vld [vmem:[%s1 + $0x4] sm:$0xf]
        %v399 = vld [vmem:[%s1 + $0x8] sm:$0xf]
        %v400 = vld [vmem:[%s1 + $0xc] sm:$0x3]
        %v401 = vld [vmem:[%s2] sm:$0x1]
        %v403 = vlaneseq
        %v404 = vshrl.u32 %v403, 7
        %v405 = vsub.s32 0, %v404
        %v406 = vrot.slane %v401, %v405
        %v440 = vunpack.c.l.b16 %v365
        %v441 = vunpack.c.l.b16 %v366
        %v442 = vunpack.c.l.b16 %v367
        %v443 = vunpack.c.l.b16 %v368
        %v444 = vunpack.c.l.b16 %v369
        %v445 = vunpack.c.l.b16 %v370
        %v446 = vunpack.c.l.b16 %v371
        %v447 = vunpack.c.l.b16 %v372
        %v448 = vunpack.c.l.b16 %v373
        %v449 = vunpack.c.l.b16 %v374
        %v450 = vunpack.c.l.b16 %v375
        %v451 = vunpack.c.l.b16 %v376
        %v452 = vunpack.c.l.b16 %v377
        %v453 = vunpack.c.l.b16 %v378
        %v454 = vunpack.c.l.b16 %v379
        %v455 = vunpack.c.l.b16 %v380
        %v456 = vunpack.c.l.b16 %v381
        %v457 = vunpack.c.l.b16 %v382
        %v458 = vunpack.c.l.b16 %v383
        %v459 = vunpack.c.l.b16 %v384
        %v460 = vunpack.c.l.b16 %v385
        %v461 = vunpack.c.l.b16 %v386
        %v462 = vunpack.c.l.b16 %v387
        %v463 = vunpack.c.l.b16 %v388
        %v464 = vunpack.c.l.b16 %v389
        %v465 = vunpack.c.l.b16 %v390
        %v466 = vunpack.c.l.b16 %v391
        %v467 = vunpack.c.l.b16 %v392
        %v468 = vunpack.c.l.b16 %v393
        %v469 = vunpack.c.l.b16 %v394
        %v470 = vunpack.c.l.b16 %v395
        %v471 = vunpack.c.l.b16 %v396
        %v472 = vpack.c.b16 %v441, %v440
        %v473 = vpack.c.b16 %v443, %v442
        %v474 = vpack.c.b16 %v445, %v444
        %v475 = vpack.c.b16 %v447, %v446
        %v476 = vpack.c.b16 %v449, %v448
        %v477 = vpack.c.b16 %v451, %v450
        %v478 = vpack.c.b16 %v453, %v452
        %v479 = vpack.c.b16 %v455, %v454
        %v480 = vpack.c.b16 %v457, %v456
        %v481 = vpack.c.b16 %v459, %v458
        %v482 = vpack.c.b16 %v461, %v460
        %v483 = vpack.c.b16 %v463, %v462
        %v484 = vpack.c.b16 %v465, %v464
        %v485 = vpack.c.b16 %v467, %v466
        %v486 = vpack.c.b16 %v469, %v468
        %v487 = vpack.c.b16 %v471, %v470
        %v492 = vunpack.c.l.b16 %v397
        %v493 = vunpack.c.l.b16 %v398
        %v494 = vunpack.c.l.b16 %v399
        %v495 = vunpack.c.l.b16 %v400
        %v496 = vpack.c.b16 %v493, %v492
        %v497 = vpack.c.b16 %v495, %v494
        %vm499 = vcmask 220160
        %v501 = vsel %vm499, %v472, 0
        %v504 = vsel %vm499, %v473, 0
        %v507 = vsel %vm499, %v474, 0
        %v510 = vsel %vm499, %v475, 0
        %v513 = vsel %vm499, %v476, 0
        %v516 = vsel %vm499, %v477, 0
        %v519 = vsel %vm499, %v478, 0
        %v522 = vsel %vm499, %v479, 0
        %v525 = vsel %vm499, %v480, 0
        %v528 = vsel %vm499, %v481, 0
        %v531 = vsel %vm499, %v482, 0
        %v534 = vsel %vm499, %v483, 0
        %v537 = vsel %vm499, %v484, 0
        %v540 = vsel %vm499, %v485, 0
        %v543 = vsel %vm499, %v486, 0
        %v546 = vsel %vm499, %v487, 0
        %vm548 = vcmask 1044480
        %vm549 = vcmask 1045504
        %v550 = vsel %vm548, 4294967295, 65535
        %v551 = vsel %vm549, %v550, 0
        %v553 = vand.u32 %v497, %v551
        %555 = vmatprep.subr.bf16.mxu0 0
        %556 = vmatpush1.bf16.msra.mxu0 0
        %557 = vmatprep.subr.bf16.mxu0 0
        %558 = vmatpush1.bf16.msra.mxu0 0
        %559 = vmatprep.subr.bf16.mxu0 0
        %560 = vmatpush1.bf16.msra.mxu0 0
        %561 = vmatprep.subr.bf16.mxu0 0
        %562 = vmatpush1.bf16.msra.mxu0 0
        %563 = vmatprep.subr.bf16.mxu0 0
        %564 = vmatpush1.bf16.msra.mxu0 0
        %565 = vmatprep.subr.bf16.mxu0 0
        %566 = vmatpush1.bf16.msra.mxu0 0
        %567 = vmatprep.subr.bf16.mxu0 0
        %568 = vmatpush1.bf16.msra.mxu0 %v553
        %569 = vmatprep.subr.bf16.mxu0 0
        %570 = vmatpush1.bf16.msra.mxu0 %v496
        %571 = vmatprep.subr.bf16.mxu0 0
        %572 = vmatpush2.bf16.msra.mxu0 0
        %573 = vmatprep.subr.bf16.mxu0 0
        %574 = vmatpush2.bf16.msra.mxu0 0
        %575 = vmatprep.subr.bf16.mxu0 0
        %576 = vmatpush2.bf16.msra.mxu0 0
        %577 = vmatprep.subr.bf16.mxu0 0
        %578 = vmatpush2.bf16.msra.mxu0 0
        %579 = vmatprep.subr.bf16.mxu0 0
        %580 = vmatpush2.bf16.msra.mxu0 0
        %581 = vmatprep.subr.bf16.mxu0 0
        %582 = vmatpush2.bf16.msra.mxu0 0
        %583 = vmatprep.subr.bf16.mxu0 0
        %584 = vmatpush2.bf16.msra.mxu0 0
        %585 = vmatprep.subr.bf16.mxu0 0
        %586 = vmatpush2.bf16.msra.mxu0 0
        %587 = vmatprep.mubr.bf16.mxu0 0
        %588 = vmatmul.mubr.bf16.gmra.mxu0 %v501
        %v589 = vpop.f32.mrf.mxu0
        %v590 = vadd.f32 %v406, %v589
        %v591 = vpop.f32.mrf.mxu0
        %v592 = vpop.f32.mrf.mxu0
        %v593 = vadd.f32 %v406, %v592
        %v594 = vpop.f32.mrf.mxu0
        %595 = vmatprep.mubr.bf16.mxu0 0
        %596 = vmatmul.mubr.bf16.gmra.mxu0 %v504
        %v597 = vpop.f32.mrf.mxu0
        %v598 = vadd.f32 %v406, %v597
        %v599 = vpop.f32.mrf.mxu0
        %v600 = vpop.f32.mrf.mxu0
        %v601 = vadd.f32 %v406, %v600
        %v602 = vpop.f32.mrf.mxu0
        %603 = vmatprep.mubr.bf16.mxu0 0
        %604 = vmatmul.mubr.bf16.gmra.mxu0 %v507
        %v605 = vpop.f32.mrf.mxu0
        %v606 = vadd.f32 %v406, %v605
        %v607 = vpop.f32.mrf.mxu0
        %v608 = vpop.f32.mrf.mxu0
        %v609 = vadd.f32 %v406, %v608
        %v610 = vpop.f32.mrf.mxu0
        %611 = vmatprep.mubr.bf16.mxu0 0
        %612 = vmatmul.mubr.bf16.gmra.mxu0 %v510
        %v613 = vpop.f32.mrf.mxu0
        %v614 = vadd.f32 %v406, %v613
        %v615 = vpop.f32.mrf.mxu0
        %v616 = vpop.f32.mrf.mxu0
        %v617 = vadd.f32 %v406, %v616
        %v618 = vpop.f32.mrf.mxu0
        %619 = vmatprep.mubr.bf16.mxu0 0
        %620 = vmatmul.mubr.bf16.gmra.mxu0 %v513
        %v621 = vpop.f32.mrf.mxu0
        %v622 = vadd.f32 %v406, %v621
        %v623 = vpop.f32.mrf.mxu0
        %v624 = vpop.f32.mrf.mxu0
        %v625 = vadd.f32 %v406, %v624
        %v626 = vpop.f32.mrf.mxu0
        %627 = vmatprep.mubr.bf16.mxu0 0
        %628 = vmatmul.mubr.bf16.gmra.mxu0 %v516
        %v629 = vpop.f32.mrf.mxu0
        %v630 = vadd.f32 %v406, %v629
        %v631 = vpop.f32.mrf.mxu0
        %v632 = vpop.f32.mrf.mxu0
        %v633 = vadd.f32 %v406, %v632
        %v634 = vpop.f32.mrf.mxu0
        %635 = vmatprep.mubr.bf16.mxu0 0
        %636 = vmatmul.mubr.bf16.gmra.mxu0 %v519
        %v637 = vpop.f32.mrf.mxu0
        %v638 = vadd.f32 %v406, %v637
        %v639 = vpop.f32.mrf.mxu0
        %v640 = vpop.f32.mrf.mxu0
        %v641 = vadd.f32 %v406, %v640
        %v642 = vpop.f32.mrf.mxu0
        %643 = vmatprep.mubr.bf16.mxu0 0
        %644 = vmatmul.mubr.bf16.gmra.mxu0 %v522
        %v645 = vpop.f32.mrf.mxu0
        %v646 = vadd.f32 %v406, %v645
        %v647 = vpop.f32.mrf.mxu0
        %v648 = vpop.f32.mrf.mxu0
        %v649 = vadd.f32 %v406, %v648
        %v650 = vpop.f32.mrf.mxu0
        %651 = vmatprep.mubr.bf16.mxu0 0
        %652 = vmatmul.mubr.bf16.gmra.mxu0 %v525
        %v653 = vpop.f32.mrf.mxu0
        %v654 = vadd.f32 %v406, %v653
        %v655 = vpop.f32.mrf.mxu0
        %v656 = vpop.f32.mrf.mxu0
        %v657 = vadd.f32 %v406, %v656
        %v658 = vpop.f32.mrf.mxu0
        %659 = vmatprep.mubr.bf16.mxu0 0
        %660 = vmatmul.mubr.bf16.gmra.mxu0 %v528
        %v661 = vpop.f32.mrf.mxu0
        %v662 = vadd.f32 %v406, %v661
        %v663 = vpop.f32.mrf.mxu0
        %v664 = vpop.f32.mrf.mxu0
        %v665 = vadd.f32 %v406, %v664
        %v666 = vpop.f32.mrf.mxu0
        %667 = vmatprep.mubr.bf16.mxu0 0
        %668 = vmatmul.mubr.bf16.gmra.mxu0 %v531
        %v669 = vpop.f32.mrf.mxu0
        %v670 = vadd.f32 %v406, %v669
        %v671 = vpop.f32.mrf.mxu0
        %v672 = vpop.f32.mrf.mxu0
        %v673 = vadd.f32 %v406, %v672
        %v674 = vpop.f32.mrf.mxu0
        %675 = vmatprep.mubr.bf16.mxu0 0
        %676 = vmatmul.mubr.bf16.gmra.mxu0 %v534
        %v677 = vpop.f32.mrf.mxu0
        %v678 = vadd.f32 %v406, %v677
        %v679 = vpop.f32.mrf.mxu0
        %v680 = vpop.f32.mrf.mxu0
        %v681 = vadd.f32 %v406, %v680
        %v682 = vpop.f32.mrf.mxu0
        %683 = vmatprep.mubr.bf16.mxu0 0
        %684 = vmatmul.mubr.bf16.gmra.mxu0 %v537
        %v685 = vpop.f32.mrf.mxu0
        %v686 = vadd.f32 %v406, %v685
        %v687 = vpop.f32.mrf.mxu0
        %v688 = vpop.f32.mrf.mxu0
        %v689 = vadd.f32 %v406, %v688
        %v690 = vpop.f32.mrf.mxu0
        %691 = vmatprep.mubr.bf16.mxu0 0
        %692 = vmatmul.mubr.bf16.gmra.mxu0 %v540
        %v693 = vpop.f32.mrf.mxu0
        %v694 = vadd.f32 %v406, %v693
        %v695 = vpop.f32.mrf.mxu0
        %v696 = vpop.f32.mrf.mxu0
        %v697 = vadd.f32 %v406, %v696
        %v698 = vpop.f32.mrf.mxu0
        %699 = vmatprep.mubr.bf16.mxu0 0
        %700 = vmatmul.mubr.bf16.gmra.mxu0 %v543
        %v701 = vpop.f32.mrf.mxu0
        %v702 = vadd.f32 %v406, %v701
        %v703 = vpop.f32.mrf.mxu0
        %v704 = vpop.f32.mrf.mxu0
        %v705 = vadd.f32 %v406, %v704
        %v706 = vpop.f32.mrf.mxu0
        %707 = vmatprep.mubr.bf16.mxu0 0
        %708 = vmatmul.mubr.bf16.gmra.mxu0 %v546
        %v709 = vpop.f32.mrf.mxu0
        %v710 = vadd.f32 %v406, %v709
        %v711 = vpop.f32.mrf.mxu0
        %v712 = vpop.f32.mrf.mxu0
        %v713 = vadd.f32 %v406, %v712
        %v714 = vpop.f32.mrf.mxu0
        %715 = vdwg.mxu0
        %v716 = vmax.f32 %v590, 0.0
        %v717 = vmax.f32 %v593, 0.0
        %v718 = vmax.f32 %v598, 0.0
        %v719 = vmax.f32 %v601, 0.0
        %v720 = vmax.f32 %v606, 0.0
        %v721 = vmax.f32 %v609, 0.0
        %v722 = vmax.f32 %v614, 0.0
        %v723 = vmax.f32 %v617, 0.0
        %v724 = vmax.f32 %v622, 0.0
        %v725 = vmax.f32 %v625, 0.0
        %v726 = vmax.f32 %v630, 0.0
        %v727 = vmax.f32 %v633, 0.0
        %v728 = vmax.f32 %v638, 0.0
        %v729 = vmax.f32 %v641, 0.0
        %v730 = vmax.f32 %v646, 0.0
        %v731 = vmax.f32 %v649, 0.0
        %v732 = vmax.f32 %v654, 0.0
        %v733 = vmax.f32 %v657, 0.0
        %v734 = vmax.f32 %v662, 0.0
        %v735 = vmax.f32 %v665, 0.0
        %v736 = vmax.f32 %v670, 0.0
        %v737 = vmax.f32 %v673, 0.0
        %v738 = vmax.f32 %v678, 0.0
        %v739 = vmax.f32 %v681, 0.0
        %v740 = vmax.f32 %v686, 0.0
        %v741 = vmax.f32 %v689, 0.0
        %v742 = vmax.f32 %v694, 0.0
        %v743 = vmax.f32 %v697, 0.0
        %v744 = vmax.f32 %v702, 0.0
        %v745 = vmax.f32 %v705, 0.0
        %v746 = vmax.f32 %v710, 0.0
        %v747 = vmax.f32 %v713, 0.0
        %748 = vst.msk [vmem:[%s290 + $0x8] sm:$0xff] %vm280, %v716
        %749 = vst.msk [vmem:[%s290 + $0x10] sm:$0xff] %vm280, %v717
        %750 = vst.msk [vmem:[%s290 + $0x28] sm:$0xff] %vm280, %v718
        %751 = vst.msk [vmem:[%s290 + $0x30] sm:$0xff] %vm280, %v719
        %752 = vst.msk [vmem:[%s290 + $0x48] sm:$0xff] %vm280, %v720
        %753 = vst.msk [vmem:[%s290 + $0x50] sm:$0xff] %vm280, %v721
        %754 = vst.msk [vmem:[%s290 + $0x68] sm:$0xff] %vm280, %v722
        %755 = vst.msk [vmem:[%s290 + $0x70] sm:$0xff] %vm280, %v723
        %756 = vst.msk [vmem:[%s290 + $0x88] sm:$0xff] %vm280, %v724
        %757 = vst.msk [vmem:[%s290 + $0x90] sm:$0xff] %vm280, %v725
        %758 = vst.msk [vmem:[%s290 + $0xa8] sm:$0xff] %vm280, %v726
        %759 = vst.msk [vmem:[%s290 + $0xb0] sm:$0xff] %vm280, %v727
        %760 = vst.msk [vmem:[%s290 + $0xc8] sm:$0xff] %vm280, %v728
        %761 = vst.msk [vmem:[%s290 + $0xd0] sm:$0xff] %vm280, %v729
        %762 = vst.msk [vmem:[%s290 + $0xe8] sm:$0xff] %vm280, %v730
        %763 = vst.msk [vmem:[%s290 + $0xf0] sm:$0xff] %vm280, %v731
        %764 = vst.msk [vmem:[%s290 + $0x108] sm:$0xff] %vm280, %v732
        %765 = vst.msk [vmem:[%s290 + $0x110] sm:$0xff] %vm280, %v733
        %766 = vst.msk [vmem:[%s290 + $0x128] sm:$0xff] %vm280, %v734
        %767 = vst.msk [vmem:[%s290 + $0x130] sm:$0xff] %vm280, %v735
        %768 = vst.msk [vmem:[%s290 + $0x148] sm:$0xff] %vm280, %v736
        %769 = vst.msk [vmem:[%s290 + $0x150] sm:$0xff] %vm280, %v737
        %770 = vst.msk [vmem:[%s290 + $0x168] sm:$0xff] %vm280, %v738
        %771 = vst.msk [vmem:[%s290 + $0x170] sm:$0xff] %vm280, %v739
        %772 = vst.msk [vmem:[%s290 + $0x188] sm:$0xff] %vm280, %v740
        %773 = vst.msk [vmem:[%s290 + $0x190] sm:$0xff] %vm280, %v741
        %774 = vst.msk [vmem:[%s290 + $0x1a8] sm:$0xff] %vm280, %v742
        %775 = vst.msk [vmem:[%s290 + $0x1b0] sm:$0xff] %vm280, %v743
        %776 = vst.msk [vmem:[%s290 + $0x1c8] sm:$0xff] %vm280, %v744
        %777 = vst.msk [vmem:[%s290 + $0x1d0] sm:$0xff] %vm280, %v745
        %778 = vst.msk [vmem:[%s290 + $0x1e8] sm:$0xff] %vm280, %v746
        %779 = vst.msk [vmem:[%s290 + $0x1f0] sm:$0xff] %vm280, %v747
        %v780 = vld [vmem:[#allocation2 + $0x7] sm:$0xff]
        %v781 = vld [vmem:[#allocation2 + $0xf] sm:$0xff]
        %v782 = vld [vmem:[#allocation2 + $0x27] sm:$0xff]
        %v783 = vld [vmem:[#allocation2 + $0x2f] sm:$0xff]
        %v784 = vld [vmem:[#allocation2 + $0x47] sm:$0xff]
        %v785 = vld [vmem:[#allocation2 + $0x4f] sm:$0xff]
        %v786 = vld [vmem:[#allocation2 + $0x67] sm:$0xff]
        %v787 = vld [vmem:[#allocation2 + $0x6f] sm:$0xff]
        %v788 = vld [vmem:[#allocation2 + $0x87] sm:$0xff]
        %v789 = vld [vmem:[#allocation2 + $0x8f] sm:$0xff]
        %v790 = vld [vmem:[#allocation2 + $0xa7] sm:$0xff]
        %v791 = vld [vmem:[#allocation2 + $0xaf] sm:$0xff]
        %v792 = vld [vmem:[#allocation2 + $0xc7] sm:$0xff]
        %v793 = vld [vmem:[#allocation2 + $0xcf] sm:$0xff]
        %v794 = vld [vmem:[#allocation2 + $0xe7] sm:$0xff]
        %v795 = vld [vmem:[#allocation2 + $0xef] sm:$0xff]
        %v796 = vld [vmem:[#allocation2 + $0x107] sm:$0xff]
        %v797 = vld [vmem:[#allocation2 + $0x10f] sm:$0xff]
        %v798 = vld [vmem:[#allocation2 + $0x127] sm:$0xff]
        %v799 = vld [vmem:[#allocation2 + $0x12f] sm:$0xff]
        %v800 = vld [vmem:[#allocation2 + $0x147] sm:$0xff]
        %v801 = vld [vmem:[#allocation2 + $0x14f] sm:$0xff]
        %v802 = vld [vmem:[#allocation2 + $0x167] sm:$0xff]
        %v803 = vld [vmem:[#allocation2 + $0x16f] sm:$0xff]
        %v804 = vld [vmem:[#allocation2 + $0x187] sm:$0xff]
        %v805 = vld [vmem:[#allocation2 + $0x18f] sm:$0xff]
        %v806 = vld [vmem:[#allocation2 + $0x1a7] sm:$0xff]
        %v807 = vld [vmem:[#allocation2 + $0x1af] sm:$0xff]
        %v808 = vld [vmem:[#allocation2 + $0x1c7] sm:$0xff]
        %v809 = vld [vmem:[#allocation2 + $0x1cf] sm:$0xff]
        %v810 = vld [vmem:[#allocation2 + $0x1e7] sm:$0xff]
        %v811 = vld [vmem:[#allocation2 + $0x1ef] sm:$0xff]
        %v812 = vpack.c.bf16 %v781, %v780
        %v813 = vpack.c.bf16 %v783, %v782
        %v814 = vpack.c.bf16 %v785, %v784
        %v815 = vpack.c.bf16 %v787, %v786
        %v816 = vpack.c.bf16 %v789, %v788
        %v817 = vpack.c.bf16 %v791, %v790
        %v818 = vpack.c.bf16 %v793, %v792
        %v819 = vpack.c.bf16 %v795, %v794
        %v820 = vpack.c.bf16 %v797, %v796
        %v821 = vpack.c.bf16 %v799, %v798
        %v822 = vpack.c.bf16 %v801, %v800
        %v823 = vpack.c.bf16 %v803, %v802
        %v824 = vpack.c.bf16 %v805, %v804
        %v825 = vpack.c.bf16 %v807, %v806
        %v826 = vpack.c.bf16 %v809, %v808
        %v827 = vpack.c.bf16 %v811, %v810
        %v828 = vld [vmem:[#allocation2 + $0x8] sm:$0xff]
        %v829 = vld [vmem:[#allocation2 + $0x10] sm:$0xff]
        %v830 = vld [vmem:[#allocation2 + $0x28] sm:$0xff]
        %v831 = vld [vmem:[#allocation2 + $0x30] sm:$0xff]
        %v832 = vld [vmem:[#allocation2 + $0x48] sm:$0xff]
        %v833 = vld [vmem:[#allocation2 + $0x50] sm:$0xff]
        %v834 = vld [vmem:[#allocation2 + $0x68] sm:$0xff]
        %v835 = vld [vmem:[#allocation2 + $0x70] sm:$0xff]
        %v836 = vld [vmem:[#allocation2 + $0x88] sm:$0xff]
        %v837 = vld [vmem:[#allocation2 + $0x90] sm:$0xff]
        %v838 = vld [vmem:[#allocation2 + $0xa8] sm:$0xff]
        %v839 = vld [vmem:[#allocation2 + $0xb0] sm:$0xff]
        %v840 = vld [vmem:[#allocation2 + $0xc8] sm:$0xff]
        %v841 = vld [vmem:[#allocation2 + $0xd0] sm:$0xff]
        %v842 = vld [vmem:[#allocation2 + $0xe8] sm:$0xff]
        %v843 = vld [vmem:[#allocation2 + $0xf0] sm:$0xff]
        %v844 = vld [vmem:[#allocation2 + $0x108] sm:$0xff]
        %v845 = vld [vmem:[#allocation2 + $0x110] sm:$0xff]
        %v846 = vld [vmem:[#allocation2 + $0x128] sm:$0xff]
        %v847 = vld [vmem:[#allocation2 + $0x130] sm:$0xff]
        %v848 = vld [vmem:[#allocation2 + $0x148] sm:$0xff]
        %v849 = vld [vmem:[#allocation2 + $0x150] sm:$0xff]
        %v850 = vld [vmem:[#allocation2 + $0x168] sm:$0xff]
        %v851 = vld [vmem:[#allocation2 + $0x170] sm:$0xff]
        %v852 = vld [vmem:[#allocation2 + $0x188] sm:$0xff]
        %v853 = vld [vmem:[#allocation2 + $0x190] sm:$0xff]
        %v854 = vld [vmem:[#allocation2 + $0x1a8] sm:$0xff]
        %v855 = vld [vmem:[#allocation2 + $0x1b0] sm:$0xff]
        %v856 = vld [vmem:[#allocation2 + $0x1c8] sm:$0xff]
        %v857 = vld [vmem:[#allocation2 + $0x1d0] sm:$0xff]
        %v858 = vld [vmem:[#allocation2 + $0x1e8] sm:$0xff]
        %v859 = vld [vmem:[#allocation2 + $0x1f0] sm:$0xff]
        %v860 = vpack.c.bf16 %v829, %v828
        %v861 = vpack.c.bf16 %v831, %v830
        %v862 = vpack.c.bf16 %v833, %v832
        %v863 = vpack.c.bf16 %v835, %v834
        %v864 = vpack.c.bf16 %v837, %v836
        %v865 = vpack.c.bf16 %v839, %v838
        %v866 = vpack.c.bf16 %v841, %v840
        %v867 = vpack.c.bf16 %v843, %v842
        %v868 = vpack.c.bf16 %v845, %v844
        %v869 = vpack.c.bf16 %v847, %v846
        %v870 = vpack.c.bf16 %v849, %v848
        %v871 = vpack.c.bf16 %v851, %v850
        %v872 = vpack.c.bf16 %v853, %v852
        %v873 = vpack.c.bf16 %v855, %v854
        %v874 = vpack.c.bf16 %v857, %v856
        %v875 = vpack.c.bf16 %v859, %v858
        %v876 = vld [vmem:[#allocation2 + $0x9] sm:$0xff]
        %v877 = vld [vmem:[#allocation2 + $0x11] sm:$0xff]
        %v878 = vld [vmem:[#allocation2 + $0x29] sm:$0xff]
        %v879 = vld [vmem:[#allocation2 + $0x31] sm:$0xff]
        %v880 = vld [vmem:[#allocation2 + $0x49] sm:$0xff]
        %v881 = vld [vmem:[#allocation2 + $0x51] sm:$0xff]
        %v882 = vld [vmem:[#allocation2 + $0x69] sm:$0xff]
        %v883 = vld [vmem:[#allocation2 + $0x71] sm:$0xff]
        %v884 = vld [vmem:[#allocation2 + $0x89] sm:$0xff]
        %v885 = vld [vmem:[#allocation2 + $0x91] sm:$0xff]
        %v886 = vld [vmem:[#allocation2 + $0xa9] sm:$0xff]
        %v887 = vld [vmem:[#allocation2 + $0xb1] sm:$0xff]
        %v888 = vld [vmem:[#allocation2 + $0xc9] sm:$0xff]
        %v889 = vld [vmem:[#allocation2 + $0xd1] sm:$0xff]
        %v890 = vld [vmem:[#allocation2 + $0xe9] sm:$0xff]
        %v891 = vld [vmem:[#allocation2 + $0xf1] sm:$0xff]
        %v892 = vld [vmem:[#allocation2 + $0x109] sm:$0xff]
        %v893 = vld [vmem:[#allocation2 + $0x111] sm:$0xff]
        %v894 = vld [vmem:[#allocation2 + $0x129] sm:$0xff]
        %v895 = vld [vmem:[#allocation2 + $0x131] sm:$0xff]
        %v896 = vld [vmem:[#allocation2 + $0x149] sm:$0xff]
        %v897 = vld [vmem:[#allocation2 + $0x151] sm:$0xff]
        %v898 = vld [vmem:[#allocation2 + $0x169] sm:$0xff]
        %v899 = vld [vmem:[#allocation2 + $0x171] sm:$0xff]
        %v900 = vld [vmem:[#allocation2 + $0x189] sm:$0xff]
        %v901 = vld [vmem:[#allocation2 + $0x191] sm:$0xff]
        %v902 = vld [vmem:[#allocation2 + $0x1a9] sm:$0xff]
        %v903 = vld [vmem:[#allocation2 + $0x1b1] sm:$0xff]
        %v904 = vld [vmem:[#allocation2 + $0x1c9] sm:$0xff]
        %v905 = vld [vmem:[#allocation2 + $0x1d1] sm:$0xff]
        %v906 = vld [vmem:[#allocation2 + $0x1e9] sm:$0xff]
        %v907 = vld [vmem:[#allocation2 + $0x1f1] sm:$0xff]
        %v908 = vpack.c.bf16 %v877, %v876
        %v909 = vpack.c.bf16 %v879, %v878
        %v910 = vpack.c.bf16 %v881, %v880
        %v911 = vpack.c.bf16 %v883, %v882
        %v912 = vpack.c.bf16 %v885, %v884
        %v913 = vpack.c.bf16 %v887, %v886
        %v914 = vpack.c.bf16 %v889, %v888
        %v915 = vpack.c.bf16 %v891, %v890
        %v916 = vpack.c.bf16 %v893, %v892
        %v917 = vpack.c.bf16 %v895, %v894
        %v918 = vpack.c.bf16 %v897, %v896
        %v919 = vpack.c.bf16 %v899, %v898
        %v920 = vpack.c.bf16 %v901, %v900
        %v921 = vpack.c.bf16 %v903, %v902
        %v922 = vpack.c.bf16 %v905, %v904
        %v923 = vpack.c.bf16 %v907, %v906
        %940 = vrot.lane.b32.xlu0 %v860, 64
        %v941 = vpop.permute.xlu0 %940
        %942 = vrot.lane.b32.xlu0 %v861, 64
        %v943 = vpop.permute.xlu0 %942
        %944 = vrot.lane.b32.xlu0 %v862, 64
        %v945 = vpop.permute.xlu0 %944
        %946 = vrot.lane.b32.xlu0 %v863, 64
        %v947 = vpop.permute.xlu0 %946
        %948 = vrot.lane.b32.xlu0 %v864, 64
        %v949 = vpop.permute.xlu0 %948
        %950 = vrot.lane.b32.xlu0 %v865, 64
        %v951 = vpop.permute.xlu0 %950
        %952 = vrot.lane.b32.xlu0 %v866, 64
        %v953 = vpop.permute.xlu0 %952
        %954 = vrot.lane.b32.xlu0 %v867, 64
        %v955 = vpop.permute.xlu0 %954
        %956 = vrot.lane.b32.xlu0 %v868, 64
        %v957 = vpop.permute.xlu0 %956
        %958 = vrot.lane.b32.xlu0 %v869, 64
        %v959 = vpop.permute.xlu0 %958
        %960 = vrot.lane.b32.xlu0 %v870, 64
        %v961 = vpop.permute.xlu0 %960
        %962 = vrot.lane.b32.xlu0 %v871, 64
        %v963 = vpop.permute.xlu0 %962
        %964 = vrot.lane.b32.xlu0 %v872, 64
        %v965 = vpop.permute.xlu0 %964
        %966 = vrot.lane.b32.xlu0 %v873, 64
        %v967 = vpop.permute.xlu0 %966
        %968 = vrot.lane.b32.xlu0 %v874, 64
        %v969 = vpop.permute.xlu0 %968
        %970 = vrot.lane.b32.xlu0 %v875, 64
        %v971 = vpop.permute.xlu0 %970
        %v974 = vsel %vm280, %v812, %v941
        %v978 = vsel %vm280, %v813, %v943
        %v982 = vsel %vm280, %v814, %v945
        %v986 = vsel %vm280, %v815, %v947
        %v990 = vsel %vm280, %v816, %v949
        %v994 = vsel %vm280, %v817, %v951
        %v998 = vsel %vm280, %v818, %v953
        %v1002 = vsel %vm280, %v819, %v955
        %v1006 = vsel %vm280, %v820, %v957
        %v1010 = vsel %vm280, %v821, %v959
        %v1014 = vsel %vm280, %v822, %v961
        %v1018 = vsel %vm280, %v823, %v963
        %v1022 = vsel %vm280, %v824, %v965
        %v1026 = vsel %vm280, %v825, %v967
        %v1030 = vsel %vm280, %v826, %v969
        %v1034 = vsel %vm280, %v827, %v971
        %v1038 = vsel %vm280, %v908, 0
        %v1041 = vsel %vm280, %v909, 0
        %v1044 = vsel %vm280, %v910, 0
        %v1047 = vsel %vm280, %v911, 0
        %v1050 = vsel %vm280, %v912, 0
        %v1053 = vsel %vm280, %v913, 0
        %v1056 = vsel %vm280, %v914, 0
        %v1059 = vsel %vm280, %v915, 0
        %v1062 = vsel %vm280, %v916, 0
        %v1065 = vsel %vm280, %v917, 0
        %v1068 = vsel %vm280, %v918, 0
        %v1071 = vsel %vm280, %v919, 0
        %v1074 = vsel %vm280, %v920, 0
        %v1077 = vsel %vm280, %v921, 0
        %v1080 = vsel %vm280, %v922, 0
        %v1083 = vsel %vm280, %v923, 0
        %v1085 = vld [vmem:[%s3] sm:$0xf]
        %v1086 = vld [vmem:[%s3 + $0x4] sm:$0xf]
        %v1087 = vld [vmem:[%s3 + $0x8] sm:$0xf]
        %v1088 = vld [vmem:[%s3 + $0xc] sm:$0xf]
        %v1089 = vld [vmem:[%s3 + $0x10] sm:$0xf]
        %v1090 = vld [vmem:[%s3 + $0x14] sm:$0xf]
        %v1091 = vld [vmem:[%s3 + $0x18] sm:$0xf]
        %v1092 = vld [vmem:[%s3 + $0x1c] sm:$0xf]
        %v1093 = vld [vmem:[%s3 + $0x20] sm:$0xf]
        %v1094 = vld [vmem:[%s3 + $0x24] sm:$0xf]
        %v1095 = vld [vmem:[%s3 + $0x28] sm:$0xf]
        %v1096 = vld [vmem:[%s3 + $0x2c] sm:$0xf]
        %v1097 = vld [vmem:[%s3 + $0x30] sm:$0xf]
        %v1098 = vld [vmem:[%s3 + $0x34] sm:$0xf]
        %v1099 = vld [vmem:[%s3 + $0x38] sm:$0xf]
        %v1100 = vld [vmem:[%s3 + $0x3c] sm:$0xf]
        %v1101 = vld [vmem:[%s3 + $0x40] sm:$0xf]
        %v1102 = vld [vmem:[%s3 + $0x44] sm:$0xf]
        %v1103 = vld [vmem:[%s3 + $0x48] sm:$0xf]
        %v1104 = vld [vmem:[%s3 + $0x4c] sm:$0xf]
        %v1105 = vld [vmem:[%s3 + $0x50] sm:$0xf]
        %v1106 = vld [vmem:[%s3 + $0x54] sm:$0xf]
        %v1107 = vld [vmem:[%s3 + $0x58] sm:$0xf]
        %v1108 = vld [vmem:[%s3 + $0x5c] sm:$0xf]
        %v1109 = vld [vmem:[%s3 + $0x60] sm:$0xf]
        %v1110 = vld [vmem:[%s3 + $0x64] sm:$0xf]
        %v1111 = vld [vmem:[%s3 + $0x68] sm:$0xf]
        %v1112 = vld [vmem:[%s3 + $0x6c] sm:$0xf]
        %v1113 = vld [vmem:[%s3 + $0x70] sm:$0xf]
        %v1114 = vld [vmem:[%s3 + $0x74] sm:$0xf]
        %v1115 = vld [vmem:[%s3 + $0x78] sm:$0xf]
        %v1116 = vld [vmem:[%s3 + $0x7c] sm:$0xf]
        %v1117 = vld [vmem:[%s290 + $0x7] sm:$0xff]
        %v1118 = vld [vmem:[%s290 + $0xf] sm:$0xff]
        %v1119 = vld [vmem:[%s290 + $0x27] sm:$0xff]
        %v1120 = vld [vmem:[%s290 + $0x2f] sm:$0xff]
        %v1121 = vld [vmem:[%s290 + $0x47] sm:$0xff]
        %v1122 = vld [vmem:[%s290 + $0x4f] sm:$0xff]
        %v1123 = vld [vmem:[%s290 + $0x67] sm:$0xff]
        %v1124 = vld [vmem:[%s290 + $0x6f] sm:$0xff]
        %v1125 = vld [vmem:[%s290 + $0x87] sm:$0xff]
        %v1126 = vld [vmem:[%s290 + $0x8f] sm:$0xff]
        %v1127 = vld [vmem:[%s290 + $0xa7] sm:$0xff]
        %v1128 = vld [vmem:[%s290 + $0xaf] sm:$0xff]
        %v1129 = vld [vmem:[%s290 + $0xc7] sm:$0xff]
        %v1130 = vld [vmem:[%s290 + $0xcf] sm:$0xff]
        %v1131 = vld [vmem:[%s290 + $0xe7] sm:$0xff]
        %v1132 = vld [vmem:[%s290 + $0xef] sm:$0xff]
        %v1133 = vld [vmem:[%s290 + $0x107] sm:$0xff]
        %v1134 = vld [vmem:[%s290 + $0x10f] sm:$0xff]
        %v1135 = vld [vmem:[%s290 + $0x127] sm:$0xff]
        %v1136 = vld [vmem:[%s290 + $0x12f] sm:$0xff]
        %v1137 = vld [vmem:[%s290 + $0x147] sm:$0xff]
        %v1138 = vld [vmem:[%s290 + $0x14f] sm:$0xff]
        %v1139 = vld [vmem:[%s290 + $0x167] sm:$0xff]
        %v1140 = vld [vmem:[%s290 + $0x16f] sm:$0xff]
        %v1141 = vld [vmem:[%s290 + $0x187] sm:$0xff]
        %v1142 = vld [vmem:[%s290 + $0x18f] sm:$0xff]
        %v1143 = vld [vmem:[%s290 + $0x1a7] sm:$0xff]
        %v1144 = vld [vmem:[%s290 + $0x1af] sm:$0xff]
        %v1145 = vld [vmem:[%s290 + $0x1c7] sm:$0xff]
        %v1146 = vld [vmem:[%s290 + $0x1cf] sm:$0xff]
        %v1147 = vld [vmem:[%s290 + $0x1e7] sm:$0xff]
        %v1148 = vld [vmem:[%s290 + $0x1ef] sm:$0xff]
        %v1149 = vpack.c.bf16 %v1118, %v1117
        %v1150 = vpack.c.bf16 %v1120, %v1119
        %v1151 = vpack.c.bf16 %v1122, %v1121
        %v1152 = vpack.c.bf16 %v1124, %v1123
        %v1153 = vpack.c.bf16 %v1126, %v1125
        %v1154 = vpack.c.bf16 %v1128, %v1127
        %v1155 = vpack.c.bf16 %v1130, %v1129
        %v1156 = vpack.c.bf16 %v1132, %v1131
        %v1157 = vpack.c.bf16 %v1134, %v1133
        %v1158 = vpack.c.bf16 %v1136, %v1135
        %v1159 = vpack.c.bf16 %v1138, %v1137
        %v1160 = vpack.c.bf16 %v1140, %v1139
        %v1161 = vpack.c.bf16 %v1142, %v1141
        %v1162 = vpack.c.bf16 %v1144, %v1143
        %v1163 = vpack.c.bf16 %v1146, %v1145
        %v1164 = vpack.c.bf16 %v1148, %v1147
        %v1165 = vld [vmem:[%s290 + $0x8] sm:$0xff]
        %v1166 = vld [vmem:[%s290 + $0x10] sm:$0xff]
        %v1167 = vld [vmem:[%s290 + $0x28] sm:$0xff]
        %v1168 = vld [vmem:[%s290 + $0x30] sm:$0xff]
        %v1169 = vld [vmem:[%s290 + $0x48] sm:$0xff]
        %v1170 = vld [vmem:[%s290 + $0x50] sm:$0xff]
        %v1171 = vld [vmem:[%s290 + $0x68] sm:$0xff]
        %v1172 = vld [vmem:[%s290 + $0x70] sm:$0xff]
        %v1173 = vld [vmem:[%s290 + $0x88] sm:$0xff]
        %v1174 = vld [vmem:[%s290 + $0x90] sm:$0xff]
        %v1175 = vld [vmem:[%s290 + $0xa8] sm:$0xff]
        %v1176 = vld [vmem:[%s290 + $0xb0] sm:$0xff]
        %v1177 = vld [vmem:[%s290 + $0xc8] sm:$0xff]
        %v1178 = vld [vmem:[%s290 + $0xd0] sm:$0xff]
        %v1179 = vld [vmem:[%s290 + $0xe8] sm:$0xff]
        %v1180 = vld [vmem:[%s290 + $0xf0] sm:$0xff]
        %v1181 = vld [vmem:[%s290 + $0x108] sm:$0xff]
        %v1182 = vld [vmem:[%s290 + $0x110] sm:$0xff]
        %v1183 = vld [vmem:[%s290 + $0x128] sm:$0xff]
        %v1184 = vld [vmem:[%s290 + $0x130] sm:$0xff]
        %v1185 = vld [vmem:[%s290 + $0x148] sm:$0xff]
        %v1186 = vld [vmem:[%s290 + $0x150] sm:$0xff]
        %v1187 = vld [vmem:[%s290 + $0x168] sm:$0xff]
        %v1188 = vld [vmem:[%s290 + $0x170] sm:$0xff]
        %v1189 = vld [vmem:[%s290 + $0x188] sm:$0xff]
        %v1190 = vld [vmem:[%s290 + $0x190] sm:$0xff]
        %v1191 = vld [vmem:[%s290 + $0x1a8] sm:$0xff]
        %v1192 = vld [vmem:[%s290 + $0x1b0] sm:$0xff]
        %v1193 = vld [vmem:[%s290 + $0x1c8] sm:$0xff]
        %v1194 = vld [vmem:[%s290 + $0x1d0] sm:$0xff]
        %v1195 = vld [vmem:[%s290 + $0x1e8] sm:$0xff]
        %v1196 = vld [vmem:[%s290 + $0x1f0] sm:$0xff]
        %v1197 = vpack.c.bf16 %v1166, %v1165
        %v1198 = vpack.c.bf16 %v1168, %v1167
        %v1199 = vpack.c.bf16 %v1170, %v1169
        %v1200 = vpack.c.bf16 %v1172, %v1171
        %v1201 = vpack.c.bf16 %v1174, %v1173
        %v1202 = vpack.c.bf16 %v1176, %v1175
        %v1203 = vpack.c.bf16 %v1178, %v1177
        %v1204 = vpack.c.bf16 %v1180, %v1179
        %v1205 = vpack.c.bf16 %v1182, %v1181
        %v1206 = vpack.c.bf16 %v1184, %v1183
        %v1207 = vpack.c.bf16 %v1186, %v1185
        %v1208 = vpack.c.bf16 %v1188, %v1187
        %v1209 = vpack.c.bf16 %v1190, %v1189
        %v1210 = vpack.c.bf16 %v1192, %v1191
        %v1211 = vpack.c.bf16 %v1194, %v1193
        %v1212 = vpack.c.bf16 %v1196, %v1195
        %v1213 = vld [vmem:[%s290 + $0x9] sm:$0xff]
        %v1214 = vld [vmem:[%s290 + $0x11] sm:$0xff]
        %v1215 = vld [vmem:[%s290 + $0x29] sm:$0xff]
        %v1216 = vld [vmem:[%s290 + $0x31] sm:$0xff]
        %v1217 = vld [vmem:[%s290 + $0x49] sm:$0xff]
        %v1218 = vld [vmem:[%s290 + $0x51] sm:$0xff]
        %v1219 = vld [vmem:[%s290 + $0x69] sm:$0xff]
        %v1220 = vld [vmem:[%s290 + $0x71] sm:$0xff]
        %v1221 = vld [vmem:[%s290 + $0x89] sm:$0xff]
        %v1222 = vld [vmem:[%s290 + $0x91] sm:$0xff]
        %v1223 = vld [vmem:[%s290 + $0xa9] sm:$0xff]
        %v1224 = vld [vmem:[%s290 + $0xb1] sm:$0xff]
        %v1225 = vld [vmem:[%s290 + $0xc9] sm:$0xff]
        %v1226 = vld [vmem:[%s290 + $0xd1] sm:$0xff]
        %v1227 = vld [vmem:[%s290 + $0xe9] sm:$0xff]
        %v1228 = vld [vmem:[%s290 + $0xf1] sm:$0xff]
        %v1229 = vld [vmem:[%s290 + $0x109] sm:$0xff]
        %v1230 = vld [vmem:[%s290 + $0x111] sm:$0xff]
        %v1231 = vld [vmem:[%s290 + $0x129] sm:$0xff]
        %v1232 = vld [vmem:[%s290 + $0x131] sm:$0xff]
        %v1233 = vld [vmem:[%s290 + $0x149] sm:$0xff]
        %v1234 = vld [vmem:[%s290 + $0x151] sm:$0xff]
        %v1235 = vld [vmem:[%s290 + $0x169] sm:$0xff]
        %v1236 = vld [vmem:[%s290 + $0x171] sm:$0xff]
        %v1237 = vld [vmem:[%s290 + $0x189] sm:$0xff]
        %v1238 = vld [vmem:[%s290 + $0x191] sm:$0xff]
        %v1239 = vld [vmem:[%s290 + $0x1a9] sm:$0xff]
        %v1240 = vld [vmem:[%s290 + $0x1b1] sm:$0xff]
        %v1241 = vld [vmem:[%s290 + $0x1c9] sm:$0xff]
        %v1242 = vld [vmem:[%s290 + $0x1d1] sm:$0xff]
        %v1243 = vld [vmem:[%s290 + $0x1e9] sm:$0xff]
        %v1244 = vld [vmem:[%s290 + $0x1f1] sm:$0xff]
        %v1245 = vpack.c.bf16 %v1214, %v1213
        %v1246 = vpack.c.bf16 %v1216, %v1215
        %v1247 = vpack.c.bf16 %v1218, %v1217
        %v1248 = vpack.c.bf16 %v1220, %v1219
        %v1249 = vpack.c.bf16 %v1222, %v1221
        %v1250 = vpack.c.bf16 %v1224, %v1223
        %v1251 = vpack.c.bf16 %v1226, %v1225
        %v1252 = vpack.c.bf16 %v1228, %v1227
        %v1253 = vpack.c.bf16 %v1230, %v1229
        %v1254 = vpack.c.bf16 %v1232, %v1231
        %v1255 = vpack.c.bf16 %v1234, %v1233
        %v1256 = vpack.c.bf16 %v1236, %v1235
        %v1257 = vpack.c.bf16 %v1238, %v1237
        %v1258 = vpack.c.bf16 %v1240, %v1239
        %v1259 = vpack.c.bf16 %v1242, %v1241
        %v1260 = vpack.c.bf16 %v1244, %v1243
        %1277 = vrot.lane.b32.xlu0 %v1197, 64
        %v1278 = vpop.permute.xlu0 %1277
        %1279 = vrot.lane.b32.xlu0 %v1198, 64
        %v1280 = vpop.permute.xlu0 %1279
        %1281 = vrot.lane.b32.xlu0 %v1199, 64
        %v1282 = vpop.permute.xlu0 %1281
        %1283 = vrot.lane.b32.xlu0 %v1200, 64
        %v1284 = vpop.permute.xlu0 %1283
        %1285 = vrot.lane.b32.xlu0 %v1201, 64
        %v1286 = vpop.permute.xlu0 %1285
        %1287 = vrot.lane.b32.xlu0 %v1202, 64
        %v1288 = vpop.permute.xlu0 %1287
        %1289 = vrot.lane.b32.xlu0 %v1203, 64
        %v1290 = vpop.permute.xlu0 %1289
        %1291 = vrot.lane.b32.xlu0 %v1204, 64
        %v1292 = vpop.permute.xlu0 %1291
        %1293 = vrot.lane.b32.xlu0 %v1205, 64
        %v1294 = vpop.permute.xlu0 %1293
        %1295 = vrot.lane.b32.xlu0 %v1206, 64
        %v1296 = vpop.permute.xlu0 %1295
        %1297 = vrot.lane.b32.xlu0 %v1207, 64
        %v1298 = vpop.permute.xlu0 %1297
        %1299 = vrot.lane.b32.xlu0 %v1208, 64
        %v1300 = vpop.permute.xlu0 %1299
        %1301 = vrot.lane.b32.xlu0 %v1209, 64
        %v1302 = vpop.permute.xlu0 %1301
        %1303 = vrot.lane.b32.xlu0 %v1210, 64
        %v1304 = vpop.permute.xlu0 %1303
        %1305 = vrot.lane.b32.xlu0 %v1211, 64
        %v1306 = vpop.permute.xlu0 %1305
        %1307 = vrot.lane.b32.xlu0 %v1212, 64
        %v1308 = vpop.permute.xlu0 %1307
        %v1311 = vsel %vm280, %v1149, %v1278
        %v1315 = vsel %vm280, %v1150, %v1280
        %v1319 = vsel %vm280, %v1151, %v1282
        %v1323 = vsel %vm280, %v1152, %v1284
        %v1327 = vsel %vm280, %v1153, %v1286
        %v1331 = vsel %vm280, %v1154, %v1288
        %v1335 = vsel %vm280, %v1155, %v1290
        %v1339 = vsel %vm280, %v1156, %v1292
        %v1343 = vsel %vm280, %v1157, %v1294
        %v1347 = vsel %vm280, %v1158, %v1296
        %v1351 = vsel %vm280, %v1159, %v1298
        %v1355 = vsel %vm280, %v1160, %v1300
        %v1359 = vsel %vm280, %v1161, %v1302
        %v1363 = vsel %vm280, %v1162, %v1304
        %v1367 = vsel %vm280, %v1163, %v1306
        %v1371 = vsel %vm280, %v1164, %v1308
        %v1374 = vsel %vm280, %v1245, 0
        %v1377 = vsel %vm280, %v1246, 0
        %v1380 = vsel %vm280, %v1247, 0
        %v1383 = vsel %vm280, %v1248, 0
        %v1386 = vsel %vm280, %v1249, 0
        %v1389 = vsel %vm280, %v1250, 0
        %v1392 = vsel %vm280, %v1251, 0
        %v1395 = vsel %vm280, %v1252, 0
        %v1398 = vsel %vm280, %v1253, 0
        %v1401 = vsel %vm280, %v1254, 0
        %v1404 = vsel %vm280, %v1255, 0
        %v1407 = vsel %vm280, %v1256, 0
        %v1410 = vsel %vm280, %v1257, 0
        %v1413 = vsel %vm280, %v1258, 0
        %v1416 = vsel %vm280, %v1259, 0
        %v1419 = vsel %vm280, %v1260, 0
        %s1421 = scalar_lea.vmem %s3, 128
        %v1422 = vld [vmem:[%s1421] sm:$0xf]
        %v1423 = vld [vmem:[%s1421 + $0x4] sm:$0xf]
        %v1424 = vld [vmem:[%s1421 + $0x8] sm:$0xf]
        %v1425 = vld [vmem:[%s1421 + $0xc] sm:$0xf]
        %v1426 = vld [vmem:[%s1421 + $0x10] sm:$0xf]
        %v1427 = vld [vmem:[%s1421 + $0x14] sm:$0xf]
        %v1428 = vld [vmem:[%s1421 + $0x18] sm:$0xf]
        %v1429 = vld [vmem:[%s1421 + $0x1c] sm:$0xf]
        %v1430 = vld [vmem:[%s1421 + $0x20] sm:$0xf]
        %v1431 = vld [vmem:[%s1421 + $0x24] sm:$0xf]
        %v1432 = vld [vmem:[%s1421 + $0x28] sm:$0xf]
        %v1433 = vld [vmem:[%s1421 + $0x2c] sm:$0xf]
        %v1434 = vld [vmem:[%s1421 + $0x30] sm:$0xf]
        %v1435 = vld [vmem:[%s1421 + $0x34] sm:$0xf]
        %v1436 = vld [vmem:[%s1421 + $0x38] sm:$0xf]
        %v1437 = vld [vmem:[%s1421 + $0x3c] sm:$0xf]
        %v1438 = vld [vmem:[%s1421 + $0x40] sm:$0xf]
        %v1439 = vld [vmem:[%s1421 + $0x44] sm:$0xf]
        %v1440 = vld [vmem:[%s1421 + $0x48] sm:$0xf]
        %v1441 = vld [vmem:[%s1421 + $0x4c] sm:$0xf]
        %v1442 = vld [vmem:[%s1421 + $0x50] sm:$0xf]
        %v1443 = vld [vmem:[%s1421 + $0x54] sm:$0xf]
        %v1444 = vld [vmem:[%s1421 + $0x58] sm:$0xf]
        %v1445 = vld [vmem:[%s1421 + $0x5c] sm:$0xf]
        %v1446 = vld [vmem:[%s1421 + $0x60] sm:$0xf]
        %v1447 = vld [vmem:[%s1421 + $0x64] sm:$0xf]
        %v1448 = vld [vmem:[%s1421 + $0x68] sm:$0xf]
        %v1449 = vld [vmem:[%s1421 + $0x6c] sm:$0xf]
        %v1450 = vld [vmem:[%s1421 + $0x70] sm:$0xf]
        %v1451 = vld [vmem:[%s1421 + $0x74] sm:$0xf]
        %v1452 = vld [vmem:[%s1421 + $0x78] sm:$0xf]
        %v1453 = vld [vmem:[%s1421 + $0x7c] sm:$0xf]
        %v1486 = vunpack.c.l.b16 %v1422
        %v1487 = vunpack.c.l.b16 %v1423
        %v1488 = vunpack.c.l.b16 %v1424
        %v1489 = vunpack.c.l.b16 %v1425
        %v1490 = vunpack.c.l.b16 %v1426
        %v1491 = vunpack.c.l.b16 %v1427
        %v1492 = vunpack.c.l.b16 %v1428
        %v1493 = vunpack.c.l.b16 %v1429
        %v1494 = vunpack.c.l.b16 %v1430
        %v1495 = vunpack.c.l.b16 %v1431
        %v1496 = vunpack.c.l.b16 %v1432
        %v1497 = vunpack.c.l.b16 %v1433
        %v1498 = vunpack.c.l.b16 %v1434
        %v1499 = vunpack.c.l.b16 %v1435
        %v1500 = vunpack.c.l.b16 %v1436
        %v1501 = vunpack.c.l.b16 %v1437
        %v1502 = vunpack.c.l.b16 %v1438
        %v1503 = vunpack.c.l.b16 %v1439
        %v1504 = vunpack.c.l.b16 %v1440
        %v1505 = vunpack.c.l.b16 %v1441
        %v1506 = vunpack.c.l.b16 %v1442
        %v1507 = vunpack.c.l.b16 %v1443
        %v1508 = vunpack.c.l.b16 %v1444
        %v1509 = vunpack.c.l.b16 %v1445
        %v1510 = vunpack.c.l.b16 %v1446
        %v1511 = vunpack.c.l.b16 %v1447
        %v1512 = vunpack.c.l.b16 %v1448
        %v1513 = vunpack.c.l.b16 %v1449
        %v1514 = vunpack.c.l.b16 %v1450
        %v1515 = vunpack.c.l.b16 %v1451
        %v1516 = vunpack.c.l.b16 %v1452
        %v1517 = vunpack.c.l.b16 %v1453
        %v1518 = vpack.c.b16 %v1487, %v1486
        %v1519 = vpack.c.b16 %v1489, %v1488
        %v1520 = vpack.c.b16 %v1491, %v1490
        %v1521 = vpack.c.b16 %v1493, %v1492
        %v1522 = vpack.c.b16 %v1495, %v1494
        %v1523 = vpack.c.b16 %v1497, %v1496
        %v1524 = vpack.c.b16 %v1499, %v1498
        %v1525 = vpack.c.b16 %v1501, %v1500
        %v1526 = vpack.c.b16 %v1503, %v1502
        %v1527 = vpack.c.b16 %v1505, %v1504
        %v1528 = vpack.c.b16 %v1507, %v1506
        %v1529 = vpack.c.b16 %v1509, %v1508
        %v1530 = vpack.c.b16 %v1511, %v1510
        %v1531 = vpack.c.b16 %v1513, %v1512
        %v1532 = vpack.c.b16 %v1515, %v1514
        %v1533 = vpack.c.b16 %v1517, %v1516
        %1550 = vmatprep.subr.bf16.mxu0 0
        %1551 = vmatpush1.bf16.msra.mxu0 %v1525
        %1552 = vmatprep.subr.bf16.mxu0 0
        %1553 = vmatpush1.bf16.msra.mxu0 %v1524
        %1554 = vmatprep.subr.bf16.mxu0 0
        %1555 = vmatpush1.bf16.msra.mxu0 %v1523
        %1556 = vmatprep.subr.bf16.mxu0 0
        %1557 = vmatpush1.bf16.msra.mxu0 %v1522
        %1558 = vmatprep.subr.bf16.mxu0 0
        %1559 = vmatpush1.bf16.msra.mxu0 %v1521
        %1560 = vmatprep.subr.bf16.mxu0 0
        %1561 = vmatpush1.bf16.msra.mxu0 %v1520
        %1562 = vmatprep.subr.bf16.mxu0 0
        %1563 = vmatpush1.bf16.msra.mxu0 %v1519
        %1564 = vmatprep.subr.bf16.mxu0 0
        %1565 = vmatpush1.bf16.msra.mxu0 %v1518
        %1566 = vmatprep.subr.bf16.mxu0 0
        %1567 = vmatpush2.bf16.msra.mxu0 %v1533
        %1568 = vmatprep.subr.bf16.mxu0 0
        %1569 = vmatpush2.bf16.msra.mxu0 %v1532
        %1570 = vmatprep.subr.bf16.mxu0 0
        %1571 = vmatpush2.bf16.msra.mxu0 %v1531
        %1572 = vmatprep.subr.bf16.mxu0 0
        %1573 = vmatpush2.bf16.msra.mxu0 %v1530
        %1574 = vmatprep.subr.bf16.mxu0 0
        %1575 = vmatpush2.bf16.msra.mxu0 %v1529
        %1576 = vmatprep.subr.bf16.mxu0 0
        %1577 = vmatpush2.bf16.msra.mxu0 %v1528
        %1578 = vmatprep.subr.bf16.mxu0 0
        %1579 = vmatpush2.bf16.msra.mxu0 %v1527
        %1580 = vmatprep.subr.bf16.mxu0 0
        %1581 = vmatpush2.bf16.msra.mxu0 %v1526
        %1582 = vmatprep.mubr.bf16.mxu0 %v1374
        %1583 = vmatmul.mubr.bf16.gmra.mxu0 %v1311
        %v1584 = vpop.f32.mrf.mxu0
        %v1585 = vadd.f32 0.0, %v1584
        %v1586 = vpop.f32.mrf.mxu0
        %v1587 = vpop.f32.mrf.mxu0
        %v1588 = vadd.f32 0.0, %v1587
        %v1589 = vpop.f32.mrf.mxu0
        %1590 = vmatprep.mubr.bf16.mxu0 %v1377
        %1591 = vmatmul.mubr.bf16.gmra.mxu0 %v1315
        %v1592 = vpop.f32.mrf.mxu0
        %v1593 = vadd.f32 0.0, %v1592
        %v1594 = vpop.f32.mrf.mxu0
        %v1595 = vpop.f32.mrf.mxu0
        %v1596 = vadd.f32 0.0, %v1595
        %v1597 = vpop.f32.mrf.mxu0
        %1598 = vmatprep.mubr.bf16.mxu0 %v1380
        %1599 = vmatmul.mubr.bf16.gmra.mxu0 %v1319
        %v1600 = vpop.f32.mrf.mxu0
        %v1601 = vadd.f32 0.0, %v1600
        %v1602 = vpop.f32.mrf.mxu0
        %v1603 = vpop.f32.mrf.mxu0
        %v1604 = vadd.f32 0.0, %v1603
        %v1605 = vpop.f32.mrf.mxu0
        %1606 = vmatprep.mubr.bf16.mxu0 %v1383
        %1607 = vmatmul.mubr.bf16.gmra.mxu0 %v1323
        %v1608 = vpop.f32.mrf.mxu0
        %v1609 = vadd.f32 0.0, %v1608
        %v1610 = vpop.f32.mrf.mxu0
        %v1611 = vpop.f32.mrf.mxu0
        %v1612 = vadd.f32 0.0, %v1611
        %v1613 = vpop.f32.mrf.mxu0
        %1614 = vmatprep.mubr.bf16.mxu0 %v1386
        %1615 = vmatmul.mubr.bf16.gmra.mxu0 %v1327
        %v1616 = vpop.f32.mrf.mxu0
        %v1617 = vadd.f32 0.0, %v1616
        %v1618 = vpop.f32.mrf.mxu0
        %v1619 = vpop.f32.mrf.mxu0
        %v1620 = vadd.f32 0.0, %v1619
        %v1621 = vpop.f32.mrf.mxu0
        %1622 = vmatprep.mubr.bf16.mxu0 %v1389
        %1623 = vmatmul.mubr.bf16.gmra.mxu0 %v1331
        %v1624 = vpop.f32.mrf.mxu0
        %v1625 = vadd.f32 0.0, %v1624
        %v1626 = vpop.f32.mrf.mxu0
        %v1627 = vpop.f32.mrf.mxu0
        %v1628 = vadd.f32 0.0, %v1627
        %v1629 = vpop.f32.mrf.mxu0
        %1630 = vmatprep.mubr.bf16.mxu0 %v1392
        %1631 = vmatmul.mubr.bf16.gmra.mxu0 %v1335
        %v1632 = vpop.f32.mrf.mxu0
        %v1633 = vadd.f32 0.0, %v1632
        %v1634 = vpop.f32.mrf.mxu0
        %v1635 = vpop.f32.mrf.mxu0
        %v1636 = vadd.f32 0.0, %v1635
        %v1637 = vpop.f32.mrf.mxu0
        %1638 = vmatprep.mubr.bf16.mxu0 %v1395
        %1639 = vmatmul.mubr.bf16.gmra.mxu0 %v1339
        %v1640 = vpop.f32.mrf.mxu0
        %v1641 = vadd.f32 0.0, %v1640
        %v1642 = vpop.f32.mrf.mxu0
        %v1643 = vpop.f32.mrf.mxu0
        %v1644 = vadd.f32 0.0, %v1643
        %v1645 = vpop.f32.mrf.mxu0
        %1646 = vmatprep.mubr.bf16.mxu0 %v1398
        %1647 = vmatmul.mubr.bf16.gmra.mxu0 %v1343
        %v1648 = vpop.f32.mrf.mxu0
        %v1649 = vadd.f32 0.0, %v1648
        %v1650 = vpop.f32.mrf.mxu0
        %v1651 = vpop.f32.mrf.mxu0
        %v1652 = vadd.f32 0.0, %v1651
        %v1653 = vpop.f32.mrf.mxu0
        %1654 = vmatprep.mubr.bf16.mxu0 %v1401
        %1655 = vmatmul.mubr.bf16.gmra.mxu0 %v1347
        %v1656 = vpop.f32.mrf.mxu0
        %v1657 = vadd.f32 0.0, %v1656
        %v1658 = vpop.f32.mrf.mxu0
        %v1659 = vpop.f32.mrf.mxu0
        %v1660 = vadd.f32 0.0, %v1659
        %v1661 = vpop.f32.mrf.mxu0
        %1662 = vmatprep.mubr.bf16.mxu0 %v1404
        %1663 = vmatmul.mubr.bf16.gmra.mxu0 %v1351
        %v1664 = vpop.f32.mrf.mxu0
        %v1665 = vadd.f32 0.0, %v1664
        %v1666 = vpop.f32.mrf.mxu0
        %v1667 = vpop.f32.mrf.mxu0
        %v1668 = vadd.f32 0.0, %v1667
        %v1669 = vpop.f32.mrf.mxu0
        %1670 = vmatprep.mubr.bf16.mxu0 %v1407
        %1671 = vmatmul.mubr.bf16.gmra.mxu0 %v1355
        %v1672 = vpop.f32.mrf.mxu0
        %v1673 = vadd.f32 0.0, %v1672
        %v1674 = vpop.f32.mrf.mxu0
        %v1675 = vpop.f32.mrf.mxu0
        %v1676 = vadd.f32 0.0, %v1675
        %v1677 = vpop.f32.mrf.mxu0
        %1678 = vmatprep.mubr.bf16.mxu0 %v1410
        %1679 = vmatmul.mubr.bf16.gmra.mxu0 %v1359
        %v1680 = vpop.f32.mrf.mxu0
        %v1681 = vadd.f32 0.0, %v1680
        %v1682 = vpop.f32.mrf.mxu0
        %v1683 = vpop.f32.mrf.mxu0
        %v1684 = vadd.f32 0.0, %v1683
        %v1685 = vpop.f32.mrf.mxu0
        %1686 = vmatprep.mubr.bf16.mxu0 %v1413
        %1687 = vmatmul.mubr.bf16.gmra.mxu0 %v1363
        %v1688 = vpop.f32.mrf.mxu0
        %v1689 = vadd.f32 0.0, %v1688
        %v1690 = vpop.f32.mrf.mxu0
        %v1691 = vpop.f32.mrf.mxu0
        %v1692 = vadd.f32 0.0, %v1691
        %v1693 = vpop.f32.mrf.mxu0
        %1694 = vmatprep.mubr.bf16.mxu0 %v1416
        %1695 = vmatmul.mubr.bf16.gmra.mxu0 %v1367
        %v1696 = vpop.f32.mrf.mxu0
        %v1697 = vadd.f32 0.0, %v1696
        %v1698 = vpop.f32.mrf.mxu0
        %v1699 = vpop.f32.mrf.mxu0
        %v1700 = vadd.f32 0.0, %v1699
        %v1701 = vpop.f32.mrf.mxu0
        %1702 = vmatprep.mubr.bf16.mxu0 %v1419
        %1703 = vmatmul.mubr.bf16.gmra.mxu0 %v1371
        %v1704 = vpop.f32.mrf.mxu0
        %v1705 = vadd.f32 0.0, %v1704
        %v1706 = vpop.f32.mrf.mxu0
        %v1707 = vpop.f32.mrf.mxu0
        %v1708 = vadd.f32 0.0, %v1707
        %v1709 = vpop.f32.mrf.mxu0
        %1710 = vdwg.mxu0
        %v1743 = vunpack.c.l.b16 %v1085
        %v1744 = vunpack.c.l.b16 %v1086
        %v1745 = vunpack.c.l.b16 %v1087
        %v1746 = vunpack.c.l.b16 %v1088
        %v1747 = vunpack.c.l.b16 %v1089
        %v1748 = vunpack.c.l.b16 %v1090
        %v1749 = vunpack.c.l.b16 %v1091
        %v1750 = vunpack.c.l.b16 %v1092
        %v1751 = vunpack.c.l.b16 %v1093
        %v1752 = vunpack.c.l.b16 %v1094
        %v1753 = vunpack.c.l.b16 %v1095
        %v1754 = vunpack.c.l.b16 %v1096
        %v1755 = vunpack.c.l.b16 %v1097
        %v1756 = vunpack.c.l.b16 %v1098
        %v1757 = vunpack.c.l.b16 %v1099
        %v1758 = vunpack.c.l.b16 %v1100
        %v1759 = vunpack.c.l.b16 %v1101
        %v1760 = vunpack.c.l.b16 %v1102
        %v1761 = vunpack.c.l.b16 %v1103
        %v1762 = vunpack.c.l.b16 %v1104
        %v1763 = vunpack.c.l.b16 %v1105
        %v1764 = vunpack.c.l.b16 %v1106
        %v1765 = vunpack.c.l.b16 %v1107
        %v1766 = vunpack.c.l.b16 %v1108
        %v1767 = vunpack.c.l.b16 %v1109
        %v1768 = vunpack.c.l.b16 %v1110
        %v1769 = vunpack.c.l.b16 %v1111
        %v1770 = vunpack.c.l.b16 %v1112
        %v1771 = vunpack.c.l.b16 %v1113
        %v1772 = vunpack.c.l.b16 %v1114
        %v1773 = vunpack.c.l.b16 %v1115
        %v1774 = vunpack.c.l.b16 %v1116
        %v1775 = vpack.c.b16 %v1744, %v1743
        %v1776 = vpack.c.b16 %v1746, %v1745
        %v1777 = vpack.c.b16 %v1748, %v1747
        %v1778 = vpack.c.b16 %v1750, %v1749
        %v1779 = vpack.c.b16 %v1752, %v1751
        %v1780 = vpack.c.b16 %v1754, %v1753
        %v1781 = vpack.c.b16 %v1756, %v1755
        %v1782 = vpack.c.b16 %v1758, %v1757
        %v1783 = vpack.c.b16 %v1760, %v1759
        %v1784 = vpack.c.b16 %v1762, %v1761
        %v1785 = vpack.c.b16 %v1764, %v1763
        %v1786 = vpack.c.b16 %v1766, %v1765
        %v1787 = vpack.c.b16 %v1768, %v1767
        %v1788 = vpack.c.b16 %v1770, %v1769
        %v1789 = vpack.c.b16 %v1772, %v1771
        %v1790 = vpack.c.b16 %v1774, %v1773
        %1807 = vmatprep.subr.bf16.mxu0 0
        %1808 = vmatpush1.bf16.msra.mxu0 %v1782
        %1809 = vmatprep.subr.bf16.mxu0 0
        %1810 = vmatpush1.bf16.msra.mxu0 %v1781
        %1811 = vmatprep.subr.bf16.mxu0 0
        %1812 = vmatpush1.bf16.msra.mxu0 %v1780
        %1813 = vmatprep.subr.bf16.mxu0 0
        %1814 = vmatpush1.bf16.msra.mxu0 %v1779
        %1815 = vmatprep.subr.bf16.mxu0 0
        %1816 = vmatpush1.bf16.msra.mxu0 %v1778
        %1817 = vmatprep.subr.bf16.mxu0 0
        %1818 = vmatpush1.bf16.msra.mxu0 %v1777
        %1819 = vmatprep.subr.bf16.mxu0 0
        %1820 = vmatpush1.bf16.msra.mxu0 %v1776
        %1821 = vmatprep.subr.bf16.mxu0 0
        %1822 = vmatpush1.bf16.msra.mxu0 %v1775
        %1823 = vmatprep.subr.bf16.mxu0 0
        %1824 = vmatpush2.bf16.msra.mxu0 %v1790
        %1825 = vmatprep.subr.bf16.mxu0 0
        %1826 = vmatpush2.bf16.msra.mxu0 %v1789
        %1827 = vmatprep.subr.bf16.mxu0 0
        %1828 = vmatpush2.bf16.msra.mxu0 %v1788
        %1829 = vmatprep.subr.bf16.mxu0 0
        %1830 = vmatpush2.bf16.msra.mxu0 %v1787
        %1831 = vmatprep.subr.bf16.mxu0 0
        %1832 = vmatpush2.bf16.msra.mxu0 %v1786
        %1833 = vmatprep.subr.bf16.mxu0 0
        %1834 = vmatpush2.bf16.msra.mxu0 %v1785
        %1835 = vmatprep.subr.bf16.mxu0 0
        %1836 = vmatpush2.bf16.msra.mxu0 %v1784
        %1837 = vmatprep.subr.bf16.mxu0 0
        %1838 = vmatpush2.bf16.msra.mxu0 %v1783
        %1839 = vmatprep.mubr.bf16.mxu0 %v1038
        %1840 = vmatmul.mubr.bf16.gmra.mxu0 %v974
        %v1841 = vpop.f32.mrf.mxu0
        %v1842 = vadd.f32 %v1585, %v1841
        %v1843 = vpop.f32.mrf.mxu0
        %v1844 = vpop.f32.mrf.mxu0
        %v1845 = vadd.f32 %v1588, %v1844
        %v1846 = vpop.f32.mrf.mxu0
        %1847 = vmatprep.mubr.bf16.mxu0 %v1041
        %1848 = vmatmul.mubr.bf16.gmra.mxu0 %v978
        %v1849 = vpop.f32.mrf.mxu0
        %v1850 = vadd.f32 %v1593, %v1849
        %v1851 = vpop.f32.mrf.mxu0
        %v1852 = vpop.f32.mrf.mxu0
        %v1853 = vadd.f32 %v1596, %v1852
        %v1854 = vpop.f32.mrf.mxu0
        %1855 = vmatprep.mubr.bf16.mxu0 %v1044
        %1856 = vmatmul.mubr.bf16.gmra.mxu0 %v982
        %v1857 = vpop.f32.mrf.mxu0
        %v1858 = vadd.f32 %v1601, %v1857
        %v1859 = vpop.f32.mrf.mxu0
        %v1860 = vpop.f32.mrf.mxu0
        %v1861 = vadd.f32 %v1604, %v1860
        %v1862 = vpop.f32.mrf.mxu0
        %1863 = vmatprep.mubr.bf16.mxu0 %v1047
        %1864 = vmatmul.mubr.bf16.gmra.mxu0 %v986
        %v1865 = vpop.f32.mrf.mxu0
        %v1866 = vadd.f32 %v1609, %v1865
        %v1867 = vpop.f32.mrf.mxu0
        %v1868 = vpop.f32.mrf.mxu0
        %v1869 = vadd.f32 %v1612, %v1868
        %v1870 = vpop.f32.mrf.mxu0
        %1871 = vmatprep.mubr.bf16.mxu0 %v1050
        %1872 = vmatmul.mubr.bf16.gmra.mxu0 %v990
        %v1873 = vpop.f32.mrf.mxu0
        %v1874 = vadd.f32 %v1617, %v1873
        %v1875 = vpop.f32.mrf.mxu0
        %v1876 = vpop.f32.mrf.mxu0
        %v1877 = vadd.f32 %v1620, %v1876
        %v1878 = vpop.f32.mrf.mxu0
        %1879 = vmatprep.mubr.bf16.mxu0 %v1053
        %1880 = vmatmul.mubr.bf16.gmra.mxu0 %v994
        %v1881 = vpop.f32.mrf.mxu0
        %v1882 = vadd.f32 %v1625, %v1881
        %v1883 = vpop.f32.mrf.mxu0
        %v1884 = vpop.f32.mrf.mxu0
        %v1885 = vadd.f32 %v1628, %v1884
        %v1886 = vpop.f32.mrf.mxu0
        %1887 = vmatprep.mubr.bf16.mxu0 %v1056
        %1888 = vmatmul.mubr.bf16.gmra.mxu0 %v998
        %v1889 = vpop.f32.mrf.mxu0
        %v1890 = vadd.f32 %v1633, %v1889
        %v1891 = vpop.f32.mrf.mxu0
        %v1892 = vpop.f32.mrf.mxu0
        %v1893 = vadd.f32 %v1636, %v1892
        %v1894 = vpop.f32.mrf.mxu0
        %1895 = vmatprep.mubr.bf16.mxu0 %v1059
        %1896 = vmatmul.mubr.bf16.gmra.mxu0 %v1002
        %v1897 = vpop.f32.mrf.mxu0
        %v1898 = vadd.f32 %v1641, %v1897
        %v1899 = vpop.f32.mrf.mxu0
        %v1900 = vpop.f32.mrf.mxu0
        %v1901 = vadd.f32 %v1644, %v1900
        %v1902 = vpop.f32.mrf.mxu0
        %1903 = vmatprep.mubr.bf16.mxu0 %v1062
        %1904 = vmatmul.mubr.bf16.gmra.mxu0 %v1006
        %v1905 = vpop.f32.mrf.mxu0
        %v1906 = vadd.f32 %v1649, %v1905
        %v1907 = vpop.f32.mrf.mxu0
        %v1908 = vpop.f32.mrf.mxu0
        %v1909 = vadd.f32 %v1652, %v1908
        %v1910 = vpop.f32.mrf.mxu0
        %1911 = vmatprep.mubr.bf16.mxu0 %v1065
        %1912 = vmatmul.mubr.bf16.gmra.mxu0 %v1010
        %v1913 = vpop.f32.mrf.mxu0
        %v1914 = vadd.f32 %v1657, %v1913
        %v1915 = vpop.f32.mrf.mxu0
        %v1916 = vpop.f32.mrf.mxu0
        %v1917 = vadd.f32 %v1660, %v1916
        %v1918 = vpop.f32.mrf.mxu0
        %1919 = vmatprep.mubr.bf16.mxu0 %v1068
        %1920 = vmatmul.mubr.bf16.gmra.mxu0 %v1014
        %v1921 = vpop.f32.mrf.mxu0
        %v1922 = vadd.f32 %v1665, %v1921
        %v1923 = vpop.f32.mrf.mxu0
        %v1924 = vpop.f32.mrf.mxu0
        %v1925 = vadd.f32 %v1668, %v1924
        %v1926 = vpop.f32.mrf.mxu0
        %1927 = vmatprep.mubr.bf16.mxu0 %v1071
        %1928 = vmatmul.mubr.bf16.gmra.mxu0 %v1018
        %v1929 = vpop.f32.mrf.mxu0
        %v1930 = vadd.f32 %v1673, %v1929
        %v1931 = vpop.f32.mrf.mxu0
        %v1932 = vpop.f32.mrf.mxu0
        %v1933 = vadd.f32 %v1676, %v1932
        %v1934 = vpop.f32.mrf.mxu0
        %1935 = vmatprep.mubr.bf16.mxu0 %v1074
        %1936 = vmatmul.mubr.bf16.gmra.mxu0 %v1022
        %v1937 = vpop.f32.mrf.mxu0
        %v1938 = vadd.f32 %v1681, %v1937
        %v1939 = vpop.f32.mrf.mxu0
        %v1940 = vpop.f32.mrf.mxu0
        %v1941 = vadd.f32 %v1684, %v1940
        %v1942 = vpop.f32.mrf.mxu0
        %1943 = vmatprep.mubr.bf16.mxu0 %v1077
        %1944 = vmatmul.mubr.bf16.gmra.mxu0 %v1026
        %v1945 = vpop.f32.mrf.mxu0
        %v1946 = vadd.f32 %v1689, %v1945
        %v1947 = vpop.f32.mrf.mxu0
        %v1948 = vpop.f32.mrf.mxu0
        %v1949 = vadd.f32 %v1692, %v1948
        %v1950 = vpop.f32.mrf.mxu0
        %1951 = vmatprep.mubr.bf16.mxu0 %v1080
        %1952 = vmatmul.mubr.bf16.gmra.mxu0 %v1030
        %v1953 = vpop.f32.mrf.mxu0
        %v1954 = vadd.f32 %v1697, %v1953
        %v1955 = vpop.f32.mrf.mxu0
        %v1956 = vpop.f32.mrf.mxu0
        %v1957 = vadd.f32 %v1700, %v1956
        %v1958 = vpop.f32.mrf.mxu0
        %1959 = vmatprep.mubr.bf16.mxu0 %v1083
        %1960 = vmatmul.mubr.bf16.gmra.mxu0 %v1034
        %v1961 = vpop.f32.mrf.mxu0
        %v1962 = vadd.f32 %v1705, %v1961
        %v1963 = vpop.f32.mrf.mxu0
        %v1964 = vpop.f32.mrf.mxu0
        %v1965 = vadd.f32 %v1708, %v1964
        %v1966 = vpop.f32.mrf.mxu0
        %1967 = vdwg.mxu0
        %s1968 = scalar_lea.vmem [#allocation2], 64
        %v1969 = vld [vmem:[%s1968 + $0x7] sm:$0xff]
        %v1970 = vld [vmem:[%s1968 + $0xf] sm:$0xff]
        %v1971 = vld [vmem:[%s1968 + $0x27] sm:$0xff]
        %v1972 = vld [vmem:[%s1968 + $0x2f] sm:$0xff]
        %v1973 = vld [vmem:[%s1968 + $0x47] sm:$0xff]
        %v1974 = vld [vmem:[%s1968 + $0x4f] sm:$0xff]
        %v1975 = vld [vmem:[%s1968 + $0x67] sm:$0xff]
        %v1976 = vld [vmem:[%s1968 + $0x6f] sm:$0xff]
        %v1977 = vld [vmem:[%s1968 + $0x87] sm:$0xff]
        %v1978 = vld [vmem:[%s1968 + $0x8f] sm:$0xff]
        %v1979 = vld [vmem:[%s1968 + $0xa7] sm:$0xff]
        %v1980 = vld [vmem:[%s1968 + $0xaf] sm:$0xff]
        %v1981 = vld [vmem:[%s1968 + $0xc7] sm:$0xff]
        %v1982 = vld [vmem:[%s1968 + $0xcf] sm:$0xff]
        %v1983 = vld [vmem:[%s1968 + $0xe7] sm:$0xff]
        %v1984 = vld [vmem:[%s1968 + $0xef] sm:$0xff]
        %v1985 = vld [vmem:[%s1968 + $0x107] sm:$0xff]
        %v1986 = vld [vmem:[%s1968 + $0x10f] sm:$0xff]
        %v1987 = vld [vmem:[%s1968 + $0x127] sm:$0xff]
        %v1988 = vld [vmem:[%s1968 + $0x12f] sm:$0xff]
        %v1989 = vld [vmem:[%s1968 + $0x147] sm:$0xff]
        %v1990 = vld [vmem:[%s1968 + $0x14f] sm:$0xff]
        %v1991 = vld [vmem:[%s1968 + $0x167] sm:$0xff]
        %v1992 = vld [vmem:[%s1968 + $0x16f] sm:$0xff]
        %v1993 = vld [vmem:[%s1968 + $0x187] sm:$0xff]
        %v1994 = vld [vmem:[%s1968 + $0x18f] sm:$0xff]
        %v1995 = vld [vmem:[%s1968 + $0x1a7] sm:$0xff]
        %v1996 = vld [vmem:[%s1968 + $0x1af] sm:$0xff]
        %v1997 = vld [vmem:[%s1968 + $0x1c7] sm:$0xff]
        %v1998 = vld [vmem:[%s1968 + $0x1cf] sm:$0xff]
        %v1999 = vld [vmem:[%s1968 + $0x1e7] sm:$0xff]
        %v2000 = vld [vmem:[%s1968 + $0x1ef] sm:$0xff]
        %v2001 = vpack.c.bf16 %v1970, %v1969
        %v2002 = vpack.c.bf16 %v1972, %v1971
        %v2003 = vpack.c.bf16 %v1974, %v1973
        %v2004 = vpack.c.bf16 %v1976, %v1975
        %v2005 = vpack.c.bf16 %v1978, %v1977
        %v2006 = vpack.c.bf16 %v1980, %v1979
        %v2007 = vpack.c.bf16 %v1982, %v1981
        %v2008 = vpack.c.bf16 %v1984, %v1983
        %v2009 = vpack.c.bf16 %v1986, %v1985
        %v2010 = vpack.c.bf16 %v1988, %v1987
        %v2011 = vpack.c.bf16 %v1990, %v1989
        %v2012 = vpack.c.bf16 %v1992, %v1991
        %v2013 = vpack.c.bf16 %v1994, %v1993
        %v2014 = vpack.c.bf16 %v1996, %v1995
        %v2015 = vpack.c.bf16 %v1998, %v1997
        %v2016 = vpack.c.bf16 %v2000, %v1999
        %v2017 = vld [vmem:[%s1968 + $0x8] sm:$0xff]
        %v2018 = vld [vmem:[%s1968 + $0x10] sm:$0xff]
        %v2019 = vld [vmem:[%s1968 + $0x28] sm:$0xff]
        %v2020 = vld [vmem:[%s1968 + $0x30] sm:$0xff]
        %v2021 = vld [vmem:[%s1968 + $0x48] sm:$0xff]
        %v2022 = vld [vmem:[%s1968 + $0x50] sm:$0xff]
        %v2023 = vld [vmem:[%s1968 + $0x68] sm:$0xff]
        %v2024 = vld [vmem:[%s1968 + $0x70] sm:$0xff]
        %v2025 = vld [vmem:[%s1968 + $0x88] sm:$0xff]
        %v2026 = vld [vmem:[%s1968 + $0x90] sm:$0xff]
        %v2027 = vld [vmem:[%s1968 + $0xa8] sm:$0xff]
        %v2028 = vld [vmem:[%s1968 + $0xb0] sm:$0xff]
        %v2029 = vld [vmem:[%s1968 + $0xc8] sm:$0xff]
        %v2030 = vld [vmem:[%s1968 + $0xd0] sm:$0xff]
        %v2031 = vld [vmem:[%s1968 + $0xe8] sm:$0xff]
        %v2032 = vld [vmem:[%s1968 + $0xf0] sm:$0xff]
        %v2033 = vld [vmem:[%s1968 + $0x108] sm:$0xff]
        %v2034 = vld [vmem:[%s1968 + $0x110] sm:$0xff]
        %v2035 = vld [vmem:[%s1968 + $0x128] sm:$0xff]
        %v2036 = vld [vmem:[%s1968 + $0x130] sm:$0xff]
        %v2037 = vld [vmem:[%s1968 + $0x148] sm:$0xff]
        %v2038 = vld [vmem:[%s1968 + $0x150] sm:$0xff]
        %v2039 = vld [vmem:[%s1968 + $0x168] sm:$0xff]
        %v2040 = vld [vmem:[%s1968 + $0x170] sm:$0xff]
        %v2041 = vld [vmem:[%s1968 + $0x188] sm:$0xff]
        %v2042 = vld [vmem:[%s1968 + $0x190] sm:$0xff]
        %v2043 = vld [vmem:[%s1968 + $0x1a8] sm:$0xff]
        %v2044 = vld [vmem:[%s1968 + $0x1b0] sm:$0xff]
        %v2045 = vld [vmem:[%s1968 + $0x1c8] sm:$0xff]
        %v2046 = vld [vmem:[%s1968 + $0x1d0] sm:$0xff]
        %v2047 = vld [vmem:[%s1968 + $0x1e8] sm:$0xff]
        %v2048 = vld [vmem:[%s1968 + $0x1f0] sm:$0xff]
        %v2049 = vpack.c.bf16 %v2018, %v2017
        %v2050 = vpack.c.bf16 %v2020, %v2019
        %v2051 = vpack.c.bf16 %v2022, %v2021
        %v2052 = vpack.c.bf16 %v2024, %v2023
        %v2053 = vpack.c.bf16 %v2026, %v2025
        %v2054 = vpack.c.bf16 %v2028, %v2027
        %v2055 = vpack.c.bf16 %v2030, %v2029
        %v2056 = vpack.c.bf16 %v2032, %v2031
        %v2057 = vpack.c.bf16 %v2034, %v2033
        %v2058 = vpack.c.bf16 %v2036, %v2035
        %v2059 = vpack.c.bf16 %v2038, %v2037
        %v2060 = vpack.c.bf16 %v2040, %v2039
        %v2061 = vpack.c.bf16 %v2042, %v2041
        %v2062 = vpack.c.bf16 %v2044, %v2043
        %v2063 = vpack.c.bf16 %v2046, %v2045
        %v2064 = vpack.c.bf16 %v2048, %v2047
        %v2065 = vld [vmem:[%s1968 + $0x9] sm:$0xff]
        %v2066 = vld [vmem:[%s1968 + $0x11] sm:$0xff]
        %v2067 = vld [vmem:[%s1968 + $0x29] sm:$0xff]
        %v2068 = vld [vmem:[%s1968 + $0x31] sm:$0xff]
        %v2069 = vld [vmem:[%s1968 + $0x49] sm:$0xff]
        %v2070 = vld [vmem:[%s1968 + $0x51] sm:$0xff]
        %v2071 = vld [vmem:[%s1968 + $0x69] sm:$0xff]
        %v2072 = vld [vmem:[%s1968 + $0x71] sm:$0xff]
        %v2073 = vld [vmem:[%s1968 + $0x89] sm:$0xff]
        %v2074 = vld [vmem:[%s1968 + $0x91] sm:$0xff]
        %v2075 = vld [vmem:[%s1968 + $0xa9] sm:$0xff]
        %v2076 = vld [vmem:[%s1968 + $0xb1] sm:$0xff]
        %v2077 = vld [vmem:[%s1968 + $0xc9] sm:$0xff]
        %v2078 = vld [vmem:[%s1968 + $0xd1] sm:$0xff]
        %v2079 = vld [vmem:[%s1968 + $0xe9] sm:$0xff]
        %v2080 = vld [vmem:[%s1968 + $0xf1] sm:$0xff]
        %v2081 = vld [vmem:[%s1968 + $0x109] sm:$0xff]
        %v2082 = vld [vmem:[%s1968 + $0x111] sm:$0xff]
        %v2083 = vld [vmem:[%s1968 + $0x129] sm:$0xff]
        %v2084 = vld [vmem:[%s1968 + $0x131] sm:$0xff]
        %v2085 = vld [vmem:[%s1968 + $0x149] sm:$0xff]
        %v2086 = vld [vmem:[%s1968 + $0x151] sm:$0xff]
        %v2087 = vld [vmem:[%s1968 + $0x169] sm:$0xff]
        %v2088 = vld [vmem:[%s1968 + $0x171] sm:$0xff]
        %v2089 = vld [vmem:[%s1968 + $0x189] sm:$0xff]
        %v2090 = vld [vmem:[%s1968 + $0x191] sm:$0xff]
        %v2091 = vld [vmem:[%s1968 + $0x1a9] sm:$0xff]
        %v2092 = vld [vmem:[%s1968 + $0x1b1] sm:$0xff]
        %v2093 = vld [vmem:[%s1968 + $0x1c9] sm:$0xff]
        %v2094 = vld [vmem:[%s1968 + $0x1d1] sm:$0xff]
        %v2095 = vld [vmem:[%s1968 + $0x1e9] sm:$0xff]
        %v2096 = vld [vmem:[%s1968 + $0x1f1] sm:$0xff]
        %v2097 = vpack.c.bf16 %v2066, %v2065
        %v2098 = vpack.c.bf16 %v2068, %v2067
        %v2099 = vpack.c.bf16 %v2070, %v2069
        %v2100 = vpack.c.bf16 %v2072, %v2071
        %v2101 = vpack.c.bf16 %v2074, %v2073
        %v2102 = vpack.c.bf16 %v2076, %v2075
        %v2103 = vpack.c.bf16 %v2078, %v2077
        %v2104 = vpack.c.bf16 %v2080, %v2079
        %v2105 = vpack.c.bf16 %v2082, %v2081
        %v2106 = vpack.c.bf16 %v2084, %v2083
        %v2107 = vpack.c.bf16 %v2086, %v2085
        %v2108 = vpack.c.bf16 %v2088, %v2087
        %v2109 = vpack.c.bf16 %v2090, %v2089
        %v2110 = vpack.c.bf16 %v2092, %v2091
        %v2111 = vpack.c.bf16 %v2094, %v2093
        %v2112 = vpack.c.bf16 %v2096, %v2095
        %2129 = vrot.lane.b32.xlu0 %v2049, 64
        %v2130 = vpop.permute.xlu0 %2129
        %2131 = vrot.lane.b32.xlu0 %v2050, 64
        %v2132 = vpop.permute.xlu0 %2131
        %2133 = vrot.lane.b32.xlu0 %v2051, 64
        %v2134 = vpop.permute.xlu0 %2133
        %2135 = vrot.lane.b32.xlu0 %v2052, 64
        %v2136 = vpop.permute.xlu0 %2135
        %2137 = vrot.lane.b32.xlu0 %v2053, 64
        %v2138 = vpop.permute.xlu0 %2137
        %2139 = vrot.lane.b32.xlu0 %v2054, 64
        %v2140 = vpop.permute.xlu0 %2139
        %2141 = vrot.lane.b32.xlu0 %v2055, 64
        %v2142 = vpop.permute.xlu0 %2141
        %2143 = vrot.lane.b32.xlu0 %v2056, 64
        %v2144 = vpop.permute.xlu0 %2143
        %2145 = vrot.lane.b32.xlu0 %v2057, 64
        %v2146 = vpop.permute.xlu0 %2145
        %2147 = vrot.lane.b32.xlu0 %v2058, 64
        %v2148 = vpop.permute.xlu0 %2147
        %2149 = vrot.lane.b32.xlu0 %v2059, 64
        %v2150 = vpop.permute.xlu0 %2149
        %2151 = vrot.lane.b32.xlu0 %v2060, 64
        %v2152 = vpop.permute.xlu0 %2151
        %2153 = vrot.lane.b32.xlu0 %v2061, 64
        %v2154 = vpop.permute.xlu0 %2153
        %2155 = vrot.lane.b32.xlu0 %v2062, 64
        %v2156 = vpop.permute.xlu0 %2155
        %2157 = vrot.lane.b32.xlu0 %v2063, 64
        %v2158 = vpop.permute.xlu0 %2157
        %2159 = vrot.lane.b32.xlu0 %v2064, 64
        %v2160 = vpop.permute.xlu0 %2159
        %v2163 = vsel %vm280, %v2001, %v2130
        %v2167 = vsel %vm280, %v2002, %v2132
        %v2171 = vsel %vm280, %v2003, %v2134
        %v2175 = vsel %vm280, %v2004, %v2136
        %v2179 = vsel %vm280, %v2005, %v2138
        %v2183 = vsel %vm280, %v2006, %v2140
        %v2187 = vsel %vm280, %v2007, %v2142
        %v2191 = vsel %vm280, %v2008, %v2144
        %v2195 = vsel %vm280, %v2009, %v2146
        %v2199 = vsel %vm280, %v2010, %v2148
        %v2203 = vsel %vm280, %v2011, %v2150
        %v2207 = vsel %vm280, %v2012, %v2152
        %v2211 = vsel %vm280, %v2013, %v2154
        %v2215 = vsel %vm280, %v2014, %v2156
        %v2219 = vsel %vm280, %v2015, %v2158
        %v2223 = vsel %vm280, %v2016, %v2160
        %v2226 = vsel %vm280, %v2097, 0
        %v2229 = vsel %vm280, %v2098, 0
        %v2232 = vsel %vm280, %v2099, 0
        %v2235 = vsel %vm280, %v2100, 0
        %v2238 = vsel %vm280, %v2101, 0
        %v2241 = vsel %vm280, %v2102, 0
        %v2244 = vsel %vm280, %v2103, 0
        %v2247 = vsel %vm280, %v2104, 0
        %v2250 = vsel %vm280, %v2105, 0
        %v2253 = vsel %vm280, %v2106, 0
        %v2256 = vsel %vm280, %v2107, 0
        %v2259 = vsel %vm280, %v2108, 0
        %v2262 = vsel %vm280, %v2109, 0
        %v2265 = vsel %vm280, %v2110, 0
        %v2268 = vsel %vm280, %v2111, 0
        %v2271 = vsel %vm280, %v2112, 0
        %s2273 = scalar_lea.vmem %s3, 256
        %v2274 = vld [vmem:[%s2273] sm:$0xf]
        %v2275 = vld [vmem:[%s2273 + $0x4] sm:$0xf]
        %v2276 = vld [vmem:[%s2273 + $0x8] sm:$0xf]
        %v2277 = vld [vmem:[%s2273 + $0xc] sm:$0xf]
        %v2278 = vld [vmem:[%s2273 + $0x10] sm:$0xf]
        %v2279 = vld [vmem:[%s2273 + $0x14] sm:$0xf]
        %v2280 = vld [vmem:[%s2273 + $0x18] sm:$0xf]
        %v2281 = vld [vmem:[%s2273 + $0x1c] sm:$0xf]
        %v2282 = vld [vmem:[%s2273 + $0x20] sm:$0xf]
        %v2283 = vld [vmem:[%s2273 + $0x24] sm:$0xf]
        %v2284 = vld [vmem:[%s2273 + $0x28] sm:$0xf]
        %v2285 = vld [vmem:[%s2273 + $0x2c] sm:$0xf]
        %v2286 = vld [vmem:[%s2273 + $0x30] sm:$0xf]
        %v2287 = vld [vmem:[%s2273 + $0x34] sm:$0xf]
        %v2288 = vld [vmem:[%s2273 + $0x38] sm:$0xf]
        %v2289 = vld [vmem:[%s2273 + $0x3c] sm:$0xf]
        %v2290 = vld [vmem:[%s2273 + $0x40] sm:$0xf]
        %v2291 = vld [vmem:[%s2273 + $0x44] sm:$0xf]
        %v2292 = vld [vmem:[%s2273 + $0x48] sm:$0xf]
        %v2293 = vld [vmem:[%s2273 + $0x4c] sm:$0xf]
        %v2294 = vld [vmem:[%s2273 + $0x50] sm:$0xf]
        %v2295 = vld [vmem:[%s2273 + $0x54] sm:$0xf]
        %v2296 = vld [vmem:[%s2273 + $0x58] sm:$0xf]
        %v2297 = vld [vmem:[%s2273 + $0x5c] sm:$0xf]
        %v2298 = vld [vmem:[%s2273 + $0x60] sm:$0xf]
        %v2299 = vld [vmem:[%s2273 + $0x64] sm:$0xf]
        %v2300 = vld [vmem:[%s2273 + $0x68] sm:$0xf]
        %v2301 = vld [vmem:[%s2273 + $0x6c] sm:$0xf]
        %v2302 = vld [vmem:[%s2273 + $0x70] sm:$0xf]
        %v2303 = vld [vmem:[%s2273 + $0x74] sm:$0xf]
        %v2304 = vld [vmem:[%s2273 + $0x78] sm:$0xf]
        %v2305 = vld [vmem:[%s2273 + $0x7c] sm:$0xf]
        %v2338 = vunpack.c.l.b16 %v2274
        %v2339 = vunpack.c.l.b16 %v2275
        %v2340 = vunpack.c.l.b16 %v2276
        %v2341 = vunpack.c.l.b16 %v2277
        %v2342 = vunpack.c.l.b16 %v2278
        %v2343 = vunpack.c.l.b16 %v2279
        %v2344 = vunpack.c.l.b16 %v2280
        %v2345 = vunpack.c.l.b16 %v2281
        %v2346 = vunpack.c.l.b16 %v2282
        %v2347 = vunpack.c.l.b16 %v2283
        %v2348 = vunpack.c.l.b16 %v2284
        %v2349 = vunpack.c.l.b16 %v2285
        %v2350 = vunpack.c.l.b16 %v2286
        %v2351 = vunpack.c.l.b16 %v2287
        %v2352 = vunpack.c.l.b16 %v2288
        %v2353 = vunpack.c.l.b16 %v2289
        %v2354 = vunpack.c.l.b16 %v2290
        %v2355 = vunpack.c.l.b16 %v2291
        %v2356 = vunpack.c.l.b16 %v2292
        %v2357 = vunpack.c.l.b16 %v2293
        %v2358 = vunpack.c.l.b16 %v2294
        %v2359 = vunpack.c.l.b16 %v2295
        %v2360 = vunpack.c.l.b16 %v2296
        %v2361 = vunpack.c.l.b16 %v2297
        %v2362 = vunpack.c.l.b16 %v2298
        %v2363 = vunpack.c.l.b16 %v2299
        %v2364 = vunpack.c.l.b16 %v2300
        %v2365 = vunpack.c.l.b16 %v2301
        %v2366 = vunpack.c.l.b16 %v2302
        %v2367 = vunpack.c.l.b16 %v2303
        %v2368 = vunpack.c.l.b16 %v2304
        %v2369 = vunpack.c.l.b16 %v2305
        %v2370 = vpack.c.b16 %v2339, %v2338
        %v2371 = vpack.c.b16 %v2341, %v2340
        %v2372 = vpack.c.b16 %v2343, %v2342
        %v2373 = vpack.c.b16 %v2345, %v2344
        %v2374 = vpack.c.b16 %v2347, %v2346
        %v2375 = vpack.c.b16 %v2349, %v2348
        %v2376 = vpack.c.b16 %v2351, %v2350
        %v2377 = vpack.c.b16 %v2353, %v2352
        %v2378 = vpack.c.b16 %v2355, %v2354
        %v2379 = vpack.c.b16 %v2357, %v2356
        %v2380 = vpack.c.b16 %v2359, %v2358
        %v2381 = vpack.c.b16 %v2361, %v2360
        %v2382 = vpack.c.b16 %v2363, %v2362
        %v2383 = vpack.c.b16 %v2365, %v2364
        %v2384 = vpack.c.b16 %v2367, %v2366
        %v2385 = vpack.c.b16 %v2369, %v2368
        %2402 = vmatprep.subr.bf16.mxu0 0
        %2403 = vmatpush1.bf16.msra.mxu0 %v2377
        %2404 = vmatprep.subr.bf16.mxu0 0
        %2405 = vmatpush1.bf16.msra.mxu0 %v2376
        %2406 = vmatprep.subr.bf16.mxu0 0
        %2407 = vmatpush1.bf16.msra.mxu0 %v2375
        %2408 = vmatprep.subr.bf16.mxu0 0
        %2409 = vmatpush1.bf16.msra.mxu0 %v2374
        %2410 = vmatprep.subr.bf16.mxu0 0
        %2411 = vmatpush1.bf16.msra.mxu0 %v2373
        %2412 = vmatprep.subr.bf16.mxu0 0
        %2413 = vmatpush1.bf16.msra.mxu0 %v2372
        %2414 = vmatprep.subr.bf16.mxu0 0
        %2415 = vmatpush1.bf16.msra.mxu0 %v2371
        %2416 = vmatprep.subr.bf16.mxu0 0
        %2417 = vmatpush1.bf16.msra.mxu0 %v2370
        %2418 = vmatprep.subr.bf16.mxu0 0
        %2419 = vmatpush2.bf16.msra.mxu0 %v2385
        %2420 = vmatprep.subr.bf16.mxu0 0
        %2421 = vmatpush2.bf16.msra.mxu0 %v2384
        %2422 = vmatprep.subr.bf16.mxu0 0
        %2423 = vmatpush2.bf16.msra.mxu0 %v2383
        %2424 = vmatprep.subr.bf16.mxu0 0
        %2425 = vmatpush2.bf16.msra.mxu0 %v2382
        %2426 = vmatprep.subr.bf16.mxu0 0
        %2427 = vmatpush2.bf16.msra.mxu0 %v2381
        %2428 = vmatprep.subr.bf16.mxu0 0
        %2429 = vmatpush2.bf16.msra.mxu0 %v2380
        %2430 = vmatprep.subr.bf16.mxu0 0
        %2431 = vmatpush2.bf16.msra.mxu0 %v2379
        %2432 = vmatprep.subr.bf16.mxu0 0
        %2433 = vmatpush2.bf16.msra.mxu0 %v2378
        %2434 = vmatprep.mubr.bf16.mxu0 %v2226
        %2435 = vmatmul.mubr.bf16.gmra.mxu0 %v2163
        %v2436 = vpop.f32.mrf.mxu0
        %v2437 = vadd.f32 0.0, %v2436
        %v2438 = vpop.f32.mrf.mxu0
        %v2439 = vpop.f32.mrf.mxu0
        %v2440 = vadd.f32 0.0, %v2439
        %v2441 = vpop.f32.mrf.mxu0
        %2442 = vmatprep.mubr.bf16.mxu0 %v2229
        %2443 = vmatmul.mubr.bf16.gmra.mxu0 %v2167
        %v2444 = vpop.f32.mrf.mxu0
        %v2445 = vadd.f32 0.0, %v2444
        %v2446 = vpop.f32.mrf.mxu0
        %v2447 = vpop.f32.mrf.mxu0
        %v2448 = vadd.f32 0.0, %v2447
        %v2449 = vpop.f32.mrf.mxu0
        %2450 = vmatprep.mubr.bf16.mxu0 %v2232
        %2451 = vmatmul.mubr.bf16.gmra.mxu0 %v2171
        %v2452 = vpop.f32.mrf.mxu0
        %v2453 = vadd.f32 0.0, %v2452
        %v2454 = vpop.f32.mrf.mxu0
        %v2455 = vpop.f32.mrf.mxu0
        %v2456 = vadd.f32 0.0, %v2455
        %v2457 = vpop.f32.mrf.mxu0
        %2458 = vmatprep.mubr.bf16.mxu0 %v2235
        %2459 = vmatmul.mubr.bf16.gmra.mxu0 %v2175
        %v2460 = vpop.f32.mrf.mxu0
        %v2461 = vadd.f32 0.0, %v2460
        %v2462 = vpop.f32.mrf.mxu0
        %v2463 = vpop.f32.mrf.mxu0
        %v2464 = vadd.f32 0.0, %v2463
        %v2465 = vpop.f32.mrf.mxu0
        %2466 = vmatprep.mubr.bf16.mxu0 %v2238
        %2467 = vmatmul.mubr.bf16.gmra.mxu0 %v2179
        %v2468 = vpop.f32.mrf.mxu0
        %v2469 = vadd.f32 0.0, %v2468
        %v2470 = vpop.f32.mrf.mxu0
        %v2471 = vpop.f32.mrf.mxu0
        %v2472 = vadd.f32 0.0, %v2471
        %v2473 = vpop.f32.mrf.mxu0
        %2474 = vmatprep.mubr.bf16.mxu0 %v2241
        %2475 = vmatmul.mubr.bf16.gmra.mxu0 %v2183
        %v2476 = vpop.f32.mrf.mxu0
        %v2477 = vadd.f32 0.0, %v2476
        %v2478 = vpop.f32.mrf.mxu0
        %v2479 = vpop.f32.mrf.mxu0
        %v2480 = vadd.f32 0.0, %v2479
        %v2481 = vpop.f32.mrf.mxu0
        %2482 = vmatprep.mubr.bf16.mxu0 %v2244
        %2483 = vmatmul.mubr.bf16.gmra.mxu0 %v2187
        %v2484 = vpop.f32.mrf.mxu0
        %v2485 = vadd.f32 0.0, %v2484
        %v2486 = vpop.f32.mrf.mxu0
        %v2487 = vpop.f32.mrf.mxu0
        %v2488 = vadd.f32 0.0, %v2487
        %v2489 = vpop.f32.mrf.mxu0
        %2490 = vmatprep.mubr.bf16.mxu0 %v2247
        %2491 = vmatmul.mubr.bf16.gmra.mxu0 %v2191
        %v2492 = vpop.f32.mrf.mxu0
        %v2493 = vadd.f32 0.0, %v2492
        %v2494 = vpop.f32.mrf.mxu0
        %v2495 = vpop.f32.mrf.mxu0
        %v2496 = vadd.f32 0.0, %v2495
        %v2497 = vpop.f32.mrf.mxu0
        %2498 = vmatprep.mubr.bf16.mxu0 %v2250
        %2499 = vmatmul.mubr.bf16.gmra.mxu0 %v2195
        %v2500 = vpop.f32.mrf.mxu0
        %v2501 = vadd.f32 0.0, %v2500
        %v2502 = vpop.f32.mrf.mxu0
        %v2503 = vpop.f32.mrf.mxu0
        %v2504 = vadd.f32 0.0, %v2503
        %v2505 = vpop.f32.mrf.mxu0
        %2506 = vmatprep.mubr.bf16.mxu0 %v2253
        %2507 = vmatmul.mubr.bf16.gmra.mxu0 %v2199
        %v2508 = vpop.f32.mrf.mxu0
        %v2509 = vadd.f32 0.0, %v2508
        %v2510 = vpop.f32.mrf.mxu0
        %v2511 = vpop.f32.mrf.mxu0
        %v2512 = vadd.f32 0.0, %v2511
        %v2513 = vpop.f32.mrf.mxu0
        %2514 = vmatprep.mubr.bf16.mxu0 %v2256
        %2515 = vmatmul.mubr.bf16.gmra.mxu0 %v2203
        %v2516 = vpop.f32.mrf.mxu0
        %v2517 = vadd.f32 0.0, %v2516
        %v2518 = vpop.f32.mrf.mxu0
        %v2519 = vpop.f32.mrf.mxu0
        %v2520 = vadd.f32 0.0, %v2519
        %v2521 = vpop.f32.mrf.mxu0
        %2522 = vmatprep.mubr.bf16.mxu0 %v2259
        %2523 = vmatmul.mubr.bf16.gmra.mxu0 %v2207
        %v2524 = vpop.f32.mrf.mxu0
        %v2525 = vadd.f32 0.0, %v2524
        %v2526 = vpop.f32.mrf.mxu0
        %v2527 = vpop.f32.mrf.mxu0
        %v2528 = vadd.f32 0.0, %v2527
        %v2529 = vpop.f32.mrf.mxu0
        %2530 = vmatprep.mubr.bf16.mxu0 %v2262
        %2531 = vmatmul.mubr.bf16.gmra.mxu0 %v2211
        %v2532 = vpop.f32.mrf.mxu0
        %v2533 = vadd.f32 0.0, %v2532
        %v2534 = vpop.f32.mrf.mxu0
        %v2535 = vpop.f32.mrf.mxu0
        %v2536 = vadd.f32 0.0, %v2535
        %v2537 = vpop.f32.mrf.mxu0
        %2538 = vmatprep.mubr.bf16.mxu0 %v2265
        %2539 = vmatmul.mubr.bf16.gmra.mxu0 %v2215
        %v2540 = vpop.f32.mrf.mxu0
        %v2541 = vadd.f32 0.0, %v2540
        %v2542 = vpop.f32.mrf.mxu0
        %v2543 = vpop.f32.mrf.mxu0
        %v2544 = vadd.f32 0.0, %v2543
        %v2545 = vpop.f32.mrf.mxu0
        %2546 = vmatprep.mubr.bf16.mxu0 %v2268
        %2547 = vmatmul.mubr.bf16.gmra.mxu0 %v2219
        %v2548 = vpop.f32.mrf.mxu0
        %v2549 = vadd.f32 0.0, %v2548
        %v2550 = vpop.f32.mrf.mxu0
        %v2551 = vpop.f32.mrf.mxu0
        %v2552 = vadd.f32 0.0, %v2551
        %v2553 = vpop.f32.mrf.mxu0
        %2554 = vmatprep.mubr.bf16.mxu0 %v2271
        %2555 = vmatmul.mubr.bf16.gmra.mxu0 %v2223
        %v2556 = vpop.f32.mrf.mxu0
        %v2557 = vadd.f32 0.0, %v2556
        %v2558 = vpop.f32.mrf.mxu0
        %v2559 = vpop.f32.mrf.mxu0
        %v2560 = vadd.f32 0.0, %v2559
        %v2561 = vpop.f32.mrf.mxu0
        %2562 = vdwg.mxu0
        %v2563 = vadd.f32 %v1842, %v2437
        %v2564 = vadd.f32 %v1845, %v2440
        %v2565 = vadd.f32 %v1850, %v2445
        %v2566 = vadd.f32 %v1853, %v2448
        %v2567 = vadd.f32 %v1858, %v2453
        %v2568 = vadd.f32 %v1861, %v2456
        %v2569 = vadd.f32 %v1866, %v2461
        %v2570 = vadd.f32 %v1869, %v2464
        %v2571 = vadd.f32 %v1874, %v2469
        %v2572 = vadd.f32 %v1877, %v2472
        %v2573 = vadd.f32 %v1882, %v2477
        %v2574 = vadd.f32 %v1885, %v2480
        %v2575 = vadd.f32 %v1890, %v2485
        %v2576 = vadd.f32 %v1893, %v2488
        %v2577 = vadd.f32 %v1898, %v2493
        %v2578 = vadd.f32 %v1901, %v2496
        %v2579 = vadd.f32 %v1906, %v2501
        %v2580 = vadd.f32 %v1909, %v2504
        %v2581 = vadd.f32 %v1914, %v2509
        %v2582 = vadd.f32 %v1917, %v2512
        %v2583 = vadd.f32 %v1922, %v2517
        %v2584 = vadd.f32 %v1925, %v2520
        %v2585 = vadd.f32 %v1930, %v2525
        %v2586 = vadd.f32 %v1933, %v2528
        %v2587 = vadd.f32 %v1938, %v2533
        %v2588 = vadd.f32 %v1941, %v2536
        %v2589 = vadd.f32 %v1946, %v2541
        %v2590 = vadd.f32 %v1949, %v2544
        %v2591 = vadd.f32 %v1954, %v2549
        %v2592 = vadd.f32 %v1957, %v2552
        %v2593 = vadd.f32 %v1962, %v2557
        %v2594 = vadd.f32 %v1965, %v2560
        %v2595 = vld [vmem:[%s4] sm:$0x1]
        %v2597 = vlaneseq
        %v2598 = vshrl.u32 %v2597, 7
        %v2599 = vsub.s32 0, %v2598
        %v2600 = vrot.slane %v2595, %v2599
        %v2602 = vadd.f32 %v2563, %v2600
        %v2603 = vadd.f32 %v2564, %v2600
        %v2604 = vadd.f32 %v2565, %v2600
        %v2605 = vadd.f32 %v2566, %v2600
        %v2606 = vadd.f32 %v2567, %v2600
        %v2607 = vadd.f32 %v2568, %v2600
        %v2608 = vadd.f32 %v2569, %v2600
        %v2609 = vadd.f32 %v2570, %v2600
        %v2610 = vadd.f32 %v2571, %v2600
        %v2611 = vadd.f32 %v2572, %v2600
        %v2612 = vadd.f32 %v2573, %v2600
        %v2613 = vadd.f32 %v2574, %v2600
        %v2614 = vadd.f32 %v2575, %v2600
        %v2615 = vadd.f32 %v2576, %v2600
        %v2616 = vadd.f32 %v2577, %v2600
        %v2617 = vadd.f32 %v2578, %v2600
        %v2618 = vadd.f32 %v2579, %v2600
        %v2619 = vadd.f32 %v2580, %v2600
        %v2620 = vadd.f32 %v2581, %v2600
        %v2621 = vadd.f32 %v2582, %v2600
        %v2622 = vadd.f32 %v2583, %v2600
        %v2623 = vadd.f32 %v2584, %v2600
        %v2624 = vadd.f32 %v2585, %v2600
        %v2625 = vadd.f32 %v2586, %v2600
        %v2626 = vadd.f32 %v2587, %v2600
        %v2627 = vadd.f32 %v2588, %v2600
        %v2628 = vadd.f32 %v2589, %v2600
        %v2629 = vadd.f32 %v2590, %v2600
        %v2630 = vadd.f32 %v2591, %v2600
        %v2631 = vadd.f32 %v2592, %v2600
        %v2632 = vadd.f32 %v2593, %v2600
        %v2633 = vadd.f32 %v2594, %v2600
        %v2634 = vmax.f32 %v2602, 0.0
        %v2635 = vmax.f32 %v2603, 0.0
        %v2636 = vmax.f32 %v2604, 0.0
        %v2637 = vmax.f32 %v2605, 0.0
        %v2638 = vmax.f32 %v2606, 0.0
        %v2639 = vmax.f32 %v2607, 0.0
        %v2640 = vmax.f32 %v2608, 0.0
        %v2641 = vmax.f32 %v2609, 0.0
        %v2642 = vmax.f32 %v2610, 0.0
        %v2643 = vmax.f32 %v2611, 0.0
        %v2644 = vmax.f32 %v2612, 0.0
        %v2645 = vmax.f32 %v2613, 0.0
        %v2646 = vmax.f32 %v2614, 0.0
        %v2647 = vmax.f32 %v2615, 0.0
        %v2648 = vmax.f32 %v2616, 0.0
        %v2649 = vmax.f32 %v2617, 0.0
        %v2650 = vmax.f32 %v2618, 0.0
        %v2651 = vmax.f32 %v2619, 0.0
        %v2652 = vmax.f32 %v2620, 0.0
        %v2653 = vmax.f32 %v2621, 0.0
        %v2654 = vmax.f32 %v2622, 0.0
        %v2655 = vmax.f32 %v2623, 0.0
        %v2656 = vmax.f32 %v2624, 0.0
        %v2657 = vmax.f32 %v2625, 0.0
        %v2658 = vmax.f32 %v2626, 0.0
        %v2659 = vmax.f32 %v2627, 0.0
        %v2660 = vmax.f32 %v2628, 0.0
        %v2661 = vmax.f32 %v2629, 0.0
        %v2662 = vmax.f32 %v2630, 0.0
        %v2663 = vmax.f32 %v2631, 0.0
        %v2664 = vmax.f32 %v2632, 0.0
        %v2665 = vmax.f32 %v2633, 0.0
        %2666 = vst.msk [vmem:[%s332 + $0x8] sm:$0xff] %vm280, %v2634
        %2667 = vst.msk [vmem:[%s332 + $0x10] sm:$0xff] %vm280, %v2635
        %2668 = vst.msk [vmem:[%s332 + $0x28] sm:$0xff] %vm280, %v2636
        %2669 = vst.msk [vmem:[%s332 + $0x30] sm:$0xff] %vm280, %v2637
        %2670 = vst.msk [vmem:[%s332 + $0x48] sm:$0xff] %vm280, %v2638
        %2671 = vst.msk [vmem:[%s332 + $0x50] sm:$0xff] %vm280, %v2639
        %2672 = vst.msk [vmem:[%s332 + $0x68] sm:$0xff] %vm280, %v2640
        %2673 = vst.msk [vmem:[%s332 + $0x70] sm:$0xff] %vm280, %v2641
        %2674 = vst.msk [vmem:[%s332 + $0x88] sm:$0xff] %vm280, %v2642
        %2675 = vst.msk [vmem:[%s332 + $0x90] sm:$0xff] %vm280, %v2643
        %2676 = vst.msk [vmem:[%s332 + $0xa8] sm:$0xff] %vm280, %v2644
        %2677 = vst.msk [vmem:[%s332 + $0xb0] sm:$0xff] %vm280, %v2645
        %2678 = vst.msk [vmem:[%s332 + $0xc8] sm:$0xff] %vm280, %v2646
        %2679 = vst.msk [vmem:[%s332 + $0xd0] sm:$0xff] %vm280, %v2647
        %2680 = vst.msk [vmem:[%s332 + $0xe8] sm:$0xff] %vm280, %v2648
        %2681 = vst.msk [vmem:[%s332 + $0xf0] sm:$0xff] %vm280, %v2649
        %2682 = vst.msk [vmem:[%s332 + $0x108] sm:$0xff] %vm280, %v2650
        %2683 = vst.msk [vmem:[%s332 + $0x110] sm:$0xff] %vm280, %v2651
        %2684 = vst.msk [vmem:[%s332 + $0x128] sm:$0xff] %vm280, %v2652
        %2685 = vst.msk [vmem:[%s332 + $0x130] sm:$0xff] %vm280, %v2653
        %2686 = vst.msk [vmem:[%s332 + $0x148] sm:$0xff] %vm280, %v2654
        %2687 = vst.msk [vmem:[%s332 + $0x150] sm:$0xff] %vm280, %v2655
        %2688 = vst.msk [vmem:[%s332 + $0x168] sm:$0xff] %vm280, %v2656
        %2689 = vst.msk [vmem:[%s332 + $0x170] sm:$0xff] %vm280, %v2657
        %2690 = vst.msk [vmem:[%s332 + $0x188] sm:$0xff] %vm280, %v2658
        %2691 = vst.msk [vmem:[%s332 + $0x190] sm:$0xff] %vm280, %v2659
        %2692 = vst.msk [vmem:[%s332 + $0x1a8] sm:$0xff] %vm280, %v2660
        %2693 = vst.msk [vmem:[%s332 + $0x1b0] sm:$0xff] %vm280, %v2661
        %2694 = vst.msk [vmem:[%s332 + $0x1c8] sm:$0xff] %vm280, %v2662
        %2695 = vst.msk [vmem:[%s332 + $0x1d0] sm:$0xff] %vm280, %v2663
        %2696 = vst.msk [vmem:[%s332 + $0x1e8] sm:$0xff] %vm280, %v2664
        %2697 = vst.msk [vmem:[%s332 + $0x1f0] sm:$0xff] %vm280, %v2665
        %v2698 = vld [vmem:[#allocation3 + $0x7] sm:$0xff]
        %v2699 = vld [vmem:[#allocation3 + $0xf] sm:$0xff]
        %v2700 = vld [vmem:[#allocation3 + $0x27] sm:$0xff]
        %v2701 = vld [vmem:[#allocation3 + $0x2f] sm:$0xff]
        %v2702 = vld [vmem:[#allocation3 + $0x47] sm:$0xff]
        %v2703 = vld [vmem:[#allocation3 + $0x4f] sm:$0xff]
        %v2704 = vld [vmem:[#allocation3 + $0x67] sm:$0xff]
        %v2705 = vld [vmem:[#allocation3 + $0x6f] sm:$0xff]
        %v2706 = vld [vmem:[#allocation3 + $0x87] sm:$0xff]
        %v2707 = vld [vmem:[#allocation3 + $0x8f] sm:$0xff]
        %v2708 = vld [vmem:[#allocation3 + $0xa7] sm:$0xff]
        %v2709 = vld [vmem:[#allocation3 + $0xaf] sm:$0xff]
        %v2710 = vld [vmem:[#allocation3 + $0xc7] sm:$0xff]
        %v2711 = vld [vmem:[#allocation3 + $0xcf] sm:$0xff]
        %v2712 = vld [vmem:[#allocation3 + $0xe7] sm:$0xff]
        %v2713 = vld [vmem:[#allocation3 + $0xef] sm:$0xff]
        %v2714 = vld [vmem:[#allocation3 + $0x107] sm:$0xff]
        %v2715 = vld [vmem:[#allocation3 + $0x10f] sm:$0xff]
        %v2716 = vld [vmem:[#allocation3 + $0x127] sm:$0xff]
        %v2717 = vld [vmem:[#allocation3 + $0x12f] sm:$0xff]
        %v2718 = vld [vmem:[#allocation3 + $0x147] sm:$0xff]
        %v2719 = vld [vmem:[#allocation3 + $0x14f] sm:$0xff]
        %v2720 = vld [vmem:[#allocation3 + $0x167] sm:$0xff]
        %v2721 = vld [vmem:[#allocation3 + $0x16f] sm:$0xff]
        %v2722 = vld [vmem:[#allocation3 + $0x187] sm:$0xff]
        %v2723 = vld [vmem:[#allocation3 + $0x18f] sm:$0xff]
        %v2724 = vld [vmem:[#allocation3 + $0x1a7] sm:$0xff]
        %v2725 = vld [vmem:[#allocation3 + $0x1af] sm:$0xff]
        %v2726 = vld [vmem:[#allocation3 + $0x1c7] sm:$0xff]
        %v2727 = vld [vmem:[#allocation3 + $0x1cf] sm:$0xff]
        %v2728 = vld [vmem:[#allocation3 + $0x1e7] sm:$0xff]
        %v2729 = vld [vmem:[#allocation3 + $0x1ef] sm:$0xff]
        %v2730 = vld [vmem:[%s5] sm:$0x1]
        %v2732 = vlaneseq
        %v2733 = vshrl.u32 %v2732, 7
        %v2734 = vsub.s32 0, %v2733
        %v2735 = vrot.slane %v2730, %v2734
        %v2737 = vmul.f32 %v2698, %v2735
        %v2738 = vmul.f32 %v2699, %v2735
        %v2739 = vmul.f32 %v2700, %v2735
        %v2740 = vmul.f32 %v2701, %v2735
        %v2741 = vmul.f32 %v2702, %v2735
        %v2742 = vmul.f32 %v2703, %v2735
        %v2743 = vmul.f32 %v2704, %v2735
        %v2744 = vmul.f32 %v2705, %v2735
        %v2745 = vmul.f32 %v2706, %v2735
        %v2746 = vmul.f32 %v2707, %v2735
        %v2747 = vmul.f32 %v2708, %v2735
        %v2748 = vmul.f32 %v2709, %v2735
        %v2749 = vmul.f32 %v2710, %v2735
        %v2750 = vmul.f32 %v2711, %v2735
        %v2751 = vmul.f32 %v2712, %v2735
        %v2752 = vmul.f32 %v2713, %v2735
        %v2753 = vmul.f32 %v2714, %v2735
        %v2754 = vmul.f32 %v2715, %v2735
        %v2755 = vmul.f32 %v2716, %v2735
        %v2756 = vmul.f32 %v2717, %v2735
        %v2757 = vmul.f32 %v2718, %v2735
        %v2758 = vmul.f32 %v2719, %v2735
        %v2759 = vmul.f32 %v2720, %v2735
        %v2760 = vmul.f32 %v2721, %v2735
        %v2761 = vmul.f32 %v2722, %v2735
        %v2762 = vmul.f32 %v2723, %v2735
        %v2763 = vmul.f32 %v2724, %v2735
        %v2764 = vmul.f32 %v2725, %v2735
        %v2765 = vmul.f32 %v2726, %v2735
        %v2766 = vmul.f32 %v2727, %v2735
        %v2767 = vmul.f32 %v2728, %v2735
        %v2768 = vmul.f32 %v2729, %v2735
        %v2769 = vsel %vm280, %v2737, 0.0
        %2770 = vadd.xlane.f32.xlu0 %v2769
        %v2771 = vpop.xlane.xlu0 %2770
        %v2772 = vsel %vm280, %v2738, 0.0
        %2773 = vadd.xlane.f32.xlu0 %v2772
        %v2774 = vpop.xlane.xlu0 %2773
        %v2775 = vsel %vm280, %v2739, 0.0
        %2776 = vadd.xlane.f32.xlu0 %v2775
        %v2777 = vpop.xlane.xlu0 %2776
        %v2778 = vsel %vm280, %v2740, 0.0
        %2779 = vadd.xlane.f32.xlu0 %v2778
        %v2780 = vpop.xlane.xlu0 %2779
        %v2781 = vsel %vm280, %v2741, 0.0
        %2782 = vadd.xlane.f32.xlu0 %v2781
        %v2783 = vpop.xlane.xlu0 %2782
        %v2784 = vsel %vm280, %v2742, 0.0
        %2785 = vadd.xlane.f32.xlu0 %v2784
        %v2786 = vpop.xlane.xlu0 %2785
        %v2787 = vsel %vm280, %v2743, 0.0
        %2788 = vadd.xlane.f32.xlu0 %v2787
        %v2789 = vpop.xlane.xlu0 %2788
        %v2790 = vsel %vm280, %v2744, 0.0
        %2791 = vadd.xlane.f32.xlu0 %v2790
        %v2792 = vpop.xlane.xlu0 %2791
        %v2793 = vsel %vm280, %v2745, 0.0
        %2794 = vadd.xlane.f32.xlu0 %v2793
        %v2795 = vpop.xlane.xlu0 %2794
        %v2796 = vsel %vm280, %v2746, 0.0
        %2797 = vadd.xlane.f32.xlu0 %v2796
        %v2798 = vpop.xlane.xlu0 %2797
        %v2799 = vsel %vm280, %v2747, 0.0
        %2800 = vadd.xlane.f32.xlu0 %v2799
        %v2801 = vpop.xlane.xlu0 %2800
        %v2802 = vsel %vm280, %v2748, 0.0
        %2803 = vadd.xlane.f32.xlu0 %v2802
        %v2804 = vpop.xlane.xlu0 %2803
        %v2805 = vsel %vm280, %v2749, 0.0
        %2806 = vadd.xlane.f32.xlu0 %v2805
        %v2807 = vpop.xlane.xlu0 %2806
        %v2808 = vsel %vm280, %v2750, 0.0
        %2809 = vadd.xlane.f32.xlu0 %v2808
        %v2810 = vpop.xlane.xlu0 %2809
        %v2811 = vsel %vm280, %v2751, 0.0
        %2812 = vadd.xlane.f32.xlu0 %v2811
        %v2813 = vpop.xlane.xlu0 %2812
        %v2814 = vsel %vm280, %v2752, 0.0
        %2815 = vadd.xlane.f32.xlu0 %v2814
        %v2816 = vpop.xlane.xlu0 %2815
        %v2817 = vsel %vm280, %v2753, 0.0
        %2818 = vadd.xlane.f32.xlu0 %v2817
        %v2819 = vpop.xlane.xlu0 %2818
        %v2820 = vsel %vm280, %v2754, 0.0
        %2821 = vadd.xlane.f32.xlu0 %v2820
        %v2822 = vpop.xlane.xlu0 %2821
        %v2823 = vsel %vm280, %v2755, 0.0
        %2824 = vadd.xlane.f32.xlu0 %v2823
        %v2825 = vpop.xlane.xlu0 %2824
        %v2826 = vsel %vm280, %v2756, 0.0
        %2827 = vadd.xlane.f32.xlu0 %v2826
        %v2828 = vpop.xlane.xlu0 %2827
        %v2829 = vsel %vm280, %v2757, 0.0
        %2830 = vadd.xlane.f32.xlu0 %v2829
        %v2831 = vpop.xlane.xlu0 %2830
        %v2832 = vsel %vm280, %v2758, 0.0
        %2833 = vadd.xlane.f32.xlu0 %v2832
        %v2834 = vpop.xlane.xlu0 %2833
        %v2835 = vsel %vm280, %v2759, 0.0
        %2836 = vadd.xlane.f32.xlu0 %v2835
        %v2837 = vpop.xlane.xlu0 %2836
        %v2838 = vsel %vm280, %v2760, 0.0
        %2839 = vadd.xlane.f32.xlu0 %v2838
        %v2840 = vpop.xlane.xlu0 %2839
        %v2841 = vsel %vm280, %v2761, 0.0
        %2842 = vadd.xlane.f32.xlu0 %v2841
        %v2843 = vpop.xlane.xlu0 %2842
        %v2844 = vsel %vm280, %v2762, 0.0
        %2845 = vadd.xlane.f32.xlu0 %v2844
        %v2846 = vpop.xlane.xlu0 %2845
        %v2847 = vsel %vm280, %v2763, 0.0
        %2848 = vadd.xlane.f32.xlu0 %v2847
        %v2849 = vpop.xlane.xlu0 %2848
        %v2850 = vsel %vm280, %v2764, 0.0
        %2851 = vadd.xlane.f32.xlu0 %v2850
        %v2852 = vpop.xlane.xlu0 %2851
        %v2853 = vsel %vm280, %v2765, 0.0
        %2854 = vadd.xlane.f32.xlu0 %v2853
        %v2855 = vpop.xlane.xlu0 %2854
        %v2856 = vsel %vm280, %v2766, 0.0
        %2857 = vadd.xlane.f32.xlu0 %v2856
        %v2858 = vpop.xlane.xlu0 %2857
        %v2859 = vsel %vm280, %v2767, 0.0
        %2860 = vadd.xlane.f32.xlu0 %v2859
        %v2861 = vpop.xlane.xlu0 %2860
        %v2862 = vsel %vm280, %v2768, 0.0
        %2863 = vadd.xlane.f32.xlu0 %v2862
        %v2864 = vpop.xlane.xlu0 %2863
        %v2865 = vadd.f32 %v2771, 0.0
        %v2866 = vadd.f32 %v2774, 0.0
        %v2867 = vadd.f32 %v2777, 0.0
        %v2868 = vadd.f32 %v2780, 0.0
        %v2869 = vadd.f32 %v2783, 0.0
        %v2870 = vadd.f32 %v2786, 0.0
        %v2871 = vadd.f32 %v2789, 0.0
        %v2872 = vadd.f32 %v2792, 0.0
        %v2873 = vadd.f32 %v2795, 0.0
        %v2874 = vadd.f32 %v2798, 0.0
        %v2875 = vadd.f32 %v2801, 0.0
        %v2876 = vadd.f32 %v2804, 0.0
        %v2877 = vadd.f32 %v2807, 0.0
        %v2878 = vadd.f32 %v2810, 0.0
        %v2879 = vadd.f32 %v2813, 0.0
        %v2880 = vadd.f32 %v2816, 0.0
        %v2881 = vadd.f32 %v2819, 0.0
        %v2882 = vadd.f32 %v2822, 0.0
        %v2883 = vadd.f32 %v2825, 0.0
        %v2884 = vadd.f32 %v2828, 0.0
        %v2885 = vadd.f32 %v2831, 0.0
        %v2886 = vadd.f32 %v2834, 0.0
        %v2887 = vadd.f32 %v2837, 0.0
        %v2888 = vadd.f32 %v2840, 0.0
        %v2889 = vadd.f32 %v2843, 0.0
        %v2890 = vadd.f32 %v2846, 0.0
        %v2891 = vadd.f32 %v2849, 0.0
        %v2892 = vadd.f32 %v2852, 0.0
        %v2893 = vadd.f32 %v2855, 0.0
        %v2894 = vadd.f32 %v2858, 0.0
        %v2895 = vadd.f32 %v2861, 0.0
        %v2896 = vadd.f32 %v2864, 0.0
        %v2897 = vld [vmem:[#allocation3 + $0x8] sm:$0xff]
        %v2898 = vld [vmem:[#allocation3 + $0x10] sm:$0xff]
        %v2899 = vld [vmem:[#allocation3 + $0x28] sm:$0xff]
        %v2900 = vld [vmem:[#allocation3 + $0x30] sm:$0xff]
        %v2901 = vld [vmem:[#allocation3 + $0x48] sm:$0xff]
        %v2902 = vld [vmem:[#allocation3 + $0x50] sm:$0xff]
        %v2903 = vld [vmem:[#allocation3 + $0x68] sm:$0xff]
        %v2904 = vld [vmem:[#allocation3 + $0x70] sm:$0xff]
        %v2905 = vld [vmem:[#allocation3 + $0x88] sm:$0xff]
        %v2906 = vld [vmem:[#allocation3 + $0x90] sm:$0xff]
        %v2907 = vld [vmem:[#allocation3 + $0xa8] sm:$0xff]
        %v2908 = vld [vmem:[#allocation3 + $0xb0] sm:$0xff]
        %v2909 = vld [vmem:[#allocation3 + $0xc8] sm:$0xff]
        %v2910 = vld [vmem:[#allocation3 + $0xd0] sm:$0xff]
        %v2911 = vld [vmem:[#allocation3 + $0xe8] sm:$0xff]
        %v2912 = vld [vmem:[#allocation3 + $0xf0] sm:$0xff]
        %v2913 = vld [vmem:[#allocation3 + $0x108] sm:$0xff]
        %v2914 = vld [vmem:[#allocation3 + $0x110] sm:$0xff]
        %v2915 = vld [vmem:[#allocation3 + $0x128] sm:$0xff]
        %v2916 = vld [vmem:[#allocation3 + $0x130] sm:$0xff]
        %v2917 = vld [vmem:[#allocation3 + $0x148] sm:$0xff]
        %v2918 = vld [vmem:[#allocation3 + $0x150] sm:$0xff]
        %v2919 = vld [vmem:[#allocation3 + $0x168] sm:$0xff]
        %v2920 = vld [vmem:[#allocation3 + $0x170] sm:$0xff]
        %v2921 = vld [vmem:[#allocation3 + $0x188] sm:$0xff]
        %v2922 = vld [vmem:[#allocation3 + $0x190] sm:$0xff]
        %v2923 = vld [vmem:[#allocation3 + $0x1a8] sm:$0xff]
        %v2924 = vld [vmem:[#allocation3 + $0x1b0] sm:$0xff]
        %v2925 = vld [vmem:[#allocation3 + $0x1c8] sm:$0xff]
        %v2926 = vld [vmem:[#allocation3 + $0x1d0] sm:$0xff]
        %v2927 = vld [vmem:[#allocation3 + $0x1e8] sm:$0xff]
        %v2928 = vld [vmem:[#allocation3 + $0x1f0] sm:$0xff]
        %s2929 = scalar_lea.vmem %s5, 1
        %v2930 = vld [vmem:[%s2929] sm:$0x1]
        %v2932 = vlaneseq
        %v2933 = vshrl.u32 %v2932, 7
        %v2934 = vsub.s32 0, %v2933
        %v2935 = vrot.slane %v2930, %v2934
        %v2937 = vmul.f32 %v2897, %v2935
        %v2938 = vmul.f32 %v2898, %v2935
        %v2939 = vmul.f32 %v2899, %v2935
        %v2940 = vmul.f32 %v2900, %v2935
        %v2941 = vmul.f32 %v2901, %v2935
        %v2942 = vmul.f32 %v2902, %v2935
        %v2943 = vmul.f32 %v2903, %v2935
        %v2944 = vmul.f32 %v2904, %v2935
        %v2945 = vmul.f32 %v2905, %v2935
        %v2946 = vmul.f32 %v2906, %v2935
        %v2947 = vmul.f32 %v2907, %v2935
        %v2948 = vmul.f32 %v2908, %v2935
        %v2949 = vmul.f32 %v2909, %v2935
        %v2950 = vmul.f32 %v2910, %v2935
        %v2951 = vmul.f32 %v2911, %v2935
        %v2952 = vmul.f32 %v2912, %v2935
        %v2953 = vmul.f32 %v2913, %v2935
        %v2954 = vmul.f32 %v2914, %v2935
        %v2955 = vmul.f32 %v2915, %v2935
        %v2956 = vmul.f32 %v2916, %v2935
        %v2957 = vmul.f32 %v2917, %v2935
        %v2958 = vmul.f32 %v2918, %v2935
        %v2959 = vmul.f32 %v2919, %v2935
        %v2960 = vmul.f32 %v2920, %v2935
        %v2961 = vmul.f32 %v2921, %v2935
        %v2962 = vmul.f32 %v2922, %v2935
        %v2963 = vmul.f32 %v2923, %v2935
        %v2964 = vmul.f32 %v2924, %v2935
        %v2965 = vmul.f32 %v2925, %v2935
        %v2966 = vmul.f32 %v2926, %v2935
        %v2967 = vmul.f32 %v2927, %v2935
        %v2968 = vmul.f32 %v2928, %v2935
        %v2969 = vsel %vm280, %v2937, 0.0
        %2970 = vadd.xlane.f32.xlu0 %v2969
        %v2971 = vpop.xlane.xlu0 %2970
        %v2972 = vsel %vm280, %v2938, 0.0
        %2973 = vadd.xlane.f32.xlu0 %v2972
        %v2974 = vpop.xlane.xlu0 %2973
        %v2975 = vsel %vm280, %v2939, 0.0
        %2976 = vadd.xlane.f32.xlu0 %v2975
        %v2977 = vpop.xlane.xlu0 %2976
        %v2978 = vsel %vm280, %v2940, 0.0
        %2979 = vadd.xlane.f32.xlu0 %v2978
        %v2980 = vpop.xlane.xlu0 %2979
        %v2981 = vsel %vm280, %v2941, 0.0
        %2982 = vadd.xlane.f32.xlu0 %v2981
        %v2983 = vpop.xlane.xlu0 %2982
        %v2984 = vsel %vm280, %v2942, 0.0
        %2985 = vadd.xlane.f32.xlu0 %v2984
        %v2986 = vpop.xlane.xlu0 %2985
        %v2987 = vsel %vm280, %v2943, 0.0
        %2988 = vadd.xlane.f32.xlu0 %v2987
        %v2989 = vpop.xlane.xlu0 %2988
        %v2990 = vsel %vm280, %v2944, 0.0
        %2991 = vadd.xlane.f32.xlu0 %v2990
        %v2992 = vpop.xlane.xlu0 %2991
        %v2993 = vsel %vm280, %v2945, 0.0
        %2994 = vadd.xlane.f32.xlu0 %v2993
        %v2995 = vpop.xlane.xlu0 %2994
        %v2996 = vsel %vm280, %v2946, 0.0
        %2997 = vadd.xlane.f32.xlu0 %v2996
        %v2998 = vpop.xlane.xlu0 %2997
        %v2999 = vsel %vm280, %v2947, 0.0
        %3000 = vadd.xlane.f32.xlu0 %v2999
        %v3001 = vpop.xlane.xlu0 %3000
        %v3002 = vsel %vm280, %v2948, 0.0
        %3003 = vadd.xlane.f32.xlu0 %v3002
        %v3004 = vpop.xlane.xlu0 %3003
        %v3005 = vsel %vm280, %v2949, 0.0
        %3006 = vadd.xlane.f32.xlu0 %v3005
        %v3007 = vpop.xlane.xlu0 %3006
        %v3008 = vsel %vm280, %v2950, 0.0
        %3009 = vadd.xlane.f32.xlu0 %v3008
        %v3010 = vpop.xlane.xlu0 %3009
        %v3011 = vsel %vm280, %v2951, 0.0
        %3012 = vadd.xlane.f32.xlu0 %v3011
        %v3013 = vpop.xlane.xlu0 %3012
        %v3014 = vsel %vm280, %v2952, 0.0
        %3015 = vadd.xlane.f32.xlu0 %v3014
        %v3016 = vpop.xlane.xlu0 %3015
        %v3017 = vsel %vm280, %v2953, 0.0
        %3018 = vadd.xlane.f32.xlu0 %v3017
        %v3019 = vpop.xlane.xlu0 %3018
        %v3020 = vsel %vm280, %v2954, 0.0
        %3021 = vadd.xlane.f32.xlu0 %v3020
        %v3022 = vpop.xlane.xlu0 %3021
        %v3023 = vsel %vm280, %v2955, 0.0
        %3024 = vadd.xlane.f32.xlu0 %v3023
        %v3025 = vpop.xlane.xlu0 %3024
        %v3026 = vsel %vm280, %v2956, 0.0
        %3027 = vadd.xlane.f32.xlu0 %v3026
        %v3028 = vpop.xlane.xlu0 %3027
        %v3029 = vsel %vm280, %v2957, 0.0
        %3030 = vadd.xlane.f32.xlu0 %v3029
        %v3031 = vpop.xlane.xlu0 %3030
        %v3032 = vsel %vm280, %v2958, 0.0
        %3033 = vadd.xlane.f32.xlu0 %v3032
        %v3034 = vpop.xlane.xlu0 %3033
        %v3035 = vsel %vm280, %v2959, 0.0
        %3036 = vadd.xlane.f32.xlu0 %v3035
        %v3037 = vpop.xlane.xlu0 %3036
        %v3038 = vsel %vm280, %v2960, 0.0
        %3039 = vadd.xlane.f32.xlu0 %v3038
        %v3040 = vpop.xlane.xlu0 %3039
        %v3041 = vsel %vm280, %v2961, 0.0
        %3042 = vadd.xlane.f32.xlu0 %v3041
        %v3043 = vpop.xlane.xlu0 %3042
        %v3044 = vsel %vm280, %v2962, 0.0
        %3045 = vadd.xlane.f32.xlu0 %v3044
        %v3046 = vpop.xlane.xlu0 %3045
        %v3047 = vsel %vm280, %v2963, 0.0
        %3048 = vadd.xlane.f32.xlu0 %v3047
        %v3049 = vpop.xlane.xlu0 %3048
        %v3050 = vsel %vm280, %v2964, 0.0
        %3051 = vadd.xlane.f32.xlu0 %v3050
        %v3052 = vpop.xlane.xlu0 %3051
        %v3053 = vsel %vm280, %v2965, 0.0
        %3054 = vadd.xlane.f32.xlu0 %v3053
        %v3055 = vpop.xlane.xlu0 %3054
        %v3056 = vsel %vm280, %v2966, 0.0
        %3057 = vadd.xlane.f32.xlu0 %v3056
        %v3058 = vpop.xlane.xlu0 %3057
        %v3059 = vsel %vm280, %v2967, 0.0
        %3060 = vadd.xlane.f32.xlu0 %v3059
        %v3061 = vpop.xlane.xlu0 %3060
        %v3062 = vsel %vm280, %v2968, 0.0
        %3063 = vadd.xlane.f32.xlu0 %v3062
        %v3064 = vpop.xlane.xlu0 %3063
        %v3065 = vadd.f32 %v2865, %v2971
        %v3066 = vadd.f32 %v2866, %v2974
        %v3067 = vadd.f32 %v2867, %v2977
        %v3068 = vadd.f32 %v2868, %v2980
        %v3069 = vadd.f32 %v2869, %v2983
        %v3070 = vadd.f32 %v2870, %v2986
        %v3071 = vadd.f32 %v2871, %v2989
        %v3072 = vadd.f32 %v2872, %v2992
        %v3073 = vadd.f32 %v2873, %v2995
        %v3074 = vadd.f32 %v2874, %v2998
        %v3075 = vadd.f32 %v2875, %v3001
        %v3076 = vadd.f32 %v2876, %v3004
        %v3077 = vadd.f32 %v2877, %v3007
        %v3078 = vadd.f32 %v2878, %v3010
        %v3079 = vadd.f32 %v2879, %v3013
        %v3080 = vadd.f32 %v2880, %v3016
        %v3081 = vadd.f32 %v2881, %v3019
        %v3082 = vadd.f32 %v2882, %v3022
        %v3083 = vadd.f32 %v2883, %v3025
        %v3084 = vadd.f32 %v2884, %v3028
        %v3085 = vadd.f32 %v2885, %v3031
        %v3086 = vadd.f32 %v2886, %v3034
        %v3087 = vadd.f32 %v2887, %v3037
        %v3088 = vadd.f32 %v2888, %v3040
        %v3089 = vadd.f32 %v2889, %v3043
        %v3090 = vadd.f32 %v2890, %v3046
        %v3091 = vadd.f32 %v2891, %v3049
        %v3092 = vadd.f32 %v2892, %v3052
        %v3093 = vadd.f32 %v2893, %v3055
        %v3094 = vadd.f32 %v2894, %v3058
        %v3095 = vadd.f32 %v2895, %v3061
        %v3096 = vadd.f32 %v2896, %v3064
        %v3097 = vld [vmem:[#allocation3 + $0x9] sm:$0xff]
        %v3098 = vld [vmem:[#allocation3 + $0x11] sm:$0xff]
        %v3099 = vld [vmem:[#allocation3 + $0x29] sm:$0xff]
        %v3100 = vld [vmem:[#allocation3 + $0x31] sm:$0xff]
        %v3101 = vld [vmem:[#allocation3 + $0x49] sm:$0xff]
        %v3102 = vld [vmem:[#allocation3 + $0x51] sm:$0xff]
        %v3103 = vld [vmem:[#allocation3 + $0x69] sm:$0xff]
        %v3104 = vld [vmem:[#allocation3 + $0x71] sm:$0xff]
        %v3105 = vld [vmem:[#allocation3 + $0x89] sm:$0xff]
        %v3106 = vld [vmem:[#allocation3 + $0x91] sm:$0xff]
        %v3107 = vld [vmem:[#allocation3 + $0xa9] sm:$0xff]
        %v3108 = vld [vmem:[#allocation3 + $0xb1] sm:$0xff]
        %v3109 = vld [vmem:[#allocation3 + $0xc9] sm:$0xff]
        %v3110 = vld [vmem:[#allocation3 + $0xd1] sm:$0xff]
        %v3111 = vld [vmem:[#allocation3 + $0xe9] sm:$0xff]
        %v3112 = vld [vmem:[#allocation3 + $0xf1] sm:$0xff]
        %v3113 = vld [vmem:[#allocation3 + $0x109] sm:$0xff]
        %v3114 = vld [vmem:[#allocation3 + $0x111] sm:$0xff]
        %v3115 = vld [vmem:[#allocation3 + $0x129] sm:$0xff]
        %v3116 = vld [vmem:[#allocation3 + $0x131] sm:$0xff]
        %v3117 = vld [vmem:[#allocation3 + $0x149] sm:$0xff]
        %v3118 = vld [vmem:[#allocation3 + $0x151] sm:$0xff]
        %v3119 = vld [vmem:[#allocation3 + $0x169] sm:$0xff]
        %v3120 = vld [vmem:[#allocation3 + $0x171] sm:$0xff]
        %v3121 = vld [vmem:[#allocation3 + $0x189] sm:$0xff]
        %v3122 = vld [vmem:[#allocation3 + $0x191] sm:$0xff]
        %v3123 = vld [vmem:[#allocation3 + $0x1a9] sm:$0xff]
        %v3124 = vld [vmem:[#allocation3 + $0x1b1] sm:$0xff]
        %v3125 = vld [vmem:[#allocation3 + $0x1c9] sm:$0xff]
        %v3126 = vld [vmem:[#allocation3 + $0x1d1] sm:$0xff]
        %v3127 = vld [vmem:[#allocation3 + $0x1e9] sm:$0xff]
        %v3128 = vld [vmem:[#allocation3 + $0x1f1] sm:$0xff]
        %s3129 = scalar_lea.vmem %s5, 2
        %v3130 = vld [vmem:[%s3129] sm:$0x1]
        %v3132 = vlaneseq
        %v3133 = vshrl.u32 %v3132, 7
        %v3134 = vsub.s32 0, %v3133
        %v3135 = vrot.slane %v3130, %v3134
        %v3137 = vmul.f32 %v3097, %v3135
        %v3138 = vmul.f32 %v3098, %v3135
        %v3139 = vmul.f32 %v3099, %v3135
        %v3140 = vmul.f32 %v3100, %v3135
        %v3141 = vmul.f32 %v3101, %v3135
        %v3142 = vmul.f32 %v3102, %v3135
        %v3143 = vmul.f32 %v3103, %v3135
        %v3144 = vmul.f32 %v3104, %v3135
        %v3145 = vmul.f32 %v3105, %v3135
        %v3146 = vmul.f32 %v3106, %v3135
        %v3147 = vmul.f32 %v3107, %v3135
        %v3148 = vmul.f32 %v3108, %v3135
        %v3149 = vmul.f32 %v3109, %v3135
        %v3150 = vmul.f32 %v3110, %v3135
        %v3151 = vmul.f32 %v3111, %v3135
        %v3152 = vmul.f32 %v3112, %v3135
        %v3153 = vmul.f32 %v3113, %v3135
        %v3154 = vmul.f32 %v3114, %v3135
        %v3155 = vmul.f32 %v3115, %v3135
        %v3156 = vmul.f32 %v3116, %v3135
        %v3157 = vmul.f32 %v3117, %v3135
        %v3158 = vmul.f32 %v3118, %v3135
        %v3159 = vmul.f32 %v3119, %v3135
        %v3160 = vmul.f32 %v3120, %v3135
        %v3161 = vmul.f32 %v3121, %v3135
        %v3162 = vmul.f32 %v3122, %v3135
        %v3163 = vmul.f32 %v3123, %v3135
        %v3164 = vmul.f32 %v3124, %v3135
        %v3165 = vmul.f32 %v3125, %v3135
        %v3166 = vmul.f32 %v3126, %v3135
        %v3167 = vmul.f32 %v3127, %v3135
        %v3168 = vmul.f32 %v3128, %v3135
        %v3169 = vsel %vm280, %v3137, 0.0
        %3170 = vadd.xlane.f32.xlu0 %v3169
        %v3171 = vpop.xlane.xlu0 %3170
        %v3172 = vsel %vm280, %v3138, 0.0
        %3173 = vadd.xlane.f32.xlu0 %v3172
        %v3174 = vpop.xlane.xlu0 %3173
        %v3175 = vsel %vm280, %v3139, 0.0
        %3176 = vadd.xlane.f32.xlu0 %v3175
        %v3177 = vpop.xlane.xlu0 %3176
        %v3178 = vsel %vm280, %v3140, 0.0
        %3179 = vadd.xlane.f32.xlu0 %v3178
        %v3180 = vpop.xlane.xlu0 %3179
        %v3181 = vsel %vm280, %v3141, 0.0
        %3182 = vadd.xlane.f32.xlu0 %v3181
        %v3183 = vpop.xlane.xlu0 %3182
        %v3184 = vsel %vm280, %v3142, 0.0
        %3185 = vadd.xlane.f32.xlu0 %v3184
        %v3186 = vpop.xlane.xlu0 %3185
        %v3187 = vsel %vm280, %v3143, 0.0
        %3188 = vadd.xlane.f32.xlu0 %v3187
        %v3189 = vpop.xlane.xlu0 %3188
        %v3190 = vsel %vm280, %v3144, 0.0
        %3191 = vadd.xlane.f32.xlu0 %v3190
        %v3192 = vpop.xlane.xlu0 %3191
        %v3193 = vsel %vm280, %v3145, 0.0
        %3194 = vadd.xlane.f32.xlu0 %v3193
        %v3195 = vpop.xlane.xlu0 %3194
        %v3196 = vsel %vm280, %v3146, 0.0
        %3197 = vadd.xlane.f32.xlu0 %v3196
        %v3198 = vpop.xlane.xlu0 %3197
        %v3199 = vsel %vm280, %v3147, 0.0
        %3200 = vadd.xlane.f32.xlu0 %v3199
        %v3201 = vpop.xlane.xlu0 %3200
        %v3202 = vsel %vm280, %v3148, 0.0
        %3203 = vadd.xlane.f32.xlu0 %v3202
        %v3204 = vpop.xlane.xlu0 %3203
        %v3205 = vsel %vm280, %v3149, 0.0
        %3206 = vadd.xlane.f32.xlu0 %v3205
        %v3207 = vpop.xlane.xlu0 %3206
        %v3208 = vsel %vm280, %v3150, 0.0
        %3209 = vadd.xlane.f32.xlu0 %v3208
        %v3210 = vpop.xlane.xlu0 %3209
        %v3211 = vsel %vm280, %v3151, 0.0
        %3212 = vadd.xlane.f32.xlu0 %v3211
        %v3213 = vpop.xlane.xlu0 %3212
        %v3214 = vsel %vm280, %v3152, 0.0
        %3215 = vadd.xlane.f32.xlu0 %v3214
        %v3216 = vpop.xlane.xlu0 %3215
        %v3217 = vsel %vm280, %v3153, 0.0
        %3218 = vadd.xlane.f32.xlu0 %v3217
        %v3219 = vpop.xlane.xlu0 %3218
        %v3220 = vsel %vm280, %v3154, 0.0
        %3221 = vadd.xlane.f32.xlu0 %v3220
        %v3222 = vpop.xlane.xlu0 %3221
        %v3223 = vsel %vm280, %v3155, 0.0
        %3224 = vadd.xlane.f32.xlu0 %v3223
        %v3225 = vpop.xlane.xlu0 %3224
        %v3226 = vsel %vm280, %v3156, 0.0
        %3227 = vadd.xlane.f32.xlu0 %v3226
        %v3228 = vpop.xlane.xlu0 %3227
        %v3229 = vsel %vm280, %v3157, 0.0
        %3230 = vadd.xlane.f32.xlu0 %v3229
        %v3231 = vpop.xlane.xlu0 %3230
        %v3232 = vsel %vm280, %v3158, 0.0
        %3233 = vadd.xlane.f32.xlu0 %v3232
        %v3234 = vpop.xlane.xlu0 %3233
        %v3235 = vsel %vm280, %v3159, 0.0
        %3236 = vadd.xlane.f32.xlu0 %v3235
        %v3237 = vpop.xlane.xlu0 %3236
        %v3238 = vsel %vm280, %v3160, 0.0
        %3239 = vadd.xlane.f32.xlu0 %v3238
        %v3240 = vpop.xlane.xlu0 %3239
        %v3241 = vsel %vm280, %v3161, 0.0
        %3242 = vadd.xlane.f32.xlu0 %v3241
        %v3243 = vpop.xlane.xlu0 %3242
        %v3244 = vsel %vm280, %v3162, 0.0
        %3245 = vadd.xlane.f32.xlu0 %v3244
        %v3246 = vpop.xlane.xlu0 %3245
        %v3247 = vsel %vm280, %v3163, 0.0
        %3248 = vadd.xlane.f32.xlu0 %v3247
        %v3249 = vpop.xlane.xlu0 %3248
        %v3250 = vsel %vm280, %v3164, 0.0
        %3251 = vadd.xlane.f32.xlu0 %v3250
        %v3252 = vpop.xlane.xlu0 %3251
        %v3253 = vsel %vm280, %v3165, 0.0
        %3254 = vadd.xlane.f32.xlu0 %v3253
        %v3255 = vpop.xlane.xlu0 %3254
        %v3256 = vsel %vm280, %v3166, 0.0
        %3257 = vadd.xlane.f32.xlu0 %v3256
        %v3258 = vpop.xlane.xlu0 %3257
        %v3259 = vsel %vm280, %v3167, 0.0
        %3260 = vadd.xlane.f32.xlu0 %v3259
        %v3261 = vpop.xlane.xlu0 %3260
        %v3262 = vsel %vm280, %v3168, 0.0
        %3263 = vadd.xlane.f32.xlu0 %v3262
        %v3264 = vpop.xlane.xlu0 %3263
        %v3265 = vadd.f32 %v3065, %v3171
        %v3266 = vadd.f32 %v3066, %v3174
        %v3267 = vadd.f32 %v3067, %v3177
        %v3268 = vadd.f32 %v3068, %v3180
        %v3269 = vadd.f32 %v3069, %v3183
        %v3270 = vadd.f32 %v3070, %v3186
        %v3271 = vadd.f32 %v3071, %v3189
        %v3272 = vadd.f32 %v3072, %v3192
        %v3273 = vadd.f32 %v3073, %v3195
        %v3274 = vadd.f32 %v3074, %v3198
        %v3275 = vadd.f32 %v3075, %v3201
        %v3276 = vadd.f32 %v3076, %v3204
        %v3277 = vadd.f32 %v3077, %v3207
        %v3278 = vadd.f32 %v3078, %v3210
        %v3279 = vadd.f32 %v3079, %v3213
        %v3280 = vadd.f32 %v3080, %v3216
        %v3281 = vadd.f32 %v3081, %v3219
        %v3282 = vadd.f32 %v3082, %v3222
        %v3283 = vadd.f32 %v3083, %v3225
        %v3284 = vadd.f32 %v3084, %v3228
        %v3285 = vadd.f32 %v3085, %v3231
        %v3286 = vadd.f32 %v3086, %v3234
        %v3287 = vadd.f32 %v3087, %v3237
        %v3288 = vadd.f32 %v3088, %v3240
        %v3289 = vadd.f32 %v3089, %v3243
        %v3290 = vadd.f32 %v3090, %v3246
        %v3291 = vadd.f32 %v3091, %v3249
        %v3292 = vadd.f32 %v3092, %v3252
        %v3293 = vadd.f32 %v3093, %v3255
        %v3294 = vadd.f32 %v3094, %v3258
        %v3295 = vadd.f32 %v3095, %v3261
        %v3296 = vadd.f32 %v3096, %v3264
        %v3297 = vld [vmem:[%s332 + $0x7] sm:$0xff]
        %v3298 = vld [vmem:[%s332 + $0xf] sm:$0xff]
        %v3299 = vld [vmem:[%s332 + $0x27] sm:$0xff]
        %v3300 = vld [vmem:[%s332 + $0x2f] sm:$0xff]
        %v3301 = vld [vmem:[%s332 + $0x47] sm:$0xff]
        %v3302 = vld [vmem:[%s332 + $0x4f] sm:$0xff]
        %v3303 = vld [vmem:[%s332 + $0x67] sm:$0xff]
        %v3304 = vld [vmem:[%s332 + $0x6f] sm:$0xff]
        %v3305 = vld [vmem:[%s332 + $0x87] sm:$0xff]
        %v3306 = vld [vmem:[%s332 + $0x8f] sm:$0xff]
        %v3307 = vld [vmem:[%s332 + $0xa7] sm:$0xff]
        %v3308 = vld [vmem:[%s332 + $0xaf] sm:$0xff]
        %v3309 = vld [vmem:[%s332 + $0xc7] sm:$0xff]
        %v3310 = vld [vmem:[%s332 + $0xcf] sm:$0xff]
        %v3311 = vld [vmem:[%s332 + $0xe7] sm:$0xff]
        %v3312 = vld [vmem:[%s332 + $0xef] sm:$0xff]
        %v3313 = vld [vmem:[%s332 + $0x107] sm:$0xff]
        %v3314 = vld [vmem:[%s332 + $0x10f] sm:$0xff]
        %v3315 = vld [vmem:[%s332 + $0x127] sm:$0xff]
        %v3316 = vld [vmem:[%s332 + $0x12f] sm:$0xff]
        %v3317 = vld [vmem:[%s332 + $0x147] sm:$0xff]
        %v3318 = vld [vmem:[%s332 + $0x14f] sm:$0xff]
        %v3319 = vld [vmem:[%s332 + $0x167] sm:$0xff]
        %v3320 = vld [vmem:[%s332 + $0x16f] sm:$0xff]
        %v3321 = vld [vmem:[%s332 + $0x187] sm:$0xff]
        %v3322 = vld [vmem:[%s332 + $0x18f] sm:$0xff]
        %v3323 = vld [vmem:[%s332 + $0x1a7] sm:$0xff]
        %v3324 = vld [vmem:[%s332 + $0x1af] sm:$0xff]
        %v3325 = vld [vmem:[%s332 + $0x1c7] sm:$0xff]
        %v3326 = vld [vmem:[%s332 + $0x1cf] sm:$0xff]
        %v3327 = vld [vmem:[%s332 + $0x1e7] sm:$0xff]
        %v3328 = vld [vmem:[%s332 + $0x1ef] sm:$0xff]
        %s3329 = scalar_lea.vmem %s5, 3
        %v3330 = vld [vmem:[%s3329] sm:$0x1]
        %v3332 = vlaneseq
        %v3333 = vshrl.u32 %v3332, 7
        %v3334 = vsub.s32 0, %v3333
        %v3335 = vrot.slane %v3330, %v3334
        %v3337 = vmul.f32 %v3297, %v3335
        %v3338 = vmul.f32 %v3298, %v3335
        %v3339 = vmul.f32 %v3299, %v3335
        %v3340 = vmul.f32 %v3300, %v3335
        %v3341 = vmul.f32 %v3301, %v3335
        %v3342 = vmul.f32 %v3302, %v3335
        %v3343 = vmul.f32 %v3303, %v3335
        %v3344 = vmul.f32 %v3304, %v3335
        %v3345 = vmul.f32 %v3305, %v3335
        %v3346 = vmul.f32 %v3306, %v3335
        %v3347 = vmul.f32 %v3307, %v3335
        %v3348 = vmul.f32 %v3308, %v3335
        %v3349 = vmul.f32 %v3309, %v3335
        %v3350 = vmul.f32 %v3310, %v3335
        %v3351 = vmul.f32 %v3311, %v3335
        %v3352 = vmul.f32 %v3312, %v3335
        %v3353 = vmul.f32 %v3313, %v3335
        %v3354 = vmul.f32 %v3314, %v3335
        %v3355 = vmul.f32 %v3315, %v3335
        %v3356 = vmul.f32 %v3316, %v3335
        %v3357 = vmul.f32 %v3317, %v3335
        %v3358 = vmul.f32 %v3318, %v3335
        %v3359 = vmul.f32 %v3319, %v3335
        %v3360 = vmul.f32 %v3320, %v3335
        %v3361 = vmul.f32 %v3321, %v3335
        %v3362 = vmul.f32 %v3322, %v3335
        %v3363 = vmul.f32 %v3323, %v3335
        %v3364 = vmul.f32 %v3324, %v3335
        %v3365 = vmul.f32 %v3325, %v3335
        %v3366 = vmul.f32 %v3326, %v3335
        %v3367 = vmul.f32 %v3327, %v3335
        %v3368 = vmul.f32 %v3328, %v3335
        %v3369 = vsel %vm280, %v3337, 0.0
        %3370 = vadd.xlane.f32.xlu0 %v3369
        %v3371 = vpop.xlane.xlu0 %3370
        %v3372 = vsel %vm280, %v3338, 0.0
        %3373 = vadd.xlane.f32.xlu0 %v3372
        %v3374 = vpop.xlane.xlu0 %3373
        %v3375 = vsel %vm280, %v3339, 0.0
        %3376 = vadd.xlane.f32.xlu0 %v3375
        %v3377 = vpop.xlane.xlu0 %3376
        %v3378 = vsel %vm280, %v3340, 0.0
        %3379 = vadd.xlane.f32.xlu0 %v3378
        %v3380 = vpop.xlane.xlu0 %3379
        %v3381 = vsel %vm280, %v3341, 0.0
        %3382 = vadd.xlane.f32.xlu0 %v3381
        %v3383 = vpop.xlane.xlu0 %3382
        %v3384 = vsel %vm280, %v3342, 0.0
        %3385 = vadd.xlane.f32.xlu0 %v3384
        %v3386 = vpop.xlane.xlu0 %3385
        %v3387 = vsel %vm280, %v3343, 0.0
        %3388 = vadd.xlane.f32.xlu0 %v3387
        %v3389 = vpop.xlane.xlu0 %3388
        %v3390 = vsel %vm280, %v3344, 0.0
        %3391 = vadd.xlane.f32.xlu0 %v3390
        %v3392 = vpop.xlane.xlu0 %3391
        %v3393 = vsel %vm280, %v3345, 0.0
        %3394 = vadd.xlane.f32.xlu0 %v3393
        %v3395 = vpop.xlane.xlu0 %3394
        %v3396 = vsel %vm280, %v3346, 0.0
        %3397 = vadd.xlane.f32.xlu0 %v3396
        %v3398 = vpop.xlane.xlu0 %3397
        %v3399 = vsel %vm280, %v3347, 0.0
        %3400 = vadd.xlane.f32.xlu0 %v3399
        %v3401 = vpop.xlane.xlu0 %3400
        %v3402 = vsel %vm280, %v3348, 0.0
        %3403 = vadd.xlane.f32.xlu0 %v3402
        %v3404 = vpop.xlane.xlu0 %3403
        %v3405 = vsel %vm280, %v3349, 0.0
        %3406 = vadd.xlane.f32.xlu0 %v3405
        %v3407 = vpop.xlane.xlu0 %3406
        %v3408 = vsel %vm280, %v3350, 0.0
        %3409 = vadd.xlane.f32.xlu0 %v3408
        %v3410 = vpop.xlane.xlu0 %3409
        %v3411 = vsel %vm280, %v3351, 0.0
        %3412 = vadd.xlane.f32.xlu0 %v3411
        %v3413 = vpop.xlane.xlu0 %3412
        %v3414 = vsel %vm280, %v3352, 0.0
        %3415 = vadd.xlane.f32.xlu0 %v3414
        %v3416 = vpop.xlane.xlu0 %3415
        %v3417 = vsel %vm280, %v3353, 0.0
        %3418 = vadd.xlane.f32.xlu0 %v3417
        %v3419 = vpop.xlane.xlu0 %3418
        %v3420 = vsel %vm280, %v3354, 0.0
        %3421 = vadd.xlane.f32.xlu0 %v3420
        %v3422 = vpop.xlane.xlu0 %3421
        %v3423 = vsel %vm280, %v3355, 0.0
        %3424 = vadd.xlane.f32.xlu0 %v3423
        %v3425 = vpop.xlane.xlu0 %3424
        %v3426 = vsel %vm280, %v3356, 0.0
        %3427 = vadd.xlane.f32.xlu0 %v3426
        %v3428 = vpop.xlane.xlu0 %3427
        %v3429 = vsel %vm280, %v3357, 0.0
        %3430 = vadd.xlane.f32.xlu0 %v3429
        %v3431 = vpop.xlane.xlu0 %3430
        %v3432 = vsel %vm280, %v3358, 0.0
        %3433 = vadd.xlane.f32.xlu0 %v3432
        %v3434 = vpop.xlane.xlu0 %3433
        %v3435 = vsel %vm280, %v3359, 0.0
        %3436 = vadd.xlane.f32.xlu0 %v3435
        %v3437 = vpop.xlane.xlu0 %3436
        %v3438 = vsel %vm280, %v3360, 0.0
        %3439 = vadd.xlane.f32.xlu0 %v3438
        %v3440 = vpop.xlane.xlu0 %3439
        %v3441 = vsel %vm280, %v3361, 0.0
        %3442 = vadd.xlane.f32.xlu0 %v3441
        %v3443 = vpop.xlane.xlu0 %3442
        %v3444 = vsel %vm280, %v3362, 0.0
        %3445 = vadd.xlane.f32.xlu0 %v3444
        %v3446 = vpop.xlane.xlu0 %3445
        %v3447 = vsel %vm280, %v3363, 0.0
        %3448 = vadd.xlane.f32.xlu0 %v3447
        %v3449 = vpop.xlane.xlu0 %3448
        %v3450 = vsel %vm280, %v3364, 0.0
        %3451 = vadd.xlane.f32.xlu0 %v3450
        %v3452 = vpop.xlane.xlu0 %3451
        %v3453 = vsel %vm280, %v3365, 0.0
        %3454 = vadd.xlane.f32.xlu0 %v3453
        %v3455 = vpop.xlane.xlu0 %3454
        %v3456 = vsel %vm280, %v3366, 0.0
        %3457 = vadd.xlane.f32.xlu0 %v3456
        %v3458 = vpop.xlane.xlu0 %3457
        %v3459 = vsel %vm280, %v3367, 0.0
        %3460 = vadd.xlane.f32.xlu0 %v3459
        %v3461 = vpop.xlane.xlu0 %3460
        %v3462 = vsel %vm280, %v3368, 0.0
        %3463 = vadd.xlane.f32.xlu0 %v3462
        %v3464 = vpop.xlane.xlu0 %3463
        %v3465 = vadd.f32 %v3265, %v3371
        %v3466 = vadd.f32 %v3266, %v3374
        %v3467 = vadd.f32 %v3267, %v3377
        %v3468 = vadd.f32 %v3268, %v3380
        %v3469 = vadd.f32 %v3269, %v3383
        %v3470 = vadd.f32 %v3270, %v3386
        %v3471 = vadd.f32 %v3271, %v3389
        %v3472 = vadd.f32 %v3272, %v3392
        %v3473 = vadd.f32 %v3273, %v3395
        %v3474 = vadd.f32 %v3274, %v3398
        %v3475 = vadd.f32 %v3275, %v3401
        %v3476 = vadd.f32 %v3276, %v3404
        %v3477 = vadd.f32 %v3277, %v3407
        %v3478 = vadd.f32 %v3278, %v3410
        %v3479 = vadd.f32 %v3279, %v3413
        %v3480 = vadd.f32 %v3280, %v3416
        %v3481 = vadd.f32 %v3281, %v3419
        %v3482 = vadd.f32 %v3282, %v3422
        %v3483 = vadd.f32 %v3283, %v3425
        %v3484 = vadd.f32 %v3284, %v3428
        %v3485 = vadd.f32 %v3285, %v3431
        %v3486 = vadd.f32 %v3286, %v3434
        %v3487 = vadd.f32 %v3287, %v3437
        %v3488 = vadd.f32 %v3288, %v3440
        %v3489 = vadd.f32 %v3289, %v3443
        %v3490 = vadd.f32 %v3290, %v3446
        %v3491 = vadd.f32 %v3291, %v3449
        %v3492 = vadd.f32 %v3292, %v3452
        %v3493 = vadd.f32 %v3293, %v3455
        %v3494 = vadd.f32 %v3294, %v3458
        %v3495 = vadd.f32 %v3295, %v3461
        %v3496 = vadd.f32 %v3296, %v3464
        %v3497 = vld [vmem:[%s332 + $0x8] sm:$0xff]
        %v3498 = vld [vmem:[%s332 + $0x10] sm:$0xff]
        %v3499 = vld [vmem:[%s332 + $0x28] sm:$0xff]
        %v3500 = vld [vmem:[%s332 + $0x30] sm:$0xff]
        %v3501 = vld [vmem:[%s332 + $0x48] sm:$0xff]
        %v3502 = vld [vmem:[%s332 + $0x50] sm:$0xff]
        %v3503 = vld [vmem:[%s332 + $0x68] sm:$0xff]
        %v3504 = vld [vmem:[%s332 + $0x70] sm:$0xff]
        %v3505 = vld [vmem:[%s332 + $0x88] sm:$0xff]
        %v3506 = vld [vmem:[%s332 + $0x90] sm:$0xff]
        %v3507 = vld [vmem:[%s332 + $0xa8] sm:$0xff]
        %v3508 = vld [vmem:[%s332 + $0xb0] sm:$0xff]
        %v3509 = vld [vmem:[%s332 + $0xc8] sm:$0xff]
        %v3510 = vld [vmem:[%s332 + $0xd0] sm:$0xff]
        %v3511 = vld [vmem:[%s332 + $0xe8] sm:$0xff]
        %v3512 = vld [vmem:[%s332 + $0xf0] sm:$0xff]
        %v3513 = vld [vmem:[%s332 + $0x108] sm:$0xff]
        %v3514 = vld [vmem:[%s332 + $0x110] sm:$0xff]
        %v3515 = vld [vmem:[%s332 + $0x128] sm:$0xff]
        %v3516 = vld [vmem:[%s332 + $0x130] sm:$0xff]
        %v3517 = vld [vmem:[%s332 + $0x148] sm:$0xff]
        %v3518 = vld [vmem:[%s332 + $0x150] sm:$0xff]
        %v3519 = vld [vmem:[%s332 + $0x168] sm:$0xff]
        %v3520 = vld [vmem:[%s332 + $0x170] sm:$0xff]
        %v3521 = vld [vmem:[%s332 + $0x188] sm:$0xff]
        %v3522 = vld [vmem:[%s332 + $0x190] sm:$0xff]
        %v3523 = vld [vmem:[%s332 + $0x1a8] sm:$0xff]
        %v3524 = vld [vmem:[%s332 + $0x1b0] sm:$0xff]
        %v3525 = vld [vmem:[%s332 + $0x1c8] sm:$0xff]
        %v3526 = vld [vmem:[%s332 + $0x1d0] sm:$0xff]
        %v3527 = vld [vmem:[%s332 + $0x1e8] sm:$0xff]
        %v3528 = vld [vmem:[%s332 + $0x1f0] sm:$0xff]
        %s3529 = scalar_lea.vmem %s5, 4
        %v3530 = vld [vmem:[%s3529] sm:$0x1]
        %v3532 = vlaneseq
        %v3533 = vshrl.u32 %v3532, 7
        %v3534 = vsub.s32 0, %v3533
        %v3535 = vrot.slane %v3530, %v3534
        %v3537 = vmul.f32 %v3497, %v3535
        %v3538 = vmul.f32 %v3498, %v3535
        %v3539 = vmul.f32 %v3499, %v3535
        %v3540 = vmul.f32 %v3500, %v3535
        %v3541 = vmul.f32 %v3501, %v3535
        %v3542 = vmul.f32 %v3502, %v3535
        %v3543 = vmul.f32 %v3503, %v3535
        %v3544 = vmul.f32 %v3504, %v3535
        %v3545 = vmul.f32 %v3505, %v3535
        %v3546 = vmul.f32 %v3506, %v3535
        %v3547 = vmul.f32 %v3507, %v3535
        %v3548 = vmul.f32 %v3508, %v3535
        %v3549 = vmul.f32 %v3509, %v3535
        %v3550 = vmul.f32 %v3510, %v3535
        %v3551 = vmul.f32 %v3511, %v3535
        %v3552 = vmul.f32 %v3512, %v3535
        %v3553 = vmul.f32 %v3513, %v3535
        %v3554 = vmul.f32 %v3514, %v3535
        %v3555 = vmul.f32 %v3515, %v3535
        %v3556 = vmul.f32 %v3516, %v3535
        %v3557 = vmul.f32 %v3517, %v3535
        %v3558 = vmul.f32 %v3518, %v3535
        %v3559 = vmul.f32 %v3519, %v3535
        %v3560 = vmul.f32 %v3520, %v3535
        %v3561 = vmul.f32 %v3521, %v3535
        %v3562 = vmul.f32 %v3522, %v3535
        %v3563 = vmul.f32 %v3523, %v3535
        %v3564 = vmul.f32 %v3524, %v3535
        %v3565 = vmul.f32 %v3525, %v3535
        %v3566 = vmul.f32 %v3526, %v3535
        %v3567 = vmul.f32 %v3527, %v3535
        %v3568 = vmul.f32 %v3528, %v3535
        %v3569 = vsel %vm280, %v3537, 0.0
        %3570 = vadd.xlane.f32.xlu0 %v3569
        %v3571 = vpop.xlane.xlu0 %3570
        %v3572 = vsel %vm280, %v3538, 0.0
        %3573 = vadd.xlane.f32.xlu0 %v3572
        %v3574 = vpop.xlane.xlu0 %3573
        %v3575 = vsel %vm280, %v3539, 0.0
        %3576 = vadd.xlane.f32.xlu0 %v3575
        %v3577 = vpop.xlane.xlu0 %3576
        %v3578 = vsel %vm280, %v3540, 0.0
        %3579 = vadd.xlane.f32.xlu0 %v3578
        %v3580 = vpop.xlane.xlu0 %3579
        %v3581 = vsel %vm280, %v3541, 0.0
        %3582 = vadd.xlane.f32.xlu0 %v3581
        %v3583 = vpop.xlane.xlu0 %3582
        %v3584 = vsel %vm280, %v3542, 0.0
        %3585 = vadd.xlane.f32.xlu0 %v3584
        %v3586 = vpop.xlane.xlu0 %3585
        %v3587 = vsel %vm280, %v3543, 0.0
        %3588 = vadd.xlane.f32.xlu0 %v3587
        %v3589 = vpop.xlane.xlu0 %3588
        %v3590 = vsel %vm280, %v3544, 0.0
        %3591 = vadd.xlane.f32.xlu0 %v3590
        %v3592 = vpop.xlane.xlu0 %3591
        %v3593 = vsel %vm280, %v3545, 0.0
        %3594 = vadd.xlane.f32.xlu0 %v3593
        %v3595 = vpop.xlane.xlu0 %3594
        %v3596 = vsel %vm280, %v3546, 0.0
        %3597 = vadd.xlane.f32.xlu0 %v3596
        %v3598 = vpop.xlane.xlu0 %3597
        %v3599 = vsel %vm280, %v3547, 0.0
        %3600 = vadd.xlane.f32.xlu0 %v3599
        %v3601 = vpop.xlane.xlu0 %3600
        %v3602 = vsel %vm280, %v3548, 0.0
        %3603 = vadd.xlane.f32.xlu0 %v3602
        %v3604 = vpop.xlane.xlu0 %3603
        %v3605 = vsel %vm280, %v3549, 0.0
        %3606 = vadd.xlane.f32.xlu0 %v3605
        %v3607 = vpop.xlane.xlu0 %3606
        %v3608 = vsel %vm280, %v3550, 0.0
        %3609 = vadd.xlane.f32.xlu0 %v3608
        %v3610 = vpop.xlane.xlu0 %3609
        %v3611 = vsel %vm280, %v3551, 0.0
        %3612 = vadd.xlane.f32.xlu0 %v3611
        %v3613 = vpop.xlane.xlu0 %3612
        %v3614 = vsel %vm280, %v3552, 0.0
        %3615 = vadd.xlane.f32.xlu0 %v3614
        %v3616 = vpop.xlane.xlu0 %3615
        %v3617 = vsel %vm280, %v3553, 0.0
        %3618 = vadd.xlane.f32.xlu0 %v3617
        %v3619 = vpop.xlane.xlu0 %3618
        %v3620 = vsel %vm280, %v3554, 0.0
        %3621 = vadd.xlane.f32.xlu0 %v3620
        %v3622 = vpop.xlane.xlu0 %3621
        %v3623 = vsel %vm280, %v3555, 0.0
        %3624 = vadd.xlane.f32.xlu0 %v3623
        %v3625 = vpop.xlane.xlu0 %3624
        %v3626 = vsel %vm280, %v3556, 0.0
        %3627 = vadd.xlane.f32.xlu0 %v3626
        %v3628 = vpop.xlane.xlu0 %3627
        %v3629 = vsel %vm280, %v3557, 0.0
        %3630 = vadd.xlane.f32.xlu0 %v3629
        %v3631 = vpop.xlane.xlu0 %3630
        %v3632 = vsel %vm280, %v3558, 0.0
        %3633 = vadd.xlane.f32.xlu0 %v3632
        %v3634 = vpop.xlane.xlu0 %3633
        %v3635 = vsel %vm280, %v3559, 0.0
        %3636 = vadd.xlane.f32.xlu0 %v3635
        %v3637 = vpop.xlane.xlu0 %3636
        %v3638 = vsel %vm280, %v3560, 0.0
        %3639 = vadd.xlane.f32.xlu0 %v3638
        %v3640 = vpop.xlane.xlu0 %3639
        %v3641 = vsel %vm280, %v3561, 0.0
        %3642 = vadd.xlane.f32.xlu0 %v3641
        %v3643 = vpop.xlane.xlu0 %3642
        %v3644 = vsel %vm280, %v3562, 0.0
        %3645 = vadd.xlane.f32.xlu0 %v3644
        %v3646 = vpop.xlane.xlu0 %3645
        %v3647 = vsel %vm280, %v3563, 0.0
        %3648 = vadd.xlane.f32.xlu0 %v3647
        %v3649 = vpop.xlane.xlu0 %3648
        %v3650 = vsel %vm280, %v3564, 0.0
        %3651 = vadd.xlane.f32.xlu0 %v3650
        %v3652 = vpop.xlane.xlu0 %3651
        %v3653 = vsel %vm280, %v3565, 0.0
        %3654 = vadd.xlane.f32.xlu0 %v3653
        %v3655 = vpop.xlane.xlu0 %3654
        %v3656 = vsel %vm280, %v3566, 0.0
        %3657 = vadd.xlane.f32.xlu0 %v3656
        %v3658 = vpop.xlane.xlu0 %3657
        %v3659 = vsel %vm280, %v3567, 0.0
        %3660 = vadd.xlane.f32.xlu0 %v3659
        %v3661 = vpop.xlane.xlu0 %3660
        %v3662 = vsel %vm280, %v3568, 0.0
        %3663 = vadd.xlane.f32.xlu0 %v3662
        %v3664 = vpop.xlane.xlu0 %3663
        %v3665 = vadd.f32 %v3465, %v3571
        %v3666 = vadd.f32 %v3466, %v3574
        %v3667 = vadd.f32 %v3467, %v3577
        %v3668 = vadd.f32 %v3468, %v3580
        %v3669 = vadd.f32 %v3469, %v3583
        %v3670 = vadd.f32 %v3470, %v3586
        %v3671 = vadd.f32 %v3471, %v3589
        %v3672 = vadd.f32 %v3472, %v3592
        %v3673 = vadd.f32 %v3473, %v3595
        %v3674 = vadd.f32 %v3474, %v3598
        %v3675 = vadd.f32 %v3475, %v3601
        %v3676 = vadd.f32 %v3476, %v3604
        %v3677 = vadd.f32 %v3477, %v3607
        %v3678 = vadd.f32 %v3478, %v3610
        %v3679 = vadd.f32 %v3479, %v3613
        %v3680 = vadd.f32 %v3480, %v3616
        %v3681 = vadd.f32 %v3481, %v3619
        %v3682 = vadd.f32 %v3482, %v3622
        %v3683 = vadd.f32 %v3483, %v3625
        %v3684 = vadd.f32 %v3484, %v3628
        %v3685 = vadd.f32 %v3485, %v3631
        %v3686 = vadd.f32 %v3486, %v3634
        %v3687 = vadd.f32 %v3487, %v3637
        %v3688 = vadd.f32 %v3488, %v3640
        %v3689 = vadd.f32 %v3489, %v3643
        %v3690 = vadd.f32 %v3490, %v3646
        %v3691 = vadd.f32 %v3491, %v3649
        %v3692 = vadd.f32 %v3492, %v3652
        %v3693 = vadd.f32 %v3493, %v3655
        %v3694 = vadd.f32 %v3494, %v3658
        %v3695 = vadd.f32 %v3495, %v3661
        %v3696 = vadd.f32 %v3496, %v3664
        %v3697 = vld [vmem:[%s332 + $0x9] sm:$0xff]
        %v3698 = vld [vmem:[%s332 + $0x11] sm:$0xff]
        %v3699 = vld [vmem:[%s332 + $0x29] sm:$0xff]
        %v3700 = vld [vmem:[%s332 + $0x31] sm:$0xff]
        %v3701 = vld [vmem:[%s332 + $0x49] sm:$0xff]
        %v3702 = vld [vmem:[%s332 + $0x51] sm:$0xff]
        %v3703 = vld [vmem:[%s332 + $0x69] sm:$0xff]
        %v3704 = vld [vmem:[%s332 + $0x71] sm:$0xff]
        %v3705 = vld [vmem:[%s332 + $0x89] sm:$0xff]
        %v3706 = vld [vmem:[%s332 + $0x91] sm:$0xff]
        %v3707 = vld [vmem:[%s332 + $0xa9] sm:$0xff]
        %v3708 = vld [vmem:[%s332 + $0xb1] sm:$0xff]
        %v3709 = vld [vmem:[%s332 + $0xc9] sm:$0xff]
        %v3710 = vld [vmem:[%s332 + $0xd1] sm:$0xff]
        %v3711 = vld [vmem:[%s332 + $0xe9] sm:$0xff]
        %v3712 = vld [vmem:[%s332 + $0xf1] sm:$0xff]
        %v3713 = vld [vmem:[%s332 + $0x109] sm:$0xff]
        %v3714 = vld [vmem:[%s332 + $0x111] sm:$0xff]
        %v3715 = vld [vmem:[%s332 + $0x129] sm:$0xff]
        %v3716 = vld [vmem:[%s332 + $0x131] sm:$0xff]
        %v3717 = vld [vmem:[%s332 + $0x149] sm:$0xff]
        %v3718 = vld [vmem:[%s332 + $0x151] sm:$0xff]
        %v3719 = vld [vmem:[%s332 + $0x169] sm:$0xff]
        %v3720 = vld [vmem:[%s332 + $0x171] sm:$0xff]
        %v3721 = vld [vmem:[%s332 + $0x189] sm:$0xff]
        %v3722 = vld [vmem:[%s332 + $0x191] sm:$0xff]
        %v3723 = vld [vmem:[%s332 + $0x1a9] sm:$0xff]
        %v3724 = vld [vmem:[%s332 + $0x1b1] sm:$0xff]
        %v3725 = vld [vmem:[%s332 + $0x1c9] sm:$0xff]
        %v3726 = vld [vmem:[%s332 + $0x1d1] sm:$0xff]
        %v3727 = vld [vmem:[%s332 + $0x1e9] sm:$0xff]
        %v3728 = vld [vmem:[%s332 + $0x1f1] sm:$0xff]
        %s3729 = scalar_lea.vmem %s5, 5
        %v3730 = vld [vmem:[%s3729] sm:$0x1]
        %v3732 = vlaneseq
        %v3733 = vshrl.u32 %v3732, 7
        %v3734 = vsub.s32 0, %v3733
        %v3735 = vrot.slane %v3730, %v3734
        %v3737 = vmul.f32 %v3697, %v3735
        %v3738 = vmul.f32 %v3698, %v3735
        %v3739 = vmul.f32 %v3699, %v3735
        %v3740 = vmul.f32 %v3700, %v3735
        %v3741 = vmul.f32 %v3701, %v3735
        %v3742 = vmul.f32 %v3702, %v3735
        %v3743 = vmul.f32 %v3703, %v3735
        %v3744 = vmul.f32 %v3704, %v3735
        %v3745 = vmul.f32 %v3705, %v3735
        %v3746 = vmul.f32 %v3706, %v3735
        %v3747 = vmul.f32 %v3707, %v3735
        %v3748 = vmul.f32 %v3708, %v3735
        %v3749 = vmul.f32 %v3709, %v3735
        %v3750 = vmul.f32 %v3710, %v3735
        %v3751 = vmul.f32 %v3711, %v3735
        %v3752 = vmul.f32 %v3712, %v3735
        %v3753 = vmul.f32 %v3713, %v3735
        %v3754 = vmul.f32 %v3714, %v3735
        %v3755 = vmul.f32 %v3715, %v3735
        %v3756 = vmul.f32 %v3716, %v3735
        %v3757 = vmul.f32 %v3717, %v3735
        %v3758 = vmul.f32 %v3718, %v3735
        %v3759 = vmul.f32 %v3719, %v3735
        %v3760 = vmul.f32 %v3720, %v3735
        %v3761 = vmul.f32 %v3721, %v3735
        %v3762 = vmul.f32 %v3722, %v3735
        %v3763 = vmul.f32 %v3723, %v3735
        %v3764 = vmul.f32 %v3724, %v3735
        %v3765 = vmul.f32 %v3725, %v3735
        %v3766 = vmul.f32 %v3726, %v3735
        %v3767 = vmul.f32 %v3727, %v3735
        %v3768 = vmul.f32 %v3728, %v3735
        %v3769 = vsel %vm280, %v3737, 0.0
        %3770 = vadd.xlane.f32.xlu0 %v3769
        %v3771 = vpop.xlane.xlu0 %3770
        %v3772 = vsel %vm280, %v3738, 0.0
        %3773 = vadd.xlane.f32.xlu0 %v3772
        %v3774 = vpop.xlane.xlu0 %3773
        %v3775 = vsel %vm280, %v3739, 0.0
        %3776 = vadd.xlane.f32.xlu0 %v3775
        %v3777 = vpop.xlane.xlu0 %3776
        %v3778 = vsel %vm280, %v3740, 0.0
        %3779 = vadd.xlane.f32.xlu0 %v3778
        %v3780 = vpop.xlane.xlu0 %3779
        %v3781 = vsel %vm280, %v3741, 0.0
        %3782 = vadd.xlane.f32.xlu0 %v3781
        %v3783 = vpop.xlane.xlu0 %3782
        %v3784 = vsel %vm280, %v3742, 0.0
        %3785 = vadd.xlane.f32.xlu0 %v3784
        %v3786 = vpop.xlane.xlu0 %3785
        %v3787 = vsel %vm280, %v3743, 0.0
        %3788 = vadd.xlane.f32.xlu0 %v3787
        %v3789 = vpop.xlane.xlu0 %3788
        %v3790 = vsel %vm280, %v3744, 0.0
        %3791 = vadd.xlane.f32.xlu0 %v3790
        %v3792 = vpop.xlane.xlu0 %3791
        %v3793 = vsel %vm280, %v3745, 0.0
        %3794 = vadd.xlane.f32.xlu0 %v3793
        %v3795 = vpop.xlane.xlu0 %3794
        %v3796 = vsel %vm280, %v3746, 0.0
        %3797 = vadd.xlane.f32.xlu0 %v3796
        %v3798 = vpop.xlane.xlu0 %3797
        %v3799 = vsel %vm280, %v3747, 0.0
        %3800 = vadd.xlane.f32.xlu0 %v3799
        %v3801 = vpop.xlane.xlu0 %3800
        %v3802 = vsel %vm280, %v3748, 0.0
        %3803 = vadd.xlane.f32.xlu0 %v3802
        %v3804 = vpop.xlane.xlu0 %3803
        %v3805 = vsel %vm280, %v3749, 0.0
        %3806 = vadd.xlane.f32.xlu0 %v3805
        %v3807 = vpop.xlane.xlu0 %3806
        %v3808 = vsel %vm280, %v3750, 0.0
        %3809 = vadd.xlane.f32.xlu0 %v3808
        %v3810 = vpop.xlane.xlu0 %3809
        %v3811 = vsel %vm280, %v3751, 0.0
        %3812 = vadd.xlane.f32.xlu0 %v3811
        %v3813 = vpop.xlane.xlu0 %3812
        %v3814 = vsel %vm280, %v3752, 0.0
        %3815 = vadd.xlane.f32.xlu0 %v3814
        %v3816 = vpop.xlane.xlu0 %3815
        %v3817 = vsel %vm280, %v3753, 0.0
        %3818 = vadd.xlane.f32.xlu0 %v3817
        %v3819 = vpop.xlane.xlu0 %3818
        %v3820 = vsel %vm280, %v3754, 0.0
        %3821 = vadd.xlane.f32.xlu0 %v3820
        %v3822 = vpop.xlane.xlu0 %3821
        %v3823 = vsel %vm280, %v3755, 0.0
        %3824 = vadd.xlane.f32.xlu0 %v3823
        %v3825 = vpop.xlane.xlu0 %3824
        %v3826 = vsel %vm280, %v3756, 0.0
        %3827 = vadd.xlane.f32.xlu0 %v3826
        %v3828 = vpop.xlane.xlu0 %3827
        %v3829 = vsel %vm280, %v3757, 0.0
        %3830 = vadd.xlane.f32.xlu0 %v3829
        %v3831 = vpop.xlane.xlu0 %3830
        %v3832 = vsel %vm280, %v3758, 0.0
        %3833 = vadd.xlane.f32.xlu0 %v3832
        %v3834 = vpop.xlane.xlu0 %3833
        %v3835 = vsel %vm280, %v3759, 0.0
        %3836 = vadd.xlane.f32.xlu0 %v3835
        %v3837 = vpop.xlane.xlu0 %3836
        %v3838 = vsel %vm280, %v3760, 0.0
        %3839 = vadd.xlane.f32.xlu0 %v3838
        %v3840 = vpop.xlane.xlu0 %3839
        %v3841 = vsel %vm280, %v3761, 0.0
        %3842 = vadd.xlane.f32.xlu0 %v3841
        %v3843 = vpop.xlane.xlu0 %3842
        %v3844 = vsel %vm280, %v3762, 0.0
        %3845 = vadd.xlane.f32.xlu0 %v3844
        %v3846 = vpop.xlane.xlu0 %3845
        %v3847 = vsel %vm280, %v3763, 0.0
        %3848 = vadd.xlane.f32.xlu0 %v3847
        %v3849 = vpop.xlane.xlu0 %3848
        %v3850 = vsel %vm280, %v3764, 0.0
        %3851 = vadd.xlane.f32.xlu0 %v3850
        %v3852 = vpop.xlane.xlu0 %3851
        %v3853 = vsel %vm280, %v3765, 0.0
        %3854 = vadd.xlane.f32.xlu0 %v3853
        %v3855 = vpop.xlane.xlu0 %3854
        %v3856 = vsel %vm280, %v3766, 0.0
        %3857 = vadd.xlane.f32.xlu0 %v3856
        %v3858 = vpop.xlane.xlu0 %3857
        %v3859 = vsel %vm280, %v3767, 0.0
        %3860 = vadd.xlane.f32.xlu0 %v3859
        %v3861 = vpop.xlane.xlu0 %3860
        %v3862 = vsel %vm280, %v3768, 0.0
        %3863 = vadd.xlane.f32.xlu0 %v3862
        %v3864 = vpop.xlane.xlu0 %3863
        %v3865 = vadd.f32 %v3665, %v3771
        %v3866 = vadd.f32 %v3666, %v3774
        %v3867 = vadd.f32 %v3667, %v3777
        %v3868 = vadd.f32 %v3668, %v3780
        %v3869 = vadd.f32 %v3669, %v3783
        %v3870 = vadd.f32 %v3670, %v3786
        %v3871 = vadd.f32 %v3671, %v3789
        %v3872 = vadd.f32 %v3672, %v3792
        %v3873 = vadd.f32 %v3673, %v3795
        %v3874 = vadd.f32 %v3674, %v3798
        %v3875 = vadd.f32 %v3675, %v3801
        %v3876 = vadd.f32 %v3676, %v3804
        %v3877 = vadd.f32 %v3677, %v3807
        %v3878 = vadd.f32 %v3678, %v3810
        %v3879 = vadd.f32 %v3679, %v3813
        %v3880 = vadd.f32 %v3680, %v3816
        %v3881 = vadd.f32 %v3681, %v3819
        %v3882 = vadd.f32 %v3682, %v3822
        %v3883 = vadd.f32 %v3683, %v3825
        %v3884 = vadd.f32 %v3684, %v3828
        %v3885 = vadd.f32 %v3685, %v3831
        %v3886 = vadd.f32 %v3686, %v3834
        %v3887 = vadd.f32 %v3687, %v3837
        %v3888 = vadd.f32 %v3688, %v3840
        %v3889 = vadd.f32 %v3689, %v3843
        %v3890 = vadd.f32 %v3690, %v3846
        %v3891 = vadd.f32 %v3691, %v3849
        %v3892 = vadd.f32 %v3692, %v3852
        %v3893 = vadd.f32 %v3693, %v3855
        %v3894 = vadd.f32 %v3694, %v3858
        %v3895 = vadd.f32 %v3695, %v3861
        %v3896 = vadd.f32 %v3696, %v3864
        %s3897 = scalar_lea.vmem [#allocation3], 64
        %v3898 = vld [vmem:[%s3897 + $0x7] sm:$0xff]
        %v3899 = vld [vmem:[%s3897 + $0xf] sm:$0xff]
        %v3900 = vld [vmem:[%s3897 + $0x27] sm:$0xff]
        %v3901 = vld [vmem:[%s3897 + $0x2f] sm:$0xff]
        %v3902 = vld [vmem:[%s3897 + $0x47] sm:$0xff]
        %v3903 = vld [vmem:[%s3897 + $0x4f] sm:$0xff]
        %v3904 = vld [vmem:[%s3897 + $0x67] sm:$0xff]
        %v3905 = vld [vmem:[%s3897 + $0x6f] sm:$0xff]
        %v3906 = vld [vmem:[%s3897 + $0x87] sm:$0xff]
        %v3907 = vld [vmem:[%s3897 + $0x8f] sm:$0xff]
        %v3908 = vld [vmem:[%s3897 + $0xa7] sm:$0xff]
        %v3909 = vld [vmem:[%s3897 + $0xaf] sm:$0xff]
        %v3910 = vld [vmem:[%s3897 + $0xc7] sm:$0xff]
        %v3911 = vld [vmem:[%s3897 + $0xcf] sm:$0xff]
        %v3912 = vld [vmem:[%s3897 + $0xe7] sm:$0xff]
        %v3913 = vld [vmem:[%s3897 + $0xef] sm:$0xff]
        %v3914 = vld [vmem:[%s3897 + $0x107] sm:$0xff]
        %v3915 = vld [vmem:[%s3897 + $0x10f] sm:$0xff]
        %v3916 = vld [vmem:[%s3897 + $0x127] sm:$0xff]
        %v3917 = vld [vmem:[%s3897 + $0x12f] sm:$0xff]
        %v3918 = vld [vmem:[%s3897 + $0x147] sm:$0xff]
        %v3919 = vld [vmem:[%s3897 + $0x14f] sm:$0xff]
        %v3920 = vld [vmem:[%s3897 + $0x167] sm:$0xff]
        %v3921 = vld [vmem:[%s3897 + $0x16f] sm:$0xff]
        %v3922 = vld [vmem:[%s3897 + $0x187] sm:$0xff]
        %v3923 = vld [vmem:[%s3897 + $0x18f] sm:$0xff]
        %v3924 = vld [vmem:[%s3897 + $0x1a7] sm:$0xff]
        %v3925 = vld [vmem:[%s3897 + $0x1af] sm:$0xff]
        %v3926 = vld [vmem:[%s3897 + $0x1c7] sm:$0xff]
        %v3927 = vld [vmem:[%s3897 + $0x1cf] sm:$0xff]
        %v3928 = vld [vmem:[%s3897 + $0x1e7] sm:$0xff]
        %v3929 = vld [vmem:[%s3897 + $0x1ef] sm:$0xff]
        %s3930 = scalar_lea.vmem %s5, 6
        %v3931 = vld [vmem:[%s3930] sm:$0x1]
        %v3933 = vlaneseq
        %v3934 = vshrl.u32 %v3933, 7
        %v3935 = vsub.s32 0, %v3934
        %v3936 = vrot.slane %v3931, %v3935
        %v3938 = vmul.f32 %v3898, %v3936
        %v3939 = vmul.f32 %v3899, %v3936
        %v3940 = vmul.f32 %v3900, %v3936
        %v3941 = vmul.f32 %v3901, %v3936
        %v3942 = vmul.f32 %v3902, %v3936
        %v3943 = vmul.f32 %v3903, %v3936
        %v3944 = vmul.f32 %v3904, %v3936
        %v3945 = vmul.f32 %v3905, %v3936
        %v3946 = vmul.f32 %v3906, %v3936
        %v3947 = vmul.f32 %v3907, %v3936
        %v3948 = vmul.f32 %v3908, %v3936
        %v3949 = vmul.f32 %v3909, %v3936
        %v3950 = vmul.f32 %v3910, %v3936
        %v3951 = vmul.f32 %v3911, %v3936
        %v3952 = vmul.f32 %v3912, %v3936
        %v3953 = vmul.f32 %v3913, %v3936
        %v3954 = vmul.f32 %v3914, %v3936
        %v3955 = vmul.f32 %v3915, %v3936
        %v3956 = vmul.f32 %v3916, %v3936
        %v3957 = vmul.f32 %v3917, %v3936
        %v3958 = vmul.f32 %v3918, %v3936
        %v3959 = vmul.f32 %v3919, %v3936
        %v3960 = vmul.f32 %v3920, %v3936
        %v3961 = vmul.f32 %v3921, %v3936
        %v3962 = vmul.f32 %v3922, %v3936
        %v3963 = vmul.f32 %v3923, %v3936
        %v3964 = vmul.f32 %v3924, %v3936
        %v3965 = vmul.f32 %v3925, %v3936
        %v3966 = vmul.f32 %v3926, %v3936
        %v3967 = vmul.f32 %v3927, %v3936
        %v3968 = vmul.f32 %v3928, %v3936
        %v3969 = vmul.f32 %v3929, %v3936
        %v3970 = vsel %vm280, %v3938, 0.0
        %3971 = vadd.xlane.f32.xlu0 %v3970
        %v3972 = vpop.xlane.xlu0 %3971
        %v3973 = vsel %vm280, %v3939, 0.0
        %3974 = vadd.xlane.f32.xlu0 %v3973
        %v3975 = vpop.xlane.xlu0 %3974
        %v3976 = vsel %vm280, %v3940, 0.0
        %3977 = vadd.xlane.f32.xlu0 %v3976
        %v3978 = vpop.xlane.xlu0 %3977
        %v3979 = vsel %vm280, %v3941, 0.0
        %3980 = vadd.xlane.f32.xlu0 %v3979
        %v3981 = vpop.xlane.xlu0 %3980
        %v3982 = vsel %vm280, %v3942, 0.0
        %3983 = vadd.xlane.f32.xlu0 %v3982
        %v3984 = vpop.xlane.xlu0 %3983
        %v3985 = vsel %vm280, %v3943, 0.0
        %3986 = vadd.xlane.f32.xlu0 %v3985
        %v3987 = vpop.xlane.xlu0 %3986
        %v3988 = vsel %vm280, %v3944, 0.0
        %3989 = vadd.xlane.f32.xlu0 %v3988
        %v3990 = vpop.xlane.xlu0 %3989
        %v3991 = vsel %vm280, %v3945, 0.0
        %3992 = vadd.xlane.f32.xlu0 %v3991
        %v3993 = vpop.xlane.xlu0 %3992
        %v3994 = vsel %vm280, %v3946, 0.0
        %3995 = vadd.xlane.f32.xlu0 %v3994
        %v3996 = vpop.xlane.xlu0 %3995
        %v3997 = vsel %vm280, %v3947, 0.0
        %3998 = vadd.xlane.f32.xlu0 %v3997
        %v3999 = vpop.xlane.xlu0 %3998
        %v4000 = vsel %vm280, %v3948, 0.0
        %4001 = vadd.xlane.f32.xlu0 %v4000
        %v4002 = vpop.xlane.xlu0 %4001
        %v4003 = vsel %vm280, %v3949, 0.0
        %4004 = vadd.xlane.f32.xlu0 %v4003
        %v4005 = vpop.xlane.xlu0 %4004
        %v4006 = vsel %vm280, %v3950, 0.0
        %4007 = vadd.xlane.f32.xlu0 %v4006
        %v4008 = vpop.xlane.xlu0 %4007
        %v4009 = vsel %vm280, %v3951, 0.0
        %4010 = vadd.xlane.f32.xlu0 %v4009
        %v4011 = vpop.xlane.xlu0 %4010
        %v4012 = vsel %vm280, %v3952, 0.0
        %4013 = vadd.xlane.f32.xlu0 %v4012
        %v4014 = vpop.xlane.xlu0 %4013
        %v4015 = vsel %vm280, %v3953, 0.0
        %4016 = vadd.xlane.f32.xlu0 %v4015
        %v4017 = vpop.xlane.xlu0 %4016
        %v4018 = vsel %vm280, %v3954, 0.0
        %4019 = vadd.xlane.f32.xlu0 %v4018
        %v4020 = vpop.xlane.xlu0 %4019
        %v4021 = vsel %vm280, %v3955, 0.0
        %4022 = vadd.xlane.f32.xlu0 %v4021
        %v4023 = vpop.xlane.xlu0 %4022
        %v4024 = vsel %vm280, %v3956, 0.0
        %4025 = vadd.xlane.f32.xlu0 %v4024
        %v4026 = vpop.xlane.xlu0 %4025
        %v4027 = vsel %vm280, %v3957, 0.0
        %4028 = vadd.xlane.f32.xlu0 %v4027
        %v4029 = vpop.xlane.xlu0 %4028
        %v4030 = vsel %vm280, %v3958, 0.0
        %4031 = vadd.xlane.f32.xlu0 %v4030
        %v4032 = vpop.xlane.xlu0 %4031
        %v4033 = vsel %vm280, %v3959, 0.0
        %4034 = vadd.xlane.f32.xlu0 %v4033
        %v4035 = vpop.xlane.xlu0 %4034
        %v4036 = vsel %vm280, %v3960, 0.0
        %4037 = vadd.xlane.f32.xlu0 %v4036
        %v4038 = vpop.xlane.xlu0 %4037
        %v4039 = vsel %vm280, %v3961, 0.0
        %4040 = vadd.xlane.f32.xlu0 %v4039
        %v4041 = vpop.xlane.xlu0 %4040
        %v4042 = vsel %vm280, %v3962, 0.0
        %4043 = vadd.xlane.f32.xlu0 %v4042
        %v4044 = vpop.xlane.xlu0 %4043
        %v4045 = vsel %vm280, %v3963, 0.0
        %4046 = vadd.xlane.f32.xlu0 %v4045
        %v4047 = vpop.xlane.xlu0 %4046
        %v4048 = vsel %vm280, %v3964, 0.0
        %4049 = vadd.xlane.f32.xlu0 %v4048
        %v4050 = vpop.xlane.xlu0 %4049
        %v4051 = vsel %vm280, %v3965, 0.0
        %4052 = vadd.xlane.f32.xlu0 %v4051
        %v4053 = vpop.xlane.xlu0 %4052
        %v4054 = vsel %vm280, %v3966, 0.0
        %4055 = vadd.xlane.f32.xlu0 %v4054
        %v4056 = vpop.xlane.xlu0 %4055
        %v4057 = vsel %vm280, %v3967, 0.0
        %4058 = vadd.xlane.f32.xlu0 %v4057
        %v4059 = vpop.xlane.xlu0 %4058
        %v4060 = vsel %vm280, %v3968, 0.0
        %4061 = vadd.xlane.f32.xlu0 %v4060
        %v4062 = vpop.xlane.xlu0 %4061
        %v4063 = vsel %vm280, %v3969, 0.0
        %4064 = vadd.xlane.f32.xlu0 %v4063
        %v4065 = vpop.xlane.xlu0 %4064
        %v4066 = vadd.f32 %v3865, %v3972
        %v4067 = vadd.f32 %v3866, %v3975
        %v4068 = vadd.f32 %v3867, %v3978
        %v4069 = vadd.f32 %v3868, %v3981
        %v4070 = vadd.f32 %v3869, %v3984
        %v4071 = vadd.f32 %v3870, %v3987
        %v4072 = vadd.f32 %v3871, %v3990
        %v4073 = vadd.f32 %v3872, %v3993
        %v4074 = vadd.f32 %v3873, %v3996
        %v4075 = vadd.f32 %v3874, %v3999
        %v4076 = vadd.f32 %v3875, %v4002
        %v4077 = vadd.f32 %v3876, %v4005
        %v4078 = vadd.f32 %v3877, %v4008
        %v4079 = vadd.f32 %v3878, %v4011
        %v4080 = vadd.f32 %v3879, %v4014
        %v4081 = vadd.f32 %v3880, %v4017
        %v4082 = vadd.f32 %v3881, %v4020
        %v4083 = vadd.f32 %v3882, %v4023
        %v4084 = vadd.f32 %v3883, %v4026
        %v4085 = vadd.f32 %v3884, %v4029
        %v4086 = vadd.f32 %v3885, %v4032
        %v4087 = vadd.f32 %v3886, %v4035
        %v4088 = vadd.f32 %v3887, %v4038
        %v4089 = vadd.f32 %v3888, %v4041
        %v4090 = vadd.f32 %v3889, %v4044
        %v4091 = vadd.f32 %v3890, %v4047
        %v4092 = vadd.f32 %v3891, %v4050
        %v4093 = vadd.f32 %v3892, %v4053
        %v4094 = vadd.f32 %v3893, %v4056
        %v4095 = vadd.f32 %v3894, %v4059
        %v4096 = vadd.f32 %v3895, %v4062
        %v4097 = vadd.f32 %v3896, %v4065
        %v4098 = vld [vmem:[%s3897 + $0x8] sm:$0xff]
        %v4099 = vld [vmem:[%s3897 + $0x10] sm:$0xff]
        %v4100 = vld [vmem:[%s3897 + $0x28] sm:$0xff]
        %v4101 = vld [vmem:[%s3897 + $0x30] sm:$0xff]
        %v4102 = vld [vmem:[%s3897 + $0x48] sm:$0xff]
        %v4103 = vld [vmem:[%s3897 + $0x50] sm:$0xff]
        %v4104 = vld [vmem:[%s3897 + $0x68] sm:$0xff]
        %v4105 = vld [vmem:[%s3897 + $0x70] sm:$0xff]
        %v4106 = vld [vmem:[%s3897 + $0x88] sm:$0xff]
        %v4107 = vld [vmem:[%s3897 + $0x90] sm:$0xff]
        %v4108 = vld [vmem:[%s3897 + $0xa8] sm:$0xff]
        %v4109 = vld [vmem:[%s3897 + $0xb0] sm:$0xff]
        %v4110 = vld [vmem:[%s3897 + $0xc8] sm:$0xff]
        %v4111 = vld [vmem:[%s3897 + $0xd0] sm:$0xff]
        %v4112 = vld [vmem:[%s3897 + $0xe8] sm:$0xff]
        %v4113 = vld [vmem:[%s3897 + $0xf0] sm:$0xff]
        %v4114 = vld [vmem:[%s3897 + $0x108] sm:$0xff]
        %v4115 = vld [vmem:[%s3897 + $0x110] sm:$0xff]
        %v4116 = vld [vmem:[%s3897 + $0x128] sm:$0xff]
        %v4117 = vld [vmem:[%s3897 + $0x130] sm:$0xff]
        %v4118 = vld [vmem:[%s3897 + $0x148] sm:$0xff]
        %v4119 = vld [vmem:[%s3897 + $0x150] sm:$0xff]
        %v4120 = vld [vmem:[%s3897 + $0x168] sm:$0xff]
        %v4121 = vld [vmem:[%s3897 + $0x170] sm:$0xff]
        %v4122 = vld [vmem:[%s3897 + $0x188] sm:$0xff]
        %v4123 = vld [vmem:[%s3897 + $0x190] sm:$0xff]
        %v4124 = vld [vmem:[%s3897 + $0x1a8] sm:$0xff]
        %v4125 = vld [vmem:[%s3897 + $0x1b0] sm:$0xff]
        %v4126 = vld [vmem:[%s3897 + $0x1c8] sm:$0xff]
        %v4127 = vld [vmem:[%s3897 + $0x1d0] sm:$0xff]
        %v4128 = vld [vmem:[%s3897 + $0x1e8] sm:$0xff]
        %v4129 = vld [vmem:[%s3897 + $0x1f0] sm:$0xff]
        %s4130 = scalar_lea.vmem %s5, 7
        %v4131 = vld [vmem:[%s4130] sm:$0x1]
        %v4133 = vlaneseq
        %v4134 = vshrl.u32 %v4133, 7
        %v4135 = vsub.s32 0, %v4134
        %v4136 = vrot.slane %v4131, %v4135
        %v4138 = vmul.f32 %v4098, %v4136
        %v4139 = vmul.f32 %v4099, %v4136
        %v4140 = vmul.f32 %v4100, %v4136
        %v4141 = vmul.f32 %v4101, %v4136
        %v4142 = vmul.f32 %v4102, %v4136
        %v4143 = vmul.f32 %v4103, %v4136
        %v4144 = vmul.f32 %v4104, %v4136
        %v4145 = vmul.f32 %v4105, %v4136
        %v4146 = vmul.f32 %v4106, %v4136
        %v4147 = vmul.f32 %v4107, %v4136
        %v4148 = vmul.f32 %v4108, %v4136
        %v4149 = vmul.f32 %v4109, %v4136
        %v4150 = vmul.f32 %v4110, %v4136
        %v4151 = vmul.f32 %v4111, %v4136
        %v4152 = vmul.f32 %v4112, %v4136
        %v4153 = vmul.f32 %v4113, %v4136
        %v4154 = vmul.f32 %v4114, %v4136
        %v4155 = vmul.f32 %v4115, %v4136
        %v4156 = vmul.f32 %v4116, %v4136
        %v4157 = vmul.f32 %v4117, %v4136
        %v4158 = vmul.f32 %v4118, %v4136
        %v4159 = vmul.f32 %v4119, %v4136
        %v4160 = vmul.f32 %v4120, %v4136
        %v4161 = vmul.f32 %v4121, %v4136
        %v4162 = vmul.f32 %v4122, %v4136
        %v4163 = vmul.f32 %v4123, %v4136
        %v4164 = vmul.f32 %v4124, %v4136
        %v4165 = vmul.f32 %v4125, %v4136
        %v4166 = vmul.f32 %v4126, %v4136
        %v4167 = vmul.f32 %v4127, %v4136
        %v4168 = vmul.f32 %v4128, %v4136
        %v4169 = vmul.f32 %v4129, %v4136
        %v4170 = vsel %vm280, %v4138, 0.0
        %4171 = vadd.xlane.f32.xlu0 %v4170
        %v4172 = vpop.xlane.xlu0 %4171
        %v4173 = vsel %vm280, %v4139, 0.0
        %4174 = vadd.xlane.f32.xlu0 %v4173
        %v4175 = vpop.xlane.xlu0 %4174
        %v4176 = vsel %vm280, %v4140, 0.0
        %4177 = vadd.xlane.f32.xlu0 %v4176
        %v4178 = vpop.xlane.xlu0 %4177
        %v4179 = vsel %vm280, %v4141, 0.0
        %4180 = vadd.xlane.f32.xlu0 %v4179
        %v4181 = vpop.xlane.xlu0 %4180
        %v4182 = vsel %vm280, %v4142, 0.0
        %4183 = vadd.xlane.f32.xlu0 %v4182
        %v4184 = vpop.xlane.xlu0 %4183
        %v4185 = vsel %vm280, %v4143, 0.0
        %4186 = vadd.xlane.f32.xlu0 %v4185
        %v4187 = vpop.xlane.xlu0 %4186
        %v4188 = vsel %vm280, %v4144, 0.0
        %4189 = vadd.xlane.f32.xlu0 %v4188
        %v4190 = vpop.xlane.xlu0 %4189
        %v4191 = vsel %vm280, %v4145, 0.0
        %4192 = vadd.xlane.f32.xlu0 %v4191
        %v4193 = vpop.xlane.xlu0 %4192
        %v4194 = vsel %vm280, %v4146, 0.0
        %4195 = vadd.xlane.f32.xlu0 %v4194
        %v4196 = vpop.xlane.xlu0 %4195
        %v4197 = vsel %vm280, %v4147, 0.0
        %4198 = vadd.xlane.f32.xlu0 %v4197
        %v4199 = vpop.xlane.xlu0 %4198
        %v4200 = vsel %vm280, %v4148, 0.0
        %4201 = vadd.xlane.f32.xlu0 %v4200
        %v4202 = vpop.xlane.xlu0 %4201
        %v4203 = vsel %vm280, %v4149, 0.0
        %4204 = vadd.xlane.f32.xlu0 %v4203
        %v4205 = vpop.xlane.xlu0 %4204
        %v4206 = vsel %vm280, %v4150, 0.0
        %4207 = vadd.xlane.f32.xlu0 %v4206
        %v4208 = vpop.xlane.xlu0 %4207
        %v4209 = vsel %vm280, %v4151, 0.0
        %4210 = vadd.xlane.f32.xlu0 %v4209
        %v4211 = vpop.xlane.xlu0 %4210
        %v4212 = vsel %vm280, %v4152, 0.0
        %4213 = vadd.xlane.f32.xlu0 %v4212
        %v4214 = vpop.xlane.xlu0 %4213
        %v4215 = vsel %vm280, %v4153, 0.0
        %4216 = vadd.xlane.f32.xlu0 %v4215
        %v4217 = vpop.xlane.xlu0 %4216
        %v4218 = vsel %vm280, %v4154, 0.0
        %4219 = vadd.xlane.f32.xlu0 %v4218
        %v4220 = vpop.xlane.xlu0 %4219
        %v4221 = vsel %vm280, %v4155, 0.0
        %4222 = vadd.xlane.f32.xlu0 %v4221
        %v4223 = vpop.xlane.xlu0 %4222
        %v4224 = vsel %vm280, %v4156, 0.0
        %4225 = vadd.xlane.f32.xlu0 %v4224
        %v4226 = vpop.xlane.xlu0 %4225
        %v4227 = vsel %vm280, %v4157, 0.0
        %4228 = vadd.xlane.f32.xlu0 %v4227
        %v4229 = vpop.xlane.xlu0 %4228
        %v4230 = vsel %vm280, %v4158, 0.0
        %4231 = vadd.xlane.f32.xlu0 %v4230
        %v4232 = vpop.xlane.xlu0 %4231
        %v4233 = vsel %vm280, %v4159, 0.0
        %4234 = vadd.xlane.f32.xlu0 %v4233
        %v4235 = vpop.xlane.xlu0 %4234
        %v4236 = vsel %vm280, %v4160, 0.0
        %4237 = vadd.xlane.f32.xlu0 %v4236
        %v4238 = vpop.xlane.xlu0 %4237
        %v4239 = vsel %vm280, %v4161, 0.0
        %4240 = vadd.xlane.f32.xlu0 %v4239
        %v4241 = vpop.xlane.xlu0 %4240
        %v4242 = vsel %vm280, %v4162, 0.0
        %4243 = vadd.xlane.f32.xlu0 %v4242
        %v4244 = vpop.xlane.xlu0 %4243
        %v4245 = vsel %vm280, %v4163, 0.0
        %4246 = vadd.xlane.f32.xlu0 %v4245
        %v4247 = vpop.xlane.xlu0 %4246
        %v4248 = vsel %vm280, %v4164, 0.0
        %4249 = vadd.xlane.f32.xlu0 %v4248
        %v4250 = vpop.xlane.xlu0 %4249
        %v4251 = vsel %vm280, %v4165, 0.0
        %4252 = vadd.xlane.f32.xlu0 %v4251
        %v4253 = vpop.xlane.xlu0 %4252
        %v4254 = vsel %vm280, %v4166, 0.0
        %4255 = vadd.xlane.f32.xlu0 %v4254
        %v4256 = vpop.xlane.xlu0 %4255
        %v4257 = vsel %vm280, %v4167, 0.0
        %4258 = vadd.xlane.f32.xlu0 %v4257
        %v4259 = vpop.xlane.xlu0 %4258
        %v4260 = vsel %vm280, %v4168, 0.0
        %4261 = vadd.xlane.f32.xlu0 %v4260
        %v4262 = vpop.xlane.xlu0 %4261
        %v4263 = vsel %vm280, %v4169, 0.0
        %4264 = vadd.xlane.f32.xlu0 %v4263
        %v4265 = vpop.xlane.xlu0 %4264
        %v4266 = vadd.f32 %v4066, %v4172
        %v4267 = vadd.f32 %v4067, %v4175
        %v4268 = vadd.f32 %v4068, %v4178
        %v4269 = vadd.f32 %v4069, %v4181
        %v4270 = vadd.f32 %v4070, %v4184
        %v4271 = vadd.f32 %v4071, %v4187
        %v4272 = vadd.f32 %v4072, %v4190
        %v4273 = vadd.f32 %v4073, %v4193
        %v4274 = vadd.f32 %v4074, %v4196
        %v4275 = vadd.f32 %v4075, %v4199
        %v4276 = vadd.f32 %v4076, %v4202
        %v4277 = vadd.f32 %v4077, %v4205
        %v4278 = vadd.f32 %v4078, %v4208
        %v4279 = vadd.f32 %v4079, %v4211
        %v4280 = vadd.f32 %v4080, %v4214
        %v4281 = vadd.f32 %v4081, %v4217
        %v4282 = vadd.f32 %v4082, %v4220
        %v4283 = vadd.f32 %v4083, %v4223
        %v4284 = vadd.f32 %v4084, %v4226
        %v4285 = vadd.f32 %v4085, %v4229
        %v4286 = vadd.f32 %v4086, %v4232
        %v4287 = vadd.f32 %v4087, %v4235
        %v4288 = vadd.f32 %v4088, %v4238
        %v4289 = vadd.f32 %v4089, %v4241
        %v4290 = vadd.f32 %v4090, %v4244
        %v4291 = vadd.f32 %v4091, %v4247
        %v4292 = vadd.f32 %v4092, %v4250
        %v4293 = vadd.f32 %v4093, %v4253
        %v4294 = vadd.f32 %v4094, %v4256
        %v4295 = vadd.f32 %v4095, %v4259
        %v4296 = vadd.f32 %v4096, %v4262
        %v4297 = vadd.f32 %v4097, %v4265
        %v4298 = vld [vmem:[%s3897 + $0x9] sm:$0xff]
        %v4299 = vld [vmem:[%s3897 + $0x11] sm:$0xff]
        %v4300 = vld [vmem:[%s3897 + $0x29] sm:$0xff]
        %v4301 = vld [vmem:[%s3897 + $0x31] sm:$0xff]
        %v4302 = vld [vmem:[%s3897 + $0x49] sm:$0xff]
        %v4303 = vld [vmem:[%s3897 + $0x51] sm:$0xff]
        %v4304 = vld [vmem:[%s3897 + $0x69] sm:$0xff]
        %v4305 = vld [vmem:[%s3897 + $0x71] sm:$0xff]
        %v4306 = vld [vmem:[%s3897 + $0x89] sm:$0xff]
        %v4307 = vld [vmem:[%s3897 + $0x91] sm:$0xff]
        %v4308 = vld [vmem:[%s3897 + $0xa9] sm:$0xff]
        %v4309 = vld [vmem:[%s3897 + $0xb1] sm:$0xff]
        %v4310 = vld [vmem:[%s3897 + $0xc9] sm:$0xff]
        %v4311 = vld [vmem:[%s3897 + $0xd1] sm:$0xff]
        %v4312 = vld [vmem:[%s3897 + $0xe9] sm:$0xff]
        %v4313 = vld [vmem:[%s3897 + $0xf1] sm:$0xff]
        %v4314 = vld [vmem:[%s3897 + $0x109] sm:$0xff]
        %v4315 = vld [vmem:[%s3897 + $0x111] sm:$0xff]
        %v4316 = vld [vmem:[%s3897 + $0x129] sm:$0xff]
        %v4317 = vld [vmem:[%s3897 + $0x131] sm:$0xff]
        %v4318 = vld [vmem:[%s3897 + $0x149] sm:$0xff]
        %v4319 = vld [vmem:[%s3897 + $0x151] sm:$0xff]
        %v4320 = vld [vmem:[%s3897 + $0x169] sm:$0xff]
        %v4321 = vld [vmem:[%s3897 + $0x171] sm:$0xff]
        %v4322 = vld [vmem:[%s3897 + $0x189] sm:$0xff]
        %v4323 = vld [vmem:[%s3897 + $0x191] sm:$0xff]
        %v4324 = vld [vmem:[%s3897 + $0x1a9] sm:$0xff]
        %v4325 = vld [vmem:[%s3897 + $0x1b1] sm:$0xff]
        %v4326 = vld [vmem:[%s3897 + $0x1c9] sm:$0xff]
        %v4327 = vld [vmem:[%s3897 + $0x1d1] sm:$0xff]
        %v4328 = vld [vmem:[%s3897 + $0x1e9] sm:$0xff]
        %v4329 = vld [vmem:[%s3897 + $0x1f1] sm:$0xff]
        %s4330 = scalar_lea.vmem %s5, 8
        %v4331 = vld [vmem:[%s4330] sm:$0x1]
        %v4333 = vlaneseq
        %v4334 = vshrl.u32 %v4333, 7
        %v4335 = vsub.s32 0, %v4334
        %v4336 = vrot.slane %v4331, %v4335
        %v4338 = vmul.f32 %v4298, %v4336
        %v4339 = vmul.f32 %v4299, %v4336
        %v4340 = vmul.f32 %v4300, %v4336
        %v4341 = vmul.f32 %v4301, %v4336
        %v4342 = vmul.f32 %v4302, %v4336
        %v4343 = vmul.f32 %v4303, %v4336
        %v4344 = vmul.f32 %v4304, %v4336
        %v4345 = vmul.f32 %v4305, %v4336
        %v4346 = vmul.f32 %v4306, %v4336
        %v4347 = vmul.f32 %v4307, %v4336
        %v4348 = vmul.f32 %v4308, %v4336
        %v4349 = vmul.f32 %v4309, %v4336
        %v4350 = vmul.f32 %v4310, %v4336
        %v4351 = vmul.f32 %v4311, %v4336
        %v4352 = vmul.f32 %v4312, %v4336
        %v4353 = vmul.f32 %v4313, %v4336
        %v4354 = vmul.f32 %v4314, %v4336
        %v4355 = vmul.f32 %v4315, %v4336
        %v4356 = vmul.f32 %v4316, %v4336
        %v4357 = vmul.f32 %v4317, %v4336
        %v4358 = vmul.f32 %v4318, %v4336
        %v4359 = vmul.f32 %v4319, %v4336
        %v4360 = vmul.f32 %v4320, %v4336
        %v4361 = vmul.f32 %v4321, %v4336
        %v4362 = vmul.f32 %v4322, %v4336
        %v4363 = vmul.f32 %v4323, %v4336
        %v4364 = vmul.f32 %v4324, %v4336
        %v4365 = vmul.f32 %v4325, %v4336
        %v4366 = vmul.f32 %v4326, %v4336
        %v4367 = vmul.f32 %v4327, %v4336
        %v4368 = vmul.f32 %v4328, %v4336
        %v4369 = vmul.f32 %v4329, %v4336
        %v4370 = vsel %vm280, %v4338, 0.0
        %4371 = vadd.xlane.f32.xlu0 %v4370
        %v4372 = vpop.xlane.xlu0 %4371
        %v4373 = vsel %vm280, %v4339, 0.0
        %4374 = vadd.xlane.f32.xlu0 %v4373
        %v4375 = vpop.xlane.xlu0 %4374
        %v4376 = vsel %vm280, %v4340, 0.0
        %4377 = vadd.xlane.f32.xlu0 %v4376
        %v4378 = vpop.xlane.xlu0 %4377
        %v4379 = vsel %vm280, %v4341, 0.0
        %4380 = vadd.xlane.f32.xlu0 %v4379
        %v4381 = vpop.xlane.xlu0 %4380
        %v4382 = vsel %vm280, %v4342, 0.0
        %4383 = vadd.xlane.f32.xlu0 %v4382
        %v4384 = vpop.xlane.xlu0 %4383
        %v4385 = vsel %vm280, %v4343, 0.0
        %4386 = vadd.xlane.f32.xlu0 %v4385
        %v4387 = vpop.xlane.xlu0 %4386
        %v4388 = vsel %vm280, %v4344, 0.0
        %4389 = vadd.xlane.f32.xlu0 %v4388
        %v4390 = vpop.xlane.xlu0 %4389
        %v4391 = vsel %vm280, %v4345, 0.0
        %4392 = vadd.xlane.f32.xlu0 %v4391
        %v4393 = vpop.xlane.xlu0 %4392
        %v4394 = vsel %vm280, %v4346, 0.0
        %4395 = vadd.xlane.f32.xlu0 %v4394
        %v4396 = vpop.xlane.xlu0 %4395
        %v4397 = vsel %vm280, %v4347, 0.0
        %4398 = vadd.xlane.f32.xlu0 %v4397
        %v4399 = vpop.xlane.xlu0 %4398
        %v4400 = vsel %vm280, %v4348, 0.0
        %4401 = vadd.xlane.f32.xlu0 %v4400
        %v4402 = vpop.xlane.xlu0 %4401
        %v4403 = vsel %vm280, %v4349, 0.0
        %4404 = vadd.xlane.f32.xlu0 %v4403
        %v4405 = vpop.xlane.xlu0 %4404
        %v4406 = vsel %vm280, %v4350, 0.0
        %4407 = vadd.xlane.f32.xlu0 %v4406
        %v4408 = vpop.xlane.xlu0 %4407
        %v4409 = vsel %vm280, %v4351, 0.0
        %4410 = vadd.xlane.f32.xlu0 %v4409
        %v4411 = vpop.xlane.xlu0 %4410
        %v4412 = vsel %vm280, %v4352, 0.0
        %4413 = vadd.xlane.f32.xlu0 %v4412
        %v4414 = vpop.xlane.xlu0 %4413
        %v4415 = vsel %vm280, %v4353, 0.0
        %4416 = vadd.xlane.f32.xlu0 %v4415
        %v4417 = vpop.xlane.xlu0 %4416
        %v4418 = vsel %vm280, %v4354, 0.0
        %4419 = vadd.xlane.f32.xlu0 %v4418
        %v4420 = vpop.xlane.xlu0 %4419
        %v4421 = vsel %vm280, %v4355, 0.0
        %4422 = vadd.xlane.f32.xlu0 %v4421
        %v4423 = vpop.xlane.xlu0 %4422
        %v4424 = vsel %vm280, %v4356, 0.0
        %4425 = vadd.xlane.f32.xlu0 %v4424
        %v4426 = vpop.xlane.xlu0 %4425
        %v4427 = vsel %vm280, %v4357, 0.0
        %4428 = vadd.xlane.f32.xlu0 %v4427
        %v4429 = vpop.xlane.xlu0 %4428
        %v4430 = vsel %vm280, %v4358, 0.0
        %4431 = vadd.xlane.f32.xlu0 %v4430
        %v4432 = vpop.xlane.xlu0 %4431
        %v4433 = vsel %vm280, %v4359, 0.0
        %4434 = vadd.xlane.f32.xlu0 %v4433
        %v4435 = vpop.xlane.xlu0 %4434
        %v4436 = vsel %vm280, %v4360, 0.0
        %4437 = vadd.xlane.f32.xlu0 %v4436
        %v4438 = vpop.xlane.xlu0 %4437
        %v4439 = vsel %vm280, %v4361, 0.0
        %4440 = vadd.xlane.f32.xlu0 %v4439
        %v4441 = vpop.xlane.xlu0 %4440
        %v4442 = vsel %vm280, %v4362, 0.0
        %4443 = vadd.xlane.f32.xlu0 %v4442
        %v4444 = vpop.xlane.xlu0 %4443
        %v4445 = vsel %vm280, %v4363, 0.0
        %4446 = vadd.xlane.f32.xlu0 %v4445
        %v4447 = vpop.xlane.xlu0 %4446
        %v4448 = vsel %vm280, %v4364, 0.0
        %4449 = vadd.xlane.f32.xlu0 %v4448
        %v4450 = vpop.xlane.xlu0 %4449
        %v4451 = vsel %vm280, %v4365, 0.0
        %4452 = vadd.xlane.f32.xlu0 %v4451
        %v4453 = vpop.xlane.xlu0 %4452
        %v4454 = vsel %vm280, %v4366, 0.0
        %4455 = vadd.xlane.f32.xlu0 %v4454
        %v4456 = vpop.xlane.xlu0 %4455
        %v4457 = vsel %vm280, %v4367, 0.0
        %4458 = vadd.xlane.f32.xlu0 %v4457
        %v4459 = vpop.xlane.xlu0 %4458
        %v4460 = vsel %vm280, %v4368, 0.0
        %4461 = vadd.xlane.f32.xlu0 %v4460
        %v4462 = vpop.xlane.xlu0 %4461
        %v4463 = vsel %vm280, %v4369, 0.0
        %4464 = vadd.xlane.f32.xlu0 %v4463
        %v4465 = vpop.xlane.xlu0 %4464
        %v4466 = vadd.f32 %v4266, %v4372
        %v4467 = vadd.f32 %v4267, %v4375
        %v4468 = vadd.f32 %v4268, %v4378
        %v4469 = vadd.f32 %v4269, %v4381
        %v4470 = vadd.f32 %v4270, %v4384
        %v4471 = vadd.f32 %v4271, %v4387
        %v4472 = vadd.f32 %v4272, %v4390
        %v4473 = vadd.f32 %v4273, %v4393
        %v4474 = vadd.f32 %v4274, %v4396
        %v4475 = vadd.f32 %v4275, %v4399
        %v4476 = vadd.f32 %v4276, %v4402
        %v4477 = vadd.f32 %v4277, %v4405
        %v4478 = vadd.f32 %v4278, %v4408
        %v4479 = vadd.f32 %v4279, %v4411
        %v4480 = vadd.f32 %v4280, %v4414
        %v4481 = vadd.f32 %v4281, %v4417
        %v4482 = vadd.f32 %v4282, %v4420
        %v4483 = vadd.f32 %v4283, %v4423
        %v4484 = vadd.f32 %v4284, %v4426
        %v4485 = vadd.f32 %v4285, %v4429
        %v4486 = vadd.f32 %v4286, %v4432
        %v4487 = vadd.f32 %v4287, %v4435
        %v4488 = vadd.f32 %v4288, %v4438
        %v4489 = vadd.f32 %v4289, %v4441
        %v4490 = vadd.f32 %v4290, %v4444
        %v4491 = vadd.f32 %v4291, %v4447
        %v4492 = vadd.f32 %v4292, %v4450
        %v4493 = vadd.f32 %v4293, %v4453
        %v4494 = vadd.f32 %v4294, %v4456
        %v4495 = vadd.f32 %v4295, %v4459
        %v4496 = vadd.f32 %v4296, %v4462
        %v4497 = vadd.f32 %v4297, %v4465
        %v4498 = vld [vmem:[#allocation4] sm:$0x1]
        %4500 = vset.pattern.permute.xlu0 0
        %4501 = vperm.xlu0 %4500, %v4498
        %v4502 = vpop.permute.xlu0 %4501
        %v4504 = vlaneseq
        %v4505 = vshrl.u32 %v4504, 7
        %v4506 = vsub.s32 0, %v4505
        %v4507 = vrot.slane %v4502, %v4506
        %v4508 = vadd.f32 %v4466, %v4507
        %v4509 = vadd.f32 %v4467, %v4507
        %v4510 = vadd.f32 %v4468, %v4507
        %v4511 = vadd.f32 %v4469, %v4507
        %v4512 = vadd.f32 %v4470, %v4507
        %v4513 = vadd.f32 %v4471, %v4507
        %v4514 = vadd.f32 %v4472, %v4507
        %v4515 = vadd.f32 %v4473, %v4507
        %v4516 = vadd.f32 %v4474, %v4507
        %v4517 = vadd.f32 %v4475, %v4507
        %v4518 = vadd.f32 %v4476, %v4507
        %v4519 = vadd.f32 %v4477, %v4507
        %v4520 = vadd.f32 %v4478, %v4507
        %v4521 = vadd.f32 %v4479, %v4507
        %v4522 = vadd.f32 %v4480, %v4507
        %v4523 = vadd.f32 %v4481, %v4507
        %v4524 = vadd.f32 %v4482, %v4507
        %v4525 = vadd.f32 %v4483, %v4507
        %v4526 = vadd.f32 %v4484, %v4507
        %v4527 = vadd.f32 %v4485, %v4507
        %v4528 = vadd.f32 %v4486, %v4507
        %v4529 = vadd.f32 %v4487, %v4507
        %v4530 = vadd.f32 %v4488, %v4507
        %v4531 = vadd.f32 %v4489, %v4507
        %v4532 = vadd.f32 %v4490, %v4507
        %v4533 = vadd.f32 %v4491, %v4507
        %v4534 = vadd.f32 %v4492, %v4507
        %v4535 = vadd.f32 %v4493, %v4507
        %v4536 = vadd.f32 %v4494, %v4507
        %v4537 = vadd.f32 %v4495, %v4507
        %v4538 = vadd.f32 %v4496, %v4507
        %v4539 = vadd.f32 %v4497, %v4507
        %v4540 = vsub.f32 0.0, %v4508
        %v4541 = vsub.f32 0.0, %v4509
        %v4542 = vsub.f32 0.0, %v4510
        %v4543 = vsub.f32 0.0, %v4511
        %v4544 = vsub.f32 0.0, %v4512
        %v4545 = vsub.f32 0.0, %v4513
        %v4546 = vsub.f32 0.0, %v4514
        %v4547 = vsub.f32 0.0, %v4515
        %v4548 = vsub.f32 0.0, %v4516
        %v4549 = vsub.f32 0.0, %v4517
        %v4550 = vsub.f32 0.0, %v4518
        %v4551 = vsub.f32 0.0, %v4519
        %v4552 = vsub.f32 0.0, %v4520
        %v4553 = vsub.f32 0.0, %v4521
        %v4554 = vsub.f32 0.0, %v4522
        %v4555 = vsub.f32 0.0, %v4523
        %v4556 = vsub.f32 0.0, %v4524
        %v4557 = vsub.f32 0.0, %v4525
        %v4558 = vsub.f32 0.0, %v4526
        %v4559 = vsub.f32 0.0, %v4527
        %v4560 = vsub.f32 0.0, %v4528
        %v4561 = vsub.f32 0.0, %v4529
        %v4562 = vsub.f32 0.0, %v4530
        %v4563 = vsub.f32 0.0, %v4531
        %v4564 = vsub.f32 0.0, %v4532
        %v4565 = vsub.f32 0.0, %v4533
        %v4566 = vsub.f32 0.0, %v4534
        %v4567 = vsub.f32 0.0, %v4535
        %v4568 = vsub.f32 0.0, %v4536
        %v4569 = vsub.f32 0.0, %v4537
        %v4570 = vsub.f32 0.0, %v4538
        %v4571 = vsub.f32 0.0, %v4539
        %v4572 = vmul.f32 %v4540, 1.442695
        %v4573 = vpow.pop %v4572
        %v4574 = vmul.f32 %v4541, 1.442695
        %v4575 = vpow.pop %v4574
        %v4576 = vmul.f32 %v4542, 1.442695
        %v4577 = vpow.pop %v4576
        %v4578 = vmul.f32 %v4543, 1.442695
        %v4579 = vpow.pop %v4578
        %v4580 = vmul.f32 %v4544, 1.442695
        %v4581 = vpow.pop %v4580
        %v4582 = vmul.f32 %v4545, 1.442695
        %v4583 = vpow.pop %v4582
        %v4584 = vmul.f32 %v4546, 1.442695
        %v4585 = vpow.pop %v4584
        %v4586 = vmul.f32 %v4547, 1.442695
        %v4587 = vpow.pop %v4586
        %v4588 = vmul.f32 %v4548, 1.442695
        %v4589 = vpow.pop %v4588
        %v4590 = vmul.f32 %v4549, 1.442695
        %v4591 = vpow.pop %v4590
        %v4592 = vmul.f32 %v4550, 1.442695
        %v4593 = vpow.pop %v4592
        %v4594 = vmul.f32 %v4551, 1.442695
        %v4595 = vpow.pop %v4594
        %v4596 = vmul.f32 %v4552, 1.442695
        %v4597 = vpow.pop %v4596
        %v4598 = vmul.f32 %v4553, 1.442695
        %v4599 = vpow.pop %v4598
        %v4600 = vmul.f32 %v4554, 1.442695
        %v4601 = vpow.pop %v4600
        %v4602 = vmul.f32 %v4555, 1.442695
        %v4603 = vpow.pop %v4602
        %v4604 = vmul.f32 %v4556, 1.442695
        %v4605 = vpow.pop %v4604
        %v4606 = vmul.f32 %v4557, 1.442695
        %v4607 = vpow.pop %v4606
        %v4608 = vmul.f32 %v4558, 1.442695
        %v4609 = vpow.pop %v4608
        %v4610 = vmul.f32 %v4559, 1.442695
        %v4611 = vpow.pop %v4610
        %v4612 = vmul.f32 %v4560, 1.442695
        %v4613 = vpow.pop %v4612
        %v4614 = vmul.f32 %v4561, 1.442695
        %v4615 = vpow.pop %v4614
        %v4616 = vmul.f32 %v4562, 1.442695
        %v4617 = vpow.pop %v4616
        %v4618 = vmul.f32 %v4563, 1.442695
        %v4619 = vpow.pop %v4618
        %v4620 = vmul.f32 %v4564, 1.442695
        %v4621 = vpow.pop %v4620
        %v4622 = vmul.f32 %v4565, 1.442695
        %v4623 = vpow.pop %v4622
        %v4624 = vmul.f32 %v4566, 1.442695
        %v4625 = vpow.pop %v4624
        %v4626 = vmul.f32 %v4567, 1.442695
        %v4627 = vpow.pop %v4626
        %v4628 = vmul.f32 %v4568, 1.442695
        %v4629 = vpow.pop %v4628
        %v4630 = vmul.f32 %v4569, 1.442695
        %v4631 = vpow.pop %v4630
        %v4632 = vmul.f32 %v4570, 1.442695
        %v4633 = vpow.pop %v4632
        %v4634 = vmul.f32 %v4571, 1.442695
        %v4635 = vpow.pop %v4634
        %v4636 = vadd.f32 %v4573, 1.0
        %v4637 = vadd.f32 %v4575, 1.0
        %v4638 = vadd.f32 %v4577, 1.0
        %v4639 = vadd.f32 %v4579, 1.0
        %v4640 = vadd.f32 %v4581, 1.0
        %v4641 = vadd.f32 %v4583, 1.0
        %v4642 = vadd.f32 %v4585, 1.0
        %v4643 = vadd.f32 %v4587, 1.0
        %v4644 = vadd.f32 %v4589, 1.0
        %v4645 = vadd.f32 %v4591, 1.0
        %v4646 = vadd.f32 %v4593, 1.0
        %v4647 = vadd.f32 %v4595, 1.0
        %v4648 = vadd.f32 %v4597, 1.0
        %v4649 = vadd.f32 %v4599, 1.0
        %v4650 = vadd.f32 %v4601, 1.0
        %v4651 = vadd.f32 %v4603, 1.0
        %v4652 = vadd.f32 %v4605, 1.0
        %v4653 = vadd.f32 %v4607, 1.0
        %v4654 = vadd.f32 %v4609, 1.0
        %v4655 = vadd.f32 %v4611, 1.0
        %v4656 = vadd.f32 %v4613, 1.0
        %v4657 = vadd.f32 %v4615, 1.0
        %v4658 = vadd.f32 %v4617, 1.0
        %v4659 = vadd.f32 %v4619, 1.0
        %v4660 = vadd.f32 %v4621, 1.0
        %v4661 = vadd.f32 %v4623, 1.0
        %v4662 = vadd.f32 %v4625, 1.0
        %v4663 = vadd.f32 %v4627, 1.0
        %v4664 = vadd.f32 %v4629, 1.0
        %v4665 = vadd.f32 %v4631, 1.0
        %v4666 = vadd.f32 %v4633, 1.0
        %v4667 = vadd.f32 %v4635, 1.0
        %v4668 = vrcp.pop %v4636
        %v4669 = vmul.f32 1.0, %v4668
        %v4670 = vrcp.pop %v4637
        %v4671 = vmul.f32 1.0, %v4670
        %v4672 = vrcp.pop %v4638
        %v4673 = vmul.f32 1.0, %v4672
        %v4674 = vrcp.pop %v4639
        %v4675 = vmul.f32 1.0, %v4674
        %v4676 = vrcp.pop %v4640
        %v4677 = vmul.f32 1.0, %v4676
        %v4678 = vrcp.pop %v4641
        %v4679 = vmul.f32 1.0, %v4678
        %v4680 = vrcp.pop %v4642
        %v4681 = vmul.f32 1.0, %v4680
        %v4682 = vrcp.pop %v4643
        %v4683 = vmul.f32 1.0, %v4682
        %v4684 = vrcp.pop %v4644
        %v4685 = vmul.f32 1.0, %v4684
        %v4686 = vrcp.pop %v4645
        %v4687 = vmul.f32 1.0, %v4686
        %v4688 = vrcp.pop %v4646
        %v4689 = vmul.f32 1.0, %v4688
        %v4690 = vrcp.pop %v4647
        %v4691 = vmul.f32 1.0, %v4690
        %v4692 = vrcp.pop %v4648
        %v4693 = vmul.f32 1.0, %v4692
        %v4694 = vrcp.pop %v4649
        %v4695 = vmul.f32 1.0, %v4694
        %v4696 = vrcp.pop %v4650
        %v4697 = vmul.f32 1.0, %v4696
        %v4698 = vrcp.pop %v4651
        %v4699 = vmul.f32 1.0, %v4698
        %v4700 = vrcp.pop %v4652
        %v4701 = vmul.f32 1.0, %v4700
        %v4702 = vrcp.pop %v4653
        %v4703 = vmul.f32 1.0, %v4702
        %v4704 = vrcp.pop %v4654
        %v4705 = vmul.f32 1.0, %v4704
        %v4706 = vrcp.pop %v4655
        %v4707 = vmul.f32 1.0, %v4706
        %v4708 = vrcp.pop %v4656
        %v4709 = vmul.f32 1.0, %v4708
        %v4710 = vrcp.pop %v4657
        %v4711 = vmul.f32 1.0, %v4710
        %v4712 = vrcp.pop %v4658
        %v4713 = vmul.f32 1.0, %v4712
        %v4714 = vrcp.pop %v4659
        %v4715 = vmul.f32 1.0, %v4714
        %v4716 = vrcp.pop %v4660
        %v4717 = vmul.f32 1.0, %v4716
        %v4718 = vrcp.pop %v4661
        %v4719 = vmul.f32 1.0, %v4718
        %v4720 = vrcp.pop %v4662
        %v4721 = vmul.f32 1.0, %v4720
        %v4722 = vrcp.pop %v4663
        %v4723 = vmul.f32 1.0, %v4722
        %v4724 = vrcp.pop %v4664
        %v4725 = vmul.f32 1.0, %v4724
        %v4726 = vrcp.pop %v4665
        %v4727 = vmul.f32 1.0, %v4726
        %v4728 = vrcp.pop %v4666
        %v4729 = vmul.f32 1.0, %v4728
        %v4730 = vrcp.pop %v4667
        %v4731 = vmul.f32 1.0, %v4730
        %v4764 = vlaneseq
        %v4765 = vshrl.u32 %v4764, 7
        %v4766 = vsub.s32 0, %v4765
        %v4767 = vrot.slane %v4669, %v4766
        %v4768 = vlaneseq
        %v4769 = vshrl.u32 %v4768, 7
        %v4770 = vsub.s32 1, %v4769
        %v4771 = vrot.slane %v4669, %v4770
        %v4772 = vlaneseq
        %v4773 = vshrl.u32 %v4772, 7
        %v4774 = vsub.s32 2, %v4773
        %v4775 = vrot.slane %v4669, %v4774
        %v4776 = vlaneseq
        %v4777 = vshrl.u32 %v4776, 7
        %v4778 = vsub.s32 3, %v4777
        %v4779 = vrot.slane %v4669, %v4778
        %v4780 = vlaneseq
        %v4781 = vshrl.u32 %v4780, 7
        %v4782 = vsub.s32 4, %v4781
        %v4783 = vrot.slane %v4669, %v4782
        %v4784 = vlaneseq
        %v4785 = vshrl.u32 %v4784, 7
        %v4786 = vsub.s32 5, %v4785
        %v4787 = vrot.slane %v4669, %v4786
        %v4788 = vlaneseq
        %v4789 = vshrl.u32 %v4788, 7
        %v4790 = vsub.s32 6, %v4789
        %v4791 = vrot.slane %v4669, %v4790
        %v4792 = vlaneseq
        %v4793 = vshrl.u32 %v4792, 7
        %v4794 = vsub.s32 7, %v4793
        %v4795 = vrot.slane %v4669, %v4794
        %v4796 = vlaneseq
        %v4797 = vshrl.u32 %v4796, 7
        %v4798 = vsub.s32 0, %v4797
        %v4799 = vrot.slane %v4671, %v4798
        %v4800 = vlaneseq
        %v4801 = vshrl.u32 %v4800, 7
        %v4802 = vsub.s32 1, %v4801
        %v4803 = vrot.slane %v4671, %v4802
        %v4804 = vlaneseq
        %v4805 = vshrl.u32 %v4804, 7
        %v4806 = vsub.s32 2, %v4805
        %v4807 = vrot.slane %v4671, %v4806
        %v4808 = vlaneseq
        %v4809 = vshrl.u32 %v4808, 7
        %v4810 = vsub.s32 3, %v4809
        %v4811 = vrot.slane %v4671, %v4810
        %v4812 = vlaneseq
        %v4813 = vshrl.u32 %v4812, 7
        %v4814 = vsub.s32 4, %v4813
        %v4815 = vrot.slane %v4671, %v4814
        %v4816 = vlaneseq
        %v4817 = vshrl.u32 %v4816, 7
        %v4818 = vsub.s32 5, %v4817
        %v4819 = vrot.slane %v4671, %v4818
        %v4820 = vlaneseq
        %v4821 = vshrl.u32 %v4820, 7
        %v4822 = vsub.s32 6, %v4821
        %v4823 = vrot.slane %v4671, %v4822
        %v4824 = vlaneseq
        %v4825 = vshrl.u32 %v4824, 7
        %v4826 = vsub.s32 7, %v4825
        %v4827 = vrot.slane %v4671, %v4826
        %v4828 = vlaneseq
        %v4829 = vshrl.u32 %v4828, 7
        %v4830 = vsub.s32 0, %v4829
        %v4831 = vrot.slane %v4673, %v4830
        %v4832 = vlaneseq
        %v4833 = vshrl.u32 %v4832, 7
        %v4834 = vsub.s32 1, %v4833
        %v4835 = vrot.slane %v4673, %v4834
        %v4836 = vlaneseq
        %v4837 = vshrl.u32 %v4836, 7
        %v4838 = vsub.s32 2, %v4837
        %v4839 = vrot.slane %v4673, %v4838
        %v4840 = vlaneseq
        %v4841 = vshrl.u32 %v4840, 7
        %v4842 = vsub.s32 3, %v4841
        %v4843 = vrot.slane %v4673, %v4842
        %v4844 = vlaneseq
        %v4845 = vshrl.u32 %v4844, 7
        %v4846 = vsub.s32 4, %v4845
        %v4847 = vrot.slane %v4673, %v4846
        %v4848 = vlaneseq
        %v4849 = vshrl.u32 %v4848, 7
        %v4850 = vsub.s32 5, %v4849
        %v4851 = vrot.slane %v4673, %v4850
        %v4852 = vlaneseq
        %v4853 = vshrl.u32 %v4852, 7
        %v4854 = vsub.s32 6, %v4853
        %v4855 = vrot.slane %v4673, %v4854
        %v4856 = vlaneseq
        %v4857 = vshrl.u32 %v4856, 7
        %v4858 = vsub.s32 7, %v4857
        %v4859 = vrot.slane %v4673, %v4858
        %v4860 = vlaneseq
        %v4861 = vshrl.u32 %v4860, 7
        %v4862 = vsub.s32 0, %v4861
        %v4863 = vrot.slane %v4675, %v4862
        %v4864 = vlaneseq
        %v4865 = vshrl.u32 %v4864, 7
        %v4866 = vsub.s32 1, %v4865
        %v4867 = vrot.slane %v4675, %v4866
        %v4868 = vlaneseq
        %v4869 = vshrl.u32 %v4868, 7
        %v4870 = vsub.s32 2, %v4869
        %v4871 = vrot.slane %v4675, %v4870
        %v4872 = vlaneseq
        %v4873 = vshrl.u32 %v4872, 7
        %v4874 = vsub.s32 3, %v4873
        %v4875 = vrot.slane %v4675, %v4874
        %v4876 = vlaneseq
        %v4877 = vshrl.u32 %v4876, 7
        %v4878 = vsub.s32 4, %v4877
        %v4879 = vrot.slane %v4675, %v4878
        %v4880 = vlaneseq
        %v4881 = vshrl.u32 %v4880, 7
        %v4882 = vsub.s32 5, %v4881
        %v4883 = vrot.slane %v4675, %v4882
        %v4884 = vlaneseq
        %v4885 = vshrl.u32 %v4884, 7
        %v4886 = vsub.s32 6, %v4885
        %v4887 = vrot.slane %v4675, %v4886
        %v4888 = vlaneseq
        %v4889 = vshrl.u32 %v4888, 7
        %v4890 = vsub.s32 7, %v4889
        %v4891 = vrot.slane %v4675, %v4890
        %v4892 = vlaneseq
        %v4893 = vshrl.u32 %v4892, 7
        %v4894 = vsub.s32 0, %v4893
        %v4895 = vrot.slane %v4677, %v4894
        %v4896 = vlaneseq
        %v4897 = vshrl.u32 %v4896, 7
        %v4898 = vsub.s32 1, %v4897
        %v4899 = vrot.slane %v4677, %v4898
        %v4900 = vlaneseq
        %v4901 = vshrl.u32 %v4900, 7
        %v4902 = vsub.s32 2, %v4901
        %v4903 = vrot.slane %v4677, %v4902
        %v4904 = vlaneseq
        %v4905 = vshrl.u32 %v4904, 7
        %v4906 = vsub.s32 3, %v4905
        %v4907 = vrot.slane %v4677, %v4906
        %v4908 = vlaneseq
        %v4909 = vshrl.u32 %v4908, 7
        %v4910 = vsub.s32 4, %v4909
        %v4911 = vrot.slane %v4677, %v4910
        %v4912 = vlaneseq
        %v4913 = vshrl.u32 %v4912, 7
        %v4914 = vsub.s32 5, %v4913
        %v4915 = vrot.slane %v4677, %v4914
        %v4916 = vlaneseq
        %v4917 = vshrl.u32 %v4916, 7
        %v4918 = vsub.s32 6, %v4917
        %v4919 = vrot.slane %v4677, %v4918
        %v4920 = vlaneseq
        %v4921 = vshrl.u32 %v4920, 7
        %v4922 = vsub.s32 7, %v4921
        %v4923 = vrot.slane %v4677, %v4922
        %v4924 = vlaneseq
        %v4925 = vshrl.u32 %v4924, 7
        %v4926 = vsub.s32 0, %v4925
        %v4927 = vrot.slane %v4679, %v4926
        %v4928 = vlaneseq
        %v4929 = vshrl.u32 %v4928, 7
        %v4930 = vsub.s32 1, %v4929
        %v4931 = vrot.slane %v4679, %v4930
        %v4932 = vlaneseq
        %v4933 = vshrl.u32 %v4932, 7
        %v4934 = vsub.s32 2, %v4933
        %v4935 = vrot.slane %v4679, %v4934
        %v4936 = vlaneseq
        %v4937 = vshrl.u32 %v4936, 7
        %v4938 = vsub.s32 3, %v4937
        %v4939 = vrot.slane %v4679, %v4938
        %v4940 = vlaneseq
        %v4941 = vshrl.u32 %v4940, 7
        %v4942 = vsub.s32 4, %v4941
        %v4943 = vrot.slane %v4679, %v4942
        %v4944 = vlaneseq
        %v4945 = vshrl.u32 %v4944, 7
        %v4946 = vsub.s32 5, %v4945
        %v4947 = vrot.slane %v4679, %v4946
        %v4948 = vlaneseq
        %v4949 = vshrl.u32 %v4948, 7
        %v4950 = vsub.s32 6, %v4949
        %v4951 = vrot.slane %v4679, %v4950
        %v4952 = vlaneseq
        %v4953 = vshrl.u32 %v4952, 7
        %v4954 = vsub.s32 7, %v4953
        %v4955 = vrot.slane %v4679, %v4954
        %v4956 = vlaneseq
        %v4957 = vshrl.u32 %v4956, 7
        %v4958 = vsub.s32 0, %v4957
        %v4959 = vrot.slane %v4681, %v4958
        %v4960 = vlaneseq
        %v4961 = vshrl.u32 %v4960, 7
        %v4962 = vsub.s32 1, %v4961
        %v4963 = vrot.slane %v4681, %v4962
        %v4964 = vlaneseq
        %v4965 = vshrl.u32 %v4964, 7
        %v4966 = vsub.s32 2, %v4965
        %v4967 = vrot.slane %v4681, %v4966
        %v4968 = vlaneseq
        %v4969 = vshrl.u32 %v4968, 7
        %v4970 = vsub.s32 3, %v4969
        %v4971 = vrot.slane %v4681, %v4970
        %v4972 = vlaneseq
        %v4973 = vshrl.u32 %v4972, 7
        %v4974 = vsub.s32 4, %v4973
        %v4975 = vrot.slane %v4681, %v4974
        %v4976 = vlaneseq
        %v4977 = vshrl.u32 %v4976, 7
        %v4978 = vsub.s32 5, %v4977
        %v4979 = vrot.slane %v4681, %v4978
        %v4980 = vlaneseq
        %v4981 = vshrl.u32 %v4980, 7
        %v4982 = vsub.s32 6, %v4981
        %v4983 = vrot.slane %v4681, %v4982
        %v4984 = vlaneseq
        %v4985 = vshrl.u32 %v4984, 7
        %v4986 = vsub.s32 7, %v4985
        %v4987 = vrot.slane %v4681, %v4986
        %v4988 = vlaneseq
        %v4989 = vshrl.u32 %v4988, 7
        %v4990 = vsub.s32 0, %v4989
        %v4991 = vrot.slane %v4683, %v4990
        %v4992 = vlaneseq
        %v4993 = vshrl.u32 %v4992, 7
        %v4994 = vsub.s32 1, %v4993
        %v4995 = vrot.slane %v4683, %v4994
        %v4996 = vlaneseq
        %v4997 = vshrl.u32 %v4996, 7
        %v4998 = vsub.s32 2, %v4997
        %v4999 = vrot.slane %v4683, %v4998
        %v5000 = vlaneseq
        %v5001 = vshrl.u32 %v5000, 7
        %v5002 = vsub.s32 3, %v5001
        %v5003 = vrot.slane %v4683, %v5002
        %v5004 = vlaneseq
        %v5005 = vshrl.u32 %v5004, 7
        %v5006 = vsub.s32 4, %v5005
        %v5007 = vrot.slane %v4683, %v5006
        %v5008 = vlaneseq
        %v5009 = vshrl.u32 %v5008, 7
        %v5010 = vsub.s32 5, %v5009
        %v5011 = vrot.slane %v4683, %v5010
        %v5012 = vlaneseq
        %v5013 = vshrl.u32 %v5012, 7
        %v5014 = vsub.s32 6, %v5013
        %v5015 = vrot.slane %v4683, %v5014
        %v5016 = vlaneseq
        %v5017 = vshrl.u32 %v5016, 7
        %v5018 = vsub.s32 7, %v5017
        %v5019 = vrot.slane %v4683, %v5018
        %v5020 = vlaneseq
        %v5021 = vshrl.u32 %v5020, 7
        %v5022 = vsub.s32 0, %v5021
        %v5023 = vrot.slane %v4685, %v5022
        %v5024 = vlaneseq
        %v5025 = vshrl.u32 %v5024, 7
        %v5026 = vsub.s32 1, %v5025
        %v5027 = vrot.slane %v4685, %v5026
        %v5028 = vlaneseq
        %v5029 = vshrl.u32 %v5028, 7
        %v5030 = vsub.s32 2, %v5029
        %v5031 = vrot.slane %v4685, %v5030
        %v5032 = vlaneseq
        %v5033 = vshrl.u32 %v5032, 7
        %v5034 = vsub.s32 3, %v5033
        %v5035 = vrot.slane %v4685, %v5034
        %v5036 = vlaneseq
        %v5037 = vshrl.u32 %v5036, 7
        %v5038 = vsub.s32 4, %v5037
        %v5039 = vrot.slane %v4685, %v5038
        %v5040 = vlaneseq
        %v5041 = vshrl.u32 %v5040, 7
        %v5042 = vsub.s32 5, %v5041
        %v5043 = vrot.slane %v4685, %v5042
        %v5044 = vlaneseq
        %v5045 = vshrl.u32 %v5044, 7
        %v5046 = vsub.s32 6, %v5045
        %v5047 = vrot.slane %v4685, %v5046
        %v5048 = vlaneseq
        %v5049 = vshrl.u32 %v5048, 7
        %v5050 = vsub.s32 7, %v5049
        %v5051 = vrot.slane %v4685, %v5050
        %v5052 = vlaneseq
        %v5053 = vshrl.u32 %v5052, 7
        %v5054 = vsub.s32 0, %v5053
        %v5055 = vrot.slane %v4687, %v5054
        %v5056 = vlaneseq
        %v5057 = vshrl.u32 %v5056, 7
        %v5058 = vsub.s32 1, %v5057
        %v5059 = vrot.slane %v4687, %v5058
        %v5060 = vlaneseq
        %v5061 = vshrl.u32 %v5060, 7
        %v5062 = vsub.s32 2, %v5061
        %v5063 = vrot.slane %v4687, %v5062
        %v5064 = vlaneseq
        %v5065 = vshrl.u32 %v5064, 7
        %v5066 = vsub.s32 3, %v5065
        %v5067 = vrot.slane %v4687, %v5066
        %v5068 = vlaneseq
        %v5069 = vshrl.u32 %v5068, 7
        %v5070 = vsub.s32 4, %v5069
        %v5071 = vrot.slane %v4687, %v5070
        %v5072 = vlaneseq
        %v5073 = vshrl.u32 %v5072, 7
        %v5074 = vsub.s32 5, %v5073
        %v5075 = vrot.slane %v4687, %v5074
        %v5076 = vlaneseq
        %v5077 = vshrl.u32 %v5076, 7
        %v5078 = vsub.s32 6, %v5077
        %v5079 = vrot.slane %v4687, %v5078
        %v5080 = vlaneseq
        %v5081 = vshrl.u32 %v5080, 7
        %v5082 = vsub.s32 7, %v5081
        %v5083 = vrot.slane %v4687, %v5082
        %v5084 = vlaneseq
        %v5085 = vshrl.u32 %v5084, 7
        %v5086 = vsub.s32 0, %v5085
        %v5087 = vrot.slane %v4689, %v5086
        %v5088 = vlaneseq
        %v5089 = vshrl.u32 %v5088, 7
        %v5090 = vsub.s32 1, %v5089
        %v5091 = vrot.slane %v4689, %v5090
        %v5092 = vlaneseq
        %v5093 = vshrl.u32 %v5092, 7
        %v5094 = vsub.s32 2, %v5093
        %v5095 = vrot.slane %v4689, %v5094
        %v5096 = vlaneseq
        %v5097 = vshrl.u32 %v5096, 7
        %v5098 = vsub.s32 3, %v5097
        %v5099 = vrot.slane %v4689, %v5098
        %v5100 = vlaneseq
        %v5101 = vshrl.u32 %v5100, 7
        %v5102 = vsub.s32 4, %v5101
        %v5103 = vrot.slane %v4689, %v5102
        %v5104 = vlaneseq
        %v5105 = vshrl.u32 %v5104, 7
        %v5106 = vsub.s32 5, %v5105
        %v5107 = vrot.slane %v4689, %v5106
        %v5108 = vlaneseq
        %v5109 = vshrl.u32 %v5108, 7
        %v5110 = vsub.s32 6, %v5109
        %v5111 = vrot.slane %v4689, %v5110
        %v5112 = vlaneseq
        %v5113 = vshrl.u32 %v5112, 7
        %v5114 = vsub.s32 7, %v5113
        %v5115 = vrot.slane %v4689, %v5114
        %v5116 = vlaneseq
        %v5117 = vshrl.u32 %v5116, 7
        %v5118 = vsub.s32 0, %v5117
        %v5119 = vrot.slane %v4691, %v5118
        %v5120 = vlaneseq
        %v5121 = vshrl.u32 %v5120, 7
        %v5122 = vsub.s32 1, %v5121
        %v5123 = vrot.slane %v4691, %v5122
        %v5124 = vlaneseq
        %v5125 = vshrl.u32 %v5124, 7
        %v5126 = vsub.s32 2, %v5125
        %v5127 = vrot.slane %v4691, %v5126
        %v5128 = vlaneseq
        %v5129 = vshrl.u32 %v5128, 7
        %v5130 = vsub.s32 3, %v5129
        %v5131 = vrot.slane %v4691, %v5130
        %v5132 = vlaneseq
        %v5133 = vshrl.u32 %v5132, 7
        %v5134 = vsub.s32 4, %v5133
        %v5135 = vrot.slane %v4691, %v5134
        %v5136 = vlaneseq
        %v5137 = vshrl.u32 %v5136, 7
        %v5138 = vsub.s32 5, %v5137
        %v5139 = vrot.slane %v4691, %v5138
        %v5140 = vlaneseq
        %v5141 = vshrl.u32 %v5140, 7
        %v5142 = vsub.s32 6, %v5141
        %v5143 = vrot.slane %v4691, %v5142
        %v5144 = vlaneseq
        %v5145 = vshrl.u32 %v5144, 7
        %v5146 = vsub.s32 7, %v5145
        %v5147 = vrot.slane %v4691, %v5146
        %v5148 = vlaneseq
        %v5149 = vshrl.u32 %v5148, 7
        %v5150 = vsub.s32 0, %v5149
        %v5151 = vrot.slane %v4693, %v5150
        %v5152 = vlaneseq
        %v5153 = vshrl.u32 %v5152, 7
        %v5154 = vsub.s32 1, %v5153
        %v5155 = vrot.slane %v4693, %v5154
        %v5156 = vlaneseq
        %v5157 = vshrl.u32 %v5156, 7
        %v5158 = vsub.s32 2, %v5157
        %v5159 = vrot.slane %v4693, %v5158
        %v5160 = vlaneseq
        %v5161 = vshrl.u32 %v5160, 7
        %v5162 = vsub.s32 3, %v5161
        %v5163 = vrot.slane %v4693, %v5162
        %v5164 = vlaneseq
        %v5165 = vshrl.u32 %v5164, 7
        %v5166 = vsub.s32 4, %v5165
        %v5167 = vrot.slane %v4693, %v5166
        %v5168 = vlaneseq
        %v5169 = vshrl.u32 %v5168, 7
        %v5170 = vsub.s32 5, %v5169
        %v5171 = vrot.slane %v4693, %v5170
        %v5172 = vlaneseq
        %v5173 = vshrl.u32 %v5172, 7
        %v5174 = vsub.s32 6, %v5173
        %v5175 = vrot.slane %v4693, %v5174
        %v5176 = vlaneseq
        %v5177 = vshrl.u32 %v5176, 7
        %v5178 = vsub.s32 7, %v5177
        %v5179 = vrot.slane %v4693, %v5178
        %v5180 = vlaneseq
        %v5181 = vshrl.u32 %v5180, 7
        %v5182 = vsub.s32 0, %v5181
        %v5183 = vrot.slane %v4695, %v5182
        %v5184 = vlaneseq
        %v5185 = vshrl.u32 %v5184, 7
        %v5186 = vsub.s32 1, %v5185
        %v5187 = vrot.slane %v4695, %v5186
        %v5188 = vlaneseq
        %v5189 = vshrl.u32 %v5188, 7
        %v5190 = vsub.s32 2, %v5189
        %v5191 = vrot.slane %v4695, %v5190
        %v5192 = vlaneseq
        %v5193 = vshrl.u32 %v5192, 7
        %v5194 = vsub.s32 3, %v5193
        %v5195 = vrot.slane %v4695, %v5194
        %v5196 = vlaneseq
        %v5197 = vshrl.u32 %v5196, 7
        %v5198 = vsub.s32 4, %v5197
        %v5199 = vrot.slane %v4695, %v5198
        %v5200 = vlaneseq
        %v5201 = vshrl.u32 %v5200, 7
        %v5202 = vsub.s32 5, %v5201
        %v5203 = vrot.slane %v4695, %v5202
        %v5204 = vlaneseq
        %v5205 = vshrl.u32 %v5204, 7
        %v5206 = vsub.s32 6, %v5205
        %v5207 = vrot.slane %v4695, %v5206
        %v5208 = vlaneseq
        %v5209 = vshrl.u32 %v5208, 7
        %v5210 = vsub.s32 7, %v5209
        %v5211 = vrot.slane %v4695, %v5210
        %v5212 = vlaneseq
        %v5213 = vshrl.u32 %v5212, 7
        %v5214 = vsub.s32 0, %v5213
        %v5215 = vrot.slane %v4697, %v5214
        %v5216 = vlaneseq
        %v5217 = vshrl.u32 %v5216, 7
        %v5218 = vsub.s32 1, %v5217
        %v5219 = vrot.slane %v4697, %v5218
        %v5220 = vlaneseq
        %v5221 = vshrl.u32 %v5220, 7
        %v5222 = vsub.s32 2, %v5221
        %v5223 = vrot.slane %v4697, %v5222
        %v5224 = vlaneseq
        %v5225 = vshrl.u32 %v5224, 7
        %v5226 = vsub.s32 3, %v5225
        %v5227 = vrot.slane %v4697, %v5226
        %v5228 = vlaneseq
        %v5229 = vshrl.u32 %v5228, 7
        %v5230 = vsub.s32 4, %v5229
        %v5231 = vrot.slane %v4697, %v5230
        %v5232 = vlaneseq
        %v5233 = vshrl.u32 %v5232, 7
        %v5234 = vsub.s32 5, %v5233
        %v5235 = vrot.slane %v4697, %v5234
        %v5236 = vlaneseq
        %v5237 = vshrl.u32 %v5236, 7
        %v5238 = vsub.s32 6, %v5237
        %v5239 = vrot.slane %v4697, %v5238
        %v5240 = vlaneseq
        %v5241 = vshrl.u32 %v5240, 7
        %v5242 = vsub.s32 7, %v5241
        %v5243 = vrot.slane %v4697, %v5242
        %v5244 = vlaneseq
        %v5245 = vshrl.u32 %v5244, 7
        %v5246 = vsub.s32 0, %v5245
        %v5247 = vrot.slane %v4699, %v5246
        %v5248 = vlaneseq
        %v5249 = vshrl.u32 %v5248, 7
        %v5250 = vsub.s32 1, %v5249
        %v5251 = vrot.slane %v4699, %v5250
        %v5252 = vlaneseq
        %v5253 = vshrl.u32 %v5252, 7
        %v5254 = vsub.s32 2, %v5253
        %v5255 = vrot.slane %v4699, %v5254
        %v5256 = vlaneseq
        %v5257 = vshrl.u32 %v5256, 7
        %v5258 = vsub.s32 3, %v5257
        %v5259 = vrot.slane %v4699, %v5258
        %v5260 = vlaneseq
        %v5261 = vshrl.u32 %v5260, 7
        %v5262 = vsub.s32 4, %v5261
        %v5263 = vrot.slane %v4699, %v5262
        %v5264 = vlaneseq
        %v5265 = vshrl.u32 %v5264, 7
        %v5266 = vsub.s32 5, %v5265
        %v5267 = vrot.slane %v4699, %v5266
        %v5268 = vlaneseq
        %v5269 = vshrl.u32 %v5268, 7
        %v5270 = vsub.s32 6, %v5269
        %v5271 = vrot.slane %v4699, %v5270
        %v5272 = vlaneseq
        %v5273 = vshrl.u32 %v5272, 7
        %v5274 = vsub.s32 7, %v5273
        %v5275 = vrot.slane %v4699, %v5274
        %v5276 = vlaneseq
        %v5277 = vshrl.u32 %v5276, 7
        %v5278 = vsub.s32 0, %v5277
        %v5279 = vrot.slane %v4701, %v5278
        %v5280 = vlaneseq
        %v5281 = vshrl.u32 %v5280, 7
        %v5282 = vsub.s32 1, %v5281
        %v5283 = vrot.slane %v4701, %v5282
        %v5284 = vlaneseq
        %v5285 = vshrl.u32 %v5284, 7
        %v5286 = vsub.s32 2, %v5285
        %v5287 = vrot.slane %v4701, %v5286
        %v5288 = vlaneseq
        %v5289 = vshrl.u32 %v5288, 7
        %v5290 = vsub.s32 3, %v5289
        %v5291 = vrot.slane %v4701, %v5290
        %v5292 = vlaneseq
        %v5293 = vshrl.u32 %v5292, 7
        %v5294 = vsub.s32 4, %v5293
        %v5295 = vrot.slane %v4701, %v5294
        %v5296 = vlaneseq
        %v5297 = vshrl.u32 %v5296, 7
        %v5298 = vsub.s32 5, %v5297
        %v5299 = vrot.slane %v4701, %v5298
        %v5300 = vlaneseq
        %v5301 = vshrl.u32 %v5300, 7
        %v5302 = vsub.s32 6, %v5301
        %v5303 = vrot.slane %v4701, %v5302
        %v5304 = vlaneseq
        %v5305 = vshrl.u32 %v5304, 7
        %v5306 = vsub.s32 7, %v5305
        %v5307 = vrot.slane %v4701, %v5306
        %v5308 = vlaneseq
        %v5309 = vshrl.u32 %v5308, 7
        %v5310 = vsub.s32 0, %v5309
        %v5311 = vrot.slane %v4703, %v5310
        %v5312 = vlaneseq
        %v5313 = vshrl.u32 %v5312, 7
        %v5314 = vsub.s32 1, %v5313
        %v5315 = vrot.slane %v4703, %v5314
        %v5316 = vlaneseq
        %v5317 = vshrl.u32 %v5316, 7
        %v5318 = vsub.s32 2, %v5317
        %v5319 = vrot.slane %v4703, %v5318
        %v5320 = vlaneseq
        %v5321 = vshrl.u32 %v5320, 7
        %v5322 = vsub.s32 3, %v5321
        %v5323 = vrot.slane %v4703, %v5322
        %v5324 = vlaneseq
        %v5325 = vshrl.u32 %v5324, 7
        %v5326 = vsub.s32 4, %v5325
        %v5327 = vrot.slane %v4703, %v5326
        %v5328 = vlaneseq
        %v5329 = vshrl.u32 %v5328, 7
        %v5330 = vsub.s32 5, %v5329
        %v5331 = vrot.slane %v4703, %v5330
        %v5332 = vlaneseq
        %v5333 = vshrl.u32 %v5332, 7
        %v5334 = vsub.s32 6, %v5333
        %v5335 = vrot.slane %v4703, %v5334
        %v5336 = vlaneseq
        %v5337 = vshrl.u32 %v5336, 7
        %v5338 = vsub.s32 7, %v5337
        %v5339 = vrot.slane %v4703, %v5338
        %v5340 = vlaneseq
        %v5341 = vshrl.u32 %v5340, 7
        %v5342 = vsub.s32 0, %v5341
        %v5343 = vrot.slane %v4705, %v5342
        %v5344 = vlaneseq
        %v5345 = vshrl.u32 %v5344, 7
        %v5346 = vsub.s32 1, %v5345
        %v5347 = vrot.slane %v4705, %v5346
        %v5348 = vlaneseq
        %v5349 = vshrl.u32 %v5348, 7
        %v5350 = vsub.s32 2, %v5349
        %v5351 = vrot.slane %v4705, %v5350
        %v5352 = vlaneseq
        %v5353 = vshrl.u32 %v5352, 7
        %v5354 = vsub.s32 3, %v5353
        %v5355 = vrot.slane %v4705, %v5354
        %v5356 = vlaneseq
        %v5357 = vshrl.u32 %v5356, 7
        %v5358 = vsub.s32 4, %v5357
        %v5359 = vrot.slane %v4705, %v5358
        %v5360 = vlaneseq
        %v5361 = vshrl.u32 %v5360, 7
        %v5362 = vsub.s32 5, %v5361
        %v5363 = vrot.slane %v4705, %v5362
        %v5364 = vlaneseq
        %v5365 = vshrl.u32 %v5364, 7
        %v5366 = vsub.s32 6, %v5365
        %v5367 = vrot.slane %v4705, %v5366
        %v5368 = vlaneseq
        %v5369 = vshrl.u32 %v5368, 7
        %v5370 = vsub.s32 7, %v5369
        %v5371 = vrot.slane %v4705, %v5370
        %v5372 = vlaneseq
        %v5373 = vshrl.u32 %v5372, 7
        %v5374 = vsub.s32 0, %v5373
        %v5375 = vrot.slane %v4707, %v5374
        %v5376 = vlaneseq
        %v5377 = vshrl.u32 %v5376, 7
        %v5378 = vsub.s32 1, %v5377
        %v5379 = vrot.slane %v4707, %v5378
        %v5380 = vlaneseq
        %v5381 = vshrl.u32 %v5380, 7
        %v5382 = vsub.s32 2, %v5381
        %v5383 = vrot.slane %v4707, %v5382
        %v5384 = vlaneseq
        %v5385 = vshrl.u32 %v5384, 7
        %v5386 = vsub.s32 3, %v5385
        %v5387 = vrot.slane %v4707, %v5386
        %v5388 = vlaneseq
        %v5389 = vshrl.u32 %v5388, 7
        %v5390 = vsub.s32 4, %v5389
        %v5391 = vrot.slane %v4707, %v5390
        %v5392 = vlaneseq
        %v5393 = vshrl.u32 %v5392, 7
        %v5394 = vsub.s32 5, %v5393
        %v5395 = vrot.slane %v4707, %v5394
        %v5396 = vlaneseq
        %v5397 = vshrl.u32 %v5396, 7
        %v5398 = vsub.s32 6, %v5397
        %v5399 = vrot.slane %v4707, %v5398
        %v5400 = vlaneseq
        %v5401 = vshrl.u32 %v5400, 7
        %v5402 = vsub.s32 7, %v5401
        %v5403 = vrot.slane %v4707, %v5402
        %v5404 = vlaneseq
        %v5405 = vshrl.u32 %v5404, 7
        %v5406 = vsub.s32 0, %v5405
        %v5407 = vrot.slane %v4709, %v5406
        %v5408 = vlaneseq
        %v5409 = vshrl.u32 %v5408, 7
        %v5410 = vsub.s32 1, %v5409
        %v5411 = vrot.slane %v4709, %v5410
        %v5412 = vlaneseq
        %v5413 = vshrl.u32 %v5412, 7
        %v5414 = vsub.s32 2, %v5413
        %v5415 = vrot.slane %v4709, %v5414
        %v5416 = vlaneseq
        %v5417 = vshrl.u32 %v5416, 7
        %v5418 = vsub.s32 3, %v5417
        %v5419 = vrot.slane %v4709, %v5418
        %v5420 = vlaneseq
        %v5421 = vshrl.u32 %v5420, 7
        %v5422 = vsub.s32 4, %v5421
        %v5423 = vrot.slane %v4709, %v5422
        %v5424 = vlaneseq
        %v5425 = vshrl.u32 %v5424, 7
        %v5426 = vsub.s32 5, %v5425
        %v5427 = vrot.slane %v4709, %v5426
        %v5428 = vlaneseq
        %v5429 = vshrl.u32 %v5428, 7
        %v5430 = vsub.s32 6, %v5429
        %v5431 = vrot.slane %v4709, %v5430
        %v5432 = vlaneseq
        %v5433 = vshrl.u32 %v5432, 7
        %v5434 = vsub.s32 7, %v5433
        %v5435 = vrot.slane %v4709, %v5434
        %v5436 = vlaneseq
        %v5437 = vshrl.u32 %v5436, 7
        %v5438 = vsub.s32 0, %v5437
        %v5439 = vrot.slane %v4711, %v5438
        %v5440 = vlaneseq
        %v5441 = vshrl.u32 %v5440, 7
        %v5442 = vsub.s32 1, %v5441
        %v5443 = vrot.slane %v4711, %v5442
        %v5444 = vlaneseq
        %v5445 = vshrl.u32 %v5444, 7
        %v5446 = vsub.s32 2, %v5445
        %v5447 = vrot.slane %v4711, %v5446
        %v5448 = vlaneseq
        %v5449 = vshrl.u32 %v5448, 7
        %v5450 = vsub.s32 3, %v5449
        %v5451 = vrot.slane %v4711, %v5450
        %v5452 = vlaneseq
        %v5453 = vshrl.u32 %v5452, 7
        %v5454 = vsub.s32 4, %v5453
        %v5455 = vrot.slane %v4711, %v5454
        %v5456 = vlaneseq
        %v5457 = vshrl.u32 %v5456, 7
        %v5458 = vsub.s32 5, %v5457
        %v5459 = vrot.slane %v4711, %v5458
        %v5460 = vlaneseq
        %v5461 = vshrl.u32 %v5460, 7
        %v5462 = vsub.s32 6, %v5461
        %v5463 = vrot.slane %v4711, %v5462
        %v5464 = vlaneseq
        %v5465 = vshrl.u32 %v5464, 7
        %v5466 = vsub.s32 7, %v5465
        %v5467 = vrot.slane %v4711, %v5466
        %v5468 = vlaneseq
        %v5469 = vshrl.u32 %v5468, 7
        %v5470 = vsub.s32 0, %v5469
        %v5471 = vrot.slane %v4713, %v5470
        %v5472 = vlaneseq
        %v5473 = vshrl.u32 %v5472, 7
        %v5474 = vsub.s32 1, %v5473
        %v5475 = vrot.slane %v4713, %v5474
        %v5476 = vlaneseq
        %v5477 = vshrl.u32 %v5476, 7
        %v5478 = vsub.s32 2, %v5477
        %v5479 = vrot.slane %v4713, %v5478
        %v5480 = vlaneseq
        %v5481 = vshrl.u32 %v5480, 7
        %v5482 = vsub.s32 3, %v5481
        %v5483 = vrot.slane %v4713, %v5482
        %v5484 = vlaneseq
        %v5485 = vshrl.u32 %v5484, 7
        %v5486 = vsub.s32 4, %v5485
        %v5487 = vrot.slane %v4713, %v5486
        %v5488 = vlaneseq
        %v5489 = vshrl.u32 %v5488, 7
        %v5490 = vsub.s32 5, %v5489
        %v5491 = vrot.slane %v4713, %v5490
        %v5492 = vlaneseq
        %v5493 = vshrl.u32 %v5492, 7
        %v5494 = vsub.s32 6, %v5493
        %v5495 = vrot.slane %v4713, %v5494
        %v5496 = vlaneseq
        %v5497 = vshrl.u32 %v5496, 7
        %v5498 = vsub.s32 7, %v5497
        %v5499 = vrot.slane %v4713, %v5498
        %v5500 = vlaneseq
        %v5501 = vshrl.u32 %v5500, 7
        %v5502 = vsub.s32 0, %v5501
        %v5503 = vrot.slane %v4715, %v5502
        %v5504 = vlaneseq
        %v5505 = vshrl.u32 %v5504, 7
        %v5506 = vsub.s32 1, %v5505
        %v5507 = vrot.slane %v4715, %v5506
        %v5508 = vlaneseq
        %v5509 = vshrl.u32 %v5508, 7
        %v5510 = vsub.s32 2, %v5509
        %v5511 = vrot.slane %v4715, %v5510
        %v5512 = vlaneseq
        %v5513 = vshrl.u32 %v5512, 7
        %v5514 = vsub.s32 3, %v5513
        %v5515 = vrot.slane %v4715, %v5514
        %v5516 = vlaneseq
        %v5517 = vshrl.u32 %v5516, 7
        %v5518 = vsub.s32 4, %v5517
        %v5519 = vrot.slane %v4715, %v5518
        %v5520 = vlaneseq
        %v5521 = vshrl.u32 %v5520, 7
        %v5522 = vsub.s32 5, %v5521
        %v5523 = vrot.slane %v4715, %v5522
        %v5524 = vlaneseq
        %v5525 = vshrl.u32 %v5524, 7
        %v5526 = vsub.s32 6, %v5525
        %v5527 = vrot.slane %v4715, %v5526
        %v5528 = vlaneseq
        %v5529 = vshrl.u32 %v5528, 7
        %v5530 = vsub.s32 7, %v5529
        %v5531 = vrot.slane %v4715, %v5530
        %v5532 = vlaneseq
        %v5533 = vshrl.u32 %v5532, 7
        %v5534 = vsub.s32 0, %v5533
        %v5535 = vrot.slane %v4717, %v5534
        %v5536 = vlaneseq
        %v5537 = vshrl.u32 %v5536, 7
        %v5538 = vsub.s32 1, %v5537
        %v5539 = vrot.slane %v4717, %v5538
        %v5540 = vlaneseq
        %v5541 = vshrl.u32 %v5540, 7
        %v5542 = vsub.s32 2, %v5541
        %v5543 = vrot.slane %v4717, %v5542
        %v5544 = vlaneseq
        %v5545 = vshrl.u32 %v5544, 7
        %v5546 = vsub.s32 3, %v5545
        %v5547 = vrot.slane %v4717, %v5546
        %v5548 = vlaneseq
        %v5549 = vshrl.u32 %v5548, 7
        %v5550 = vsub.s32 4, %v5549
        %v5551 = vrot.slane %v4717, %v5550
        %v5552 = vlaneseq
        %v5553 = vshrl.u32 %v5552, 7
        %v5554 = vsub.s32 5, %v5553
        %v5555 = vrot.slane %v4717, %v5554
        %v5556 = vlaneseq
        %v5557 = vshrl.u32 %v5556, 7
        %v5558 = vsub.s32 6, %v5557
        %v5559 = vrot.slane %v4717, %v5558
        %v5560 = vlaneseq
        %v5561 = vshrl.u32 %v5560, 7
        %v5562 = vsub.s32 7, %v5561
        %v5563 = vrot.slane %v4717, %v5562
        %v5564 = vlaneseq
        %v5565 = vshrl.u32 %v5564, 7
        %v5566 = vsub.s32 0, %v5565
        %v5567 = vrot.slane %v4719, %v5566
        %v5568 = vlaneseq
        %v5569 = vshrl.u32 %v5568, 7
        %v5570 = vsub.s32 1, %v5569
        %v5571 = vrot.slane %v4719, %v5570
        %v5572 = vlaneseq
        %v5573 = vshrl.u32 %v5572, 7
        %v5574 = vsub.s32 2, %v5573
        %v5575 = vrot.slane %v4719, %v5574
        %v5576 = vlaneseq
        %v5577 = vshrl.u32 %v5576, 7
        %v5578 = vsub.s32 3, %v5577
        %v5579 = vrot.slane %v4719, %v5578
        %v5580 = vlaneseq
        %v5581 = vshrl.u32 %v5580, 7
        %v5582 = vsub.s32 4, %v5581
        %v5583 = vrot.slane %v4719, %v5582
        %v5584 = vlaneseq
        %v5585 = vshrl.u32 %v5584, 7
        %v5586 = vsub.s32 5, %v5585
        %v5587 = vrot.slane %v4719, %v5586
        %v5588 = vlaneseq
        %v5589 = vshrl.u32 %v5588, 7
        %v5590 = vsub.s32 6, %v5589
        %v5591 = vrot.slane %v4719, %v5590
        %v5592 = vlaneseq
        %v5593 = vshrl.u32 %v5592, 7
        %v5594 = vsub.s32 7, %v5593
        %v5595 = vrot.slane %v4719, %v5594
        %v5596 = vlaneseq
        %v5597 = vshrl.u32 %v5596, 7
        %v5598 = vsub.s32 0, %v5597
        %v5599 = vrot.slane %v4721, %v5598
        %v5600 = vlaneseq
        %v5601 = vshrl.u32 %v5600, 7
        %v5602 = vsub.s32 1, %v5601
        %v5603 = vrot.slane %v4721, %v5602
        %v5604 = vlaneseq
        %v5605 = vshrl.u32 %v5604, 7
        %v5606 = vsub.s32 2, %v5605
        %v5607 = vrot.slane %v4721, %v5606
        %v5608 = vlaneseq
        %v5609 = vshrl.u32 %v5608, 7
        %v5610 = vsub.s32 3, %v5609
        %v5611 = vrot.slane %v4721, %v5610
        %v5612 = vlaneseq
        %v5613 = vshrl.u32 %v5612, 7
        %v5614 = vsub.s32 4, %v5613
        %v5615 = vrot.slane %v4721, %v5614
        %v5616 = vlaneseq
        %v5617 = vshrl.u32 %v5616, 7
        %v5618 = vsub.s32 5, %v5617
        %v5619 = vrot.slane %v4721, %v5618
        %v5620 = vlaneseq
        %v5621 = vshrl.u32 %v5620, 7
        %v5622 = vsub.s32 6, %v5621
        %v5623 = vrot.slane %v4721, %v5622
        %v5624 = vlaneseq
        %v5625 = vshrl.u32 %v5624, 7
        %v5626 = vsub.s32 7, %v5625
        %v5627 = vrot.slane %v4721, %v5626
        %v5628 = vlaneseq
        %v5629 = vshrl.u32 %v5628, 7
        %v5630 = vsub.s32 0, %v5629
        %v5631 = vrot.slane %v4723, %v5630
        %v5632 = vlaneseq
        %v5633 = vshrl.u32 %v5632, 7
        %v5634 = vsub.s32 1, %v5633
        %v5635 = vrot.slane %v4723, %v5634
        %v5636 = vlaneseq
        %v5637 = vshrl.u32 %v5636, 7
        %v5638 = vsub.s32 2, %v5637
        %v5639 = vrot.slane %v4723, %v5638
        %v5640 = vlaneseq
        %v5641 = vshrl.u32 %v5640, 7
        %v5642 = vsub.s32 3, %v5641
        %v5643 = vrot.slane %v4723, %v5642
        %v5644 = vlaneseq
        %v5645 = vshrl.u32 %v5644, 7
        %v5646 = vsub.s32 4, %v5645
        %v5647 = vrot.slane %v4723, %v5646
        %v5648 = vlaneseq
        %v5649 = vshrl.u32 %v5648, 7
        %v5650 = vsub.s32 5, %v5649
        %v5651 = vrot.slane %v4723, %v5650
        %v5652 = vlaneseq
        %v5653 = vshrl.u32 %v5652, 7
        %v5654 = vsub.s32 6, %v5653
        %v5655 = vrot.slane %v4723, %v5654
        %v5656 = vlaneseq
        %v5657 = vshrl.u32 %v5656, 7
        %v5658 = vsub.s32 7, %v5657
        %v5659 = vrot.slane %v4723, %v5658
        %v5660 = vlaneseq
        %v5661 = vshrl.u32 %v5660, 7
        %v5662 = vsub.s32 0, %v5661
        %v5663 = vrot.slane %v4725, %v5662
        %v5664 = vlaneseq
        %v5665 = vshrl.u32 %v5664, 7
        %v5666 = vsub.s32 1, %v5665
        %v5667 = vrot.slane %v4725, %v5666
        %v5668 = vlaneseq
        %v5669 = vshrl.u32 %v5668, 7
        %v5670 = vsub.s32 2, %v5669
        %v5671 = vrot.slane %v4725, %v5670
        %v5672 = vlaneseq
        %v5673 = vshrl.u32 %v5672, 7
        %v5674 = vsub.s32 3, %v5673
        %v5675 = vrot.slane %v4725, %v5674
        %v5676 = vlaneseq
        %v5677 = vshrl.u32 %v5676, 7
        %v5678 = vsub.s32 4, %v5677
        %v5679 = vrot.slane %v4725, %v5678
        %v5680 = vlaneseq
        %v5681 = vshrl.u32 %v5680, 7
        %v5682 = vsub.s32 5, %v5681
        %v5683 = vrot.slane %v4725, %v5682
        %v5684 = vlaneseq
        %v5685 = vshrl.u32 %v5684, 7
        %v5686 = vsub.s32 6, %v5685
        %v5687 = vrot.slane %v4725, %v5686
        %v5688 = vlaneseq
        %v5689 = vshrl.u32 %v5688, 7
        %v5690 = vsub.s32 7, %v5689
        %v5691 = vrot.slane %v4725, %v5690
        %v5692 = vlaneseq
        %v5693 = vshrl.u32 %v5692, 7
        %v5694 = vsub.s32 0, %v5693
        %v5695 = vrot.slane %v4727, %v5694
        %v5696 = vlaneseq
        %v5697 = vshrl.u32 %v5696, 7
        %v5698 = vsub.s32 1, %v5697
        %v5699 = vrot.slane %v4727, %v5698
        %v5700 = vlaneseq
        %v5701 = vshrl.u32 %v5700, 7
        %v5702 = vsub.s32 2, %v5701
        %v5703 = vrot.slane %v4727, %v5702
        %v5704 = vlaneseq
        %v5705 = vshrl.u32 %v5704, 7
        %v5706 = vsub.s32 3, %v5705
        %v5707 = vrot.slane %v4727, %v5706
        %v5708 = vlaneseq
        %v5709 = vshrl.u32 %v5708, 7
        %v5710 = vsub.s32 4, %v5709
        %v5711 = vrot.slane %v4727, %v5710
        %v5712 = vlaneseq
        %v5713 = vshrl.u32 %v5712, 7
        %v5714 = vsub.s32 5, %v5713
        %v5715 = vrot.slane %v4727, %v5714
        %v5716 = vlaneseq
        %v5717 = vshrl.u32 %v5716, 7
        %v5718 = vsub.s32 6, %v5717
        %v5719 = vrot.slane %v4727, %v5718
        %v5720 = vlaneseq
        %v5721 = vshrl.u32 %v5720, 7
        %v5722 = vsub.s32 7, %v5721
        %v5723 = vrot.slane %v4727, %v5722
        %v5724 = vlaneseq
        %v5725 = vshrl.u32 %v5724, 7
        %v5726 = vsub.s32 0, %v5725
        %v5727 = vrot.slane %v4729, %v5726
        %v5728 = vlaneseq
        %v5729 = vshrl.u32 %v5728, 7
        %v5730 = vsub.s32 1, %v5729
        %v5731 = vrot.slane %v4729, %v5730
        %v5732 = vlaneseq
        %v5733 = vshrl.u32 %v5732, 7
        %v5734 = vsub.s32 2, %v5733
        %v5735 = vrot.slane %v4729, %v5734
        %v5736 = vlaneseq
        %v5737 = vshrl.u32 %v5736, 7
        %v5738 = vsub.s32 3, %v5737
        %v5739 = vrot.slane %v4729, %v5738
        %v5740 = vlaneseq
        %v5741 = vshrl.u32 %v5740, 7
        %v5742 = vsub.s32 4, %v5741
        %v5743 = vrot.slane %v4729, %v5742
        %v5744 = vlaneseq
        %v5745 = vshrl.u32 %v5744, 7
        %v5746 = vsub.s32 5, %v5745
        %v5747 = vrot.slane %v4729, %v5746
        %v5748 = vlaneseq
        %v5749 = vshrl.u32 %v5748, 7
        %v5750 = vsub.s32 6, %v5749
        %v5751 = vrot.slane %v4729, %v5750
        %v5752 = vlaneseq
        %v5753 = vshrl.u32 %v5752, 7
        %v5754 = vsub.s32 7, %v5753
        %v5755 = vrot.slane %v4729, %v5754
        %v5756 = vlaneseq
        %v5757 = vshrl.u32 %v5756, 7
        %v5758 = vsub.s32 0, %v5757
        %v5759 = vrot.slane %v4731, %v5758
        %v5760 = vlaneseq
        %v5761 = vshrl.u32 %v5760, 7
        %v5762 = vsub.s32 1, %v5761
        %v5763 = vrot.slane %v4731, %v5762
        %v5764 = vlaneseq
        %v5765 = vshrl.u32 %v5764, 7
        %v5766 = vsub.s32 2, %v5765
        %v5767 = vrot.slane %v4731, %v5766
        %v5768 = vlaneseq
        %v5769 = vshrl.u32 %v5768, 7
        %v5770 = vsub.s32 3, %v5769
        %v5771 = vrot.slane %v4731, %v5770
        %v5772 = vlaneseq
        %v5773 = vshrl.u32 %v5772, 7
        %v5774 = vsub.s32 4, %v5773
        %v5775 = vrot.slane %v4731, %v5774
        %v5776 = vlaneseq
        %v5777 = vshrl.u32 %v5776, 7
        %v5778 = vsub.s32 5, %v5777
        %v5779 = vrot.slane %v4731, %v5778
        %v5780 = vlaneseq
        %v5781 = vshrl.u32 %v5780, 7
        %v5782 = vsub.s32 6, %v5781
        %v5783 = vrot.slane %v4731, %v5782
        %v5784 = vlaneseq
        %v5785 = vshrl.u32 %v5784, 7
        %v5786 = vsub.s32 7, %v5785
        %v5787 = vrot.slane %v4731, %v5786
        %v5788 = vcombine.low %v4767, %v4771
        %v5789 = vcombine.low %v4775, %v4779
        %v5790 = vcombine.low %v4783, %v4787
        %v5791 = vcombine.low %v4791, %v4795
        %v5793 = vunpack.c.l.s4 1966171168
        %v5794 = vunpack.c.0.s8 %v5793
        %v5795 = vlaneseq
        %v5796 = vshrl.u32 %v5795, 7
        %v5797 = vsub.s32 %v5794, %v5796
        %v5798 = vrot.slane %v5788, %v5797
        %v5800 = vunpack.c.l.s4 1966171168
        %v5801 = vunpack.c.0.s8 %v5800
        %v5802 = vlaneseq
        %v5803 = vshrl.u32 %v5802, 7
        %v5804 = vsub.s32 %v5801, %v5803
        %v5805 = vrot.slane %v5789, %v5804
        %v5807 = vunpack.c.l.s4 1966171168
        %v5808 = vunpack.c.0.s8 %v5807
        %v5809 = vlaneseq
        %v5810 = vshrl.u32 %v5809, 7
        %v5811 = vsub.s32 %v5808, %v5810
        %v5812 = vrot.slane %v5790, %v5811
        %v5814 = vunpack.c.l.s4 1966171168
        %v5815 = vunpack.c.0.s8 %v5814
        %v5816 = vlaneseq
        %v5817 = vshrl.u32 %v5816, 7
        %v5818 = vsub.s32 %v5815, %v5817
        %v5819 = vrot.slane %v5791, %v5818
        %v5820 = vcombine.low %v5798, %v5805
        %v5821 = vcombine.low %v5812, %v5819
        %v5823 = vunpack.c.l.s4 1966171168
        %v5824 = vunpack.c.0.s8 %v5823
        %v5825 = vlaneseq
        %v5826 = vshrl.u32 %v5825, 7
        %v5827 = vsub.s32 %v5824, %v5826
        %v5828 = vrot.slane %v5820, %v5827
        %v5830 = vunpack.c.l.s4 1966171168
        %v5831 = vunpack.c.0.s8 %v5830
        %v5832 = vlaneseq
        %v5833 = vshrl.u32 %v5832, 7
        %v5834 = vsub.s32 %v5831, %v5833
        %v5835 = vrot.slane %v5821, %v5834
        %v5836 = vcombine.low %v5828, %v5835
        %v5837 = vcombine.low %v4799, %v4803
        %v5838 = vcombine.low %v4807, %v4811
        %v5839 = vcombine.low %v4815, %v4819
        %v5840 = vcombine.low %v4823, %v4827
        %v5842 = vunpack.c.l.s4 1966171168
        %v5843 = vunpack.c.0.s8 %v5842
        %v5844 = vlaneseq
        %v5845 = vshrl.u32 %v5844, 7
        %v5846 = vsub.s32 %v5843, %v5845
        %v5847 = vrot.slane %v5837, %v5846
        %v5849 = vunpack.c.l.s4 1966171168
        %v5850 = vunpack.c.0.s8 %v5849
        %v5851 = vlaneseq
        %v5852 = vshrl.u32 %v5851, 7
        %v5853 = vsub.s32 %v5850, %v5852
        %v5854 = vrot.slane %v5838, %v5853
        %v5856 = vunpack.c.l.s4 1966171168
        %v5857 = vunpack.c.0.s8 %v5856
        %v5858 = vlaneseq
        %v5859 = vshrl.u32 %v5858, 7
        %v5860 = vsub.s32 %v5857, %v5859
        %v5861 = vrot.slane %v5839, %v5860
        %v5863 = vunpack.c.l.s4 1966171168
        %v5864 = vunpack.c.0.s8 %v5863
        %v5865 = vlaneseq
        %v5866 = vshrl.u32 %v5865, 7
        %v5867 = vsub.s32 %v5864, %v5866
        %v5868 = vrot.slane %v5840, %v5867
        %v5869 = vcombine.low %v5847, %v5854
        %v5870 = vcombine.low %v5861, %v5868
        %v5872 = vunpack.c.l.s4 1966171168
        %v5873 = vunpack.c.0.s8 %v5872
        %v5874 = vlaneseq
        %v5875 = vshrl.u32 %v5874, 7
        %v5876 = vsub.s32 %v5873, %v5875
        %v5877 = vrot.slane %v5869, %v5876
        %v5879 = vunpack.c.l.s4 1966171168
        %v5880 = vunpack.c.0.s8 %v5879
        %v5881 = vlaneseq
        %v5882 = vshrl.u32 %v5881, 7
        %v5883 = vsub.s32 %v5880, %v5882
        %v5884 = vrot.slane %v5870, %v5883
        %v5885 = vcombine.low %v5877, %v5884
        %v5886 = vcombine.low %v4831, %v4835
        %v5887 = vcombine.low %v4839, %v4843
        %v5888 = vcombine.low %v4847, %v4851
        %v5889 = vcombine.low %v4855, %v4859
        %v5891 = vunpack.c.l.s4 1966171168
        %v5892 = vunpack.c.0.s8 %v5891
        %v5893 = vlaneseq
        %v5894 = vshrl.u32 %v5893, 7
        %v5895 = vsub.s32 %v5892, %v5894
        %v5896 = vrot.slane %v5886, %v5895
        %v5898 = vunpack.c.l.s4 1966171168
        %v5899 = vunpack.c.0.s8 %v5898
        %v5900 = vlaneseq
        %v5901 = vshrl.u32 %v5900, 7
        %v5902 = vsub.s32 %v5899, %v5901
        %v5903 = vrot.slane %v5887, %v5902
        %v5905 = vunpack.c.l.s4 1966171168
        %v5906 = vunpack.c.0.s8 %v5905
        %v5907 = vlaneseq
        %v5908 = vshrl.u32 %v5907, 7
        %v5909 = vsub.s32 %v5906, %v5908
        %v5910 = vrot.slane %v5888, %v5909
        %v5912 = vunpack.c.l.s4 1966171168
        %v5913 = vunpack.c.0.s8 %v5912
        %v5914 = vlaneseq
        %v5915 = vshrl.u32 %v5914, 7
        %v5916 = vsub.s32 %v5913, %v5915
        %v5917 = vrot.slane %v5889, %v5916
        %v5918 = vcombine.low %v5896, %v5903
        %v5919 = vcombine.low %v5910, %v5917
        %v5921 = vunpack.c.l.s4 1966171168
        %v5922 = vunpack.c.0.s8 %v5921
        %v5923 = vlaneseq
        %v5924 = vshrl.u32 %v5923, 7
        %v5925 = vsub.s32 %v5922, %v5924
        %v5926 = vrot.slane %v5918, %v5925
        %v5928 = vunpack.c.l.s4 1966171168
        %v5929 = vunpack.c.0.s8 %v5928
        %v5930 = vlaneseq
        %v5931 = vshrl.u32 %v5930, 7
        %v5932 = vsub.s32 %v5929, %v5931
        %v5933 = vrot.slane %v5919, %v5932
        %v5934 = vcombine.low %v5926, %v5933
        %v5935 = vcombine.low %v4863, %v4867
        %v5936 = vcombine.low %v4871, %v4875
        %v5937 = vcombine.low %v4879, %v4883
        %v5938 = vcombine.low %v4887, %v4891
        %v5940 = vunpack.c.l.s4 1966171168
        %v5941 = vunpack.c.0.s8 %v5940
        %v5942 = vlaneseq
        %v5943 = vshrl.u32 %v5942, 7
        %v5944 = vsub.s32 %v5941, %v5943
        %v5945 = vrot.slane %v5935, %v5944
        %v5947 = vunpack.c.l.s4 1966171168
        %v5948 = vunpack.c.0.s8 %v5947
        %v5949 = vlaneseq
        %v5950 = vshrl.u32 %v5949, 7
        %v5951 = vsub.s32 %v5948, %v5950
        %v5952 = vrot.slane %v5936, %v5951
        %v5954 = vunpack.c.l.s4 1966171168
        %v5955 = vunpack.c.0.s8 %v5954
        %v5956 = vlaneseq
        %v5957 = vshrl.u32 %v5956, 7
        %v5958 = vsub.s32 %v5955, %v5957
        %v5959 = vrot.slane %v5937, %v5958
        %v5961 = vunpack.c.l.s4 1966171168
        %v5962 = vunpack.c.0.s8 %v5961
        %v5963 = vlaneseq
        %v5964 = vshrl.u32 %v5963, 7
        %v5965 = vsub.s32 %v5962, %v5964
        %v5966 = vrot.slane %v5938, %v5965
        %v5967 = vcombine.low %v5945, %v5952
        %v5968 = vcombine.low %v5959, %v5966
        %v5970 = vunpack.c.l.s4 1966171168
        %v5971 = vunpack.c.0.s8 %v5970
        %v5972 = vlaneseq
        %v5973 = vshrl.u32 %v5972, 7
        %v5974 = vsub.s32 %v5971, %v5973
        %v5975 = vrot.slane %v5967, %v5974
        %v5977 = vunpack.c.l.s4 1966171168
        %v5978 = vunpack.c.0.s8 %v5977
        %v5979 = vlaneseq
        %v5980 = vshrl.u32 %v5979, 7
        %v5981 = vsub.s32 %v5978, %v5980
        %v5982 = vrot.slane %v5968, %v5981
        %v5983 = vcombine.low %v5975, %v5982
        %v5984 = vcombine.low %v4895, %v4899
        %v5985 = vcombine.low %v4903, %v4907
        %v5986 = vcombine.low %v4911, %v4915
        %v5987 = vcombine.low %v4919, %v4923
        %v5989 = vunpack.c.l.s4 1966171168
        %v5990 = vunpack.c.0.s8 %v5989
        %v5991 = vlaneseq
        %v5992 = vshrl.u32 %v5991, 7
        %v5993 = vsub.s32 %v5990, %v5992
        %v5994 = vrot.slane %v5984, %v5993
        %v5996 = vunpack.c.l.s4 1966171168
        %v5997 = vunpack.c.0.s8 %v5996
        %v5998 = vlaneseq
        %v5999 = vshrl.u32 %v5998, 7
        %v6000 = vsub.s32 %v5997, %v5999
        %v6001 = vrot.slane %v5985, %v6000
        %v6003 = vunpack.c.l.s4 1966171168
        %v6004 = vunpack.c.0.s8 %v6003
        %v6005 = vlaneseq
        %v6006 = vshrl.u32 %v6005, 7
        %v6007 = vsub.s32 %v6004, %v6006
        %v6008 = vrot.slane %v5986, %v6007
        %v6010 = vunpack.c.l.s4 1966171168
        %v6011 = vunpack.c.0.s8 %v6010
        %v6012 = vlaneseq
        %v6013 = vshrl.u32 %v6012, 7
        %v6014 = vsub.s32 %v6011, %v6013
        %v6015 = vrot.slane %v5987, %v6014
        %v6016 = vcombine.low %v5994, %v6001
        %v6017 = vcombine.low %v6008, %v6015
        %v6019 = vunpack.c.l.s4 1966171168
        %v6020 = vunpack.c.0.s8 %v6019
        %v6021 = vlaneseq
        %v6022 = vshrl.u32 %v6021, 7
        %v6023 = vsub.s32 %v6020, %v6022
        %v6024 = vrot.slane %v6016, %v6023
        %v6026 = vunpack.c.l.s4 1966171168
        %v6027 = vunpack.c.0.s8 %v6026
        %v6028 = vlaneseq
        %v6029 = vshrl.u32 %v6028, 7
        %v6030 = vsub.s32 %v6027, %v6029
        %v6031 = vrot.slane %v6017, %v6030
        %v6032 = vcombine.low %v6024, %v6031
        %v6033 = vcombine.low %v4927, %v4931
        %v6034 = vcombine.low %v4935, %v4939
        %v6035 = vcombine.low %v4943, %v4947
        %v6036 = vcombine.low %v4951, %v4955
        %v6038 = vunpack.c.l.s4 1966171168
        %v6039 = vunpack.c.0.s8 %v6038
        %v6040 = vlaneseq
        %v6041 = vshrl.u32 %v6040, 7
        %v6042 = vsub.s32 %v6039, %v6041
        %v6043 = vrot.slane %v6033, %v6042
        %v6045 = vunpack.c.l.s4 1966171168
        %v6046 = vunpack.c.0.s8 %v6045
        %v6047 = vlaneseq
        %v6048 = vshrl.u32 %v6047, 7
        %v6049 = vsub.s32 %v6046, %v6048
        %v6050 = vrot.slane %v6034, %v6049
        %v6052 = vunpack.c.l.s4 1966171168
        %v6053 = vunpack.c.0.s8 %v6052
        %v6054 = vlaneseq
        %v6055 = vshrl.u32 %v6054, 7
        %v6056 = vsub.s32 %v6053, %v6055
        %v6057 = vrot.slane %v6035, %v6056
        %v6059 = vunpack.c.l.s4 1966171168
        %v6060 = vunpack.c.0.s8 %v6059
        %v6061 = vlaneseq
        %v6062 = vshrl.u32 %v6061, 7
        %v6063 = vsub.s32 %v6060, %v6062
        %v6064 = vrot.slane %v6036, %v6063
        %v6065 = vcombine.low %v6043, %v6050
        %v6066 = vcombine.low %v6057, %v6064
        %v6068 = vunpack.c.l.s4 1966171168
        %v6069 = vunpack.c.0.s8 %v6068
        %v6070 = vlaneseq
        %v6071 = vshrl.u32 %v6070, 7
        %v6072 = vsub.s32 %v6069, %v6071
        %v6073 = vrot.slane %v6065, %v6072
        %v6075 = vunpack.c.l.s4 1966171168
        %v6076 = vunpack.c.0.s8 %v6075
        %v6077 = vlaneseq
        %v6078 = vshrl.u32 %v6077, 7
        %v6079 = vsub.s32 %v6076, %v6078
        %v6080 = vrot.slane %v6066, %v6079
        %v6081 = vcombine.low %v6073, %v6080
        %v6082 = vcombine.low %v4959, %v4963
        %v6083 = vcombine.low %v4967, %v4971
        %v6084 = vcombine.low %v4975, %v4979
        %v6085 = vcombine.low %v4983, %v4987
        %v6087 = vunpack.c.l.s4 1966171168
        %v6088 = vunpack.c.0.s8 %v6087
        %v6089 = vlaneseq
        %v6090 = vshrl.u32 %v6089, 7
        %v6091 = vsub.s32 %v6088, %v6090
        %v6092 = vrot.slane %v6082, %v6091
        %v6094 = vunpack.c.l.s4 1966171168
        %v6095 = vunpack.c.0.s8 %v6094
        %v6096 = vlaneseq
        %v6097 = vshrl.u32 %v6096, 7
        %v6098 = vsub.s32 %v6095, %v6097
        %v6099 = vrot.slane %v6083, %v6098
        %v6101 = vunpack.c.l.s4 1966171168
        %v6102 = vunpack.c.0.s8 %v6101
        %v6103 = vlaneseq
        %v6104 = vshrl.u32 %v6103, 7
        %v6105 = vsub.s32 %v6102, %v6104
        %v6106 = vrot.slane %v6084, %v6105
        %v6108 = vunpack.c.l.s4 1966171168
        %v6109 = vunpack.c.0.s8 %v6108
        %v6110 = vlaneseq
        %v6111 = vshrl.u32 %v6110, 7
        %v6112 = vsub.s32 %v6109, %v6111
        %v6113 = vrot.slane %v6085, %v6112
        %v6114 = vcombine.low %v6092, %v6099
        %v6115 = vcombine.low %v6106, %v6113
        %v6117 = vunpack.c.l.s4 1966171168
        %v6118 = vunpack.c.0.s8 %v6117
        %v6119 = vlaneseq
        %v6120 = vshrl.u32 %v6119, 7
        %v6121 = vsub.s32 %v6118, %v6120
        %v6122 = vrot.slane %v6114, %v6121
        %v6124 = vunpack.c.l.s4 1966171168
        %v6125 = vunpack.c.0.s8 %v6124
        %v6126 = vlaneseq
        %v6127 = vshrl.u32 %v6126, 7
        %v6128 = vsub.s32 %v6125, %v6127
        %v6129 = vrot.slane %v6115, %v6128
        %v6130 = vcombine.low %v6122, %v6129
        %v6131 = vcombine.low %v4991, %v4995
        %v6132 = vcombine.low %v4999, %v5003
        %v6133 = vcombine.low %v5007, %v5011
        %v6134 = vcombine.low %v5015, %v5019
        %v6136 = vunpack.c.l.s4 1966171168
        %v6137 = vunpack.c.0.s8 %v6136
        %v6138 = vlaneseq
        %v6139 = vshrl.u32 %v6138, 7
        %v6140 = vsub.s32 %v6137, %v6139
        %v6141 = vrot.slane %v6131, %v6140
        %v6143 = vunpack.c.l.s4 1966171168
        %v6144 = vunpack.c.0.s8 %v6143
        %v6145 = vlaneseq
        %v6146 = vshrl.u32 %v6145, 7
        %v6147 = vsub.s32 %v6144, %v6146
        %v6148 = vrot.slane %v6132, %v6147
        %v6150 = vunpack.c.l.s4 1966171168
        %v6151 = vunpack.c.0.s8 %v6150
        %v6152 = vlaneseq
        %v6153 = vshrl.u32 %v6152, 7
        %v6154 = vsub.s32 %v6151, %v6153
        %v6155 = vrot.slane %v6133, %v6154
        %v6157 = vunpack.c.l.s4 1966171168
        %v6158 = vunpack.c.0.s8 %v6157
        %v6159 = vlaneseq
        %v6160 = vshrl.u32 %v6159, 7
        %v6161 = vsub.s32 %v6158, %v6160
        %v6162 = vrot.slane %v6134, %v6161
        %v6163 = vcombine.low %v6141, %v6148
        %v6164 = vcombine.low %v6155, %v6162
        %v6166 = vunpack.c.l.s4 1966171168
        %v6167 = vunpack.c.0.s8 %v6166
        %v6168 = vlaneseq
        %v6169 = vshrl.u32 %v6168, 7
        %v6170 = vsub.s32 %v6167, %v6169
        %v6171 = vrot.slane %v6163, %v6170
        %v6173 = vunpack.c.l.s4 1966171168
        %v6174 = vunpack.c.0.s8 %v6173
        %v6175 = vlaneseq
        %v6176 = vshrl.u32 %v6175, 7
        %v6177 = vsub.s32 %v6174, %v6176
        %v6178 = vrot.slane %v6164, %v6177
        %v6179 = vcombine.low %v6171, %v6178
        %v6180 = vcombine.low %v5023, %v5027
        %v6181 = vcombine.low %v5031, %v5035
        %v6182 = vcombine.low %v5039, %v5043
        %v6183 = vcombine.low %v5047, %v5051
        %v6185 = vunpack.c.l.s4 1966171168
        %v6186 = vunpack.c.0.s8 %v6185
        %v6187 = vlaneseq
        %v6188 = vshrl.u32 %v6187, 7
        %v6189 = vsub.s32 %v6186, %v6188
        %v6190 = vrot.slane %v6180, %v6189
        %v6192 = vunpack.c.l.s4 1966171168
        %v6193 = vunpack.c.0.s8 %v6192
        %v6194 = vlaneseq
        %v6195 = vshrl.u32 %v6194, 7
        %v6196 = vsub.s32 %v6193, %v6195
        %v6197 = vrot.slane %v6181, %v6196
        %v6199 = vunpack.c.l.s4 1966171168
        %v6200 = vunpack.c.0.s8 %v6199
        %v6201 = vlaneseq
        %v6202 = vshrl.u32 %v6201, 7
        %v6203 = vsub.s32 %v6200, %v6202
        %v6204 = vrot.slane %v6182, %v6203
        %v6206 = vunpack.c.l.s4 1966171168
        %v6207 = vunpack.c.0.s8 %v6206
        %v6208 = vlaneseq
        %v6209 = vshrl.u32 %v6208, 7
        %v6210 = vsub.s32 %v6207, %v6209
        %v6211 = vrot.slane %v6183, %v6210
        %v6212 = vcombine.low %v6190, %v6197
        %v6213 = vcombine.low %v6204, %v6211
        %v6215 = vunpack.c.l.s4 1966171168
        %v6216 = vunpack.c.0.s8 %v6215
        %v6217 = vlaneseq
        %v6218 = vshrl.u32 %v6217, 7
        %v6219 = vsub.s32 %v6216, %v6218
        %v6220 = vrot.slane %v6212, %v6219
        %v6222 = vunpack.c.l.s4 1966171168
        %v6223 = vunpack.c.0.s8 %v6222
        %v6224 = vlaneseq
        %v6225 = vshrl.u32 %v6224, 7
        %v6226 = vsub.s32 %v6223, %v6225
        %v6227 = vrot.slane %v6213, %v6226
        %v6228 = vcombine.low %v6220, %v6227
        %v6229 = vcombine.low %v5055, %v5059
        %v6230 = vcombine.low %v5063, %v5067
        %v6231 = vcombine.low %v5071, %v5075
        %v6232 = vcombine.low %v5079, %v5083
        %v6234 = vunpack.c.l.s4 1966171168
        %v6235 = vunpack.c.0.s8 %v6234
        %v6236 = vlaneseq
        %v6237 = vshrl.u32 %v6236, 7
        %v6238 = vsub.s32 %v6235, %v6237
        %v6239 = vrot.slane %v6229, %v6238
        %v6241 = vunpack.c.l.s4 1966171168
        %v6242 = vunpack.c.0.s8 %v6241
        %v6243 = vlaneseq
        %v6244 = vshrl.u32 %v6243, 7
        %v6245 = vsub.s32 %v6242, %v6244
        %v6246 = vrot.slane %v6230, %v6245
        %v6248 = vunpack.c.l.s4 1966171168
        %v6249 = vunpack.c.0.s8 %v6248
        %v6250 = vlaneseq
        %v6251 = vshrl.u32 %v6250, 7
        %v6252 = vsub.s32 %v6249, %v6251
        %v6253 = vrot.slane %v6231, %v6252
        %v6255 = vunpack.c.l.s4 1966171168
        %v6256 = vunpack.c.0.s8 %v6255
        %v6257 = vlaneseq
        %v6258 = vshrl.u32 %v6257, 7
        %v6259 = vsub.s32 %v6256, %v6258
        %v6260 = vrot.slane %v6232, %v6259
        %v6261 = vcombine.low %v6239, %v6246
        %v6262 = vcombine.low %v6253, %v6260
        %v6264 = vunpack.c.l.s4 1966171168
        %v6265 = vunpack.c.0.s8 %v6264
        %v6266 = vlaneseq
        %v6267 = vshrl.u32 %v6266, 7
        %v6268 = vsub.s32 %v6265, %v6267
        %v6269 = vrot.slane %v6261, %v6268
        %v6271 = vunpack.c.l.s4 1966171168
        %v6272 = vunpack.c.0.s8 %v6271
        %v6273 = vlaneseq
        %v6274 = vshrl.u32 %v6273, 7
        %v6275 = vsub.s32 %v6272, %v6274
        %v6276 = vrot.slane %v6262, %v6275
        %v6277 = vcombine.low %v6269, %v6276
        %v6278 = vcombine.low %v5087, %v5091
        %v6279 = vcombine.low %v5095, %v5099
        %v6280 = vcombine.low %v5103, %v5107
        %v6281 = vcombine.low %v5111, %v5115
        %v6283 = vunpack.c.l.s4 1966171168
        %v6284 = vunpack.c.0.s8 %v6283
        %v6285 = vlaneseq
        %v6286 = vshrl.u32 %v6285, 7
        %v6287 = vsub.s32 %v6284, %v6286
        %v6288 = vrot.slane %v6278, %v6287
        %v6290 = vunpack.c.l.s4 1966171168
        %v6291 = vunpack.c.0.s8 %v6290
        %v6292 = vlaneseq
        %v6293 = vshrl.u32 %v6292, 7
        %v6294 = vsub.s32 %v6291, %v6293
        %v6295 = vrot.slane %v6279, %v6294
        %v6297 = vunpack.c.l.s4 1966171168
        %v6298 = vunpack.c.0.s8 %v6297
        %v6299 = vlaneseq
        %v6300 = vshrl.u32 %v6299, 7
        %v6301 = vsub.s32 %v6298, %v6300
        %v6302 = vrot.slane %v6280, %v6301
        %v6304 = vunpack.c.l.s4 1966171168
        %v6305 = vunpack.c.0.s8 %v6304
        %v6306 = vlaneseq
        %v6307 = vshrl.u32 %v6306, 7
        %v6308 = vsub.s32 %v6305, %v6307
        %v6309 = vrot.slane %v6281, %v6308
        %v6310 = vcombine.low %v6288, %v6295
        %v6311 = vcombine.low %v6302, %v6309
        %v6313 = vunpack.c.l.s4 1966171168
        %v6314 = vunpack.c.0.s8 %v6313
        %v6315 = vlaneseq
        %v6316 = vshrl.u32 %v6315, 7
        %v6317 = vsub.s32 %v6314, %v6316
        %v6318 = vrot.slane %v6310, %v6317
        %v6320 = vunpack.c.l.s4 1966171168
        %v6321 = vunpack.c.0.s8 %v6320
        %v6322 = vlaneseq
        %v6323 = vshrl.u32 %v6322, 7
        %v6324 = vsub.s32 %v6321, %v6323
        %v6325 = vrot.slane %v6311, %v6324
        %v6326 = vcombine.low %v6318, %v6325
        %v6327 = vcombine.low %v5119, %v5123
        %v6328 = vcombine.low %v5127, %v5131
        %v6329 = vcombine.low %v5135, %v5139
        %v6330 = vcombine.low %v5143, %v5147
        %v6332 = vunpack.c.l.s4 1966171168
        %v6333 = vunpack.c.0.s8 %v6332
        %v6334 = vlaneseq
        %v6335 = vshrl.u32 %v6334, 7
        %v6336 = vsub.s32 %v6333, %v6335
        %v6337 = vrot.slane %v6327, %v6336
        %v6339 = vunpack.c.l.s4 1966171168
        %v6340 = vunpack.c.0.s8 %v6339
        %v6341 = vlaneseq
        %v6342 = vshrl.u32 %v6341, 7
        %v6343 = vsub.s32 %v6340, %v6342
        %v6344 = vrot.slane %v6328, %v6343
        %v6346 = vunpack.c.l.s4 1966171168
        %v6347 = vunpack.c.0.s8 %v6346
        %v6348 = vlaneseq
        %v6349 = vshrl.u32 %v6348, 7
        %v6350 = vsub.s32 %v6347, %v6349
        %v6351 = vrot.slane %v6329, %v6350
        %v6353 = vunpack.c.l.s4 1966171168
        %v6354 = vunpack.c.0.s8 %v6353
        %v6355 = vlaneseq
        %v6356 = vshrl.u32 %v6355, 7
        %v6357 = vsub.s32 %v6354, %v6356
        %v6358 = vrot.slane %v6330, %v6357
        %v6359 = vcombine.low %v6337, %v6344
        %v6360 = vcombine.low %v6351, %v6358
        %v6362 = vunpack.c.l.s4 1966171168
        %v6363 = vunpack.c.0.s8 %v6362
        %v6364 = vlaneseq
        %v6365 = vshrl.u32 %v6364, 7
        %v6366 = vsub.s32 %v6363, %v6365
        %v6367 = vrot.slane %v6359, %v6366
        %v6369 = vunpack.c.l.s4 1966171168
        %v6370 = vunpack.c.0.s8 %v6369
        %v6371 = vlaneseq
        %v6372 = vshrl.u32 %v6371, 7
        %v6373 = vsub.s32 %v6370, %v6372
        %v6374 = vrot.slane %v6360, %v6373
        %v6375 = vcombine.low %v6367, %v6374
        %v6376 = vcombine.low %v5151, %v5155
        %v6377 = vcombine.low %v5159, %v5163
        %v6378 = vcombine.low %v5167, %v5171
        %v6379 = vcombine.low %v5175, %v5179
        %v6381 = vunpack.c.l.s4 1966171168
        %v6382 = vunpack.c.0.s8 %v6381
        %v6383 = vlaneseq
        %v6384 = vshrl.u32 %v6383, 7
        %v6385 = vsub.s32 %v6382, %v6384
        %v6386 = vrot.slane %v6376, %v6385
        %v6388 = vunpack.c.l.s4 1966171168
        %v6389 = vunpack.c.0.s8 %v6388
        %v6390 = vlaneseq
        %v6391 = vshrl.u32 %v6390, 7
        %v6392 = vsub.s32 %v6389, %v6391
        %v6393 = vrot.slane %v6377, %v6392
        %v6395 = vunpack.c.l.s4 1966171168
        %v6396 = vunpack.c.0.s8 %v6395
        %v6397 = vlaneseq
        %v6398 = vshrl.u32 %v6397, 7
        %v6399 = vsub.s32 %v6396, %v6398
        %v6400 = vrot.slane %v6378, %v6399
        %v6402 = vunpack.c.l.s4 1966171168
        %v6403 = vunpack.c.0.s8 %v6402
        %v6404 = vlaneseq
        %v6405 = vshrl.u32 %v6404, 7
        %v6406 = vsub.s32 %v6403, %v6405
        %v6407 = vrot.slane %v6379, %v6406
        %v6408 = vcombine.low %v6386, %v6393
        %v6409 = vcombine.low %v6400, %v6407
        %v6411 = vunpack.c.l.s4 1966171168
        %v6412 = vunpack.c.0.s8 %v6411
        %v6413 = vlaneseq
        %v6414 = vshrl.u32 %v6413, 7
        %v6415 = vsub.s32 %v6412, %v6414
        %v6416 = vrot.slane %v6408, %v6415
        %v6418 = vunpack.c.l.s4 1966171168
        %v6419 = vunpack.c.0.s8 %v6418
        %v6420 = vlaneseq
        %v6421 = vshrl.u32 %v6420, 7
        %v6422 = vsub.s32 %v6419, %v6421
        %v6423 = vrot.slane %v6409, %v6422
        %v6424 = vcombine.low %v6416, %v6423
        %v6425 = vcombine.low %v5183, %v5187
        %v6426 = vcombine.low %v5191, %v5195
        %v6427 = vcombine.low %v5199, %v5203
        %v6428 = vcombine.low %v5207, %v5211
        %v6430 = vunpack.c.l.s4 1966171168
        %v6431 = vunpack.c.0.s8 %v6430
        %v6432 = vlaneseq
        %v6433 = vshrl.u32 %v6432, 7
        %v6434 = vsub.s32 %v6431, %v6433
        %v6435 = vrot.slane %v6425, %v6434
        %v6437 = vunpack.c.l.s4 1966171168
        %v6438 = vunpack.c.0.s8 %v6437
        %v6439 = vlaneseq
        %v6440 = vshrl.u32 %v6439, 7
        %v6441 = vsub.s32 %v6438, %v6440
        %v6442 = vrot.slane %v6426, %v6441
        %v6444 = vunpack.c.l.s4 1966171168
        %v6445 = vunpack.c.0.s8 %v6444
        %v6446 = vlaneseq
        %v6447 = vshrl.u32 %v6446, 7
        %v6448 = vsub.s32 %v6445, %v6447
        %v6449 = vrot.slane %v6427, %v6448
        %v6451 = vunpack.c.l.s4 1966171168
        %v6452 = vunpack.c.0.s8 %v6451
        %v6453 = vlaneseq
        %v6454 = vshrl.u32 %v6453, 7
        %v6455 = vsub.s32 %v6452, %v6454
        %v6456 = vrot.slane %v6428, %v6455
        %v6457 = vcombine.low %v6435, %v6442
        %v6458 = vcombine.low %v6449, %v6456
        %v6460 = vunpack.c.l.s4 1966171168
        %v6461 = vunpack.c.0.s8 %v6460
        %v6462 = vlaneseq
        %v6463 = vshrl.u32 %v6462, 7
        %v6464 = vsub.s32 %v6461, %v6463
        %v6465 = vrot.slane %v6457, %v6464
        %v6467 = vunpack.c.l.s4 1966171168
        %v6468 = vunpack.c.0.s8 %v6467
        %v6469 = vlaneseq
        %v6470 = vshrl.u32 %v6469, 7
        %v6471 = vsub.s32 %v6468, %v6470
        %v6472 = vrot.slane %v6458, %v6471
        %v6473 = vcombine.low %v6465, %v6472
        %v6474 = vcombine.low %v5215, %v5219
        %v6475 = vcombine.low %v5223, %v5227
        %v6476 = vcombine.low %v5231, %v5235
        %v6477 = vcombine.low %v5239, %v5243
        %v6479 = vunpack.c.l.s4 1966171168
        %v6480 = vunpack.c.0.s8 %v6479
        %v6481 = vlaneseq
        %v6482 = vshrl.u32 %v6481, 7
        %v6483 = vsub.s32 %v6480, %v6482
        %v6484 = vrot.slane %v6474, %v6483
        %v6486 = vunpack.c.l.s4 1966171168
        %v6487 = vunpack.c.0.s8 %v6486
        %v6488 = vlaneseq
        %v6489 = vshrl.u32 %v6488, 7
        %v6490 = vsub.s32 %v6487, %v6489
        %v6491 = vrot.slane %v6475, %v6490
        %v6493 = vunpack.c.l.s4 1966171168
        %v6494 = vunpack.c.0.s8 %v6493
        %v6495 = vlaneseq
        %v6496 = vshrl.u32 %v6495, 7
        %v6497 = vsub.s32 %v6494, %v6496
        %v6498 = vrot.slane %v6476, %v6497
        %v6500 = vunpack.c.l.s4 1966171168
        %v6501 = vunpack.c.0.s8 %v6500
        %v6502 = vlaneseq
        %v6503 = vshrl.u32 %v6502, 7
        %v6504 = vsub.s32 %v6501, %v6503
        %v6505 = vrot.slane %v6477, %v6504
        %v6506 = vcombine.low %v6484, %v6491
        %v6507 = vcombine.low %v6498, %v6505
        %v6509 = vunpack.c.l.s4 1966171168
        %v6510 = vunpack.c.0.s8 %v6509
        %v6511 = vlaneseq
        %v6512 = vshrl.u32 %v6511, 7
        %v6513 = vsub.s32 %v6510, %v6512
        %v6514 = vrot.slane %v6506, %v6513
        %v6516 = vunpack.c.l.s4 1966171168
        %v6517 = vunpack.c.0.s8 %v6516
        %v6518 = vlaneseq
        %v6519 = vshrl.u32 %v6518, 7
        %v6520 = vsub.s32 %v6517, %v6519
        %v6521 = vrot.slane %v6507, %v6520
        %v6522 = vcombine.low %v6514, %v6521
        %v6523 = vcombine.low %v5247, %v5251
        %v6524 = vcombine.low %v5255, %v5259
        %v6525 = vcombine.low %v5263, %v5267
        %v6526 = vcombine.low %v5271, %v5275
        %v6528 = vunpack.c.l.s4 1966171168
        %v6529 = vunpack.c.0.s8 %v6528
        %v6530 = vlaneseq
        %v6531 = vshrl.u32 %v6530, 7
        %v6532 = vsub.s32 %v6529, %v6531
        %v6533 = vrot.slane %v6523, %v6532
        %v6535 = vunpack.c.l.s4 1966171168
        %v6536 = vunpack.c.0.s8 %v6535
        %v6537 = vlaneseq
        %v6538 = vshrl.u32 %v6537, 7
        %v6539 = vsub.s32 %v6536, %v6538
        %v6540 = vrot.slane %v6524, %v6539
        %v6542 = vunpack.c.l.s4 1966171168
        %v6543 = vunpack.c.0.s8 %v6542
        %v6544 = vlaneseq
        %v6545 = vshrl.u32 %v6544, 7
        %v6546 = vsub.s32 %v6543, %v6545
        %v6547 = vrot.slane %v6525, %v6546
        %v6549 = vunpack.c.l.s4 1966171168
        %v6550 = vunpack.c.0.s8 %v6549
        %v6551 = vlaneseq
        %v6552 = vshrl.u32 %v6551, 7
        %v6553 = vsub.s32 %v6550, %v6552
        %v6554 = vrot.slane %v6526, %v6553
        %v6555 = vcombine.low %v6533, %v6540
        %v6556 = vcombine.low %v6547, %v6554
        %v6558 = vunpack.c.l.s4 1966171168
        %v6559 = vunpack.c.0.s8 %v6558
        %v6560 = vlaneseq
        %v6561 = vshrl.u32 %v6560, 7
        %v6562 = vsub.s32 %v6559, %v6561
        %v6563 = vrot.slane %v6555, %v6562
        %v6565 = vunpack.c.l.s4 1966171168
        %v6566 = vunpack.c.0.s8 %v6565
        %v6567 = vlaneseq
        %v6568 = vshrl.u32 %v6567, 7
        %v6569 = vsub.s32 %v6566, %v6568
        %v6570 = vrot.slane %v6556, %v6569
        %v6571 = vcombine.low %v6563, %v6570
        %v6572 = vcombine.low %v5279, %v5283
        %v6573 = vcombine.low %v5287, %v5291
        %v6574 = vcombine.low %v5295, %v5299
        %v6575 = vcombine.low %v5303, %v5307
        %v6577 = vunpack.c.l.s4 1966171168
        %v6578 = vunpack.c.0.s8 %v6577
        %v6579 = vlaneseq
        %v6580 = vshrl.u32 %v6579, 7
        %v6581 = vsub.s32 %v6578, %v6580
        %v6582 = vrot.slane %v6572, %v6581
        %v6584 = vunpack.c.l.s4 1966171168
        %v6585 = vunpack.c.0.s8 %v6584
        %v6586 = vlaneseq
        %v6587 = vshrl.u32 %v6586, 7
        %v6588 = vsub.s32 %v6585, %v6587
        %v6589 = vrot.slane %v6573, %v6588
        %v6591 = vunpack.c.l.s4 1966171168
        %v6592 = vunpack.c.0.s8 %v6591
        %v6593 = vlaneseq
        %v6594 = vshrl.u32 %v6593, 7
        %v6595 = vsub.s32 %v6592, %v6594
        %v6596 = vrot.slane %v6574, %v6595
        %v6598 = vunpack.c.l.s4 1966171168
        %v6599 = vunpack.c.0.s8 %v6598
        %v6600 = vlaneseq
        %v6601 = vshrl.u32 %v6600, 7
        %v6602 = vsub.s32 %v6599, %v6601
        %v6603 = vrot.slane %v6575, %v6602
        %v6604 = vcombine.low %v6582, %v6589
        %v6605 = vcombine.low %v6596, %v6603
        %v6607 = vunpack.c.l.s4 1966171168
        %v6608 = vunpack.c.0.s8 %v6607
        %v6609 = vlaneseq
        %v6610 = vshrl.u32 %v6609, 7
        %v6611 = vsub.s32 %v6608, %v6610
        %v6612 = vrot.slane %v6604, %v6611
        %v6614 = vunpack.c.l.s4 1966171168
        %v6615 = vunpack.c.0.s8 %v6614
        %v6616 = vlaneseq
        %v6617 = vshrl.u32 %v6616, 7
        %v6618 = vsub.s32 %v6615, %v6617
        %v6619 = vrot.slane %v6605, %v6618
        %v6620 = vcombine.low %v6612, %v6619
        %v6621 = vcombine.low %v5311, %v5315
        %v6622 = vcombine.low %v5319, %v5323
        %v6623 = vcombine.low %v5327, %v5331
        %v6624 = vcombine.low %v5335, %v5339
        %v6626 = vunpack.c.l.s4 1966171168
        %v6627 = vunpack.c.0.s8 %v6626
        %v6628 = vlaneseq
        %v6629 = vshrl.u32 %v6628, 7
        %v6630 = vsub.s32 %v6627, %v6629
        %v6631 = vrot.slane %v6621, %v6630
        %v6633 = vunpack.c.l.s4 1966171168
        %v6634 = vunpack.c.0.s8 %v6633
        %v6635 = vlaneseq
        %v6636 = vshrl.u32 %v6635, 7
        %v6637 = vsub.s32 %v6634, %v6636
        %v6638 = vrot.slane %v6622, %v6637
        %v6640 = vunpack.c.l.s4 1966171168
        %v6641 = vunpack.c.0.s8 %v6640
        %v6642 = vlaneseq
        %v6643 = vshrl.u32 %v6642, 7
        %v6644 = vsub.s32 %v6641, %v6643
        %v6645 = vrot.slane %v6623, %v6644
        %v6647 = vunpack.c.l.s4 1966171168
        %v6648 = vunpack.c.0.s8 %v6647
        %v6649 = vlaneseq
        %v6650 = vshrl.u32 %v6649, 7
        %v6651 = vsub.s32 %v6648, %v6650
        %v6652 = vrot.slane %v6624, %v6651
        %v6653 = vcombine.low %v6631, %v6638
        %v6654 = vcombine.low %v6645, %v6652
        %v6656 = vunpack.c.l.s4 1966171168
        %v6657 = vunpack.c.0.s8 %v6656
        %v6658 = vlaneseq
        %v6659 = vshrl.u32 %v6658, 7
        %v6660 = vsub.s32 %v6657, %v6659
        %v6661 = vrot.slane %v6653, %v6660
        %v6663 = vunpack.c.l.s4 1966171168
        %v6664 = vunpack.c.0.s8 %v6663
        %v6665 = vlaneseq
        %v6666 = vshrl.u32 %v6665, 7
        %v6667 = vsub.s32 %v6664, %v6666
        %v6668 = vrot.slane %v6654, %v6667
        %v6669 = vcombine.low %v6661, %v6668
        %v6670 = vcombine.low %v5343, %v5347
        %v6671 = vcombine.low %v5351, %v5355
        %v6672 = vcombine.low %v5359, %v5363
        %v6673 = vcombine.low %v5367, %v5371
        %v6675 = vunpack.c.l.s4 1966171168
        %v6676 = vunpack.c.0.s8 %v6675
        %v6677 = vlaneseq
        %v6678 = vshrl.u32 %v6677, 7
        %v6679 = vsub.s32 %v6676, %v6678
        %v6680 = vrot.slane %v6670, %v6679
        %v6682 = vunpack.c.l.s4 1966171168
        %v6683 = vunpack.c.0.s8 %v6682
        %v6684 = vlaneseq
        %v6685 = vshrl.u32 %v6684, 7
        %v6686 = vsub.s32 %v6683, %v6685
        %v6687 = vrot.slane %v6671, %v6686
        %v6689 = vunpack.c.l.s4 1966171168
        %v6690 = vunpack.c.0.s8 %v6689
        %v6691 = vlaneseq
        %v6692 = vshrl.u32 %v6691, 7
        %v6693 = vsub.s32 %v6690, %v6692
        %v6694 = vrot.slane %v6672, %v6693
        %v6696 = vunpack.c.l.s4 1966171168
        %v6697 = vunpack.c.0.s8 %v6696
        %v6698 = vlaneseq
        %v6699 = vshrl.u32 %v6698, 7
        %v6700 = vsub.s32 %v6697, %v6699
        %v6701 = vrot.slane %v6673, %v6700
        %v6702 = vcombine.low %v6680, %v6687
        %v6703 = vcombine.low %v6694, %v6701
        %v6705 = vunpack.c.l.s4 1966171168
        %v6706 = vunpack.c.0.s8 %v6705
        %v6707 = vlaneseq
        %v6708 = vshrl.u32 %v6707, 7
        %v6709 = vsub.s32 %v6706, %v6708
        %v6710 = vrot.slane %v6702, %v6709
        %v6712 = vunpack.c.l.s4 1966171168
        %v6713 = vunpack.c.0.s8 %v6712
        %v6714 = vlaneseq
        %v6715 = vshrl.u32 %v6714, 7
        %v6716 = vsub.s32 %v6713, %v6715
        %v6717 = vrot.slane %v6703, %v6716
        %v6718 = vcombine.low %v6710, %v6717
        %v6719 = vcombine.low %v5375, %v5379
        %v6720 = vcombine.low %v5383, %v5387
        %v6721 = vcombine.low %v5391, %v5395
        %v6722 = vcombine.low %v5399, %v5403
        %v6724 = vunpack.c.l.s4 1966171168
        %v6725 = vunpack.c.0.s8 %v6724
        %v6726 = vlaneseq
        %v6727 = vshrl.u32 %v6726, 7
        %v6728 = vsub.s32 %v6725, %v6727
        %v6729 = vrot.slane %v6719, %v6728
        %v6731 = vunpack.c.l.s4 1966171168
        %v6732 = vunpack.c.0.s8 %v6731
        %v6733 = vlaneseq
        %v6734 = vshrl.u32 %v6733, 7
        %v6735 = vsub.s32 %v6732, %v6734
        %v6736 = vrot.slane %v6720, %v6735
        %v6738 = vunpack.c.l.s4 1966171168
        %v6739 = vunpack.c.0.s8 %v6738
        %v6740 = vlaneseq
        %v6741 = vshrl.u32 %v6740, 7
        %v6742 = vsub.s32 %v6739, %v6741
        %v6743 = vrot.slane %v6721, %v6742
        %v6745 = vunpack.c.l.s4 1966171168
        %v6746 = vunpack.c.0.s8 %v6745
        %v6747 = vlaneseq
        %v6748 = vshrl.u32 %v6747, 7
        %v6749 = vsub.s32 %v6746, %v6748
        %v6750 = vrot.slane %v6722, %v6749
        %v6751 = vcombine.low %v6729, %v6736
        %v6752 = vcombine.low %v6743, %v6750
        %v6754 = vunpack.c.l.s4 1966171168
        %v6755 = vunpack.c.0.s8 %v6754
        %v6756 = vlaneseq
        %v6757 = vshrl.u32 %v6756, 7
        %v6758 = vsub.s32 %v6755, %v6757
        %v6759 = vrot.slane %v6751, %v6758
        %v6761 = vunpack.c.l.s4 1966171168
        %v6762 = vunpack.c.0.s8 %v6761
        %v6763 = vlaneseq
        %v6764 = vshrl.u32 %v6763, 7
        %v6765 = vsub.s32 %v6762, %v6764
        %v6766 = vrot.slane %v6752, %v6765
        %v6767 = vcombine.low %v6759, %v6766
        %v6768 = vcombine.low %v5407, %v5411
        %v6769 = vcombine.low %v5415, %v5419
        %v6770 = vcombine.low %v5423, %v5427
        %v6771 = vcombine.low %v5431, %v5435
        %v6773 = vunpack.c.l.s4 1966171168
        %v6774 = vunpack.c.0.s8 %v6773
        %v6775 = vlaneseq
        %v6776 = vshrl.u32 %v6775, 7
        %v6777 = vsub.s32 %v6774, %v6776
        %v6778 = vrot.slane %v6768, %v6777
        %v6780 = vunpack.c.l.s4 1966171168
        %v6781 = vunpack.c.0.s8 %v6780
        %v6782 = vlaneseq
        %v6783 = vshrl.u32 %v6782, 7
        %v6784 = vsub.s32 %v6781, %v6783
        %v6785 = vrot.slane %v6769, %v6784
        %v6787 = vunpack.c.l.s4 1966171168
        %v6788 = vunpack.c.0.s8 %v6787
        %v6789 = vlaneseq
        %v6790 = vshrl.u32 %v6789, 7
        %v6791 = vsub.s32 %v6788, %v6790
        %v6792 = vrot.slane %v6770, %v6791
        %v6794 = vunpack.c.l.s4 1966171168
        %v6795 = vunpack.c.0.s8 %v6794
        %v6796 = vlaneseq
        %v6797 = vshrl.u32 %v6796, 7
        %v6798 = vsub.s32 %v6795, %v6797
        %v6799 = vrot.slane %v6771, %v6798
        %v6800 = vcombine.low %v6778, %v6785
        %v6801 = vcombine.low %v6792, %v6799
        %v6803 = vunpack.c.l.s4 1966171168
        %v6804 = vunpack.c.0.s8 %v6803
        %v6805 = vlaneseq
        %v6806 = vshrl.u32 %v6805, 7
        %v6807 = vsub.s32 %v6804, %v6806
        %v6808 = vrot.slane %v6800, %v6807
        %v6810 = vunpack.c.l.s4 1966171168
        %v6811 = vunpack.c.0.s8 %v6810
        %v6812 = vlaneseq
        %v6813 = vshrl.u32 %v6812, 7
        %v6814 = vsub.s32 %v6811, %v6813
        %v6815 = vrot.slane %v6801, %v6814
        %v6816 = vcombine.low %v6808, %v6815
        %v6817 = vcombine.low %v5439, %v5443
        %v6818 = vcombine.low %v5447, %v5451
        %v6819 = vcombine.low %v5455, %v5459
        %v6820 = vcombine.low %v5463, %v5467
        %v6822 = vunpack.c.l.s4 1966171168
        %v6823 = vunpack.c.0.s8 %v6822
        %v6824 = vlaneseq
        %v6825 = vshrl.u32 %v6824, 7
        %v6826 = vsub.s32 %v6823, %v6825
        %v6827 = vrot.slane %v6817, %v6826
        %v6829 = vunpack.c.l.s4 1966171168
        %v6830 = vunpack.c.0.s8 %v6829
        %v6831 = vlaneseq
        %v6832 = vshrl.u32 %v6831, 7
        %v6833 = vsub.s32 %v6830, %v6832
        %v6834 = vrot.slane %v6818, %v6833
        %v6836 = vunpack.c.l.s4 1966171168
        %v6837 = vunpack.c.0.s8 %v6836
        %v6838 = vlaneseq
        %v6839 = vshrl.u32 %v6838, 7
        %v6840 = vsub.s32 %v6837, %v6839
        %v6841 = vrot.slane %v6819, %v6840
        %v6843 = vunpack.c.l.s4 1966171168
        %v6844 = vunpack.c.0.s8 %v6843
        %v6845 = vlaneseq
        %v6846 = vshrl.u32 %v6845, 7
        %v6847 = vsub.s32 %v6844, %v6846
        %v6848 = vrot.slane %v6820, %v6847
        %v6849 = vcombine.low %v6827, %v6834
        %v6850 = vcombine.low %v6841, %v6848
        %v6852 = vunpack.c.l.s4 1966171168
        %v6853 = vunpack.c.0.s8 %v6852
        %v6854 = vlaneseq
        %v6855 = vshrl.u32 %v6854, 7
        %v6856 = vsub.s32 %v6853, %v6855
        %v6857 = vrot.slane %v6849, %v6856
        %v6859 = vunpack.c.l.s4 1966171168
        %v6860 = vunpack.c.0.s8 %v6859
        %v6861 = vlaneseq
        %v6862 = vshrl.u32 %v6861, 7
        %v6863 = vsub.s32 %v6860, %v6862
        %v6864 = vrot.slane %v6850, %v6863
        %v6865 = vcombine.low %v6857, %v6864
        %v6866 = vcombine.low %v5471, %v5475
        %v6867 = vcombine.low %v5479, %v5483
        %v6868 = vcombine.low %v5487, %v5491
        %v6869 = vcombine.low %v5495, %v5499
        %v6871 = vunpack.c.l.s4 1966171168
        %v6872 = vunpack.c.0.s8 %v6871
        %v6873 = vlaneseq
        %v6874 = vshrl.u32 %v6873, 7
        %v6875 = vsub.s32 %v6872, %v6874
        %v6876 = vrot.slane %v6866, %v6875
        %v6878 = vunpack.c.l.s4 1966171168
        %v6879 = vunpack.c.0.s8 %v6878
        %v6880 = vlaneseq
        %v6881 = vshrl.u32 %v6880, 7
        %v6882 = vsub.s32 %v6879, %v6881
        %v6883 = vrot.slane %v6867, %v6882
        %v6885 = vunpack.c.l.s4 1966171168
        %v6886 = vunpack.c.0.s8 %v6885
        %v6887 = vlaneseq
        %v6888 = vshrl.u32 %v6887, 7
        %v6889 = vsub.s32 %v6886, %v6888
        %v6890 = vrot.slane %v6868, %v6889
        %v6892 = vunpack.c.l.s4 1966171168
        %v6893 = vunpack.c.0.s8 %v6892
        %v6894 = vlaneseq
        %v6895 = vshrl.u32 %v6894, 7
        %v6896 = vsub.s32 %v6893, %v6895
        %v6897 = vrot.slane %v6869, %v6896
        %v6898 = vcombine.low %v6876, %v6883
        %v6899 = vcombine.low %v6890, %v6897
        %v6901 = vunpack.c.l.s4 1966171168
        %v6902 = vunpack.c.0.s8 %v6901
        %v6903 = vlaneseq
        %v6904 = vshrl.u32 %v6903, 7
        %v6905 = vsub.s32 %v6902, %v6904
        %v6906 = vrot.slane %v6898, %v6905
        %v6908 = vunpack.c.l.s4 1966171168
        %v6909 = vunpack.c.0.s8 %v6908
        %v6910 = vlaneseq
        %v6911 = vshrl.u32 %v6910, 7
        %v6912 = vsub.s32 %v6909, %v6911
        %v6913 = vrot.slane %v6899, %v6912
        %v6914 = vcombine.low %v6906, %v6913
        %v6915 = vcombine.low %v5503, %v5507
        %v6916 = vcombine.low %v5511, %v5515
        %v6917 = vcombine.low %v5519, %v5523
        %v6918 = vcombine.low %v5527, %v5531
        %v6920 = vunpack.c.l.s4 1966171168
        %v6921 = vunpack.c.0.s8 %v6920
        %v6922 = vlaneseq
        %v6923 = vshrl.u32 %v6922, 7
        %v6924 = vsub.s32 %v6921, %v6923
        %v6925 = vrot.slane %v6915, %v6924
        %v6927 = vunpack.c.l.s4 1966171168
        %v6928 = vunpack.c.0.s8 %v6927
        %v6929 = vlaneseq
        %v6930 = vshrl.u32 %v6929, 7
        %v6931 = vsub.s32 %v6928, %v6930
        %v6932 = vrot.slane %v6916, %v6931
        %v6934 = vunpack.c.l.s4 1966171168
        %v6935 = vunpack.c.0.s8 %v6934
        %v6936 = vlaneseq
        %v6937 = vshrl.u32 %v6936, 7
        %v6938 = vsub.s32 %v6935, %v6937
        %v6939 = vrot.slane %v6917, %v6938
        %v6941 = vunpack.c.l.s4 1966171168
        %v6942 = vunpack.c.0.s8 %v6941
        %v6943 = vlaneseq
        %v6944 = vshrl.u32 %v6943, 7
        %v6945 = vsub.s32 %v6942, %v6944
        %v6946 = vrot.slane %v6918, %v6945
        %v6947 = vcombine.low %v6925, %v6932
        %v6948 = vcombine.low %v6939, %v6946
        %v6950 = vunpack.c.l.s4 1966171168
        %v6951 = vunpack.c.0.s8 %v6950
        %v6952 = vlaneseq
        %v6953 = vshrl.u32 %v6952, 7
        %v6954 = vsub.s32 %v6951, %v6953
        %v6955 = vrot.slane %v6947, %v6954
        %v6957 = vunpack.c.l.s4 1966171168
        %v6958 = vunpack.c.0.s8 %v6957
        %v6959 = vlaneseq
        %v6960 = vshrl.u32 %v6959, 7
        %v6961 = vsub.s32 %v6958, %v6960
        %v6962 = vrot.slane %v6948, %v6961
        %v6963 = vcombine.low %v6955, %v6962
        %v6964 = vcombine.low %v5535, %v5539
        %v6965 = vcombine.low %v5543, %v5547
        %v6966 = vcombine.low %v5551, %v5555
        %v6967 = vcombine.low %v5559, %v5563
        %v6969 = vunpack.c.l.s4 1966171168
        %v6970 = vunpack.c.0.s8 %v6969
        %v6971 = vlaneseq
        %v6972 = vshrl.u32 %v6971, 7
        %v6973 = vsub.s32 %v6970, %v6972
        %v6974 = vrot.slane %v6964, %v6973
        %v6976 = vunpack.c.l.s4 1966171168
        %v6977 = vunpack.c.0.s8 %v6976
        %v6978 = vlaneseq
        %v6979 = vshrl.u32 %v6978, 7
        %v6980 = vsub.s32 %v6977, %v6979
        %v6981 = vrot.slane %v6965, %v6980
        %v6983 = vunpack.c.l.s4 1966171168
        %v6984 = vunpack.c.0.s8 %v6983
        %v6985 = vlaneseq
        %v6986 = vshrl.u32 %v6985, 7
        %v6987 = vsub.s32 %v6984, %v6986
        %v6988 = vrot.slane %v6966, %v6987
        %v6990 = vunpack.c.l.s4 1966171168
        %v6991 = vunpack.c.0.s8 %v6990
        %v6992 = vlaneseq
        %v6993 = vshrl.u32 %v6992, 7
        %v6994 = vsub.s32 %v6991, %v6993
        %v6995 = vrot.slane %v6967, %v6994
        %v6996 = vcombine.low %v6974, %v6981
        %v6997 = vcombine.low %v6988, %v6995
        %v6999 = vunpack.c.l.s4 1966171168
        %v7000 = vunpack.c.0.s8 %v6999
        %v7001 = vlaneseq
        %v7002 = vshrl.u32 %v7001, 7
        %v7003 = vsub.s32 %v7000, %v7002
        %v7004 = vrot.slane %v6996, %v7003
        %v7006 = vunpack.c.l.s4 1966171168
        %v7007 = vunpack.c.0.s8 %v7006
        %v7008 = vlaneseq
        %v7009 = vshrl.u32 %v7008, 7
        %v7010 = vsub.s32 %v7007, %v7009
        %v7011 = vrot.slane %v6997, %v7010
        %v7012 = vcombine.low %v7004, %v7011
        %v7013 = vcombine.low %v5567, %v5571
        %v7014 = vcombine.low %v5575, %v5579
        %v7015 = vcombine.low %v5583, %v5587
        %v7016 = vcombine.low %v5591, %v5595
        %v7018 = vunpack.c.l.s4 1966171168
        %v7019 = vunpack.c.0.s8 %v7018
        %v7020 = vlaneseq
        %v7021 = vshrl.u32 %v7020, 7
        %v7022 = vsub.s32 %v7019, %v7021
        %v7023 = vrot.slane %v7013, %v7022
        %v7025 = vunpack.c.l.s4 1966171168
        %v7026 = vunpack.c.0.s8 %v7025
        %v7027 = vlaneseq
        %v7028 = vshrl.u32 %v7027, 7
        %v7029 = vsub.s32 %v7026, %v7028
        %v7030 = vrot.slane %v7014, %v7029
        %v7032 = vunpack.c.l.s4 1966171168
        %v7033 = vunpack.c.0.s8 %v7032
        %v7034 = vlaneseq
        %v7035 = vshrl.u32 %v7034, 7
        %v7036 = vsub.s32 %v7033, %v7035
        %v7037 = vrot.slane %v7015, %v7036
        %v7039 = vunpack.c.l.s4 1966171168
        %v7040 = vunpack.c.0.s8 %v7039
        %v7041 = vlaneseq
        %v7042 = vshrl.u32 %v7041, 7
        %v7043 = vsub.s32 %v7040, %v7042
        %v7044 = vrot.slane %v7016, %v7043
        %v7045 = vcombine.low %v7023, %v7030
        %v7046 = vcombine.low %v7037, %v7044
        %v7048 = vunpack.c.l.s4 1966171168
        %v7049 = vunpack.c.0.s8 %v7048
        %v7050 = vlaneseq
        %v7051 = vshrl.u32 %v7050, 7
        %v7052 = vsub.s32 %v7049, %v7051
        %v7053 = vrot.slane %v7045, %v7052
        %v7055 = vunpack.c.l.s4 1966171168
        %v7056 = vunpack.c.0.s8 %v7055
        %v7057 = vlaneseq
        %v7058 = vshrl.u32 %v7057, 7
        %v7059 = vsub.s32 %v7056, %v7058
        %v7060 = vrot.slane %v7046, %v7059
        %v7061 = vcombine.low %v7053, %v7060
        %v7062 = vcombine.low %v5599, %v5603
        %v7063 = vcombine.low %v5607, %v5611
        %v7064 = vcombine.low %v5615, %v5619
        %v7065 = vcombine.low %v5623, %v5627
        %v7067 = vunpack.c.l.s4 1966171168
        %v7068 = vunpack.c.0.s8 %v7067
        %v7069 = vlaneseq
        %v7070 = vshrl.u32 %v7069, 7
        %v7071 = vsub.s32 %v7068, %v7070
        %v7072 = vrot.slane %v7062, %v7071
        %v7074 = vunpack.c.l.s4 1966171168
        %v7075 = vunpack.c.0.s8 %v7074
        %v7076 = vlaneseq
        %v7077 = vshrl.u32 %v7076, 7
        %v7078 = vsub.s32 %v7075, %v7077
        %v7079 = vrot.slane %v7063, %v7078
        %v7081 = vunpack.c.l.s4 1966171168
        %v7082 = vunpack.c.0.s8 %v7081
        %v7083 = vlaneseq
        %v7084 = vshrl.u32 %v7083, 7
        %v7085 = vsub.s32 %v7082, %v7084
        %v7086 = vrot.slane %v7064, %v7085
        %v7088 = vunpack.c.l.s4 1966171168
        %v7089 = vunpack.c.0.s8 %v7088
        %v7090 = vlaneseq
        %v7091 = vshrl.u32 %v7090, 7
        %v7092 = vsub.s32 %v7089, %v7091
        %v7093 = vrot.slane %v7065, %v7092
        %v7094 = vcombine.low %v7072, %v7079
        %v7095 = vcombine.low %v7086, %v7093
        %v7097 = vunpack.c.l.s4 1966171168
        %v7098 = vunpack.c.0.s8 %v7097
        %v7099 = vlaneseq
        %v7100 = vshrl.u32 %v7099, 7
        %v7101 = vsub.s32 %v7098, %v7100
        %v7102 = vrot.slane %v7094, %v7101
        %v7104 = vunpack.c.l.s4 1966171168
        %v7105 = vunpack.c.0.s8 %v7104
        %v7106 = vlaneseq
        %v7107 = vshrl.u32 %v7106, 7
        %v7108 = vsub.s32 %v7105, %v7107
        %v7109 = vrot.slane %v7095, %v7108
        %v7110 = vcombine.low %v7102, %v7109
        %v7111 = vcombine.low %v5631, %v5635
        %v7112 = vcombine.low %v5639, %v5643
        %v7113 = vcombine.low %v5647, %v5651
        %v7114 = vcombine.low %v5655, %v5659
        %v7116 = vunpack.c.l.s4 1966171168
        %v7117 = vunpack.c.0.s8 %v7116
        %v7118 = vlaneseq
        %v7119 = vshrl.u32 %v7118, 7
        %v7120 = vsub.s32 %v7117, %v7119
        %v7121 = vrot.slane %v7111, %v7120
        %v7123 = vunpack.c.l.s4 1966171168
        %v7124 = vunpack.c.0.s8 %v7123
        %v7125 = vlaneseq
        %v7126 = vshrl.u32 %v7125, 7
        %v7127 = vsub.s32 %v7124, %v7126
        %v7128 = vrot.slane %v7112, %v7127
        %v7130 = vunpack.c.l.s4 1966171168
        %v7131 = vunpack.c.0.s8 %v7130
        %v7132 = vlaneseq
        %v7133 = vshrl.u32 %v7132, 7
        %v7134 = vsub.s32 %v7131, %v7133
        %v7135 = vrot.slane %v7113, %v7134
        %v7137 = vunpack.c.l.s4 1966171168
        %v7138 = vunpack.c.0.s8 %v7137
        %v7139 = vlaneseq
        %v7140 = vshrl.u32 %v7139, 7
        %v7141 = vsub.s32 %v7138, %v7140
        %v7142 = vrot.slane %v7114, %v7141
        %v7143 = vcombine.low %v7121, %v7128
        %v7144 = vcombine.low %v7135, %v7142
        %v7146 = vunpack.c.l.s4 1966171168
        %v7147 = vunpack.c.0.s8 %v7146
        %v7148 = vlaneseq
        %v7149 = vshrl.u32 %v7148, 7
        %v7150 = vsub.s32 %v7147, %v7149
        %v7151 = vrot.slane %v7143, %v7150
        %v7153 = vunpack.c.l.s4 1966171168
        %v7154 = vunpack.c.0.s8 %v7153
        %v7155 = vlaneseq
        %v7156 = vshrl.u32 %v7155, 7
        %v7157 = vsub.s32 %v7154, %v7156
        %v7158 = vrot.slane %v7144, %v7157
        %v7159 = vcombine.low %v7151, %v7158
        %v7160 = vcombine.low %v5663, %v5667
        %v7161 = vcombine.low %v5671, %v5675
        %v7162 = vcombine.low %v5679, %v5683
        %v7163 = vcombine.low %v5687, %v5691
        %v7165 = vunpack.c.l.s4 1966171168
        %v7166 = vunpack.c.0.s8 %v7165
        %v7167 = vlaneseq
        %v7168 = vshrl.u32 %v7167, 7
        %v7169 = vsub.s32 %v7166, %v7168
        %v7170 = vrot.slane %v7160, %v7169
        %v7172 = vunpack.c.l.s4 1966171168
        %v7173 = vunpack.c.0.s8 %v7172
        %v7174 = vlaneseq
        %v7175 = vshrl.u32 %v7174, 7
        %v7176 = vsub.s32 %v7173, %v7175
        %v7177 = vrot.slane %v7161, %v7176
        %v7179 = vunpack.c.l.s4 1966171168
        %v7180 = vunpack.c.0.s8 %v7179
        %v7181 = vlaneseq
        %v7182 = vshrl.u32 %v7181, 7
        %v7183 = vsub.s32 %v7180, %v7182
        %v7184 = vrot.slane %v7162, %v7183
        %v7186 = vunpack.c.l.s4 1966171168
        %v7187 = vunpack.c.0.s8 %v7186
        %v7188 = vlaneseq
        %v7189 = vshrl.u32 %v7188, 7
        %v7190 = vsub.s32 %v7187, %v7189
        %v7191 = vrot.slane %v7163, %v7190
        %v7192 = vcombine.low %v7170, %v7177
        %v7193 = vcombine.low %v7184, %v7191
        %v7195 = vunpack.c.l.s4 1966171168
        %v7196 = vunpack.c.0.s8 %v7195
        %v7197 = vlaneseq
        %v7198 = vshrl.u32 %v7197, 7
        %v7199 = vsub.s32 %v7196, %v7198
        %v7200 = vrot.slane %v7192, %v7199
        %v7202 = vunpack.c.l.s4 1966171168
        %v7203 = vunpack.c.0.s8 %v7202
        %v7204 = vlaneseq
        %v7205 = vshrl.u32 %v7204, 7
        %v7206 = vsub.s32 %v7203, %v7205
        %v7207 = vrot.slane %v7193, %v7206
        %v7208 = vcombine.low %v7200, %v7207
        %v7209 = vcombine.low %v5695, %v5699
        %v7210 = vcombine.low %v5703, %v5707
        %v7211 = vcombine.low %v5711, %v5715
        %v7212 = vcombine.low %v5719, %v5723
        %v7214 = vunpack.c.l.s4 1966171168
        %v7215 = vunpack.c.0.s8 %v7214
        %v7216 = vlaneseq
        %v7217 = vshrl.u32 %v7216, 7
        %v7218 = vsub.s32 %v7215, %v7217
        %v7219 = vrot.slane %v7209, %v7218
        %v7221 = vunpack.c.l.s4 1966171168
        %v7222 = vunpack.c.0.s8 %v7221
        %v7223 = vlaneseq
        %v7224 = vshrl.u32 %v7223, 7
        %v7225 = vsub.s32 %v7222, %v7224
        %v7226 = vrot.slane %v7210, %v7225
        %v7228 = vunpack.c.l.s4 1966171168
        %v7229 = vunpack.c.0.s8 %v7228
        %v7230 = vlaneseq
        %v7231 = vshrl.u32 %v7230, 7
        %v7232 = vsub.s32 %v7229, %v7231
        %v7233 = vrot.slane %v7211, %v7232
        %v7235 = vunpack.c.l.s4 1966171168
        %v7236 = vunpack.c.0.s8 %v7235
        %v7237 = vlaneseq
        %v7238 = vshrl.u32 %v7237, 7
        %v7239 = vsub.s32 %v7236, %v7238
        %v7240 = vrot.slane %v7212, %v7239
        %v7241 = vcombine.low %v7219, %v7226
        %v7242 = vcombine.low %v7233, %v7240
        %v7244 = vunpack.c.l.s4 1966171168
        %v7245 = vunpack.c.0.s8 %v7244
        %v7246 = vlaneseq
        %v7247 = vshrl.u32 %v7246, 7
        %v7248 = vsub.s32 %v7245, %v7247
        %v7249 = vrot.slane %v7241, %v7248
        %v7251 = vunpack.c.l.s4 1966171168
        %v7252 = vunpack.c.0.s8 %v7251
        %v7253 = vlaneseq
        %v7254 = vshrl.u32 %v7253, 7
        %v7255 = vsub.s32 %v7252, %v7254
        %v7256 = vrot.slane %v7242, %v7255
        %v7257 = vcombine.low %v7249, %v7256
        %v7258 = vcombine.low %v5727, %v5731
        %v7259 = vcombine.low %v5735, %v5739
        %v7260 = vcombine.low %v5743, %v5747
        %v7261 = vcombine.low %v5751, %v5755
        %v7263 = vunpack.c.l.s4 1966171168
        %v7264 = vunpack.c.0.s8 %v7263
        %v7265 = vlaneseq
        %v7266 = vshrl.u32 %v7265, 7
        %v7267 = vsub.s32 %v7264, %v7266
        %v7268 = vrot.slane %v7258, %v7267
        %v7270 = vunpack.c.l.s4 1966171168
        %v7271 = vunpack.c.0.s8 %v7270
        %v7272 = vlaneseq
        %v7273 = vshrl.u32 %v7272, 7
        %v7274 = vsub.s32 %v7271, %v7273
        %v7275 = vrot.slane %v7259, %v7274
        %v7277 = vunpack.c.l.s4 1966171168
        %v7278 = vunpack.c.0.s8 %v7277
        %v7279 = vlaneseq
        %v7280 = vshrl.u32 %v7279, 7
        %v7281 = vsub.s32 %v7278, %v7280
        %v7282 = vrot.slane %v7260, %v7281
        %v7284 = vunpack.c.l.s4 1966171168
        %v7285 = vunpack.c.0.s8 %v7284
        %v7286 = vlaneseq
        %v7287 = vshrl.u32 %v7286, 7
        %v7288 = vsub.s32 %v7285, %v7287
        %v7289 = vrot.slane %v7261, %v7288
        %v7290 = vcombine.low %v7268, %v7275
        %v7291 = vcombine.low %v7282, %v7289
        %v7293 = vunpack.c.l.s4 1966171168
        %v7294 = vunpack.c.0.s8 %v7293
        %v7295 = vlaneseq
        %v7296 = vshrl.u32 %v7295, 7
        %v7297 = vsub.s32 %v7294, %v7296
        %v7298 = vrot.slane %v7290, %v7297
        %v7300 = vunpack.c.l.s4 1966171168
        %v7301 = vunpack.c.0.s8 %v7300
        %v7302 = vlaneseq
        %v7303 = vshrl.u32 %v7302, 7
        %v7304 = vsub.s32 %v7301, %v7303
        %v7305 = vrot.slane %v7291, %v7304
        %v7306 = vcombine.low %v7298, %v7305
        %v7307 = vcombine.low %v5759, %v5763
        %v7308 = vcombine.low %v5767, %v5771
        %v7309 = vcombine.low %v5775, %v5779
        %v7310 = vcombine.low %v5783, %v5787
        %v7312 = vunpack.c.l.s4 1966171168
        %v7313 = vunpack.c.0.s8 %v7312
        %v7314 = vlaneseq
        %v7315 = vshrl.u32 %v7314, 7
        %v7316 = vsub.s32 %v7313, %v7315
        %v7317 = vrot.slane %v7307, %v7316
        %v7319 = vunpack.c.l.s4 1966171168
        %v7320 = vunpack.c.0.s8 %v7319
        %v7321 = vlaneseq
        %v7322 = vshrl.u32 %v7321, 7
        %v7323 = vsub.s32 %v7320, %v7322
        %v7324 = vrot.slane %v7308, %v7323
        %v7326 = vunpack.c.l.s4 1966171168
        %v7327 = vunpack.c.0.s8 %v7326
        %v7328 = vlaneseq
        %v7329 = vshrl.u32 %v7328, 7
        %v7330 = vsub.s32 %v7327, %v7329
        %v7331 = vrot.slane %v7309, %v7330
        %v7333 = vunpack.c.l.s4 1966171168
        %v7334 = vunpack.c.0.s8 %v7333
        %v7335 = vlaneseq
        %v7336 = vshrl.u32 %v7335, 7
        %v7337 = vsub.s32 %v7334, %v7336
        %v7338 = vrot.slane %v7310, %v7337
        %v7339 = vcombine.low %v7317, %v7324
        %v7340 = vcombine.low %v7331, %v7338
        %v7342 = vunpack.c.l.s4 1966171168
        %v7343 = vunpack.c.0.s8 %v7342
        %v7344 = vlaneseq
        %v7345 = vshrl.u32 %v7344, 7
        %v7346 = vsub.s32 %v7343, %v7345
        %v7347 = vrot.slane %v7339, %v7346
        %v7349 = vunpack.c.l.s4 1966171168
        %v7350 = vunpack.c.0.s8 %v7349
        %v7351 = vlaneseq
        %v7352 = vshrl.u32 %v7351, 7
        %v7353 = vsub.s32 %v7350, %v7352
        %v7354 = vrot.slane %v7340, %v7353
        %v7355 = vcombine.low %v7347, %v7354
        %7356 = vset.pattern.permute.xlu0 0
        %7357 = vperm.xlu0 %7356, %v5836
        %v7358 = vpop.permute.xlu0 %7357
        %7359 = vset.pattern.permute.xlu0 0
        %7360 = vperm.xlu0 %7359, %v5885
        %v7361 = vpop.permute.xlu0 %7360
        %7362 = vset.pattern.permute.xlu0 0
        %7363 = vperm.xlu0 %7362, %v5934
        %v7364 = vpop.permute.xlu0 %7363
        %7365 = vset.pattern.permute.xlu0 0
        %7366 = vperm.xlu0 %7365, %v5983
        %v7367 = vpop.permute.xlu0 %7366
        %7368 = vset.pattern.permute.xlu0 0
        %7369 = vperm.xlu0 %7368, %v6032
        %v7370 = vpop.permute.xlu0 %7369
        %7371 = vset.pattern.permute.xlu0 0
        %7372 = vperm.xlu0 %7371, %v6081
        %v7373 = vpop.permute.xlu0 %7372
        %7374 = vset.pattern.permute.xlu0 0
        %7375 = vperm.xlu0 %7374, %v6130
        %v7376 = vpop.permute.xlu0 %7375
        %7377 = vset.pattern.permute.xlu0 0
        %7378 = vperm.xlu0 %7377, %v6179
        %v7379 = vpop.permute.xlu0 %7378
        %7380 = vset.pattern.permute.xlu0 0
        %7381 = vperm.xlu0 %7380, %v6228
        %v7382 = vpop.permute.xlu0 %7381
        %7383 = vset.pattern.permute.xlu0 0
        %7384 = vperm.xlu0 %7383, %v6277
        %v7385 = vpop.permute.xlu0 %7384
        %7386 = vset.pattern.permute.xlu0 0
        %7387 = vperm.xlu0 %7386, %v6326
        %v7388 = vpop.permute.xlu0 %7387
        %7389 = vset.pattern.permute.xlu0 0
        %7390 = vperm.xlu0 %7389, %v6375
        %v7391 = vpop.permute.xlu0 %7390
        %7392 = vset.pattern.permute.xlu0 0
        %7393 = vperm.xlu0 %7392, %v6424
        %v7394 = vpop.permute.xlu0 %7393
        %7395 = vset.pattern.permute.xlu0 0
        %7396 = vperm.xlu0 %7395, %v6473
        %v7397 = vpop.permute.xlu0 %7396
        %7398 = vset.pattern.permute.xlu0 0
        %7399 = vperm.xlu0 %7398, %v6522
        %v7400 = vpop.permute.xlu0 %7399
        %7401 = vset.pattern.permute.xlu0 0
        %7402 = vperm.xlu0 %7401, %v6571
        %v7403 = vpop.permute.xlu0 %7402
        %7404 = vset.pattern.permute.xlu0 0
        %7405 = vperm.xlu0 %7404, %v6620
        %v7406 = vpop.permute.xlu0 %7405
        %7407 = vset.pattern.permute.xlu0 0
        %7408 = vperm.xlu0 %7407, %v6669
        %v7409 = vpop.permute.xlu0 %7408
        %7410 = vset.pattern.permute.xlu0 0
        %7411 = vperm.xlu0 %7410, %v6718
        %v7412 = vpop.permute.xlu0 %7411
        %7413 = vset.pattern.permute.xlu0 0
        %7414 = vperm.xlu0 %7413, %v6767
        %v7415 = vpop.permute.xlu0 %7414
        %7416 = vset.pattern.permute.xlu0 0
        %7417 = vperm.xlu0 %7416, %v6816
        %v7418 = vpop.permute.xlu0 %7417
        %7419 = vset.pattern.permute.xlu0 0
        %7420 = vperm.xlu0 %7419, %v6865
        %v7421 = vpop.permute.xlu0 %7420
        %7422 = vset.pattern.permute.xlu0 0
        %7423 = vperm.xlu0 %7422, %v6914
        %v7424 = vpop.permute.xlu0 %7423
        %7425 = vset.pattern.permute.xlu0 0
        %7426 = vperm.xlu0 %7425, %v6963
        %v7427 = vpop.permute.xlu0 %7426
        %7428 = vset.pattern.permute.xlu0 0
        %7429 = vperm.xlu0 %7428, %v7012
        %v7430 = vpop.permute.xlu0 %7429
        %7431 = vset.pattern.permute.xlu0 0
        %7432 = vperm.xlu0 %7431, %v7061
        %v7433 = vpop.permute.xlu0 %7432
        %7434 = vset.pattern.permute.xlu0 0
        %7435 = vperm.xlu0 %7434, %v7110
        %v7436 = vpop.permute.xlu0 %7435
        %7437 = vset.pattern.permute.xlu0 0
        %7438 = vperm.xlu0 %7437, %v7159
        %v7439 = vpop.permute.xlu0 %7438
        %7440 = vset.pattern.permute.xlu0 0
        %7441 = vperm.xlu0 %7440, %v7208
        %v7442 = vpop.permute.xlu0 %7441
        %7443 = vset.pattern.permute.xlu0 0
        %7444 = vperm.xlu0 %7443, %v7257
        %v7445 = vpop.permute.xlu0 %7444
        %7446 = vset.pattern.permute.xlu0 0
        %7447 = vperm.xlu0 %7446, %v7306
        %v7448 = vpop.permute.xlu0 %7447
        %7449 = vset.pattern.permute.xlu0 0
        %7450 = vperm.xlu0 %7449, %v7355
        %v7451 = vpop.permute.xlu0 %7450
        %v7452 = vlaneseq
        %v7453 = vand.u32 %v7452, 127
        %v7454 = vlaneseq
        %v7455 = vshrl.u32 %v7454, 7
        %v7456 = vsub.s32 %v7453, %v7455
        %v7457 = vrot.slane %v7358, %v7456
        %v7458 = vadd.s32 %v7453, 4294967288
        %v7459 = vlaneseq
        %v7460 = vshrl.u32 %v7459, 7
        %v7461 = vsub.s32 %v7458, %v7460
        %v7462 = vrot.slane %v7361, %v7461
        %vm7463 = vcmask 130112
        %v7464 = vsel %vm7463, %v7462, %v7457
        %v7465 = vadd.s32 %v7453, 4294967280
        %v7466 = vlaneseq
        %v7467 = vshrl.u32 %v7466, 7
        %v7468 = vsub.s32 %v7465, %v7467
        %v7469 = vrot.slane %v7364, %v7468
        %vm7470 = vcmask 195712
        %v7471 = vsel %vm7470, %v7469, %v7464
        %v7472 = vadd.s32 %v7453, 4294967272
        %v7473 = vlaneseq
        %v7474 = vshrl.u32 %v7473, 7
        %v7475 = vsub.s32 %v7472, %v7474
        %v7476 = vrot.slane %v7367, %v7475
        %vm7477 = vcmask 261312
        %v7478 = vsel %vm7477, %v7476, %v7471
        %v7479 = vadd.s32 %v7453, 4294967264
        %v7480 = vlaneseq
        %v7481 = vshrl.u32 %v7480, 7
        %v7482 = vsub.s32 %v7479, %v7481
        %v7483 = vrot.slane %v7370, %v7482
        %vm7484 = vcmask 326912
        %v7485 = vsel %vm7484, %v7483, %v7478
        %v7486 = vadd.s32 %v7453, 4294967256
        %v7487 = vlaneseq
        %v7488 = vshrl.u32 %v7487, 7
        %v7489 = vsub.s32 %v7486, %v7488
        %v7490 = vrot.slane %v7373, %v7489
        %vm7491 = vcmask 392512
        %v7492 = vsel %vm7491, %v7490, %v7485
        %v7493 = vadd.s32 %v7453, 4294967248
        %v7494 = vlaneseq
        %v7495 = vshrl.u32 %v7494, 7
        %v7496 = vsub.s32 %v7493, %v7495
        %v7497 = vrot.slane %v7376, %v7496
        %vm7498 = vcmask 458112
        %v7499 = vsel %vm7498, %v7497, %v7492
        %v7500 = vadd.s32 %v7453, 4294967240
        %v7501 = vlaneseq
        %v7502 = vshrl.u32 %v7501, 7
        %v7503 = vsub.s32 %v7500, %v7502
        %v7504 = vrot.slane %v7379, %v7503
        %vm7505 = vcmask 523712
        %v7506 = vsel %vm7505, %v7504, %v7499
        %v7507 = vadd.s32 %v7453, 4294967232
        %v7508 = vlaneseq
        %v7509 = vshrl.u32 %v7508, 7
        %v7510 = vsub.s32 %v7507, %v7509
        %v7511 = vrot.slane %v7382, %v7510
        %vm7512 = vcmask 589312
        %v7513 = vsel %vm7512, %v7511, %v7506
        %v7514 = vadd.s32 %v7453, 4294967224
        %v7515 = vlaneseq
        %v7516 = vshrl.u32 %v7515, 7
        %v7517 = vsub.s32 %v7514, %v7516
        %v7518 = vrot.slane %v7385, %v7517
        %vm7519 = vcmask 654912
        %v7520 = vsel %vm7519, %v7518, %v7513
        %v7521 = vadd.s32 %v7453, 4294967216
        %v7522 = vlaneseq
        %v7523 = vshrl.u32 %v7522, 7
        %v7524 = vsub.s32 %v7521, %v7523
        %v7525 = vrot.slane %v7388, %v7524
        %vm7526 = vcmask 720512
        %v7527 = vsel %vm7526, %v7525, %v7520
        %v7528 = vadd.s32 %v7453, 4294967208
        %v7529 = vlaneseq
        %v7530 = vshrl.u32 %v7529, 7
        %v7531 = vsub.s32 %v7528, %v7530
        %v7532 = vrot.slane %v7391, %v7531
        %vm7533 = vcmask 786112
        %v7534 = vsel %vm7533, %v7532, %v7527
        %v7535 = vadd.s32 %v7453, 4294967200
        %v7536 = vlaneseq
        %v7537 = vshrl.u32 %v7536, 7
        %v7538 = vsub.s32 %v7535, %v7537
        %v7539 = vrot.slane %v7394, %v7538
        %vm7540 = vcmask 851712
        %v7541 = vsel %vm7540, %v7539, %v7534
        %v7542 = vadd.s32 %v7453, 4294967192
        %v7543 = vlaneseq
        %v7544 = vshrl.u32 %v7543, 7
        %v7545 = vsub.s32 %v7542, %v7544
        %v7546 = vrot.slane %v7397, %v7545
        %vm7547 = vcmask 917312
        %v7548 = vsel %vm7547, %v7546, %v7541
        %v7549 = vadd.s32 %v7453, 4294967184
        %v7550 = vlaneseq
        %v7551 = vshrl.u32 %v7550, 7
        %v7552 = vsub.s32 %v7549, %v7551
        %v7553 = vrot.slane %v7400, %v7552
        %vm7554 = vcmask 982912
        %v7555 = vsel %vm7554, %v7553, %v7548
        %v7556 = vadd.s32 %v7453, 4294967176
        %v7557 = vlaneseq
        %v7558 = vshrl.u32 %v7557, 7
        %v7559 = vsub.s32 %v7556, %v7558
        %v7560 = vrot.slane %v7403, %v7559
        %vm7561 = vcmask 1048512
        %v7562 = vsel %vm7561, %v7560, %v7555
        %v7563 = vlaneseq
        %v7564 = vshrl.u32 %v7563, 7
        %v7565 = vsub.s32 %v7453, %v7564
        %v7566 = vrot.slane %v7406, %v7565
        %v7567 = vlaneseq
        %v7568 = vshrl.u32 %v7567, 7
        %v7569 = vsub.s32 %v7458, %v7568
        %v7570 = vrot.slane %v7409, %v7569
        %v7571 = vsel %vm7463, %v7570, %v7566
        %v7572 = vlaneseq
        %v7573 = vshrl.u32 %v7572, 7
        %v7574 = vsub.s32 %v7465, %v7573
        %v7575 = vrot.slane %v7412, %v7574
        %v7576 = vsel %vm7470, %v7575, %v7571
        %v7577 = vlaneseq
        %v7578 = vshrl.u32 %v7577, 7
        %v7579 = vsub.s32 %v7472, %v7578
        %v7580 = vrot.slane %v7415, %v7579
        %v7581 = vsel %vm7477, %v7580, %v7576
        %v7582 = vlaneseq
        %v7583 = vshrl.u32 %v7582, 7
        %v7584 = vsub.s32 %v7479, %v7583
        %v7585 = vrot.slane %v7418, %v7584
        %v7586 = vsel %vm7484, %v7585, %v7581
        %v7587 = vlaneseq
        %v7588 = vshrl.u32 %v7587, 7
        %v7589 = vsub.s32 %v7486, %v7588
        %v7590 = vrot.slane %v7421, %v7589
        %v7591 = vsel %vm7491, %v7590, %v7586
        %v7592 = vlaneseq
        %v7593 = vshrl.u32 %v7592, 7
        %v7594 = vsub.s32 %v7493, %v7593
        %v7595 = vrot.slane %v7424, %v7594
        %v7596 = vsel %vm7498, %v7595, %v7591
        %v7597 = vlaneseq
        %v7598 = vshrl.u32 %v7597, 7
        %v7599 = vsub.s32 %v7500, %v7598
        %v7600 = vrot.slane %v7427, %v7599
        %v7601 = vsel %vm7505, %v7600, %v7596
        %v7602 = vlaneseq
        %v7603 = vshrl.u32 %v7602, 7
        %v7604 = vsub.s32 %v7507, %v7603
        %v7605 = vrot.slane %v7430, %v7604
        %v7606 = vsel %vm7512, %v7605, %v7601
        %v7607 = vlaneseq
        %v7608 = vshrl.u32 %v7607, 7
        %v7609 = vsub.s32 %v7514, %v7608
        %v7610 = vrot.slane %v7433, %v7609
        %v7611 = vsel %vm7519, %v7610, %v7606
        %v7612 = vlaneseq
        %v7613 = vshrl.u32 %v7612, 7
        %v7614 = vsub.s32 %v7521, %v7613
        %v7615 = vrot.slane %v7436, %v7614
        %v7616 = vsel %vm7526, %v7615, %v7611
        %v7617 = vlaneseq
        %v7618 = vshrl.u32 %v7617, 7
        %v7619 = vsub.s32 %v7528, %v7618
        %v7620 = vrot.slane %v7439, %v7619
        %v7621 = vsel %vm7533, %v7620, %v7616
        %v7622 = vlaneseq
        %v7623 = vshrl.u32 %v7622, 7
        %v7624 = vsub.s32 %v7535, %v7623
        %v7625 = vrot.slane %v7442, %v7624
        %v7626 = vsel %vm7540, %v7625, %v7621
        %v7627 = vlaneseq
        %v7628 = vshrl.u32 %v7627, 7
        %v7629 = vsub.s32 %v7542, %v7628
        %v7630 = vrot.slane %v7445, %v7629
        %v7631 = vsel %vm7547, %v7630, %v7626
        %v7632 = vlaneseq
        %v7633 = vshrl.u32 %v7632, 7
        %v7634 = vsub.s32 %v7549, %v7633
        %v7635 = vrot.slane %v7448, %v7634
        %v7636 = vsel %vm7554, %v7635, %v7631
        %v7637 = vlaneseq
        %v7638 = vshrl.u32 %v7637, 7
        %v7639 = vsub.s32 %v7556, %v7638
        %v7640 = vrot.slane %v7451, %v7639
        %v7641 = vsel %vm7561, %v7640, %v7636
        %v7642 = vcombine.low %v7562, %v7641
        %v7644 = vunpack.c.l.s4 1966171168
        %v7645 = vunpack.c.0.s8 %v7644
        %v7646 = vlaneseq
        %v7647 = vshrl.u32 %v7646, 7
        %v7648 = vsub.s32 %v7645, %v7647
        %v7649 = vrot.slane %v7642, %v7648
        %v7651 = vunpack.c.l.s4 1966171168
        %v7652 = vunpack.c.0.s8 %v7651
        %v7653 = vlaneseq
        %v7654 = vshrl.u32 %v7653, 7
        %v7655 = vsub.s32 %v7652, %v7654
        %v7656 = vrot.slane %v7649, %v7655
        %v7658 = vlaneseq
        %vm7659 = vcmp.ge.s32.totalorder %v7658, 0
        %vm7660 = vcmp.lt.s32.totalorder %v7658, 256
        %vm7661 = vmand %vm7659, %vm7660
        %7662 = vst.msk [vmem:[%s273] sm:$0x3] %vm7661, %v7656
        %s7663 = sand.u32 %s183, 1
        %s7664 = scalar_lea.sflag [#allocation6], %s7663
        %s7665 = sand.u32 %s183, 1
        %s7666 = smul.addr %s7665, 2
        %s7667 = scalar_lea.vmem [#allocation5], %s7666
        // Predicated region
        $region49: #{tpu_custom_call.1} parent=47 // pred_check
          %p7668 = pneg %p193
        $region50: #{tpu_custom_call.1} parent=47 // pred_check_branch
          %7670 = sbr.rel (%p7668) target = $region52
        $region51: #{tpu_custom_call.1} parent=47 // pred_region
          %s7672 = ssub.s32 32, 32
          %7673 = vsyncadd %s7664, %s7672
          %s7674 = smul.addr %s23, 2
          %s7675 = smul.addr %s7674, 16
          %s7676 = scalar_lea.hbm %s7, %s7675
          %s7678 = sshll.u32 %s7667, 4
          %s7679 = int_to_ptr.vmem [resolvable:$true] %s7678
          %7681 = dma.vmem_to_hbm [thread:$0]  %s7679, 32, %s7676, %s7664
        $region52: #{tpu_custom_call.1} parent=47 // pred_fallthru
          _
      $region48: #{tpu_custom_call.1} parent=5 // pred_fallthru
        _
      %p7682 = scmp.le.s32.totalorder 2, %s18
      // Predicated region
      $region53: #{tpu_custom_call.1} parent=5 // pred_check
        %p7683 = pneg %p7682
      $region54: #{tpu_custom_call.1} parent=5 // pred_check_branch
        %7685 = sbr.rel (%p7683) target = $region56
      $region55: #{tpu_custom_call.1} parent=5 // pred_region
        %s7686 = ssub.s32 %s18, 2
        // Predicated region
        $region57: #{tpu_custom_call.1} parent=55 // pred_check
          %p7687 = pneg %p199
        $region58: #{tpu_custom_call.1} parent=55 // pred_check_branch
          %7689 = sbr.rel (%p7687) target = $region60
        $region59: #{tpu_custom_call.1} parent=55 // pred_region
          %s7690 = sand.u32 %s184, 1
          %s7691 = scalar_lea.sflag [#allocation6], %s7690
          %s7692 = sand.u32 %s184, 1
          %s7693 = smul.addr %s7692, 2
          %s7694 = scalar_lea.vmem [#allocation5], %s7693
          %7695 = dma.done %s7691, 32
        $region60: #{tpu_custom_call.1} parent=55 // pred_fallthru
          _
      $region56: #{tpu_custom_call.1} parent=5 // pred_fallthru
        _
    $region6: #{tpu_custom_call.1} parent=1 // loop_footer
      %s22 = sadd.s32 1, %s18
    $region7: #{tpu_custom_call.1} parent=1 // loop_footer_branch
      %17 = sbr.rel target = $region3
    $region8: #{tpu_custom_call.1} parent=1 // loop_exit
      _
    %7696 = vsyncpa [#allocation6], 1
    %s7697 = scalar_lea.sflag [#allocation6], 1
    %7698 = vsyncpa %s7697, 1

</llo_original>
